<compile_context>
chip_gen: v5e
topology: v5e:2x2
jax: 0.10.0
libtpu: 0.0.40
codegen_flags: <defaults>
</compile_context>

<pallas_src>
import jax
import jax.numpy as jnp
from jax.experimental import pallas as pl
from jax.experimental.pallas import tpu as pltpu

_BLOCK_B = 8    # batch rows per grid step (sublane-full output tile)
_LANE = 128     # lane width; embedding dim padded to a multiple of this


def _embed_mean_kernel(ids_ref, emb_hbm, out_ref, buf, sems):
    """One grid step = _BLOCK_B batch rows.

    ids_ref : SMEM (Bp, S) int32      (scalar-prefetched token ids)
    emb_hbm : HBM  (V, Dp) float32    (full table, never copied wholesale)
    out_ref : VMEM (TB, Dp) float32   (dense output tile for this batch block)
    buf     : VMEM (2, S, Dp)         (double-buffered gathered rows)
    sems    : DMA semaphores (2, S)
    """
    i = pl.program_id(0)
    block_b, _ = out_ref.shape
    seq_len = buf.shape[1]
    inv_s = 1.0 / seq_len  # torch.mean over dim=1 divides by padded seq length

    # NOTE: the token loop is statically unrolled (seq_len is small in this
    # demo); for long sequences chunk the token axis instead.
    def issue(r, slot):
        """Start S row-gather DMAs for local batch row r into buf[slot]."""
        cps = []
        row = i * block_b + r
        for s in range(seq_len):
            tok = ids_ref[row, s]                       # scalar int32 from SMEM
            cp = pltpu.make_async_copy(
                emb_hbm.at[pl.ds(tok, 1), :],           # (1, Dp) row in HBM
                buf.at[slot, pl.ds(s, 1), :],           # (1, Dp) slot in VMEM
                sems.at[slot, s],
            )
            cp.start()
            cps.append(cp)
        return cps

    pending = {0: issue(0, 0)}                          # prime slot 0
    for r in range(block_b):                            # static unroll
        slot = r & 1
        if r + 1 < block_b:                             # prefetch next row's gather
            pending[1 - slot] = issue(r + 1, 1 - slot)
        for cp in pending[slot]:                        # wait current row's gather
            cp.wait()
        rows = buf[slot].astype(jnp.float32)            # (S, Dp), vectorized
        mean = jnp.sum(rows, axis=0, keepdims=True) * inv_s
        out_ref[pl.ds(r, 1), :] = mean.astype(out_ref.dtype)


@jax.jit
def embedding_mean(input_ids, emb_table):
    """input_ids: (B, S) int32; emb_table: (V, D) float32 -> (B, D) float32."""
    B, S = input_ids.shape
    V, D = emb_table.shape

    # Lane-dense embedding dim (zero-padded columns are inert for the mean).
    Dp = pl.cdiv(D, _LANE) * _LANE
    # Sublane-full batch blocks (padded rows gather row 0 and are discarded).
    Bp = pl.cdiv(B, _BLOCK_B) * _BLOCK_B

    # Clamp ids so a bad token id can never drive an out-of-bounds HBM DMA.
    ids = jnp.clip(input_ids, 0, V - 1).astype(jnp.int32)
    ids = jnp.pad(ids, ((0, Bp - B), (0, 0)))
    table = jnp.pad(emb_table, ((0, 0), (0, Dp - D)))

    itemsize = table.dtype.itemsize
    cost = pl.CostEstimate(
        flops=2 * Bp * S * Dp,
        transcendentals=0,
        bytes_accessed=Bp * S * Dp * itemsize      # gathered rows (HBM reads)
        + Bp * Dp * itemsize                       # output writes
        + Bp * S * 4,                              # token ids
    )

    out = pl.pallas_call(
        _embed_mean_kernel,
        out_shape=jax.ShapeDtypeStruct((Bp, Dp), emb_table.dtype),
        grid_spec=pltpu.PrefetchScalarGridSpec(
            num_scalar_prefetch=1,                 # input_ids -> SMEM
            grid=(Bp // _BLOCK_B,),
            in_specs=[
                # Full table stays in HBM; rows are gathered manually by DMA.
                pl.BlockSpec(memory_space=pl.ANY),
            ],
            out_specs=pl.BlockSpec((_BLOCK_B, Dp), lambda i, ids: (i, 0)),
            scratch_shapes=[
                pltpu.VMEM((2, S, Dp), emb_table.dtype),   # double-buffered rows
                pltpu.SemaphoreType.DMA((2, S)),           # one sem per row DMA
            ],
        ),
        compiler_params=pltpu.CompilerParams(
            dimension_semantics=("parallel",),     # batch blocks are independent
            vmem_limit_bytes=32 * 1024 * 1024,     # explicit, v7x-safe budget
        ),
        cost_estimate=cost,
    )(ids, table)

    return out[:B, :D]


if __name__ == "__main__":
    # Small, deterministic shapes consistent with the module's forward.
    # bert-base-uncased: vocab_size=30522, pad_token_id=0. Small vocab for the
    # demo, keeping nn.Embedding's zeroed padding row semantics.
    vocab_size = 1024
    embedding_dim = 32
    batch = 2
    seq = 8

    key = jax.random.PRNGKey(0)
    k_emb, k_ids = jax.random.split(key)

    # nn.Embedding default init: N(0, 1); row at padding_idx is zeroed.
    emb_table = jax.random.normal(k_emb, (vocab_size, embedding_dim), dtype=jnp.float32)
    emb_table = emb_table.at[0].set(0.0)  # padding_idx = 0

    # Synthetic "tokenized, padded" batch of ids (trailing pads = 0).
    input_ids = jax.random.randint(k_ids, (batch, seq), 1, vocab_size, dtype=jnp.int32)
    input_ids = input_ids.at[1, -2:].set(0)  # simulate padding on second sentence

    out = jax.block_until_ready(embedding_mean(input_ids, emb_table))

    # Cross-check against plain-JAX reference (torch.mean(embedding, dim=1)).
    ref = jnp.mean(emb_table[input_ids], axis=1)
    assert out.shape == (batch, embedding_dim)
    assert jnp.allclose(out, ref, atol=1e-5, rtol=1e-5), "mismatch vs reference"

    print("KERNEL_OK")
</pallas_src>

<mosaic_0001>
module attributes {stable_mosaic.version = 11 : i64} {
  func.func @_embed_mean_kernel(%arg0: i32, %arg1: memref<8x8xi32, #tpu.memory_space<smem>>, %arg2: memref<1024x128xf32, #tpu.memory_space<any>>, %arg3: memref<8x128xf32, #tpu.memory_space<vmem>>, %arg4: memref<2x8x128xf32, #tpu.memory_space<vmem>>, %arg5: memref<2x8x!tpu.dma_semaphore, #tpu.memory_space<semaphore_mem>>) attributes {dimension_semantics = [#tpu.dimension_semantics<parallel>], iteration_bounds = array<i64: 1>, scalar_prefetch = 1 : i64, scratch_operands = 2 : i64, tpu.core_type = #tpu.core_type<tc>, window_params = [{}, {transform_indices = @transform_1, window_bounds = array<i64: 8, 128>}]} {
    %c8_i32 = arith.constant 8 : i32
    %0 = arith.muli %arg0, %c8_i32 : i32
    %c0_i32 = arith.constant 0 : i32
    %1 = arith.addi %0, %c0_i32 : i32
    %2 = arith.index_cast %1 : i32 to index
    %c0 = arith.constant 0 : index
    %3 = memref.load %arg1[%2, %c0] : memref<8x8xi32, #tpu.memory_space<smem>>
    %c0_i32_0 = arith.constant 0 : i32
    %c0_i32_1 = arith.constant 0 : i32
    %c0_i32_2 = arith.constant 0 : i32
    %c0_i32_3 = arith.constant 0 : i32
    %4 = tpu.memref_slice %arg2[%3, %c0_i32_3] : memref<1024x128xf32, #tpu.memory_space<any>> -> memref<1x128xf32, #tpu.memory_space<any>>
    %c0_i32_4 = arith.constant 0 : i32
    %c0_i32_5 = arith.constant 0 : i32
    %5 = tpu.memref_slice %arg4[%c0_i32_0, %c0_i32_4, %c0_i32_5] : memref<2x8x128xf32, #tpu.memory_space<vmem>> -> memref<1x1x128xf32, #tpu.memory_space<vmem>>
    %6 = tpu.memref_squeeze %5 : memref<1x1x128xf32, #tpu.memory_space<vmem>> -> memref<1x128xf32, #tpu.memory_space<vmem>>
    %7 = tpu.memref_slice %arg5[%c0_i32_1, %c0_i32_2] : memref<2x8x!tpu.dma_semaphore, #tpu.memory_space<semaphore_mem>> -> memref<1x1x!tpu.dma_semaphore, #tpu.memory_space<semaphore_mem>>
    %8 = tpu.memref_squeeze %7 : memref<1x1x!tpu.dma_semaphore, #tpu.memory_space<semaphore_mem>> -> memref<!tpu.dma_semaphore, #tpu.memory_space<semaphore_mem>>
    tpu.enqueue_dma source(%4 : memref<1x128xf32, #tpu.memory_space<any>>) target(%6 : memref<1x128xf32, #tpu.memory_space<vmem>>) target_semaphore(%8 : memref<!tpu.dma_semaphore, #tpu.memory_space<semaphore_mem>>)
    %9 = arith.index_cast %1 : i32 to index
    %c1 = arith.constant 1 : index
    %10 = memref.load %arg1[%9, %c1] : memref<8x8xi32, #tpu.memory_space<smem>>
    %c0_i32_6 = arith.constant 0 : i32
    %c0_i32_7 = arith.constant 0 : i32
    %c1_i32 = arith.constant 1 : i32
    %c0_i32_8 = arith.constant 0 : i32
    %11 = tpu.memref_slice %arg2[%10, %c0_i32_8] : memref<1024x128xf32, #tpu.memory_space<any>> -> memref<1x128xf32, #tpu.memory_space<any>>
    %c1_i32_9 = arith.constant 1 : i32
    %c0_i32_10 = arith.constant 0 : i32
    %12 = tpu.memref_slice %arg4[%c0_i32_6, %c1_i32_9, %c0_i32_10] : memref<2x8x128xf32, #tpu.memory_space<vmem>> -> memref<1x1x128xf32, #tpu.memory_space<vmem>>
    %13 = tpu.memref_squeeze %12 : memref<1x1x128xf32, #tpu.memory_space<vmem>> -> memref<1x128xf32, #tpu.memory_space<vmem>>
    %14 = tpu.memref_slice %arg5[%c0_i32_7, %c1_i32] : memref<2x8x!tpu.dma_semaphore, #tpu.memory_space<semaphore_mem>> -> memref<1x1x!tpu.dma_semaphore, #tpu.memory_space<semaphore_mem>>
    %15 = tpu.memref_squeeze %14 : memref<1x1x!tpu.dma_semaphore, #tpu.memory_space<semaphore_mem>> -> memref<!tpu.dma_semaphore, #tpu.memory_space<semaphore_mem>>
    tpu.enqueue_dma source(%11 : memref<1x128xf32, #tpu.memory_space<any>>) target(%13 : memref<1x128xf32, #tpu.memory_space<vmem>>) target_semaphore(%15 : memref<!tpu.dma_semaphore, #tpu.memory_space<semaphore_mem>>)
    %16 = arith.index_cast %1 : i32 to index
    %c2 = arith.constant 2 : index
    %17 = memref.load %arg1[%16, %c2] : memref<8x8xi32, #tpu.memory_space<smem>>
    %c0_i32_11 = arith.constant 0 : i32
    %c0_i32_12 = arith.constant 0 : i32
    %c2_i32 = arith.constant 2 : i32
    %c0_i32_13 = arith.constant 0 : i32
    %18 = tpu.memref_slice %arg2[%17, %c0_i32_13] : memref<1024x128xf32, #tpu.memory_space<any>> -> memref<1x128xf32, #tpu.memory_space<any>>
    %c2_i32_14 = arith.constant 2 : i32
    %c0_i32_15 = arith.constant 0 : i32
    %19 = tpu.memref_slice %arg4[%c0_i32_11, %c2_i32_14, %c0_i32_15] : memref<2x8x128xf32, #tpu.memory_space<vmem>> -> memref<1x1x128xf32, #tpu.memory_space<vmem>>
    %20 = tpu.memref_squeeze %19 : memref<1x1x128xf32, #tpu.memory_space<vmem>> -> memref<1x128xf32, #tpu.memory_space<vmem>>
    %21 = tpu.memref_slice %arg5[%c0_i32_12, %c2_i32] : memref<2x8x!tpu.dma_semaphore, #tpu.memory_space<semaphore_mem>> -> memref<1x1x!tpu.dma_semaphore, #tpu.memory_space<semaphore_mem>>
    %22 = tpu.memref_squeeze %21 : memref<1x1x!tpu.dma_semaphore, #tpu.memory_space<semaphore_mem>> -> memref<!tpu.dma_semaphore, #tpu.memory_space<semaphore_mem>>
    tpu.enqueue_dma source(%18 : memref<1x128xf32, #tpu.memory_space<any>>) target(%20 : memref<1x128xf32, #tpu.memory_space<vmem>>) target_semaphore(%22 : memref<!tpu.dma_semaphore, #tpu.memory_space<semaphore_mem>>)
    %23 = arith.index_cast %1 : i32 to index
    %c3 = arith.constant 3 : index
    %24 = memref.load %arg1[%23, %c3] : memref<8x8xi32, #tpu.memory_space<smem>>
    %c0_i32_16 = arith.constant 0 : i32
    %c0_i32_17 = arith.constant 0 : i32
    %c3_i32 = arith.constant 3 : i32
    %c0_i32_18 = arith.constant 0 : i32
    %25 = tpu.memref_slice %arg2[%24, %c0_i32_18] : memref<1024x128xf32, #tpu.memory_space<any>> -> memref<1x128xf32, #tpu.memory_space<any>>
    %c3_i32_19 = arith.constant 3 : i32
    %c0_i32_20 = arith.constant 0 : i32
    %26 = tpu.memref_slice %arg4[%c0_i32_16, %c3_i32_19, %c0_i32_20] : memref<2x8x128xf32, #tpu.memory_space<vmem>> -> memref<1x1x128xf32, #tpu.memory_space<vmem>>
    %27 = tpu.memref_squeeze %26 : memref<1x1x128xf32, #tpu.memory_space<vmem>> -> memref<1x128xf32, #tpu.memory_space<vmem>>
    %28 = tpu.memref_slice %arg5[%c0_i32_17, %c3_i32] : memref<2x8x!tpu.dma_semaphore, #tpu.memory_space<semaphore_mem>> -> memref<1x1x!tpu.dma_semaphore, #tpu.memory_space<semaphore_mem>>
    %29 = tpu.memref_squeeze %28 : memref<1x1x!tpu.dma_semaphore, #tpu.memory_space<semaphore_mem>> -> memref<!tpu.dma_semaphore, #tpu.memory_space<semaphore_mem>>
    tpu.enqueue_dma source(%25 : memref<1x128xf32, #tpu.memory_space<any>>) target(%27 : memref<1x128xf32, #tpu.memory_space<vmem>>) target_semaphore(%29 : memref<!tpu.dma_semaphore, #tpu.memory_space<semaphore_mem>>)
    %30 = arith.index_cast %1 : i32 to index
    %c4 = arith.constant 4 : index
    %31 = memref.load %arg1[%30, %c4] : memref<8x8xi32, #tpu.memory_space<smem>>
    %c0_i32_21 = arith.constant 0 : i32
    %c0_i32_22 = arith.constant 0 : i32
    %c4_i32 = arith.constant 4 : i32
    %c0_i32_23 = arith.constant 0 : i32
    %32 = tpu.memref_slice %arg2[%31, %c0_i32_23] : memref<1024x128xf32, #tpu.memory_space<any>> -> memref<1x128xf32, #tpu.memory_space<any>>
    %c4_i32_24 = arith.constant 4 : i32
    %c0_i32_25 = arith.constant 0 : i32
    %33 = tpu.memref_slice %arg4[%c0_i32_21, %c4_i32_24, %c0_i32_25] : memref<2x8x128xf32, #tpu.memory_space<vmem>> -> memref<1x1x128xf32, #tpu.memory_space<vmem>>
    %34 = tpu.memref_squeeze %33 : memref<1x1x128xf32, #tpu.memory_space<vmem>> -> memref<1x128xf32, #tpu.memory_space<vmem>>
    %35 = tpu.memref_slice %arg5[%c0_i32_22, %c4_i32] : memref<2x8x!tpu.dma_semaphore, #tpu.memory_space<semaphore_mem>> -> memref<1x1x!tpu.dma_semaphore, #tpu.memory_space<semaphore_mem>>
    %36 = tpu.memref_squeeze %35 : memref<1x1x!tpu.dma_semaphore, #tpu.memory_space<semaphore_mem>> -> memref<!tpu.dma_semaphore, #tpu.memory_space<semaphore_mem>>
    tpu.enqueue_dma source(%32 : memref<1x128xf32, #tpu.memory_space<any>>) target(%34 : memref<1x128xf32, #tpu.memory_space<vmem>>) target_semaphore(%36 : memref<!tpu.dma_semaphore, #tpu.memory_space<semaphore_mem>>)
    %37 = arith.index_cast %1 : i32 to index
    %c5 = arith.constant 5 : index
    %38 = memref.load %arg1[%37, %c5] : memref<8x8xi32, #tpu.memory_space<smem>>
    %c0_i32_26 = arith.constant 0 : i32
    %c0_i32_27 = arith.constant 0 : i32
    %c5_i32 = arith.constant 5 : i32
    %c0_i32_28 = arith.constant 0 : i32
    %39 = tpu.memref_slice %arg2[%38, %c0_i32_28] : memref<1024x128xf32, #tpu.memory_space<any>> -> memref<1x128xf32, #tpu.memory_space<any>>
    %c5_i32_29 = arith.constant 5 : i32
    %c0_i32_30 = arith.constant 0 : i32
    %40 = tpu.memref_slice %arg4[%c0_i32_26, %c5_i32_29, %c0_i32_30] : memref<2x8x128xf32, #tpu.memory_space<vmem>> -> memref<1x1x128xf32, #tpu.memory_space<vmem>>
    %41 = tpu.memref_squeeze %40 : memref<1x1x128xf32, #tpu.memory_space<vmem>> -> memref<1x128xf32, #tpu.memory_space<vmem>>
    %42 = tpu.memref_slice %arg5[%c0_i32_27, %c5_i32] : memref<2x8x!tpu.dma_semaphore, #tpu.memory_space<semaphore_mem>> -> memref<1x1x!tpu.dma_semaphore, #tpu.memory_space<semaphore_mem>>
    %43 = tpu.memref_squeeze %42 : memref<1x1x!tpu.dma_semaphore, #tpu.memory_space<semaphore_mem>> -> memref<!tpu.dma_semaphore, #tpu.memory_space<semaphore_mem>>
    tpu.enqueue_dma source(%39 : memref<1x128xf32, #tpu.memory_space<any>>) target(%41 : memref<1x128xf32, #tpu.memory_space<vmem>>) target_semaphore(%43 : memref<!tpu.dma_semaphore, #tpu.memory_space<semaphore_mem>>)
    %44 = arith.index_cast %1 : i32 to index
    %c6 = arith.constant 6 : index
    %45 = memref.load %arg1[%44, %c6] : memref<8x8xi32, #tpu.memory_space<smem>>
    %c0_i32_31 = arith.constant 0 : i32
    %c0_i32_32 = arith.constant 0 : i32
    %c6_i32 = arith.constant 6 : i32
    %c0_i32_33 = arith.constant 0 : i32
    %46 = tpu.memref_slice %arg2[%45, %c0_i32_33] : memref<1024x128xf32, #tpu.memory_space<any>> -> memref<1x128xf32, #tpu.memory_space<any>>
    %c6_i32_34 = arith.constant 6 : i32
    %c0_i32_35 = arith.constant 0 : i32
    %47 = tpu.memref_slice %arg4[%c0_i32_31, %c6_i32_34, %c0_i32_35] : memref<2x8x128xf32, #tpu.memory_space<vmem>> -> memref<1x1x128xf32, #tpu.memory_space<vmem>>
    %48 = tpu.memref_squeeze %47 : memref<1x1x128xf32, #tpu.memory_space<vmem>> -> memref<1x128xf32, #tpu.memory_space<vmem>>
    %49 = tpu.memref_slice %arg5[%c0_i32_32, %c6_i32] : memref<2x8x!tpu.dma_semaphore, #tpu.memory_space<semaphore_mem>> -> memref<1x1x!tpu.dma_semaphore, #tpu.memory_space<semaphore_mem>>
    %50 = tpu.memref_squeeze %49 : memref<1x1x!tpu.dma_semaphore, #tpu.memory_space<semaphore_mem>> -> memref<!tpu.dma_semaphore, #tpu.memory_space<semaphore_mem>>
    tpu.enqueue_dma source(%46 : memref<1x128xf32, #tpu.memory_space<any>>) target(%48 : memref<1x128xf32, #tpu.memory_space<vmem>>) target_semaphore(%50 : memref<!tpu.dma_semaphore, #tpu.memory_space<semaphore_mem>>)
    %51 = arith.index_cast %1 : i32 to index
    %c7 = arith.constant 7 : index
    %52 = memref.load %arg1[%51, %c7] : memref<8x8xi32, #tpu.memory_space<smem>>
    %c0_i32_36 = arith.constant 0 : i32
    %c0_i32_37 = arith.constant 0 : i32
    %c7_i32 = arith.constant 7 : i32
    %c0_i32_38 = arith.constant 0 : i32
    %53 = tpu.memref_slice %arg2[%52, %c0_i32_38] : memref<1024x128xf32, #tpu.memory_space<any>> -> memref<1x128xf32, #tpu.memory_space<any>>
    %c7_i32_39 = arith.constant 7 : i32
    %c0_i32_40 = arith.constant 0 : i32
    %54 = tpu.memref_slice %arg4[%c0_i32_36, %c7_i32_39, %c0_i32_40] : memref<2x8x128xf32, #tpu.memory_space<vmem>> -> memref<1x1x128xf32, #tpu.memory_space<vmem>>
    %55 = tpu.memref_squeeze %54 : memref<1x1x128xf32, #tpu.memory_space<vmem>> -> memref<1x128xf32, #tpu.memory_space<vmem>>
    %56 = tpu.memref_slice %arg5[%c0_i32_37, %c7_i32] : memref<2x8x!tpu.dma_semaphore, #tpu.memory_space<semaphore_mem>> -> memref<1x1x!tpu.dma_semaphore, #tpu.memory_space<semaphore_mem>>
    %57 = tpu.memref_squeeze %56 : memref<1x1x!tpu.dma_semaphore, #tpu.memory_space<semaphore_mem>> -> memref<!tpu.dma_semaphore, #tpu.memory_space<semaphore_mem>>
    tpu.enqueue_dma source(%53 : memref<1x128xf32, #tpu.memory_space<any>>) target(%55 : memref<1x128xf32, #tpu.memory_space<vmem>>) target_semaphore(%57 : memref<!tpu.dma_semaphore, #tpu.memory_space<semaphore_mem>>)
    %c8_i32_41 = arith.constant 8 : i32
    %58 = arith.muli %arg0, %c8_i32_41 : i32
    %c1_i32_42 = arith.constant 1 : i32
    %59 = arith.addi %58, %c1_i32_42 : i32
    %60 = arith.index_cast %59 : i32 to index
    %c0_43 = arith.constant 0 : index
    %61 = memref.load %arg1[%60, %c0_43] : memref<8x8xi32, #tpu.memory_space<smem>>
    %c1_i32_44 = arith.constant 1 : i32
    %c1_i32_45 = arith.constant 1 : i32
    %c0_i32_46 = arith.constant 0 : i32
    %c0_i32_47 = arith.constant 0 : i32
    %62 = tpu.memref_slice %arg2[%61, %c0_i32_47] : memref<1024x128xf32, #tpu.memory_space<any>> -> memref<1x128xf32, #tpu.memory_space<any>>
    %c0_i32_48 = arith.constant 0 : i32
    %c0_i32_49 = arith.constant 0 : i32
    %63 = tpu.memref_slice %arg4[%c1_i32_44, %c0_i32_48, %c0_i32_49] : memref<2x8x128xf32, #tpu.memory_space<vmem>> -> memref<1x1x128xf32, #tpu.memory_space<vmem>>
    %64 = tpu.memref_squeeze %63 : memref<1x1x128xf32, #tpu.memory_space<vmem>> -> memref<1x128xf32, #tpu.memory_space<vmem>>
    %65 = tpu.memref_slice %arg5[%c1_i32_45, %c0_i32_46] : memref<2x8x!tpu.dma_semaphore, #tpu.memory_space<semaphore_mem>> -> memref<1x1x!tpu.dma_semaphore, #tpu.memory_space<semaphore_mem>>
    %66 = tpu.memref_squeeze %65 : memref<1x1x!tpu.dma_semaphore, #tpu.memory_space<semaphore_mem>> -> memref<!tpu.dma_semaphore, #tpu.memory_space<semaphore_mem>>
    tpu.enqueue_dma source(%62 : memref<1x128xf32, #tpu.memory_space<any>>) target(%64 : memref<1x128xf32, #tpu.memory_space<vmem>>) target_semaphore(%66 : memref<!tpu.dma_semaphore, #tpu.memory_space<semaphore_mem>>)
    %67 = arith.index_cast %59 : i32 to index
    %c1_50 = arith.constant 1 : index
    %68 = memref.load %arg1[%67, %c1_50] : memref<8x8xi32, #tpu.memory_space<smem>>
    %c1_i32_51 = arith.constant 1 : i32
    %c1_i32_52 = arith.constant 1 : i32
    %c1_i32_53 = arith.constant 1 : i32
    %c0_i32_54 = arith.constant 0 : i32
    %69 = tpu.memref_slice %arg2[%68, %c0_i32_54] : memref<1024x128xf32, #tpu.memory_space<any>> -> memref<1x128xf32, #tpu.memory_space<any>>
    %c1_i32_55 = arith.constant 1 : i32
    %c0_i32_56 = arith.constant 0 : i32
    %70 = tpu.memref_slice %arg4[%c1_i32_51, %c1_i32_55, %c0_i32_56] : memref<2x8x128xf32, #tpu.memory_space<vmem>> -> memref<1x1x128xf32, #tpu.memory_space<vmem>>
    %71 = tpu.memref_squeeze %70 : memref<1x1x128xf32, #tpu.memory_space<vmem>> -> memref<1x128xf32, #tpu.memory_space<vmem>>
    %72 = tpu.memref_slice %arg5[%c1_i32_52, %c1_i32_53] : memref<2x8x!tpu.dma_semaphore, #tpu.memory_space<semaphore_mem>> -> memref<1x1x!tpu.dma_semaphore, #tpu.memory_space<semaphore_mem>>
    %73 = tpu.memref_squeeze %72 : memref<1x1x!tpu.dma_semaphore, #tpu.memory_space<semaphore_mem>> -> memref<!tpu.dma_semaphore, #tpu.memory_space<semaphore_mem>>
    tpu.enqueue_dma source(%69 : memref<1x128xf32, #tpu.memory_space<any>>) target(%71 : memref<1x128xf32, #tpu.memory_space<vmem>>) target_semaphore(%73 : memref<!tpu.dma_semaphore, #tpu.memory_space<semaphore_mem>>)
    %74 = arith.index_cast %59 : i32 to index
    %c2_57 = arith.constant 2 : index
    %75 = memref.load %arg1[%74, %c2_57] : memref<8x8xi32, #tpu.memory_space<smem>>
    %c1_i32_58 = arith.constant 1 : i32
    %c1_i32_59 = arith.constant 1 : i32
    %c2_i32_60 = arith.constant 2 : i32
    %c0_i32_61 = arith.constant 0 : i32
    %76 = tpu.memref_slice %arg2[%75, %c0_i32_61] : memref<1024x128xf32, #tpu.memory_space<any>> -> memref<1x128xf32, #tpu.memory_space<any>>
    %c2_i32_62 = arith.constant 2 : i32
    %c0_i32_63 = arith.constant 0 : i32
    %77 = tpu.memref_slice %arg4[%c1_i32_58, %c2_i32_62, %c0_i32_63] : memref<2x8x128xf32, #tpu.memory_space<vmem>> -> memref<1x1x128xf32, #tpu.memory_space<vmem>>
    %78 = tpu.memref_squeeze %77 : memref<1x1x128xf32, #tpu.memory_space<vmem>> -> memref<1x128xf32, #tpu.memory_space<vmem>>
    %79 = tpu.memref_slice %arg5[%c1_i32_59, %c2_i32_60] : memref<2x8x!tpu.dma_semaphore, #tpu.memory_space<semaphore_mem>> -> memref<1x1x!tpu.dma_semaphore, #tpu.memory_space<semaphore_mem>>
    %80 = tpu.memref_squeeze %79 : memref<1x1x!tpu.dma_semaphore, #tpu.memory_space<semaphore_mem>> -> memref<!tpu.dma_semaphore, #tpu.memory_space<semaphore_mem>>
    tpu.enqueue_dma source(%76 : memref<1x128xf32, #tpu.memory_space<any>>) target(%78 : memref<1x128xf32, #tpu.memory_space<vmem>>) target_semaphore(%80 : memref<!tpu.dma_semaphore, #tpu.memory_space<semaphore_mem>>)
    %81 = arith.index_cast %59 : i32 to index
    %c3_64 = arith.constant 3 : index
    %82 = memref.load %arg1[%81, %c3_64] : memref<8x8xi32, #tpu.memory_space<smem>>
    %c1_i32_65 = arith.constant 1 : i32
    %c1_i32_66 = arith.constant 1 : i32
    %c3_i32_67 = arith.constant 3 : i32
    %c0_i32_68 = arith.constant 0 : i32
    %83 = tpu.memref_slice %arg2[%82, %c0_i32_68] : memref<1024x128xf32, #tpu.memory_space<any>> -> memref<1x128xf32, #tpu.memory_space<any>>
    %c3_i32_69 = arith.constant 3 : i32
    %c0_i32_70 = arith.constant 0 : i32
    %84 = tpu.memref_slice %arg4[%c1_i32_65, %c3_i32_69, %c0_i32_70] : memref<2x8x128xf32, #tpu.memory_space<vmem>> -> memref<1x1x128xf32, #tpu.memory_space<vmem>>
    %85 = tpu.memref_squeeze %84 : memref<1x1x128xf32, #tpu.memory_space<vmem>> -> memref<1x128xf32, #tpu.memory_space<vmem>>
    %86 = tpu.memref_slice %arg5[%c1_i32_66, %c3_i32_67] : memref<2x8x!tpu.dma_semaphore, #tpu.memory_space<semaphore_mem>> -> memref<1x1x!tpu.dma_semaphore, #tpu.memory_space<semaphore_mem>>
    %87 = tpu.memref_squeeze %86 : memref<1x1x!tpu.dma_semaphore, #tpu.memory_space<semaphore_mem>> -> memref<!tpu.dma_semaphore, #tpu.memory_space<semaphore_mem>>
    tpu.enqueue_dma source(%83 : memref<1x128xf32, #tpu.memory_space<any>>) target(%85 : memref<1x128xf32, #tpu.memory_space<vmem>>) target_semaphore(%87 : memref<!tpu.dma_semaphore, #tpu.memory_space<semaphore_mem>>)
    %88 = arith.index_cast %59 : i32 to index
    %c4_71 = arith.constant 4 : index
    %89 = memref.load %arg1[%88, %c4_71] : memref<8x8xi32, #tpu.memory_space<smem>>
    %c1_i32_72 = arith.constant 1 : i32
    %c1_i32_73 = arith.constant 1 : i32
    %c4_i32_74 = arith.constant 4 : i32
    %c0_i32_75 = arith.constant 0 : i32
    %90 = tpu.memref_slice %arg2[%89, %c0_i32_75] : memref<1024x128xf32, #tpu.memory_space<any>> -> memref<1x128xf32, #tpu.memory_space<any>>
    %c4_i32_76 = arith.constant 4 : i32
    %c0_i32_77 = arith.constant 0 : i32
    %91 = tpu.memref_slice %arg4[%c1_i32_72, %c4_i32_76, %c0_i32_77] : memref<2x8x128xf32, #tpu.memory_space<vmem>> -> memref<1x1x128xf32, #tpu.memory_space<vmem>>
    %92 = tpu.memref_squeeze %91 : memref<1x1x128xf32, #tpu.memory_space<vmem>> -> memref<1x128xf32, #tpu.memory_space<vmem>>
    %93 = tpu.memref_slice %arg5[%c1_i32_73, %c4_i32_74] : memref<2x8x!tpu.dma_semaphore, #tpu.memory_space<semaphore_mem>> -> memref<1x1x!tpu.dma_semaphore, #tpu.memory_space<semaphore_mem>>
    %94 = tpu.memref_squeeze %93 : memref<1x1x!tpu.dma_semaphore, #tpu.memory_space<semaphore_mem>> -> memref<!tpu.dma_semaphore, #tpu.memory_space<semaphore_mem>>
    tpu.enqueue_dma source(%90 : memref<1x128xf32, #tpu.memory_space<any>>) target(%92 : memref<1x128xf32, #tpu.memory_space<vmem>>) target_semaphore(%94 : memref<!tpu.dma_semaphore, #tpu.memory_space<semaphore_mem>>)
    %95 = arith.index_cast %59 : i32 to index
    %c5_78 = arith.constant 5 : index
    %96 = memref.load %arg1[%95, %c5_78] : memref<8x8xi32, #tpu.memory_space<smem>>
    %c1_i32_79 = arith.constant 1 : i32
    %c1_i32_80 = arith.constant 1 : i32
    %c5_i32_81 = arith.constant 5 : i32
    %c0_i32_82 = arith.constant 0 : i32
    %97 = tpu.memref_slice %arg2[%96, %c0_i32_82] : memref<1024x128xf32, #tpu.memory_space<any>> -> memref<1x128xf32, #tpu.memory_space<any>>
    %c5_i32_83 = arith.constant 5 : i32
    %c0_i32_84 = arith.constant 0 : i32
    %98 = tpu.memref_slice %arg4[%c1_i32_79, %c5_i32_83, %c0_i32_84] : memref<2x8x128xf32, #tpu.memory_space<vmem>> -> memref<1x1x128xf32, #tpu.memory_space<vmem>>
    %99 = tpu.memref_squeeze %98 : memref<1x1x128xf32, #tpu.memory_space<vmem>> -> memref<1x128xf32, #tpu.memory_space<vmem>>
    %100 = tpu.memref_slice %arg5[%c1_i32_80, %c5_i32_81] : memref<2x8x!tpu.dma_semaphore, #tpu.memory_space<semaphore_mem>> -> memref<1x1x!tpu.dma_semaphore, #tpu.memory_space<semaphore_mem>>
    %101 = tpu.memref_squeeze %100 : memref<1x1x!tpu.dma_semaphore, #tpu.memory_space<semaphore_mem>> -> memref<!tpu.dma_semaphore, #tpu.memory_space<semaphore_mem>>
    tpu.enqueue_dma source(%97 : memref<1x128xf32, #tpu.memory_space<any>>) target(%99 : memref<1x128xf32, #tpu.memory_space<vmem>>) target_semaphore(%101 : memref<!tpu.dma_semaphore, #tpu.memory_space<semaphore_mem>>)
    %102 = arith.index_cast %59 : i32 to index
    %c6_85 = arith.constant 6 : index
    %103 = memref.load %arg1[%102, %c6_85] : memref<8x8xi32, #tpu.memory_space<smem>>
    %c1_i32_86 = arith.constant 1 : i32
    %c1_i32_87 = arith.constant 1 : i32
    %c6_i32_88 = arith.constant 6 : i32
    %c0_i32_89 = arith.constant 0 : i32
    %104 = tpu.memref_slice %arg2[%103, %c0_i32_89] : memref<1024x128xf32, #tpu.memory_space<any>> -> memref<1x128xf32, #tpu.memory_space<any>>
    %c6_i32_90 = arith.constant 6 : i32
    %c0_i32_91 = arith.constant 0 : i32
    %105 = tpu.memref_slice %arg4[%c1_i32_86, %c6_i32_90, %c0_i32_91] : memref<2x8x128xf32, #tpu.memory_space<vmem>> -> memref<1x1x128xf32, #tpu.memory_space<vmem>>
    %106 = tpu.memref_squeeze %105 : memref<1x1x128xf32, #tpu.memory_space<vmem>> -> memref<1x128xf32, #tpu.memory_space<vmem>>
    %107 = tpu.memref_slice %arg5[%c1_i32_87, %c6_i32_88] : memref<2x8x!tpu.dma_semaphore, #tpu.memory_space<semaphore_mem>> -> memref<1x1x!tpu.dma_semaphore, #tpu.memory_space<semaphore_mem>>
    %108 = tpu.memref_squeeze %107 : memref<1x1x!tpu.dma_semaphore, #tpu.memory_space<semaphore_mem>> -> memref<!tpu.dma_semaphore, #tpu.memory_space<semaphore_mem>>
    tpu.enqueue_dma source(%104 : memref<1x128xf32, #tpu.memory_space<any>>) target(%106 : memref<1x128xf32, #tpu.memory_space<vmem>>) target_semaphore(%108 : memref<!tpu.dma_semaphore, #tpu.memory_space<semaphore_mem>>)
    %109 = arith.index_cast %59 : i32 to index
    %c7_92 = arith.constant 7 : index
    %110 = memref.load %arg1[%109, %c7_92] : memref<8x8xi32, #tpu.memory_space<smem>>
    %c1_i32_93 = arith.constant 1 : i32
    %c1_i32_94 = arith.constant 1 : i32
    %c7_i32_95 = arith.constant 7 : i32
    %c0_i32_96 = arith.constant 0 : i32
    %111 = tpu.memref_slice %arg2[%110, %c0_i32_96] : memref<1024x128xf32, #tpu.memory_space<any>> -> memref<1x128xf32, #tpu.memory_space<any>>
    %c7_i32_97 = arith.constant 7 : i32
    %c0_i32_98 = arith.constant 0 : i32
    %112 = tpu.memref_slice %arg4[%c1_i32_93, %c7_i32_97, %c0_i32_98] : memref<2x8x128xf32, #tpu.memory_space<vmem>> -> memref<1x1x128xf32, #tpu.memory_space<vmem>>
    %113 = tpu.memref_squeeze %112 : memref<1x1x128xf32, #tpu.memory_space<vmem>> -> memref<1x128xf32, #tpu.memory_space<vmem>>
    %114 = tpu.memref_slice %arg5[%c1_i32_94, %c7_i32_95] : memref<2x8x!tpu.dma_semaphore, #tpu.memory_space<semaphore_mem>> -> memref<1x1x!tpu.dma_semaphore, #tpu.memory_space<semaphore_mem>>
    %115 = tpu.memref_squeeze %114 : memref<1x1x!tpu.dma_semaphore, #tpu.memory_space<semaphore_mem>> -> memref<!tpu.dma_semaphore, #tpu.memory_space<semaphore_mem>>
    tpu.enqueue_dma source(%111 : memref<1x128xf32, #tpu.memory_space<any>>) target(%113 : memref<1x128xf32, #tpu.memory_space<vmem>>) target_semaphore(%115 : memref<!tpu.dma_semaphore, #tpu.memory_space<semaphore_mem>>)
    %c0_i32_99 = arith.constant 0 : i32
    %c0_i32_100 = arith.constant 0 : i32
    %c0_i32_101 = arith.constant 0 : i32
    %c0_i32_102 = arith.constant 0 : i32
    %116 = tpu.memref_slice %arg2[%3, %c0_i32_102] : memref<1024x128xf32, #tpu.memory_space<any>> -> memref<1x128xf32, #tpu.memory_space<any>>
    %c0_i32_103 = arith.constant 0 : i32
    %c0_i32_104 = arith.constant 0 : i32
    %117 = tpu.memref_slice %arg4[%c0_i32_99, %c0_i32_103, %c0_i32_104] : memref<2x8x128xf32, #tpu.memory_space<vmem>> -> memref<1x1x128xf32, #tpu.memory_space<vmem>>
    %118 = tpu.memref_squeeze %117 : memref<1x1x128xf32, #tpu.memory_space<vmem>> -> memref<1x128xf32, #tpu.memory_space<vmem>>
    %119 = tpu.memref_slice %arg5[%c0_i32_100, %c0_i32_101] : memref<2x8x!tpu.dma_semaphore, #tpu.memory_space<semaphore_mem>> -> memref<1x1x!tpu.dma_semaphore, #tpu.memory_space<semaphore_mem>>
    %120 = tpu.memref_squeeze %119 : memref<1x1x!tpu.dma_semaphore, #tpu.memory_space<semaphore_mem>> -> memref<!tpu.dma_semaphore, #tpu.memory_space<semaphore_mem>>
    tpu.wait_dma2 semaphore(%120 : memref<!tpu.dma_semaphore, #tpu.memory_space<semaphore_mem>>) src(%116 : memref<1x128xf32, #tpu.memory_space<any>>) dst(%118 : memref<1x128xf32, #tpu.memory_space<vmem>>)
    %c0_i32_105 = arith.constant 0 : i32
    %c0_i32_106 = arith.constant 0 : i32
    %c1_i32_107 = arith.constant 1 : i32
    %c0_i32_108 = arith.constant 0 : i32
    %121 = tpu.memref_slice %arg2[%10, %c0_i32_108] : memref<1024x128xf32, #tpu.memory_space<any>> -> memref<1x128xf32, #tpu.memory_space<any>>
    %c1_i32_109 = arith.constant 1 : i32
    %c0_i32_110 = arith.constant 0 : i32
    %122 = tpu.memref_slice %arg4[%c0_i32_105, %c1_i32_109, %c0_i32_110] : memref<2x8x128xf32, #tpu.memory_space<vmem>> -> memref<1x1x128xf32, #tpu.memory_space<vmem>>
    %123 = tpu.memref_squeeze %122 : memref<1x1x128xf32, #tpu.memory_space<vmem>> -> memref<1x128xf32, #tpu.memory_space<vmem>>
    %124 = tpu.memref_slice %arg5[%c0_i32_106, %c1_i32_107] : memref<2x8x!tpu.dma_semaphore, #tpu.memory_space<semaphore_mem>> -> memref<1x1x!tpu.dma_semaphore, #tpu.memory_space<semaphore_mem>>
    %125 = tpu.memref_squeeze %124 : memref<1x1x!tpu.dma_semaphore, #tpu.memory_space<semaphore_mem>> -> memref<!tpu.dma_semaphore, #tpu.memory_space<semaphore_mem>>
    tpu.wait_dma2 semaphore(%125 : memref<!tpu.dma_semaphore, #tpu.memory_space<semaphore_mem>>) src(%121 : memref<1x128xf32, #tpu.memory_space<any>>) dst(%123 : memref<1x128xf32, #tpu.memory_space<vmem>>)
    %c0_i32_111 = arith.constant 0 : i32
    %c0_i32_112 = arith.constant 0 : i32
    %c2_i32_113 = arith.constant 2 : i32
    %c0_i32_114 = arith.constant 0 : i32
    %126 = tpu.memref_slice %arg2[%17, %c0_i32_114] : memref<1024x128xf32, #tpu.memory_space<any>> -> memref<1x128xf32, #tpu.memory_space<any>>
    %c2_i32_115 = arith.constant 2 : i32
    %c0_i32_116 = arith.constant 0 : i32
    %127 = tpu.memref_slice %arg4[%c0_i32_111, %c2_i32_115, %c0_i32_116] : memref<2x8x128xf32, #tpu.memory_space<vmem>> -> memref<1x1x128xf32, #tpu.memory_space<vmem>>
    %128 = tpu.memref_squeeze %127 : memref<1x1x128xf32, #tpu.memory_space<vmem>> -> memref<1x128xf32, #tpu.memory_space<vmem>>
    %129 = tpu.memref_slice %arg5[%c0_i32_112, %c2_i32_113] : memref<2x8x!tpu.dma_semaphore, #tpu.memory_space<semaphore_mem>> -> memref<1x1x!tpu.dma_semaphore, #tpu.memory_space<semaphore_mem>>
    %130 = tpu.memref_squeeze %129 : memref<1x1x!tpu.dma_semaphore, #tpu.memory_space<semaphore_mem>> -> memref<!tpu.dma_semaphore, #tpu.memory_space<semaphore_mem>>
    tpu.wait_dma2 semaphore(%130 : memref<!tpu.dma_semaphore, #tpu.memory_space<semaphore_mem>>) src(%126 : memref<1x128xf32, #tpu.memory_space<any>>) dst(%128 : memref<1x128xf32, #tpu.memory_space<vmem>>)
    %c0_i32_117 = arith.constant 0 : i32
    %c0_i32_118 = arith.constant 0 : i32
    %c3_i32_119 = arith.constant 3 : i32
    %c0_i32_120 = arith.constant 0 : i32
    %131 = tpu.memref_slice %arg2[%24, %c0_i32_120] : memref<1024x128xf32, #tpu.memory_space<any>> -> memref<1x128xf32, #tpu.memory_space<any>>
    %c3_i32_121 = arith.constant 3 : i32
    %c0_i32_122 = arith.constant 0 : i32
    %132 = tpu.memref_slice %arg4[%c0_i32_117, %c3_i32_121, %c0_i32_122] : memref<2x8x128xf32, #tpu.memory_space<vmem>> -> memref<1x1x128xf32, #tpu.memory_space<vmem>>
    %133 = tpu.memref_squeeze %132 : memref<1x1x128xf32, #tpu.memory_space<vmem>> -> memref<1x128xf32, #tpu.memory_space<vmem>>
    %134 = tpu.memref_slice %arg5[%c0_i32_118, %c3_i32_119] : memref<2x8x!tpu.dma_semaphore, #tpu.memory_space<semaphore_mem>> -> memref<1x1x!tpu.dma_semaphore, #tpu.memory_space<semaphore_mem>>
    %135 = tpu.memref_squeeze %134 : memref<1x1x!tpu.dma_semaphore, #tpu.memory_space<semaphore_mem>> -> memref<!tpu.dma_semaphore, #tpu.memory_space<semaphore_mem>>
    tpu.wait_dma2 semaphore(%135 : memref<!tpu.dma_semaphore, #tpu.memory_space<semaphore_mem>>) src(%131 : memref<1x128xf32, #tpu.memory_space<any>>) dst(%133 : memref<1x128xf32, #tpu.memory_space<vmem>>)
    %c0_i32_123 = arith.constant 0 : i32
    %c0_i32_124 = arith.constant 0 : i32
    %c4_i32_125 = arith.constant 4 : i32
    %c0_i32_126 = arith.constant 0 : i32
    %136 = tpu.memref_slice %arg2[%31, %c0_i32_126] : memref<1024x128xf32, #tpu.memory_space<any>> -> memref<1x128xf32, #tpu.memory_space<any>>
    %c4_i32_127 = arith.constant 4 : i32
    %c0_i32_128 = arith.constant 0 : i32
    %137 = tpu.memref_slice %arg4[%c0_i32_123, %c4_i32_127, %c0_i32_128] : memref<2x8x128xf32, #tpu.memory_space<vmem>> -> memref<1x1x128xf32, #tpu.memory_space<vmem>>
    %138 = tpu.memref_squeeze %137 : memref<1x1x128xf32, #tpu.memory_space<vmem>> -> memref<1x128xf32, #tpu.memory_space<vmem>>
    %139 = tpu.memref_slice %arg5[%c0_i32_124, %c4_i32_125] : memref<2x8x!tpu.dma_semaphore, #tpu.memory_space<semaphore_mem>> -> memref<1x1x!tpu.dma_semaphore, #tpu.memory_space<semaphore_mem>>
    %140 = tpu.memref_squeeze %139 : memref<1x1x!tpu.dma_semaphore, #tpu.memory_space<semaphore_mem>> -> memref<!tpu.dma_semaphore, #tpu.memory_space<semaphore_mem>>
    tpu.wait_dma2 semaphore(%140 : memref<!tpu.dma_semaphore, #tpu.memory_space<semaphore_mem>>) src(%136 : memref<1x128xf32, #tpu.memory_space<any>>) dst(%138 : memref<1x128xf32, #tpu.memory_space<vmem>>)
    %c0_i32_129 = arith.constant 0 : i32
    %c0_i32_130 = arith.constant 0 : i32
    %c5_i32_131 = arith.constant 5 : i32
    %c0_i32_132 = arith.constant 0 : i32
    %141 = tpu.memref_slice %arg2[%38, %c0_i32_132] : memref<1024x128xf32, #tpu.memory_space<any>> -> memref<1x128xf32, #tpu.memory_space<any>>
    %c5_i32_133 = arith.constant 5 : i32
    %c0_i32_134 = arith.constant 0 : i32
    %142 = tpu.memref_slice %arg4[%c0_i32_129, %c5_i32_133, %c0_i32_134] : memref<2x8x128xf32, #tpu.memory_space<vmem>> -> memref<1x1x128xf32, #tpu.memory_space<vmem>>
    %143 = tpu.memref_squeeze %142 : memref<1x1x128xf32, #tpu.memory_space<vmem>> -> memref<1x128xf32, #tpu.memory_space<vmem>>
    %144 = tpu.memref_slice %arg5[%c0_i32_130, %c5_i32_131] : memref<2x8x!tpu.dma_semaphore, #tpu.memory_space<semaphore_mem>> -> memref<1x1x!tpu.dma_semaphore, #tpu.memory_space<semaphore_mem>>
    %145 = tpu.memref_squeeze %144 : memref<1x1x!tpu.dma_semaphore, #tpu.memory_space<semaphore_mem>> -> memref<!tpu.dma_semaphore, #tpu.memory_space<semaphore_mem>>
    tpu.wait_dma2 semaphore(%145 : memref<!tpu.dma_semaphore, #tpu.memory_space<semaphore_mem>>) src(%141 : memref<1x128xf32, #tpu.memory_space<any>>) dst(%143 : memref<1x128xf32, #tpu.memory_space<vmem>>)
    %c0_i32_135 = arith.constant 0 : i32
    %c0_i32_136 = arith.constant 0 : i32
    %c6_i32_137 = arith.constant 6 : i32
    %c0_i32_138 = arith.constant 0 : i32
    %146 = tpu.memref_slice %arg2[%45, %c0_i32_138] : memref<1024x128xf32, #tpu.memory_space<any>> -> memref<1x128xf32, #tpu.memory_space<any>>
    %c6_i32_139 = arith.constant 6 : i32
    %c0_i32_140 = arith.constant 0 : i32
    %147 = tpu.memref_slice %arg4[%c0_i32_135, %c6_i32_139, %c0_i32_140] : memref<2x8x128xf32, #tpu.memory_space<vmem>> -> memref<1x1x128xf32, #tpu.memory_space<vmem>>
    %148 = tpu.memref_squeeze %147 : memref<1x1x128xf32, #tpu.memory_space<vmem>> -> memref<1x128xf32, #tpu.memory_space<vmem>>
    %149 = tpu.memref_slice %arg5[%c0_i32_136, %c6_i32_137] : memref<2x8x!tpu.dma_semaphore, #tpu.memory_space<semaphore_mem>> -> memref<1x1x!tpu.dma_semaphore, #tpu.memory_space<semaphore_mem>>
    %150 = tpu.memref_squeeze %149 : memref<1x1x!tpu.dma_semaphore, #tpu.memory_space<semaphore_mem>> -> memref<!tpu.dma_semaphore, #tpu.memory_space<semaphore_mem>>
    tpu.wait_dma2 semaphore(%150 : memref<!tpu.dma_semaphore, #tpu.memory_space<semaphore_mem>>) src(%146 : memref<1x128xf32, #tpu.memory_space<any>>) dst(%148 : memref<1x128xf32, #tpu.memory_space<vmem>>)
    %c0_i32_141 = arith.constant 0 : i32
    %c0_i32_142 = arith.constant 0 : i32
    %c7_i32_143 = arith.constant 7 : i32
    %c0_i32_144 = arith.constant 0 : i32
    %151 = tpu.memref_slice %arg2[%52, %c0_i32_144] : memref<1024x128xf32, #tpu.memory_space<any>> -> memref<1x128xf32, #tpu.memory_space<any>>
    %c7_i32_145 = arith.constant 7 : i32
    %c0_i32_146 = arith.constant 0 : i32
    %152 = tpu.memref_slice %arg4[%c0_i32_141, %c7_i32_145, %c0_i32_146] : memref<2x8x128xf32, #tpu.memory_space<vmem>> -> memref<1x1x128xf32, #tpu.memory_space<vmem>>
    %153 = tpu.memref_squeeze %152 : memref<1x1x128xf32, #tpu.memory_space<vmem>> -> memref<1x128xf32, #tpu.memory_space<vmem>>
    %154 = tpu.memref_slice %arg5[%c0_i32_142, %c7_i32_143] : memref<2x8x!tpu.dma_semaphore, #tpu.memory_space<semaphore_mem>> -> memref<1x1x!tpu.dma_semaphore, #tpu.memory_space<semaphore_mem>>
    %155 = tpu.memref_squeeze %154 : memref<1x1x!tpu.dma_semaphore, #tpu.memory_space<semaphore_mem>> -> memref<!tpu.dma_semaphore, #tpu.memory_space<semaphore_mem>>
    tpu.wait_dma2 semaphore(%155 : memref<!tpu.dma_semaphore, #tpu.memory_space<semaphore_mem>>) src(%151 : memref<1x128xf32, #tpu.memory_space<any>>) dst(%153 : memref<1x128xf32, #tpu.memory_space<vmem>>)
    %c0_147 = arith.constant 0 : index
    %c0_148 = arith.constant 0 : index
    %c0_149 = arith.constant 0 : index
    %156 = vector.load %arg4[%c0_147, %c0_148, %c0_149] : memref<2x8x128xf32, #tpu.memory_space<vmem>>, vector<1x8x128xf32>
    %157 = vector.shape_cast %156 : vector<1x8x128xf32> to vector<8x128xf32>
    %cst = arith.constant dense<0.000000e+00> : vector<128xf32>
    %158 = vector.multi_reduction <add>, %157, %cst [0] : vector<8x128xf32> to vector<128xf32>
    %159 = vector.shape_cast %158 : vector<128xf32> to vector<1x128xf32>
    %cst_150 = arith.constant 1.250000e-01 : f32
    %160 = vector.broadcast %cst_150 : f32 to vector<1x128xf32>
    %161 = arith.mulf %159, %160 : vector<1x128xf32>
    %c0_151 = arith.constant 0 : index
    %c0_152 = arith.constant 0 : index
    %162 = vector.load %arg3[%c0_151, %c0_152] : memref<8x128xf32, #tpu.memory_space<vmem>>, vector<1x128xf32>
    tpu.vector_store %arg3[%c0_151, %c0_152], %161 {strides = array<i32>} : memref<8x128xf32, #tpu.memory_space<vmem>>, vector<1x128xf32>,
    %c8_i32_153 = arith.constant 8 : i32
    %163 = arith.muli %arg0, %c8_i32_153 : i32
    %c2_i32_154 = arith.constant 2 : i32
    %164 = arith.addi %163, %c2_i32_154 : i32
    %165 = arith.index_cast %164 : i32 to index
    %c0_155 = arith.constant 0 : index
    %166 = memref.load %arg1[%165, %c0_155] : memref<8x8xi32, #tpu.memory_space<smem>>
    %c0_i32_156 = arith.constant 0 : i32
    %c0_i32_157 = arith.constant 0 : i32
    %c0_i32_158 = arith.constant 0 : i32
    %c0_i32_159 = arith.constant 0 : i32
    %167 = tpu.memref_slice %arg2[%166, %c0_i32_159] : memref<1024x128xf32, #tpu.memory_space<any>> -> memref<1x128xf32, #tpu.memory_space<any>>
    %c0_i32_160 = arith.constant 0 : i32
    %c0_i32_161 = arith.constant 0 : i32
    %168 = tpu.memref_slice %arg4[%c0_i32_156, %c0_i32_160, %c0_i32_161] : memref<2x8x128xf32, #tpu.memory_space<vmem>> -> memref<1x1x128xf32, #tpu.memory_space<vmem>>
    %169 = tpu.memref_squeeze %168 : memref<1x1x128xf32, #tpu.memory_space<vmem>> -> memref<1x128xf32, #tpu.memory_space<vmem>>
    %170 = tpu.memref_slice %arg5[%c0_i32_157, %c0_i32_158] : memref<2x8x!tpu.dma_semaphore, #tpu.memory_space<semaphore_mem>> -> memref<1x1x!tpu.dma_semaphore, #tpu.memory_space<semaphore_mem>>
    %171 = tpu.memref_squeeze %170 : memref<1x1x!tpu.dma_semaphore, #tpu.memory_space<semaphore_mem>> -> memref<!tpu.dma_semaphore, #tpu.memory_space<semaphore_mem>>
    tpu.enqueue_dma source(%167 : memref<1x128xf32, #tpu.memory_space<any>>) target(%169 : memref<1x128xf32, #tpu.memory_space<vmem>>) target_semaphore(%171 : memref<!tpu.dma_semaphore, #tpu.memory_space<semaphore_mem>>)
    %172 = arith.index_cast %164 : i32 to index
    %c1_162 = arith.constant 1 : index
    %173 = memref.load %arg1[%172, %c1_162] : memref<8x8xi32, #tpu.memory_space<smem>>
    %c0_i32_163 = arith.constant 0 : i32
    %c0_i32_164 = arith.constant 0 : i32
    %c1_i32_165 = arith.constant 1 : i32
    %c0_i32_166 = arith.constant 0 : i32
    %174 = tpu.memref_slice %arg2[%173, %c0_i32_166] : memref<1024x128xf32, #tpu.memory_space<any>> -> memref<1x128xf32, #tpu.memory_space<any>>
    %c1_i32_167 = arith.constant 1 : i32
    %c0_i32_168 = arith.constant 0 : i32
    %175 = tpu.memref_slice %arg4[%c0_i32_163, %c1_i32_167, %c0_i32_168] : memref<2x8x128xf32, #tpu.memory_space<vmem>> -> memref<1x1x128xf32, #tpu.memory_space<vmem>>
    %176 = tpu.memref_squeeze %175 : memref<1x1x128xf32, #tpu.memory_space<vmem>> -> memref<1x128xf32, #tpu.memory_space<vmem>>
    %177 = tpu.memref_slice %arg5[%c0_i32_164, %c1_i32_165] : memref<2x8x!tpu.dma_semaphore, #tpu.memory_space<semaphore_mem>> -> memref<1x1x!tpu.dma_semaphore, #tpu.memory_space<semaphore_mem>>
    %178 = tpu.memref_squeeze %177 : memref<1x1x!tpu.dma_semaphore, #tpu.memory_space<semaphore_mem>> -> memref<!tpu.dma_semaphore, #tpu.memory_space<semaphore_mem>>
    tpu.enqueue_dma source(%174 : memref<1x128xf32, #tpu.memory_space<any>>) target(%176 : memref<1x128xf32, #tpu.memory_space<vmem>>) target_semaphore(%178 : memref<!tpu.dma_semaphore, #tpu.memory_space<semaphore_mem>>)
    %179 = arith.index_cast %164 : i32 to index
    %c2_169 = arith.constant 2 : index
    %180 = memref.load %arg1[%179, %c2_169] : memref<8x8xi32, #tpu.memory_space<smem>>
    %c0_i32_170 = arith.constant 0 : i32
    %c0_i32_171 = arith.constant 0 : i32
    %c2_i32_172 = arith.constant 2 : i32
    %c0_i32_173 = arith.constant 0 : i32
    %181 = tpu.memref_slice %arg2[%180, %c0_i32_173] : memref<1024x128xf32, #tpu.memory_space<any>> -> memref<1x128xf32, #tpu.memory_space<any>>
    %c2_i32_174 = arith.constant 2 : i32
    %c0_i32_175 = arith.constant 0 : i32
    %182 = tpu.memref_slice %arg4[%c0_i32_170, %c2_i32_174, %c0_i32_175] : memref<2x8x128xf32, #tpu.memory_space<vmem>> -> memref<1x1x128xf32, #tpu.memory_space<vmem>>
    %183 = tpu.memref_squeeze %182 : memref<1x1x128xf32, #tpu.memory_space<vmem>> -> memref<1x128xf32, #tpu.memory_space<vmem>>
    %184 = tpu.memref_slice %arg5[%c0_i32_171, %c2_i32_172] : memref<2x8x!tpu.dma_semaphore, #tpu.memory_space<semaphore_mem>> -> memref<1x1x!tpu.dma_semaphore, #tpu.memory_space<semaphore_mem>>
    %185 = tpu.memref_squeeze %184 : memref<1x1x!tpu.dma_semaphore, #tpu.memory_space<semaphore_mem>> -> memref<!tpu.dma_semaphore, #tpu.memory_space<semaphore_mem>>
    tpu.enqueue_dma source(%181 : memref<1x128xf32, #tpu.memory_space<any>>) target(%183 : memref<1x128xf32, #tpu.memory_space<vmem>>) target_semaphore(%185 : memref<!tpu.dma_semaphore, #tpu.memory_space<semaphore_mem>>)
    %186 = arith.index_cast %164 : i32 to index
    %c3_176 = arith.constant 3 : index
    %187 = memref.load %arg1[%186, %c3_176] : memref<8x8xi32, #tpu.memory_space<smem>>
    %c0_i32_177 = arith.constant 0 : i32
    %c0_i32_178 = arith.constant 0 : i32
    %c3_i32_179 = arith.constant 3 : i32
    %c0_i32_180 = arith.constant 0 : i32
    %188 = tpu.memref_slice %arg2[%187, %c0_i32_180] : memref<1024x128xf32, #tpu.memory_space<any>> -> memref<1x128xf32, #tpu.memory_space<any>>
    %c3_i32_181 = arith.constant 3 : i32
    %c0_i32_182 = arith.constant 0 : i32
    %189 = tpu.memref_slice %arg4[%c0_i32_177, %c3_i32_181, %c0_i32_182] : memref<2x8x128xf32, #tpu.memory_space<vmem>> -> memref<1x1x128xf32, #tpu.memory_space<vmem>>
    %190 = tpu.memref_squeeze %189 : memref<1x1x128xf32, #tpu.memory_space<vmem>> -> memref<1x128xf32, #tpu.memory_space<vmem>>
    %191 = tpu.memref_slice %arg5[%c0_i32_178, %c3_i32_179] : memref<2x8x!tpu.dma_semaphore, #tpu.memory_space<semaphore_mem>> -> memref<1x1x!tpu.dma_semaphore, #tpu.memory_space<semaphore_mem>>
    %192 = tpu.memref_squeeze %191 : memref<1x1x!tpu.dma_semaphore, #tpu.memory_space<semaphore_mem>> -> memref<!tpu.dma_semaphore, #tpu.memory_space<semaphore_mem>>
    tpu.enqueue_dma source(%188 : memref<1x128xf32, #tpu.memory_space<any>>) target(%190 : memref<1x128xf32, #tpu.memory_space<vmem>>) target_semaphore(%192 : memref<!tpu.dma_semaphore, #tpu.memory_space<semaphore_mem>>)
    %193 = arith.index_cast %164 : i32 to index
    %c4_183 = arith.constant 4 : index
    %194 = memref.load %arg1[%193, %c4_183] : memref<8x8xi32, #tpu.memory_space<smem>>
    %c0_i32_184 = arith.constant 0 : i32
    %c0_i32_185 = arith.constant 0 : i32
    %c4_i32_186 = arith.constant 4 : i32
    %c0_i32_187 = arith.constant 0 : i32
    %195 = tpu.memref_slice %arg2[%194, %c0_i32_187] : memref<1024x128xf32, #tpu.memory_space<any>> -> memref<1x128xf32, #tpu.memory_space<any>>
    %c4_i32_188 = arith.constant 4 : i32
    %c0_i32_189 = arith.constant 0 : i32
    %196 = tpu.memref_slice %arg4[%c0_i32_184, %c4_i32_188, %c0_i32_189] : memref<2x8x128xf32, #tpu.memory_space<vmem>> -> memref<1x1x128xf32, #tpu.memory_space<vmem>>
    %197 = tpu.memref_squeeze %196 : memref<1x1x128xf32, #tpu.memory_space<vmem>> -> memref<1x128xf32, #tpu.memory_space<vmem>>
    %198 = tpu.memref_slice %arg5[%c0_i32_185, %c4_i32_186] : memref<2x8x!tpu.dma_semaphore, #tpu.memory_space<semaphore_mem>> -> memref<1x1x!tpu.dma_semaphore, #tpu.memory_space<semaphore_mem>>
    %199 = tpu.memref_squeeze %198 : memref<1x1x!tpu.dma_semaphore, #tpu.memory_space<semaphore_mem>> -> memref<!tpu.dma_semaphore, #tpu.memory_space<semaphore_mem>>
    tpu.enqueue_dma source(%195 : memref<1x128xf32, #tpu.memory_space<any>>) target(%197 : memref<1x128xf32, #tpu.memory_space<vmem>>) target_semaphore(%199 : memref<!tpu.dma_semaphore, #tpu.memory_space<semaphore_mem>>)
    %200 = arith.index_cast %164 : i32 to index
    %c5_190 = arith.constant 5 : index
    %201 = memref.load %arg1[%200, %c5_190] : memref<8x8xi32, #tpu.memory_space<smem>>
    %c0_i32_191 = arith.constant 0 : i32
    %c0_i32_192 = arith.constant 0 : i32
    %c5_i32_193 = arith.constant 5 : i32
    %c0_i32_194 = arith.constant 0 : i32
    %202 = tpu.memref_slice %arg2[%201, %c0_i32_194] : memref<1024x128xf32, #tpu.memory_space<any>> -> memref<1x128xf32, #tpu.memory_space<any>>
    %c5_i32_195 = arith.constant 5 : i32
    %c0_i32_196 = arith.constant 0 : i32
    %203 = tpu.memref_slice %arg4[%c0_i32_191, %c5_i32_195, %c0_i32_196] : memref<2x8x128xf32, #tpu.memory_space<vmem>> -> memref<1x1x128xf32, #tpu.memory_space<vmem>>
    %204 = tpu.memref_squeeze %203 : memref<1x1x128xf32, #tpu.memory_space<vmem>> -> memref<1x128xf32, #tpu.memory_space<vmem>>
    %205 = tpu.memref_slice %arg5[%c0_i32_192, %c5_i32_193] : memref<2x8x!tpu.dma_semaphore, #tpu.memory_space<semaphore_mem>> -> memref<1x1x!tpu.dma_semaphore, #tpu.memory_space<semaphore_mem>>
    %206 = tpu.memref_squeeze %205 : memref<1x1x!tpu.dma_semaphore, #tpu.memory_space<semaphore_mem>> -> memref<!tpu.dma_semaphore, #tpu.memory_space<semaphore_mem>>
    tpu.enqueue_dma source(%202 : memref<1x128xf32, #tpu.memory_space<any>>) target(%204 : memref<1x128xf32, #tpu.memory_space<vmem>>) target_semaphore(%206 : memref<!tpu.dma_semaphore, #tpu.memory_space<semaphore_mem>>)
    %207 = arith.index_cast %164 : i32 to index
    %c6_197 = arith.constant 6 : index
    %208 = memref.load %arg1[%207, %c6_197] : memref<8x8xi32, #tpu.memory_space<smem>>
    %c0_i32_198 = arith.constant 0 : i32
    %c0_i32_199 = arith.constant 0 : i32
    %c6_i32_200 = arith.constant 6 : i32
    %c0_i32_201 = arith.constant 0 : i32
    %209 = tpu.memref_slice %arg2[%208, %c0_i32_201] : memref<1024x128xf32, #tpu.memory_space<any>> -> memref<1x128xf32, #tpu.memory_space<any>>
    %c6_i32_202 = arith.constant 6 : i32
    %c0_i32_203 = arith.constant 0 : i32
    %210 = tpu.memref_slice %arg4[%c0_i32_198, %c6_i32_202, %c0_i32_203] : memref<2x8x128xf32, #tpu.memory_space<vmem>> -> memref<1x1x128xf32, #tpu.memory_space<vmem>>
    %211 = tpu.memref_squeeze %210 : memref<1x1x128xf32, #tpu.memory_space<vmem>> -> memref<1x128xf32, #tpu.memory_space<vmem>>
    %212 = tpu.memref_slice %arg5[%c0_i32_199, %c6_i32_200] : memref<2x8x!tpu.dma_semaphore, #tpu.memory_space<semaphore_mem>> -> memref<1x1x!tpu.dma_semaphore, #tpu.memory_space<semaphore_mem>>
    %213 = tpu.memref_squeeze %212 : memref<1x1x!tpu.dma_semaphore, #tpu.memory_space<semaphore_mem>> -> memref<!tpu.dma_semaphore, #tpu.memory_space<semaphore_mem>>
    tpu.enqueue_dma source(%209 : memref<1x128xf32, #tpu.memory_space<any>>) target(%211 : memref<1x128xf32, #tpu.memory_space<vmem>>) target_semaphore(%213 : memref<!tpu.dma_semaphore, #tpu.memory_space<semaphore_mem>>)
    %214 = arith.index_cast %164 : i32 to index
    %c7_204 = arith.constant 7 : index
    %215 = memref.load %arg1[%214, %c7_204] : memref<8x8xi32, #tpu.memory_space<smem>>
    %c0_i32_205 = arith.constant 0 : i32
    %c0_i32_206 = arith.constant 0 : i32
    %c7_i32_207 = arith.constant 7 : i32
    %c0_i32_208 = arith.constant 0 : i32
    %216 = tpu.memref_slice %arg2[%215, %c0_i32_208] : memref<1024x128xf32, #tpu.memory_space<any>> -> memref<1x128xf32, #tpu.memory_space<any>>
    %c7_i32_209 = arith.constant 7 : i32
    %c0_i32_210 = arith.constant 0 : i32
    %217 = tpu.memref_slice %arg4[%c0_i32_205, %c7_i32_209, %c0_i32_210] : memref<2x8x128xf32, #tpu.memory_space<vmem>> -> memref<1x1x128xf32, #tpu.memory_space<vmem>>
    %218 = tpu.memref_squeeze %217 : memref<1x1x128xf32, #tpu.memory_space<vmem>> -> memref<1x128xf32, #tpu.memory_space<vmem>>
    %219 = tpu.memref_slice %arg5[%c0_i32_206, %c7_i32_207] : memref<2x8x!tpu.dma_semaphore, #tpu.memory_space<semaphore_mem>> -> memref<1x1x!tpu.dma_semaphore, #tpu.memory_space<semaphore_mem>>
    %220 = tpu.memref_squeeze %219 : memref<1x1x!tpu.dma_semaphore, #tpu.memory_space<semaphore_mem>> -> memref<!tpu.dma_semaphore, #tpu.memory_space<semaphore_mem>>
    tpu.enqueue_dma source(%216 : memref<1x128xf32, #tpu.memory_space<any>>) target(%218 : memref<1x128xf32, #tpu.memory_space<vmem>>) target_semaphore(%220 : memref<!tpu.dma_semaphore, #tpu.memory_space<semaphore_mem>>)
    %c1_i32_211 = arith.constant 1 : i32
    %c1_i32_212 = arith.constant 1 : i32
    %c0_i32_213 = arith.constant 0 : i32
    %c0_i32_214 = arith.constant 0 : i32
    %221 = tpu.memref_slice %arg2[%61, %c0_i32_214] : memref<1024x128xf32, #tpu.memory_space<any>> -> memref<1x128xf32, #tpu.memory_space<any>>
    %c0_i32_215 = arith.constant 0 : i32
    %c0_i32_216 = arith.constant 0 : i32
    %222 = tpu.memref_slice %arg4[%c1_i32_211, %c0_i32_215, %c0_i32_216] : memref<2x8x128xf32, #tpu.memory_space<vmem>> -> memref<1x1x128xf32, #tpu.memory_space<vmem>>
    %223 = tpu.memref_squeeze %222 : memref<1x1x128xf32, #tpu.memory_space<vmem>> -> memref<1x128xf32, #tpu.memory_space<vmem>>
    %224 = tpu.memref_slice %arg5[%c1_i32_212, %c0_i32_213] : memref<2x8x!tpu.dma_semaphore, #tpu.memory_space<semaphore_mem>> -> memref<1x1x!tpu.dma_semaphore, #tpu.memory_space<semaphore_mem>>
    %225 = tpu.memref_squeeze %224 : memref<1x1x!tpu.dma_semaphore, #tpu.memory_space<semaphore_mem>> -> memref<!tpu.dma_semaphore, #tpu.memory_space<semaphore_mem>>
    tpu.wait_dma2 semaphore(%225 : memref<!tpu.dma_semaphore, #tpu.memory_space<semaphore_mem>>) src(%221 : memref<1x128xf32, #tpu.memory_space<any>>) dst(%223 : memref<1x128xf32, #tpu.memory_space<vmem>>)
    %c1_i32_217 = arith.constant 1 : i32
    %c1_i32_218 = arith.constant 1 : i32
    %c1_i32_219 = arith.constant 1 : i32
    %c0_i32_220 = arith.constant 0 : i32
    %226 = tpu.memref_slice %arg2[%68, %c0_i32_220] : memref<1024x128xf32, #tpu.memory_space<any>> -> memref<1x128xf32, #tpu.memory_space<any>>
    %c1_i32_221 = arith.constant 1 : i32
    %c0_i32_222 = arith.constant 0 : i32
    %227 = tpu.memref_slice %arg4[%c1_i32_217, %c1_i32_221, %c0_i32_222] : memref<2x8x128xf32, #tpu.memory_space<vmem>> -> memref<1x1x128xf32, #tpu.memory_space<vmem>>
    %228 = tpu.memref_squeeze %227 : memref<1x1x128xf32, #tpu.memory_space<vmem>> -> memref<1x128xf32, #tpu.memory_space<vmem>>
    %229 = tpu.memref_slice %arg5[%c1_i32_218, %c1_i32_219] : memref<2x8x!tpu.dma_semaphore, #tpu.memory_space<semaphore_mem>> -> memref<1x1x!tpu.dma_semaphore, #tpu.memory_space<semaphore_mem>>
    %230 = tpu.memref_squeeze %229 : memref<1x1x!tpu.dma_semaphore, #tpu.memory_space<semaphore_mem>> -> memref<!tpu.dma_semaphore, #tpu.memory_space<semaphore_mem>>
    tpu.wait_dma2 semaphore(%230 : memref<!tpu.dma_semaphore, #tpu.memory_space<semaphore_mem>>) src(%226 : memref<1x128xf32, #tpu.memory_space<any>>) dst(%228 : memref<1x128xf32, #tpu.memory_space<vmem>>)
    %c1_i32_223 = arith.constant 1 : i32
    %c1_i32_224 = arith.constant 1 : i32
    %c2_i32_225 = arith.constant 2 : i32
    %c0_i32_226 = arith.constant 0 : i32
    %231 = tpu.memref_slice %arg2[%75, %c0_i32_226] : memref<1024x128xf32, #tpu.memory_space<any>> -> memref<1x128xf32, #tpu.memory_space<any>>
    %c2_i32_227 = arith.constant 2 : i32
    %c0_i32_228 = arith.constant 0 : i32
    %232 = tpu.memref_slice %arg4[%c1_i32_223, %c2_i32_227, %c0_i32_228] : memref<2x8x128xf32, #tpu.memory_space<vmem>> -> memref<1x1x128xf32, #tpu.memory_space<vmem>>
    %233 = tpu.memref_squeeze %232 : memref<1x1x128xf32, #tpu.memory_space<vmem>> -> memref<1x128xf32, #tpu.memory_space<vmem>>
    %234 = tpu.memref_slice %arg5[%c1_i32_224, %c2_i32_225] : memref<2x8x!tpu.dma_semaphore, #tpu.memory_space<semaphore_mem>> -> memref<1x1x!tpu.dma_semaphore, #tpu.memory_space<semaphore_mem>>
    %235 = tpu.memref_squeeze %234 : memref<1x1x!tpu.dma_semaphore, #tpu.memory_space<semaphore_mem>> -> memref<!tpu.dma_semaphore, #tpu.memory_space<semaphore_mem>>
    tpu.wait_dma2 semaphore(%235 : memref<!tpu.dma_semaphore, #tpu.memory_space<semaphore_mem>>) src(%231 : memref<1x128xf32, #tpu.memory_space<any>>) dst(%233 : memref<1x128xf32, #tpu.memory_space<vmem>>)
    %c1_i32_229 = arith.constant 1 : i32
    %c1_i32_230 = arith.constant 1 : i32
    %c3_i32_231 = arith.constant 3 : i32
    %c0_i32_232 = arith.constant 0 : i32
    %236 = tpu.memref_slice %arg2[%82, %c0_i32_232] : memref<1024x128xf32, #tpu.memory_space<any>> -> memref<1x128xf32, #tpu.memory_space<any>>
    %c3_i32_233 = arith.constant 3 : i32
    %c0_i32_234 = arith.constant 0 : i32
    %237 = tpu.memref_slice %arg4[%c1_i32_229, %c3_i32_233, %c0_i32_234] : memref<2x8x128xf32, #tpu.memory_space<vmem>> -> memref<1x1x128xf32, #tpu.memory_space<vmem>>
    %238 = tpu.memref_squeeze %237 : memref<1x1x128xf32, #tpu.memory_space<vmem>> -> memref<1x128xf32, #tpu.memory_space<vmem>>
    %239 = tpu.memref_slice %arg5[%c1_i32_230, %c3_i32_231] : memref<2x8x!tpu.dma_semaphore, #tpu.memory_space<semaphore_mem>> -> memref<1x1x!tpu.dma_semaphore, #tpu.memory_space<semaphore_mem>>
    %240 = tpu.memref_squeeze %239 : memref<1x1x!tpu.dma_semaphore, #tpu.memory_space<semaphore_mem>> -> memref<!tpu.dma_semaphore, #tpu.memory_space<semaphore_mem>>
    tpu.wait_dma2 semaphore(%240 : memref<!tpu.dma_semaphore, #tpu.memory_space<semaphore_mem>>) src(%236 : memref<1x128xf32, #tpu.memory_space<any>>) dst(%238 : memref<1x128xf32, #tpu.memory_space<vmem>>)
    %c1_i32_235 = arith.constant 1 : i32
    %c1_i32_236 = arith.constant 1 : i32
    %c4_i32_237 = arith.constant 4 : i32
    %c0_i32_238 = arith.constant 0 : i32
    %241 = tpu.memref_slice %arg2[%89, %c0_i32_238] : memref<1024x128xf32, #tpu.memory_space<any>> -> memref<1x128xf32, #tpu.memory_space<any>>
    %c4_i32_239 = arith.constant 4 : i32
    %c0_i32_240 = arith.constant 0 : i32
    %242 = tpu.memref_slice %arg4[%c1_i32_235, %c4_i32_239, %c0_i32_240] : memref<2x8x128xf32, #tpu.memory_space<vmem>> -> memref<1x1x128xf32, #tpu.memory_space<vmem>>
    %243 = tpu.memref_squeeze %242 : memref<1x1x128xf32, #tpu.memory_space<vmem>> -> memref<1x128xf32, #tpu.memory_space<vmem>>
    %244 = tpu.memref_slice %arg5[%c1_i32_236, %c4_i32_237] : memref<2x8x!tpu.dma_semaphore, #tpu.memory_space<semaphore_mem>> -> memref<1x1x!tpu.dma_semaphore, #tpu.memory_space<semaphore_mem>>
    %245 = tpu.memref_squeeze %244 : memref<1x1x!tpu.dma_semaphore, #tpu.memory_space<semaphore_mem>> -> memref<!tpu.dma_semaphore, #tpu.memory_space<semaphore_mem>>
    tpu.wait_dma2 semaphore(%245 : memref<!tpu.dma_semaphore, #tpu.memory_space<semaphore_mem>>) src(%241 : memref<1x128xf32, #tpu.memory_space<any>>) dst(%243 : memref<1x128xf32, #tpu.memory_space<vmem>>)
    %c1_i32_241 = arith.constant 1 : i32
    %c1_i32_242 = arith.constant 1 : i32
    %c5_i32_243 = arith.constant 5 : i32
    %c0_i32_244 = arith.constant 0 : i32
    %246 = tpu.memref_slice %arg2[%96, %c0_i32_244] : memref<1024x128xf32, #tpu.memory_space<any>> -> memref<1x128xf32, #tpu.memory_space<any>>
    %c5_i32_245 = arith.constant 5 : i32
    %c0_i32_246 = arith.constant 0 : i32
    %247 = tpu.memref_slice %arg4[%c1_i32_241, %c5_i32_245, %c0_i32_246] : memref<2x8x128xf32, #tpu.memory_space<vmem>> -> memref<1x1x128xf32, #tpu.memory_space<vmem>>
    %248 = tpu.memref_squeeze %247 : memref<1x1x128xf32, #tpu.memory_space<vmem>> -> memref<1x128xf32, #tpu.memory_space<vmem>>
    %249 = tpu.memref_slice %arg5[%c1_i32_242, %c5_i32_243] : memref<2x8x!tpu.dma_semaphore, #tpu.memory_space<semaphore_mem>> -> memref<1x1x!tpu.dma_semaphore, #tpu.memory_space<semaphore_mem>>
    %250 = tpu.memref_squeeze %249 : memref<1x1x!tpu.dma_semaphore, #tpu.memory_space<semaphore_mem>> -> memref<!tpu.dma_semaphore, #tpu.memory_space<semaphore_mem>>
    tpu.wait_dma2 semaphore(%250 : memref<!tpu.dma_semaphore, #tpu.memory_space<semaphore_mem>>) src(%246 : memref<1x128xf32, #tpu.memory_space<any>>) dst(%248 : memref<1x128xf32, #tpu.memory_space<vmem>>)
    %c1_i32_247 = arith.constant 1 : i32
    %c1_i32_248 = arith.constant 1 : i32
    %c6_i32_249 = arith.constant 6 : i32
    %c0_i32_250 = arith.constant 0 : i32
    %251 = tpu.memref_slice %arg2[%103, %c0_i32_250] : memref<1024x128xf32, #tpu.memory_space<any>> -> memref<1x128xf32, #tpu.memory_space<any>>
    %c6_i32_251 = arith.constant 6 : i32
    %c0_i32_252 = arith.constant 0 : i32
    %252 = tpu.memref_slice %arg4[%c1_i32_247, %c6_i32_251, %c0_i32_252] : memref<2x8x128xf32, #tpu.memory_space<vmem>> -> memref<1x1x128xf32, #tpu.memory_space<vmem>>
    %253 = tpu.memref_squeeze %252 : memref<1x1x128xf32, #tpu.memory_space<vmem>> -> memref<1x128xf32, #tpu.memory_space<vmem>>
    %254 = tpu.memref_slice %arg5[%c1_i32_248, %c6_i32_249] : memref<2x8x!tpu.dma_semaphore, #tpu.memory_space<semaphore_mem>> -> memref<1x1x!tpu.dma_semaphore, #tpu.memory_space<semaphore_mem>>
    %255 = tpu.memref_squeeze %254 : memref<1x1x!tpu.dma_semaphore, #tpu.memory_space<semaphore_mem>> -> memref<!tpu.dma_semaphore, #tpu.memory_space<semaphore_mem>>
    tpu.wait_dma2 semaphore(%255 : memref<!tpu.dma_semaphore, #tpu.memory_space<semaphore_mem>>) src(%251 : memref<1x128xf32, #tpu.memory_space<any>>) dst(%253 : memref<1x128xf32, #tpu.memory_space<vmem>>)
    %c1_i32_253 = arith.constant 1 : i32
    %c1_i32_254 = arith.constant 1 : i32
    %c7_i32_255 = arith.constant 7 : i32
    %c0_i32_256 = arith.constant 0 : i32
    %256 = tpu.memref_slice %arg2[%110, %c0_i32_256] : memref<1024x128xf32, #tpu.memory_space<any>> -> memref<1x128xf32, #tpu.memory_space<any>>
    %c7_i32_257 = arith.constant 7 : i32
    %c0_i32_258 = arith.constant 0 : i32
    %257 = tpu.memref_slice %arg4[%c1_i32_253, %c7_i32_257, %c0_i32_258] : memref<2x8x128xf32, #tpu.memory_space<vmem>> -> memref<1x1x128xf32, #tpu.memory_space<vmem>>
    %258 = tpu.memref_squeeze %257 : memref<1x1x128xf32, #tpu.memory_space<vmem>> -> memref<1x128xf32, #tpu.memory_space<vmem>>
    %259 = tpu.memref_slice %arg5[%c1_i32_254, %c7_i32_255] : memref<2x8x!tpu.dma_semaphore, #tpu.memory_space<semaphore_mem>> -> memref<1x1x!tpu.dma_semaphore, #tpu.memory_space<semaphore_mem>>
    %260 = tpu.memref_squeeze %259 : memref<1x1x!tpu.dma_semaphore, #tpu.memory_space<semaphore_mem>> -> memref<!tpu.dma_semaphore, #tpu.memory_space<semaphore_mem>>
    tpu.wait_dma2 semaphore(%260 : memref<!tpu.dma_semaphore, #tpu.memory_space<semaphore_mem>>) src(%256 : memref<1x128xf32, #tpu.memory_space<any>>) dst(%258 : memref<1x128xf32, #tpu.memory_space<vmem>>)
    %c1_259 = arith.constant 1 : index
    %c0_260 = arith.constant 0 : index
    %c0_261 = arith.constant 0 : index
    %261 = vector.load %arg4[%c1_259, %c0_260, %c0_261] : memref<2x8x128xf32, #tpu.memory_space<vmem>>, vector<1x8x128xf32>
    %262 = vector.shape_cast %261 : vector<1x8x128xf32> to vector<8x128xf32>
    %cst_262 = arith.constant dense<0.000000e+00> : vector<128xf32>
    %263 = vector.multi_reduction <add>, %262, %cst_262 [0] : vector<8x128xf32> to vector<128xf32>
    %264 = vector.shape_cast %263 : vector<128xf32> to vector<1x128xf32>
    %cst_263 = arith.constant 1.250000e-01 : f32
    %265 = vector.broadcast %cst_263 : f32 to vector<1x128xf32>
    %266 = arith.mulf %264, %265 : vector<1x128xf32>
    %c1_264 = arith.constant 1 : index
    %c0_265 = arith.constant 0 : index
    %267 = vector.load %arg3[%c1_264, %c0_265] : memref<8x128xf32, #tpu.memory_space<vmem>>, vector<1x128xf32>
    tpu.vector_store %arg3[%c1_264, %c0_265], %266 {strides = array<i32>} : memref<8x128xf32, #tpu.memory_space<vmem>>, vector<1x128xf32>,
    %c8_i32_266 = arith.constant 8 : i32
    %268 = arith.muli %arg0, %c8_i32_266 : i32
    %c3_i32_267 = arith.constant 3 : i32
    %269 = arith.addi %268, %c3_i32_267 : i32
    %270 = arith.index_cast %269 : i32 to index
    %c0_268 = arith.constant 0 : index
    %271 = memref.load %arg1[%270, %c0_268] : memref<8x8xi32, #tpu.memory_space<smem>>
    %c1_i32_269 = arith.constant 1 : i32
    %c1_i32_270 = arith.constant 1 : i32
    %c0_i32_271 = arith.constant 0 : i32
    %c0_i32_272 = arith.constant 0 : i32
    %272 = tpu.memref_slice %arg2[%271, %c0_i32_272] : memref<1024x128xf32, #tpu.memory_space<any>> -> memref<1x128xf32, #tpu.memory_space<any>>
    %c0_i32_273 = arith.constant 0 : i32
    %c0_i32_274 = arith.constant 0 : i32
    %273 = tpu.memref_slice %arg4[%c1_i32_269, %c0_i32_273, %c0_i32_274] : memref<2x8x128xf32, #tpu.memory_space<vmem>> -> memref<1x1x128xf32, #tpu.memory_space<vmem>>
    %274 = tpu.memref_squeeze %273 : memref<1x1x128xf32, #tpu.memory_space<vmem>> -> memref<1x128xf32, #tpu.memory_space<vmem>>
    %275 = tpu.memref_slice %arg5[%c1_i32_270, %c0_i32_271] : memref<2x8x!tpu.dma_semaphore, #tpu.memory_space<semaphore_mem>> -> memref<1x1x!tpu.dma_semaphore, #tpu.memory_space<semaphore_mem>>
    %276 = tpu.memref_squeeze %275 : memref<1x1x!tpu.dma_semaphore, #tpu.memory_space<semaphore_mem>> -> memref<!tpu.dma_semaphore, #tpu.memory_space<semaphore_mem>>
    tpu.enqueue_dma source(%272 : memref<1x128xf32, #tpu.memory_space<any>>) target(%274 : memref<1x128xf32, #tpu.memory_space<vmem>>) target_semaphore(%276 : memref<!tpu.dma_semaphore, #tpu.memory_space<semaphore_mem>>)
    %277 = arith.index_cast %269 : i32 to index
    %c1_275 = arith.constant 1 : index
    %278 = memref.load %arg1[%277, %c1_275] : memref<8x8xi32, #tpu.memory_space<smem>>
    %c1_i32_276 = arith.constant 1 : i32
    %c1_i32_277 = arith.constant 1 : i32
    %c1_i32_278 = arith.constant 1 : i32
    %c0_i32_279 = arith.constant 0 : i32
    %279 = tpu.memref_slice %arg2[%278, %c0_i32_279] : memref<1024x128xf32, #tpu.memory_space<any>> -> memref<1x128xf32, #tpu.memory_space<any>>
    %c1_i32_280 = arith.constant 1 : i32
    %c0_i32_281 = arith.constant 0 : i32
    %280 = tpu.memref_slice %arg4[%c1_i32_276, %c1_i32_280, %c0_i32_281] : memref<2x8x128xf32, #tpu.memory_space<vmem>> -> memref<1x1x128xf32, #tpu.memory_space<vmem>>
    %281 = tpu.memref_squeeze %280 : memref<1x1x128xf32, #tpu.memory_space<vmem>> -> memref<1x128xf32, #tpu.memory_space<vmem>>
    %282 = tpu.memref_slice %arg5[%c1_i32_277, %c1_i32_278] : memref<2x8x!tpu.dma_semaphore, #tpu.memory_space<semaphore_mem>> -> memref<1x1x!tpu.dma_semaphore, #tpu.memory_space<semaphore_mem>>
    %283 = tpu.memref_squeeze %282 : memref<1x1x!tpu.dma_semaphore, #tpu.memory_space<semaphore_mem>> -> memref<!tpu.dma_semaphore, #tpu.memory_space<semaphore_mem>>
    tpu.enqueue_dma source(%279 : memref<1x128xf32, #tpu.memory_space<any>>) target(%281 : memref<1x128xf32, #tpu.memory_space<vmem>>) target_semaphore(%283 : memref<!tpu.dma_semaphore, #tpu.memory_space<semaphore_mem>>)
    %284 = arith.index_cast %269 : i32 to index
    %c2_282 = arith.constant 2 : index
    %285 = memref.load %arg1[%284, %c2_282] : memref<8x8xi32, #tpu.memory_space<smem>>
    %c1_i32_283 = arith.constant 1 : i32
    %c1_i32_284 = arith.constant 1 : i32
    %c2_i32_285 = arith.constant 2 : i32
    %c0_i32_286 = arith.constant 0 : i32
    %286 = tpu.memref_slice %arg2[%285, %c0_i32_286] : memref<1024x128xf32, #tpu.memory_space<any>> -> memref<1x128xf32, #tpu.memory_space<any>>
    %c2_i32_287 = arith.constant 2 : i32
    %c0_i32_288 = arith.constant 0 : i32
    %287 = tpu.memref_slice %arg4[%c1_i32_283, %c2_i32_287, %c0_i32_288] : memref<2x8x128xf32, #tpu.memory_space<vmem>> -> memref<1x1x128xf32, #tpu.memory_space<vmem>>
    %288 = tpu.memref_squeeze %287 : memref<1x1x128xf32, #tpu.memory_space<vmem>> -> memref<1x128xf32, #tpu.memory_space<vmem>>
    %289 = tpu.memref_slice %arg5[%c1_i32_284, %c2_i32_285] : memref<2x8x!tpu.dma_semaphore, #tpu.memory_space<semaphore_mem>> -> memref<1x1x!tpu.dma_semaphore, #tpu.memory_space<semaphore_mem>>
    %290 = tpu.memref_squeeze %289 : memref<1x1x!tpu.dma_semaphore, #tpu.memory_space<semaphore_mem>> -> memref<!tpu.dma_semaphore, #tpu.memory_space<semaphore_mem>>
    tpu.enqueue_dma source(%286 : memref<1x128xf32, #tpu.memory_space<any>>) target(%288 : memref<1x128xf32, #tpu.memory_space<vmem>>) target_semaphore(%290 : memref<!tpu.dma_semaphore, #tpu.memory_space<semaphore_mem>>)
    %291 = arith.index_cast %269 : i32 to index
    %c3_289 = arith.constant 3 : index
    %292 = memref.load %arg1[%291, %c3_289] : memref<8x8xi32, #tpu.memory_space<smem>>
    %c1_i32_290 = arith.constant 1 : i32
    %c1_i32_291 = arith.constant 1 : i32
    %c3_i32_292 = arith.constant 3 : i32
    %c0_i32_293 = arith.constant 0 : i32
    %293 = tpu.memref_slice %arg2[%292, %c0_i32_293] : memref<1024x128xf32, #tpu.memory_space<any>> -> memref<1x128xf32, #tpu.memory_space<any>>
    %c3_i32_294 = arith.constant 3 : i32
    %c0_i32_295 = arith.constant 0 : i32
    %294 = tpu.memref_slice %arg4[%c1_i32_290, %c3_i32_294, %c0_i32_295] : memref<2x8x128xf32, #tpu.memory_space<vmem>> -> memref<1x1x128xf32, #tpu.memory_space<vmem>>
    %295 = tpu.memref_squeeze %294 : memref<1x1x128xf32, #tpu.memory_space<vmem>> -> memref<1x128xf32, #tpu.memory_space<vmem>>
    %296 = tpu.memref_slice %arg5[%c1_i32_291, %c3_i32_292] : memref<2x8x!tpu.dma_semaphore, #tpu.memory_space<semaphore_mem>> -> memref<1x1x!tpu.dma_semaphore, #tpu.memory_space<semaphore_mem>>
    %297 = tpu.memref_squeeze %296 : memref<1x1x!tpu.dma_semaphore, #tpu.memory_space<semaphore_mem>> -> memref<!tpu.dma_semaphore, #tpu.memory_space<semaphore_mem>>
    tpu.enqueue_dma source(%293 : memref<1x128xf32, #tpu.memory_space<any>>) target(%295 : memref<1x128xf32, #tpu.memory_space<vmem>>) target_semaphore(%297 : memref<!tpu.dma_semaphore, #tpu.memory_space<semaphore_mem>>)
    %298 = arith.index_cast %269 : i32 to index
    %c4_296 = arith.constant 4 : index
    %299 = memref.load %arg1[%298, %c4_296] : memref<8x8xi32, #tpu.memory_space<smem>>
    %c1_i32_297 = arith.constant 1 : i32
    %c1_i32_298 = arith.constant 1 : i32
    %c4_i32_299 = arith.constant 4 : i32
    %c0_i32_300 = arith.constant 0 : i32
    %300 = tpu.memref_slice %arg2[%299, %c0_i32_300] : memref<1024x128xf32, #tpu.memory_space<any>> -> memref<1x128xf32, #tpu.memory_space<any>>
    %c4_i32_301 = arith.constant 4 : i32
    %c0_i32_302 = arith.constant 0 : i32
    %301 = tpu.memref_slice %arg4[%c1_i32_297, %c4_i32_301, %c0_i32_302] : memref<2x8x128xf32, #tpu.memory_space<vmem>> -> memref<1x1x128xf32, #tpu.memory_space<vmem>>
    %302 = tpu.memref_squeeze %301 : memref<1x1x128xf32, #tpu.memory_space<vmem>> -> memref<1x128xf32, #tpu.memory_space<vmem>>
    %303 = tpu.memref_slice %arg5[%c1_i32_298, %c4_i32_299] : memref<2x8x!tpu.dma_semaphore, #tpu.memory_space<semaphore_mem>> -> memref<1x1x!tpu.dma_semaphore, #tpu.memory_space<semaphore_mem>>
    %304 = tpu.memref_squeeze %303 : memref<1x1x!tpu.dma_semaphore, #tpu.memory_space<semaphore_mem>> -> memref<!tpu.dma_semaphore, #tpu.memory_space<semaphore_mem>>
    tpu.enqueue_dma source(%300 : memref<1x128xf32, #tpu.memory_space<any>>) target(%302 : memref<1x128xf32, #tpu.memory_space<vmem>>) target_semaphore(%304 : memref<!tpu.dma_semaphore, #tpu.memory_space<semaphore_mem>>)
    %305 = arith.index_cast %269 : i32 to index
    %c5_303 = arith.constant 5 : index
    %306 = memref.load %arg1[%305, %c5_303] : memref<8x8xi32, #tpu.memory_space<smem>>
    %c1_i32_304 = arith.constant 1 : i32
    %c1_i32_305 = arith.constant 1 : i32
    %c5_i32_306 = arith.constant 5 : i32
    %c0_i32_307 = arith.constant 0 : i32
    %307 = tpu.memref_slice %arg2[%306, %c0_i32_307] : memref<1024x128xf32, #tpu.memory_space<any>> -> memref<1x128xf32, #tpu.memory_space<any>>
    %c5_i32_308 = arith.constant 5 : i32
    %c0_i32_309 = arith.constant 0 : i32
    %308 = tpu.memref_slice %arg4[%c1_i32_304, %c5_i32_308, %c0_i32_309] : memref<2x8x128xf32, #tpu.memory_space<vmem>> -> memref<1x1x128xf32, #tpu.memory_space<vmem>>
    %309 = tpu.memref_squeeze %308 : memref<1x1x128xf32, #tpu.memory_space<vmem>> -> memref<1x128xf32, #tpu.memory_space<vmem>>
    %310 = tpu.memref_slice %arg5[%c1_i32_305, %c5_i32_306] : memref<2x8x!tpu.dma_semaphore, #tpu.memory_space<semaphore_mem>> -> memref<1x1x!tpu.dma_semaphore, #tpu.memory_space<semaphore_mem>>
    %311 = tpu.memref_squeeze %310 : memref<1x1x!tpu.dma_semaphore, #tpu.memory_space<semaphore_mem>> -> memref<!tpu.dma_semaphore, #tpu.memory_space<semaphore_mem>>
    tpu.enqueue_dma source(%307 : memref<1x128xf32, #tpu.memory_space<any>>) target(%309 : memref<1x128xf32, #tpu.memory_space<vmem>>) target_semaphore(%311 : memref<!tpu.dma_semaphore, #tpu.memory_space<semaphore_mem>>)
    %312 = arith.index_cast %269 : i32 to index
    %c6_310 = arith.constant 6 : index
    %313 = memref.load %arg1[%312, %c6_310] : memref<8x8xi32, #tpu.memory_space<smem>>
    %c1_i32_311 = arith.constant 1 : i32
    %c1_i32_312 = arith.constant 1 : i32
    %c6_i32_313 = arith.constant 6 : i32
    %c0_i32_314 = arith.constant 0 : i32
    %314 = tpu.memref_slice %arg2[%313, %c0_i32_314] : memref<1024x128xf32, #tpu.memory_space<any>> -> memref<1x128xf32, #tpu.memory_space<any>>
    %c6_i32_315 = arith.constant 6 : i32
    %c0_i32_316 = arith.constant 0 : i32
    %315 = tpu.memref_slice %arg4[%c1_i32_311, %c6_i32_315, %c0_i32_316] : memref<2x8x128xf32, #tpu.memory_space<vmem>> -> memref<1x1x128xf32, #tpu.memory_space<vmem>>
    %316 = tpu.memref_squeeze %315 : memref<1x1x128xf32, #tpu.memory_space<vmem>> -> memref<1x128xf32, #tpu.memory_space<vmem>>
    %317 = tpu.memref_slice %arg5[%c1_i32_312, %c6_i32_313] : memref<2x8x!tpu.dma_semaphore, #tpu.memory_space<semaphore_mem>> -> memref<1x1x!tpu.dma_semaphore, #tpu.memory_space<semaphore_mem>>
    %318 = tpu.memref_squeeze %317 : memref<1x1x!tpu.dma_semaphore, #tpu.memory_space<semaphore_mem>> -> memref<!tpu.dma_semaphore, #tpu.memory_space<semaphore_mem>>
    tpu.enqueue_dma source(%314 : memref<1x128xf32, #tpu.memory_space<any>>) target(%316 : memref<1x128xf32, #tpu.memory_space<vmem>>) target_semaphore(%318 : memref<!tpu.dma_semaphore, #tpu.memory_space<semaphore_mem>>)
    %319 = arith.index_cast %269 : i32 to index
    %c7_317 = arith.constant 7 : index
    %320 = memref.load %arg1[%319, %c7_317] : memref<8x8xi32, #tpu.memory_space<smem>>
    %c1_i32_318 = arith.constant 1 : i32
    %c1_i32_319 = arith.constant 1 : i32
    %c7_i32_320 = arith.constant 7 : i32
    %c0_i32_321 = arith.constant 0 : i32
    %321 = tpu.memref_slice %arg2[%320, %c0_i32_321] : memref<1024x128xf32, #tpu.memory_space<any>> -> memref<1x128xf32, #tpu.memory_space<any>>
    %c7_i32_322 = arith.constant 7 : i32
    %c0_i32_323 = arith.constant 0 : i32
    %322 = tpu.memref_slice %arg4[%c1_i32_318, %c7_i32_322, %c0_i32_323] : memref<2x8x128xf32, #tpu.memory_space<vmem>> -> memref<1x1x128xf32, #tpu.memory_space<vmem>>
    %323 = tpu.memref_squeeze %322 : memref<1x1x128xf32, #tpu.memory_space<vmem>> -> memref<1x128xf32, #tpu.memory_space<vmem>>
    %324 = tpu.memref_slice %arg5[%c1_i32_319, %c7_i32_320] : memref<2x8x!tpu.dma_semaphore, #tpu.memory_space<semaphore_mem>> -> memref<1x1x!tpu.dma_semaphore, #tpu.memory_space<semaphore_mem>>
    %325 = tpu.memref_squeeze %324 : memref<1x1x!tpu.dma_semaphore, #tpu.memory_space<semaphore_mem>> -> memref<!tpu.dma_semaphore, #tpu.memory_space<semaphore_mem>>
    tpu.enqueue_dma source(%321 : memref<1x128xf32, #tpu.memory_space<any>>) target(%323 : memref<1x128xf32, #tpu.memory_space<vmem>>) target_semaphore(%325 : memref<!tpu.dma_semaphore, #tpu.memory_space<semaphore_mem>>)
    %c0_i32_324 = arith.constant 0 : i32
    %c0_i32_325 = arith.constant 0 : i32
    %c0_i32_326 = arith.constant 0 : i32
    %c0_i32_327 = arith.constant 0 : i32
    %326 = tpu.memref_slice %arg2[%166, %c0_i32_327] : memref<1024x128xf32, #tpu.memory_space<any>> -> memref<1x128xf32, #tpu.memory_space<any>>
    %c0_i32_328 = arith.constant 0 : i32
    %c0_i32_329 = arith.constant 0 : i32
    %327 = tpu.memref_slice %arg4[%c0_i32_324, %c0_i32_328, %c0_i32_329] : memref<2x8x128xf32, #tpu.memory_space<vmem>> -> memref<1x1x128xf32, #tpu.memory_space<vmem>>
    %328 = tpu.memref_squeeze %327 : memref<1x1x128xf32, #tpu.memory_space<vmem>> -> memref<1x128xf32, #tpu.memory_space<vmem>>
    %329 = tpu.memref_slice %arg5[%c0_i32_325, %c0_i32_326] : memref<2x8x!tpu.dma_semaphore, #tpu.memory_space<semaphore_mem>> -> memref<1x1x!tpu.dma_semaphore, #tpu.memory_space<semaphore_mem>>
    %330 = tpu.memref_squeeze %329 : memref<1x1x!tpu.dma_semaphore, #tpu.memory_space<semaphore_mem>> -> memref<!tpu.dma_semaphore, #tpu.memory_space<semaphore_mem>>
    tpu.wait_dma2 semaphore(%330 : memref<!tpu.dma_semaphore, #tpu.memory_space<semaphore_mem>>) src(%326 : memref<1x128xf32, #tpu.memory_space<any>>) dst(%328 : memref<1x128xf32, #tpu.memory_space<vmem>>)
    %c0_i32_330 = arith.constant 0 : i32
    %c0_i32_331 = arith.constant 0 : i32
    %c1_i32_332 = arith.constant 1 : i32
    %c0_i32_333 = arith.constant 0 : i32
    %331 = tpu.memref_slice %arg2[%173, %c0_i32_333] : memref<1024x128xf32, #tpu.memory_space<any>> -> memref<1x128xf32, #tpu.memory_space<any>>
    %c1_i32_334 = arith.constant 1 : i32
    %c0_i32_335 = arith.constant 0 : i32
    %332 = tpu.memref_slice %arg4[%c0_i32_330, %c1_i32_334, %c0_i32_335] : memref<2x8x128xf32, #tpu.memory_space<vmem>> -> memref<1x1x128xf32, #tpu.memory_space<vmem>>
    %333 = tpu.memref_squeeze %332 : memref<1x1x128xf32, #tpu.memory_space<vmem>> -> memref<1x128xf32, #tpu.memory_space<vmem>>
    %334 = tpu.memref_slice %arg5[%c0_i32_331, %c1_i32_332] : memref<2x8x!tpu.dma_semaphore, #tpu.memory_space<semaphore_mem>> -> memref<1x1x!tpu.dma_semaphore, #tpu.memory_space<semaphore_mem>>
    %335 = tpu.memref_squeeze %334 : memref<1x1x!tpu.dma_semaphore, #tpu.memory_space<semaphore_mem>> -> memref<!tpu.dma_semaphore, #tpu.memory_space<semaphore_mem>>
    tpu.wait_dma2 semaphore(%335 : memref<!tpu.dma_semaphore, #tpu.memory_space<semaphore_mem>>) src(%331 : memref<1x128xf32, #tpu.memory_space<any>>) dst(%333 : memref<1x128xf32, #tpu.memory_space<vmem>>)
    %c0_i32_336 = arith.constant 0 : i32
    %c0_i32_337 = arith.constant 0 : i32
    %c2_i32_338 = arith.constant 2 : i32
    %c0_i32_339 = arith.constant 0 : i32
    %336 = tpu.memref_slice %arg2[%180, %c0_i32_339] : memref<1024x128xf32, #tpu.memory_space<any>> -> memref<1x128xf32, #tpu.memory_space<any>>
    %c2_i32_340 = arith.constant 2 : i32
    %c0_i32_341 = arith.constant 0 : i32
    %337 = tpu.memref_slice %arg4[%c0_i32_336, %c2_i32_340, %c0_i32_341] : memref<2x8x128xf32, #tpu.memory_space<vmem>> -> memref<1x1x128xf32, #tpu.memory_space<vmem>>
    %338 = tpu.memref_squeeze %337 : memref<1x1x128xf32, #tpu.memory_space<vmem>> -> memref<1x128xf32, #tpu.memory_space<vmem>>
    %339 = tpu.memref_slice %arg5[%c0_i32_337, %c2_i32_338] : memref<2x8x!tpu.dma_semaphore, #tpu.memory_space<semaphore_mem>> -> memref<1x1x!tpu.dma_semaphore, #tpu.memory_space<semaphore_mem>>
    %340 = tpu.memref_squeeze %339 : memref<1x1x!tpu.dma_semaphore, #tpu.memory_space<semaphore_mem>> -> memref<!tpu.dma_semaphore, #tpu.memory_space<semaphore_mem>>
    tpu.wait_dma2 semaphore(%340 : memref<!tpu.dma_semaphore, #tpu.memory_space<semaphore_mem>>) src(%336 : memref<1x128xf32, #tpu.memory_space<any>>) dst(%338 : memref<1x128xf32, #tpu.memory_space<vmem>>)
    %c0_i32_342 = arith.constant 0 : i32
    %c0_i32_343 = arith.constant 0 : i32
    %c3_i32_344 = arith.constant 3 : i32
    %c0_i32_345 = arith.constant 0 : i32
    %341 = tpu.memref_slice %arg2[%187, %c0_i32_345] : memref<1024x128xf32, #tpu.memory_space<any>> -> memref<1x128xf32, #tpu.memory_space<any>>
    %c3_i32_346 = arith.constant 3 : i32
    %c0_i32_347 = arith.constant 0 : i32
    %342 = tpu.memref_slice %arg4[%c0_i32_342, %c3_i32_346, %c0_i32_347] : memref<2x8x128xf32, #tpu.memory_space<vmem>> -> memref<1x1x128xf32, #tpu.memory_space<vmem>>
    %343 = tpu.memref_squeeze %342 : memref<1x1x128xf32, #tpu.memory_space<vmem>> -> memref<1x128xf32, #tpu.memory_space<vmem>>
    %344 = tpu.memref_slice %arg5[%c0_i32_343, %c3_i32_344] : memref<2x8x!tpu.dma_semaphore, #tpu.memory_space<semaphore_mem>> -> memref<1x1x!tpu.dma_semaphore, #tpu.memory_space<semaphore_mem>>
    %345 = tpu.memref_squeeze %344 : memref<1x1x!tpu.dma_semaphore, #tpu.memory_space<semaphore_mem>> -> memref<!tpu.dma_semaphore, #tpu.memory_space<semaphore_mem>>
    tpu.wait_dma2 semaphore(%345 : memref<!tpu.dma_semaphore, #tpu.memory_space<semaphore_mem>>) src(%341 : memref<1x128xf32, #tpu.memory_space<any>>) dst(%343 : memref<1x128xf32, #tpu.memory_space<vmem>>)
    %c0_i32_348 = arith.constant 0 : i32
    %c0_i32_349 = arith.constant 0 : i32
    %c4_i32_350 = arith.constant 4 : i32
    %c0_i32_351 = arith.constant 0 : i32
    %346 = tpu.memref_slice %arg2[%194, %c0_i32_351] : memref<1024x128xf32, #tpu.memory_space<any>> -> memref<1x128xf32, #tpu.memory_space<any>>
    %c4_i32_352 = arith.constant 4 : i32
    %c0_i32_353 = arith.constant 0 : i32
    %347 = tpu.memref_slice %arg4[%c0_i32_348, %c4_i32_352, %c0_i32_353] : memref<2x8x128xf32, #tpu.memory_space<vmem>> -> memref<1x1x128xf32, #tpu.memory_space<vmem>>
    %348 = tpu.memref_squeeze %347 : memref<1x1x128xf32, #tpu.memory_space<vmem>> -> memref<1x128xf32, #tpu.memory_space<vmem>>
    %349 = tpu.memref_slice %arg5[%c0_i32_349, %c4_i32_350] : memref<2x8x!tpu.dma_semaphore, #tpu.memory_space<semaphore_mem>> -> memref<1x1x!tpu.dma_semaphore, #tpu.memory_space<semaphore_mem>>
    %350 = tpu.memref_squeeze %349 : memref<1x1x!tpu.dma_semaphore, #tpu.memory_space<semaphore_mem>> -> memref<!tpu.dma_semaphore, #tpu.memory_space<semaphore_mem>>
    tpu.wait_dma2 semaphore(%350 : memref<!tpu.dma_semaphore, #tpu.memory_space<semaphore_mem>>) src(%346 : memref<1x128xf32, #tpu.memory_space<any>>) dst(%348 : memref<1x128xf32, #tpu.memory_space<vmem>>)
    %c0_i32_354 = arith.constant 0 : i32
    %c0_i32_355 = arith.constant 0 : i32
    %c5_i32_356 = arith.constant 5 : i32
    %c0_i32_357 = arith.constant 0 : i32
    %351 = tpu.memref_slice %arg2[%201, %c0_i32_357] : memref<1024x128xf32, #tpu.memory_space<any>> -> memref<1x128xf32, #tpu.memory_space<any>>
    %c5_i32_358 = arith.constant 5 : i32
    %c0_i32_359 = arith.constant 0 : i32
    %352 = tpu.memref_slice %arg4[%c0_i32_354, %c5_i32_358, %c0_i32_359] : memref<2x8x128xf32, #tpu.memory_space<vmem>> -> memref<1x1x128xf32, #tpu.memory_space<vmem>>
    %353 = tpu.memref_squeeze %352 : memref<1x1x128xf32, #tpu.memory_space<vmem>> -> memref<1x128xf32, #tpu.memory_space<vmem>>
    %354 = tpu.memref_slice %arg5[%c0_i32_355, %c5_i32_356] : memref<2x8x!tpu.dma_semaphore, #tpu.memory_space<semaphore_mem>> -> memref<1x1x!tpu.dma_semaphore, #tpu.memory_space<semaphore_mem>>
    %355 = tpu.memref_squeeze %354 : memref<1x1x!tpu.dma_semaphore, #tpu.memory_space<semaphore_mem>> -> memref<!tpu.dma_semaphore, #tpu.memory_space<semaphore_mem>>
    tpu.wait_dma2 semaphore(%355 : memref<!tpu.dma_semaphore, #tpu.memory_space<semaphore_mem>>) src(%351 : memref<1x128xf32, #tpu.memory_space<any>>) dst(%353 : memref<1x128xf32, #tpu.memory_space<vmem>>)
    %c0_i32_360 = arith.constant 0 : i32
    %c0_i32_361 = arith.constant 0 : i32
    %c6_i32_362 = arith.constant 6 : i32
    %c0_i32_363 = arith.constant 0 : i32
    %356 = tpu.memref_slice %arg2[%208, %c0_i32_363] : memref<1024x128xf32, #tpu.memory_space<any>> -> memref<1x128xf32, #tpu.memory_space<any>>
    %c6_i32_364 = arith.constant 6 : i32
    %c0_i32_365 = arith.constant 0 : i32
    %357 = tpu.memref_slice %arg4[%c0_i32_360, %c6_i32_364, %c0_i32_365] : memref<2x8x128xf32, #tpu.memory_space<vmem>> -> memref<1x1x128xf32, #tpu.memory_space<vmem>>
    %358 = tpu.memref_squeeze %357 : memref<1x1x128xf32, #tpu.memory_space<vmem>> -> memref<1x128xf32, #tpu.memory_space<vmem>>
    %359 = tpu.memref_slice %arg5[%c0_i32_361, %c6_i32_362] : memref<2x8x!tpu.dma_semaphore, #tpu.memory_space<semaphore_mem>> -> memref<1x1x!tpu.dma_semaphore, #tpu.memory_space<semaphore_mem>>
    %360 = tpu.memref_squeeze %359 : memref<1x1x!tpu.dma_semaphore, #tpu.memory_space<semaphore_mem>> -> memref<!tpu.dma_semaphore, #tpu.memory_space<semaphore_mem>>
    tpu.wait_dma2 semaphore(%360 : memref<!tpu.dma_semaphore, #tpu.memory_space<semaphore_mem>>) src(%356 : memref<1x128xf32, #tpu.memory_space<any>>) dst(%358 : memref<1x128xf32, #tpu.memory_space<vmem>>)
    %c0_i32_366 = arith.constant 0 : i32
    %c0_i32_367 = arith.constant 0 : i32
    %c7_i32_368 = arith.constant 7 : i32
    %c0_i32_369 = arith.constant 0 : i32
    %361 = tpu.memref_slice %arg2[%215, %c0_i32_369] : memref<1024x128xf32, #tpu.memory_space<any>> -> memref<1x128xf32, #tpu.memory_space<any>>
    %c7_i32_370 = arith.constant 7 : i32
    %c0_i32_371 = arith.constant 0 : i32
    %362 = tpu.memref_slice %arg4[%c0_i32_366, %c7_i32_370, %c0_i32_371] : memref<2x8x128xf32, #tpu.memory_space<vmem>> -> memref<1x1x128xf32, #tpu.memory_space<vmem>>
    %363 = tpu.memref_squeeze %362 : memref<1x1x128xf32, #tpu.memory_space<vmem>> -> memref<1x128xf32, #tpu.memory_space<vmem>>
    %364 = tpu.memref_slice %arg5[%c0_i32_367, %c7_i32_368] : memref<2x8x!tpu.dma_semaphore, #tpu.memory_space<semaphore_mem>> -> memref<1x1x!tpu.dma_semaphore, #tpu.memory_space<semaphore_mem>>
    %365 = tpu.memref_squeeze %364 : memref<1x1x!tpu.dma_semaphore, #tpu.memory_space<semaphore_mem>> -> memref<!tpu.dma_semaphore, #tpu.memory_space<semaphore_mem>>
    tpu.wait_dma2 semaphore(%365 : memref<!tpu.dma_semaphore, #tpu.memory_space<semaphore_mem>>) src(%361 : memref<1x128xf32, #tpu.memory_space<any>>) dst(%363 : memref<1x128xf32, #tpu.memory_space<vmem>>)
    %c0_372 = arith.constant 0 : index
    %c0_373 = arith.constant 0 : index
    %c0_374 = arith.constant 0 : index
    %366 = vector.load %arg4[%c0_372, %c0_373, %c0_374] : memref<2x8x128xf32, #tpu.memory_space<vmem>>, vector<1x8x128xf32>
    %367 = vector.shape_cast %366 : vector<1x8x128xf32> to vector<8x128xf32>
    %cst_375 = arith.constant dense<0.000000e+00> : vector<128xf32>
    %368 = vector.multi_reduction <add>, %367, %cst_375 [0] : vector<8x128xf32> to vector<128xf32>
    %369 = vector.shape_cast %368 : vector<128xf32> to vector<1x128xf32>
    %cst_376 = arith.constant 1.250000e-01 : f32
    %370 = vector.broadcast %cst_376 : f32 to vector<1x128xf32>
    %371 = arith.mulf %369, %370 : vector<1x128xf32>
    %c2_377 = arith.constant 2 : index
    %c0_378 = arith.constant 0 : index
    %372 = vector.load %arg3[%c2_377, %c0_378] : memref<8x128xf32, #tpu.memory_space<vmem>>, vector<1x128xf32>
    tpu.vector_store %arg3[%c2_377, %c0_378], %371 {strides = array<i32>} : memref<8x128xf32, #tpu.memory_space<vmem>>, vector<1x128xf32>,
    %c8_i32_379 = arith.constant 8 : i32
    %373 = arith.muli %arg0, %c8_i32_379 : i32
    %c4_i32_380 = arith.constant 4 : i32
    %374 = arith.addi %373, %c4_i32_380 : i32
    %375 = arith.index_cast %374 : i32 to index
    %c0_381 = arith.constant 0 : index
    %376 = memref.load %arg1[%375, %c0_381] : memref<8x8xi32, #tpu.memory_space<smem>>
    %c0_i32_382 = arith.constant 0 : i32
    %c0_i32_383 = arith.constant 0 : i32
    %c0_i32_384 = arith.constant 0 : i32
    %c0_i32_385 = arith.constant 0 : i32
    %377 = tpu.memref_slice %arg2[%376, %c0_i32_385] : memref<1024x128xf32, #tpu.memory_space<any>> -> memref<1x128xf32, #tpu.memory_space<any>>
    %c0_i32_386 = arith.constant 0 : i32
    %c0_i32_387 = arith.constant 0 : i32
    %378 = tpu.memref_slice %arg4[%c0_i32_382, %c0_i32_386, %c0_i32_387] : memref<2x8x128xf32, #tpu.memory_space<vmem>> -> memref<1x1x128xf32, #tpu.memory_space<vmem>>
    %379 = tpu.memref_squeeze %378 : memref<1x1x128xf32, #tpu.memory_space<vmem>> -> memref<1x128xf32, #tpu.memory_space<vmem>>
    %380 = tpu.memref_slice %arg5[%c0_i32_383, %c0_i32_384] : memref<2x8x!tpu.dma_semaphore, #tpu.memory_space<semaphore_mem>> -> memref<1x1x!tpu.dma_semaphore, #tpu.memory_space<semaphore_mem>>
    %381 = tpu.memref_squeeze %380 : memref<1x1x!tpu.dma_semaphore, #tpu.memory_space<semaphore_mem>> -> memref<!tpu.dma_semaphore, #tpu.memory_space<semaphore_mem>>
    tpu.enqueue_dma source(%377 : memref<1x128xf32, #tpu.memory_space<any>>) target(%379 : memref<1x128xf32, #tpu.memory_space<vmem>>) target_semaphore(%381 : memref<!tpu.dma_semaphore, #tpu.memory_space<semaphore_mem>>)
    %382 = arith.index_cast %374 : i32 to index
    %c1_388 = arith.constant 1 : index
    %383 = memref.load %arg1[%382, %c1_388] : memref<8x8xi32, #tpu.memory_space<smem>>
    %c0_i32_389 = arith.constant 0 : i32
    %c0_i32_390 = arith.constant 0 : i32
    %c1_i32_391 = arith.constant 1 : i32
    %c0_i32_392 = arith.constant 0 : i32
    %384 = tpu.memref_slice %arg2[%383, %c0_i32_392] : memref<1024x128xf32, #tpu.memory_space<any>> -> memref<1x128xf32, #tpu.memory_space<any>>
    %c1_i32_393 = arith.constant 1 : i32
    %c0_i32_394 = arith.constant 0 : i32
    %385 = tpu.memref_slice %arg4[%c0_i32_389, %c1_i32_393, %c0_i32_394] : memref<2x8x128xf32, #tpu.memory_space<vmem>> -> memref<1x1x128xf32, #tpu.memory_space<vmem>>
    %386 = tpu.memref_squeeze %385 : memref<1x1x128xf32, #tpu.memory_space<vmem>> -> memref<1x128xf32, #tpu.memory_space<vmem>>
    %387 = tpu.memref_slice %arg5[%c0_i32_390, %c1_i32_391] : memref<2x8x!tpu.dma_semaphore, #tpu.memory_space<semaphore_mem>> -> memref<1x1x!tpu.dma_semaphore, #tpu.memory_space<semaphore_mem>>
    %388 = tpu.memref_squeeze %387 : memref<1x1x!tpu.dma_semaphore, #tpu.memory_space<semaphore_mem>> -> memref<!tpu.dma_semaphore, #tpu.memory_space<semaphore_mem>>
    tpu.enqueue_dma source(%384 : memref<1x128xf32, #tpu.memory_space<any>>) target(%386 : memref<1x128xf32, #tpu.memory_space<vmem>>) target_semaphore(%388 : memref<!tpu.dma_semaphore, #tpu.memory_space<semaphore_mem>>)
    %389 = arith.index_cast %374 : i32 to index
    %c2_395 = arith.constant 2 : index
    %390 = memref.load %arg1[%389, %c2_395] : memref<8x8xi32, #tpu.memory_space<smem>>
    %c0_i32_396 = arith.constant 0 : i32
    %c0_i32_397 = arith.constant 0 : i32
    %c2_i32_398 = arith.constant 2 : i32
    %c0_i32_399 = arith.constant 0 : i32
    %391 = tpu.memref_slice %arg2[%390, %c0_i32_399] : memref<1024x128xf32, #tpu.memory_space<any>> -> memref<1x128xf32, #tpu.memory_space<any>>
    %c2_i32_400 = arith.constant 2 : i32
    %c0_i32_401 = arith.constant 0 : i32
    %392 = tpu.memref_slice %arg4[%c0_i32_396, %c2_i32_400, %c0_i32_401] : memref<2x8x128xf32, #tpu.memory_space<vmem>> -> memref<1x1x128xf32, #tpu.memory_space<vmem>>
    %393 = tpu.memref_squeeze %392 : memref<1x1x128xf32, #tpu.memory_space<vmem>> -> memref<1x128xf32, #tpu.memory_space<vmem>>
    %394 = tpu.memref_slice %arg5[%c0_i32_397, %c2_i32_398] : memref<2x8x!tpu.dma_semaphore, #tpu.memory_space<semaphore_mem>> -> memref<1x1x!tpu.dma_semaphore, #tpu.memory_space<semaphore_mem>>
    %395 = tpu.memref_squeeze %394 : memref<1x1x!tpu.dma_semaphore, #tpu.memory_space<semaphore_mem>> -> memref<!tpu.dma_semaphore, #tpu.memory_space<semaphore_mem>>
    tpu.enqueue_dma source(%391 : memref<1x128xf32, #tpu.memory_space<any>>) target(%393 : memref<1x128xf32, #tpu.memory_space<vmem>>) target_semaphore(%395 : memref<!tpu.dma_semaphore, #tpu.memory_space<semaphore_mem>>)
    %396 = arith.index_cast %374 : i32 to index
    %c3_402 = arith.constant 3 : index
    %397 = memref.load %arg1[%396, %c3_402] : memref<8x8xi32, #tpu.memory_space<smem>>
    %c0_i32_403 = arith.constant 0 : i32
    %c0_i32_404 = arith.constant 0 : i32
    %c3_i32_405 = arith.constant 3 : i32
    %c0_i32_406 = arith.constant 0 : i32
    %398 = tpu.memref_slice %arg2[%397, %c0_i32_406] : memref<1024x128xf32, #tpu.memory_space<any>> -> memref<1x128xf32, #tpu.memory_space<any>>
    %c3_i32_407 = arith.constant 3 : i32
    %c0_i32_408 = arith.constant 0 : i32
    %399 = tpu.memref_slice %arg4[%c0_i32_403, %c3_i32_407, %c0_i32_408] : memref<2x8x128xf32, #tpu.memory_space<vmem>> -> memref<1x1x128xf32, #tpu.memory_space<vmem>>
    %400 = tpu.memref_squeeze %399 : memref<1x1x128xf32, #tpu.memory_space<vmem>> -> memref<1x128xf32, #tpu.memory_space<vmem>>
    %401 = tpu.memref_slice %arg5[%c0_i32_404, %c3_i32_405] : memref<2x8x!tpu.dma_semaphore, #tpu.memory_space<semaphore_mem>> -> memref<1x1x!tpu.dma_semaphore, #tpu.memory_space<semaphore_mem>>
    %402 = tpu.memref_squeeze %401 : memref<1x1x!tpu.dma_semaphore, #tpu.memory_space<semaphore_mem>> -> memref<!tpu.dma_semaphore, #tpu.memory_space<semaphore_mem>>
    tpu.enqueue_dma source(%398 : memref<1x128xf32, #tpu.memory_space<any>>) target(%400 : memref<1x128xf32, #tpu.memory_space<vmem>>) target_semaphore(%402 : memref<!tpu.dma_semaphore, #tpu.memory_space<semaphore_mem>>)
    %403 = arith.index_cast %374 : i32 to index
    %c4_409 = arith.constant 4 : index
    %404 = memref.load %arg1[%403, %c4_409] : memref<8x8xi32, #tpu.memory_space<smem>>
    %c0_i32_410 = arith.constant 0 : i32
    %c0_i32_411 = arith.constant 0 : i32
    %c4_i32_412 = arith.constant 4 : i32
    %c0_i32_413 = arith.constant 0 : i32
    %405 = tpu.memref_slice %arg2[%404, %c0_i32_413] : memref<1024x128xf32, #tpu.memory_space<any>> -> memref<1x128xf32, #tpu.memory_space<any>>
    %c4_i32_414 = arith.constant 4 : i32
    %c0_i32_415 = arith.constant 0 : i32
    %406 = tpu.memref_slice %arg4[%c0_i32_410, %c4_i32_414, %c0_i32_415] : memref<2x8x128xf32, #tpu.memory_space<vmem>> -> memref<1x1x128xf32, #tpu.memory_space<vmem>>
    %407 = tpu.memref_squeeze %406 : memref<1x1x128xf32, #tpu.memory_space<vmem>> -> memref<1x128xf32, #tpu.memory_space<vmem>>
    %408 = tpu.memref_slice %arg5[%c0_i32_411, %c4_i32_412] : memref<2x8x!tpu.dma_semaphore, #tpu.memory_space<semaphore_mem>> -> memref<1x1x!tpu.dma_semaphore, #tpu.memory_space<semaphore_mem>>
    %409 = tpu.memref_squeeze %408 : memref<1x1x!tpu.dma_semaphore, #tpu.memory_space<semaphore_mem>> -> memref<!tpu.dma_semaphore, #tpu.memory_space<semaphore_mem>>
    tpu.enqueue_dma source(%405 : memref<1x128xf32, #tpu.memory_space<any>>) target(%407 : memref<1x128xf32, #tpu.memory_space<vmem>>) target_semaphore(%409 : memref<!tpu.dma_semaphore, #tpu.memory_space<semaphore_mem>>)
    %410 = arith.index_cast %374 : i32 to index
    %c5_416 = arith.constant 5 : index
    %411 = memref.load %arg1[%410, %c5_416] : memref<8x8xi32, #tpu.memory_space<smem>>
    %c0_i32_417 = arith.constant 0 : i32
    %c0_i32_418 = arith.constant 0 : i32
    %c5_i32_419 = arith.constant 5 : i32
    %c0_i32_420 = arith.constant 0 : i32
    %412 = tpu.memref_slice %arg2[%411, %c0_i32_420] : memref<1024x128xf32, #tpu.memory_space<any>> -> memref<1x128xf32, #tpu.memory_space<any>>
    %c5_i32_421 = arith.constant 5 : i32
    %c0_i32_422 = arith.constant 0 : i32
    %413 = tpu.memref_slice %arg4[%c0_i32_417, %c5_i32_421, %c0_i32_422] : memref<2x8x128xf32, #tpu.memory_space<vmem>> -> memref<1x1x128xf32, #tpu.memory_space<vmem>>
    %414 = tpu.memref_squeeze %413 : memref<1x1x128xf32, #tpu.memory_space<vmem>> -> memref<1x128xf32, #tpu.memory_space<vmem>>
    %415 = tpu.memref_slice %arg5[%c0_i32_418, %c5_i32_419] : memref<2x8x!tpu.dma_semaphore, #tpu.memory_space<semaphore_mem>> -> memref<1x1x!tpu.dma_semaphore, #tpu.memory_space<semaphore_mem>>
    %416 = tpu.memref_squeeze %415 : memref<1x1x!tpu.dma_semaphore, #tpu.memory_space<semaphore_mem>> -> memref<!tpu.dma_semaphore, #tpu.memory_space<semaphore_mem>>
    tpu.enqueue_dma source(%412 : memref<1x128xf32, #tpu.memory_space<any>>) target(%414 : memref<1x128xf32, #tpu.memory_space<vmem>>) target_semaphore(%416 : memref<!tpu.dma_semaphore, #tpu.memory_space<semaphore_mem>>)
    %417 = arith.index_cast %374 : i32 to index
    %c6_423 = arith.constant 6 : index
    %418 = memref.load %arg1[%417, %c6_423] : memref<8x8xi32, #tpu.memory_space<smem>>
    %c0_i32_424 = arith.constant 0 : i32
    %c0_i32_425 = arith.constant 0 : i32
    %c6_i32_426 = arith.constant 6 : i32
    %c0_i32_427 = arith.constant 0 : i32
    %419 = tpu.memref_slice %arg2[%418, %c0_i32_427] : memref<1024x128xf32, #tpu.memory_space<any>> -> memref<1x128xf32, #tpu.memory_space<any>>
    %c6_i32_428 = arith.constant 6 : i32
    %c0_i32_429 = arith.constant 0 : i32
    %420 = tpu.memref_slice %arg4[%c0_i32_424, %c6_i32_428, %c0_i32_429] : memref<2x8x128xf32, #tpu.memory_space<vmem>> -> memref<1x1x128xf32, #tpu.memory_space<vmem>>
    %421 = tpu.memref_squeeze %420 : memref<1x1x128xf32, #tpu.memory_space<vmem>> -> memref<1x128xf32, #tpu.memory_space<vmem>>
    %422 = tpu.memref_slice %arg5[%c0_i32_425, %c6_i32_426] : memref<2x8x!tpu.dma_semaphore, #tpu.memory_space<semaphore_mem>> -> memref<1x1x!tpu.dma_semaphore, #tpu.memory_space<semaphore_mem>>
    %423 = tpu.memref_squeeze %422 : memref<1x1x!tpu.dma_semaphore, #tpu.memory_space<semaphore_mem>> -> memref<!tpu.dma_semaphore, #tpu.memory_space<semaphore_mem>>
    tpu.enqueue_dma source(%419 : memref<1x128xf32, #tpu.memory_space<any>>) target(%421 : memref<1x128xf32, #tpu.memory_space<vmem>>) target_semaphore(%423 : memref<!tpu.dma_semaphore, #tpu.memory_space<semaphore_mem>>)
    %424 = arith.index_cast %374 : i32 to index
    %c7_430 = arith.constant 7 : index
    %425 = memref.load %arg1[%424, %c7_430] : memref<8x8xi32, #tpu.memory_space<smem>>
    %c0_i32_431 = arith.constant 0 : i32
    %c0_i32_432 = arith.constant 0 : i32
    %c7_i32_433 = arith.constant 7 : i32
    %c0_i32_434 = arith.constant 0 : i32
    %426 = tpu.memref_slice %arg2[%425, %c0_i32_434] : memref<1024x128xf32, #tpu.memory_space<any>> -> memref<1x128xf32, #tpu.memory_space<any>>
    %c7_i32_435 = arith.constant 7 : i32
    %c0_i32_436 = arith.constant 0 : i32
    %427 = tpu.memref_slice %arg4[%c0_i32_431, %c7_i32_435, %c0_i32_436] : memref<2x8x128xf32, #tpu.memory_space<vmem>> -> memref<1x1x128xf32, #tpu.memory_space<vmem>>
    %428 = tpu.memref_squeeze %427 : memref<1x1x128xf32, #tpu.memory_space<vmem>> -> memref<1x128xf32, #tpu.memory_space<vmem>>
    %429 = tpu.memref_slice %arg5[%c0_i32_432, %c7_i32_433] : memref<2x8x!tpu.dma_semaphore, #tpu.memory_space<semaphore_mem>> -> memref<1x1x!tpu.dma_semaphore, #tpu.memory_space<semaphore_mem>>
    %430 = tpu.memref_squeeze %429 : memref<1x1x!tpu.dma_semaphore, #tpu.memory_space<semaphore_mem>> -> memref<!tpu.dma_semaphore, #tpu.memory_space<semaphore_mem>>
    tpu.enqueue_dma source(%426 : memref<1x128xf32, #tpu.memory_space<any>>) target(%428 : memref<1x128xf32, #tpu.memory_space<vmem>>) target_semaphore(%430 : memref<!tpu.dma_semaphore, #tpu.memory_space<semaphore_mem>>)
    %c1_i32_437 = arith.constant 1 : i32
    %c1_i32_438 = arith.constant 1 : i32
    %c0_i32_439 = arith.constant 0 : i32
    %c0_i32_440 = arith.constant 0 : i32
    %431 = tpu.memref_slice %arg2[%271, %c0_i32_440] : memref<1024x128xf32, #tpu.memory_space<any>> -> memref<1x128xf32, #tpu.memory_space<any>>
    %c0_i32_441 = arith.constant 0 : i32
    %c0_i32_442 = arith.constant 0 : i32
    %432 = tpu.memref_slice %arg4[%c1_i32_437, %c0_i32_441, %c0_i32_442] : memref<2x8x128xf32, #tpu.memory_space<vmem>> -> memref<1x1x128xf32, #tpu.memory_space<vmem>>
    %433 = tpu.memref_squeeze %432 : memref<1x1x128xf32, #tpu.memory_space<vmem>> -> memref<1x128xf32, #tpu.memory_space<vmem>>
    %434 = tpu.memref_slice %arg5[%c1_i32_438, %c0_i32_439] : memref<2x8x!tpu.dma_semaphore, #tpu.memory_space<semaphore_mem>> -> memref<1x1x!tpu.dma_semaphore, #tpu.memory_space<semaphore_mem>>
    %435 = tpu.memref_squeeze %434 : memref<1x1x!tpu.dma_semaphore, #tpu.memory_space<semaphore_mem>> -> memref<!tpu.dma_semaphore, #tpu.memory_space<semaphore_mem>>
    tpu.wait_dma2 semaphore(%435 : memref<!tpu.dma_semaphore, #tpu.memory_space<semaphore_mem>>) src(%431 : memref<1x128xf32, #tpu.memory_space<any>>) dst(%433 : memref<1x128xf32, #tpu.memory_space<vmem>>)
    %c1_i32_443 = arith.constant 1 : i32
    %c1_i32_444 = arith.constant 1 : i32
    %c1_i32_445 = arith.constant 1 : i32
    %c0_i32_446 = arith.constant 0 : i32
    %436 = tpu.memref_slice %arg2[%278, %c0_i32_446] : memref<1024x128xf32, #tpu.memory_space<any>> -> memref<1x128xf32, #tpu.memory_space<any>>
    %c1_i32_447 = arith.constant 1 : i32
    %c0_i32_448 = arith.constant 0 : i32
    %437 = tpu.memref_slice %arg4[%c1_i32_443, %c1_i32_447, %c0_i32_448] : memref<2x8x128xf32, #tpu.memory_space<vmem>> -> memref<1x1x128xf32, #tpu.memory_space<vmem>>
    %438 = tpu.memref_squeeze %437 : memref<1x1x128xf32, #tpu.memory_space<vmem>> -> memref<1x128xf32, #tpu.memory_space<vmem>>
    %439 = tpu.memref_slice %arg5[%c1_i32_444, %c1_i32_445] : memref<2x8x!tpu.dma_semaphore, #tpu.memory_space<semaphore_mem>> -> memref<1x1x!tpu.dma_semaphore, #tpu.memory_space<semaphore_mem>>
    %440 = tpu.memref_squeeze %439 : memref<1x1x!tpu.dma_semaphore, #tpu.memory_space<semaphore_mem>> -> memref<!tpu.dma_semaphore, #tpu.memory_space<semaphore_mem>>
    tpu.wait_dma2 semaphore(%440 : memref<!tpu.dma_semaphore, #tpu.memory_space<semaphore_mem>>) src(%436 : memref<1x128xf32, #tpu.memory_space<any>>) dst(%438 : memref<1x128xf32, #tpu.memory_space<vmem>>)
    %c1_i32_449 = arith.constant 1 : i32
    %c1_i32_450 = arith.constant 1 : i32
    %c2_i32_451 = arith.constant 2 : i32
    %c0_i32_452 = arith.constant 0 : i32
    %441 = tpu.memref_slice %arg2[%285, %c0_i32_452] : memref<1024x128xf32, #tpu.memory_space<any>> -> memref<1x128xf32, #tpu.memory_space<any>>
    %c2_i32_453 = arith.constant 2 : i32
    %c0_i32_454 = arith.constant 0 : i32
    %442 = tpu.memref_slice %arg4[%c1_i32_449, %c2_i32_453, %c0_i32_454] : memref<2x8x128xf32, #tpu.memory_space<vmem>> -> memref<1x1x128xf32, #tpu.memory_space<vmem>>
    %443 = tpu.memref_squeeze %442 : memref<1x1x128xf32, #tpu.memory_space<vmem>> -> memref<1x128xf32, #tpu.memory_space<vmem>>
    %444 = tpu.memref_slice %arg5[%c1_i32_450, %c2_i32_451] : memref<2x8x!tpu.dma_semaphore, #tpu.memory_space<semaphore_mem>> -> memref<1x1x!tpu.dma_semaphore, #tpu.memory_space<semaphore_mem>>
    %445 = tpu.memref_squeeze %444 : memref<1x1x!tpu.dma_semaphore, #tpu.memory_space<semaphore_mem>> -> memref<!tpu.dma_semaphore, #tpu.memory_space<semaphore_mem>>
    tpu.wait_dma2 semaphore(%445 : memref<!tpu.dma_semaphore, #tpu.memory_space<semaphore_mem>>) src(%441 : memref<1x128xf32, #tpu.memory_space<any>>) dst(%443 : memref<1x128xf32, #tpu.memory_space<vmem>>)
    %c1_i32_455 = arith.constant 1 : i32
    %c1_i32_456 = arith.constant 1 : i32
    %c3_i32_457 = arith.constant 3 : i32
    %c0_i32_458 = arith.constant 0 : i32
    %446 = tpu.memref_slice %arg2[%292, %c0_i32_458] : memref<1024x128xf32, #tpu.memory_space<any>> -> memref<1x128xf32, #tpu.memory_space<any>>
    %c3_i32_459 = arith.constant 3 : i32
    %c0_i32_460 = arith.constant 0 : i32
    %447 = tpu.memref_slice %arg4[%c1_i32_455, %c3_i32_459, %c0_i32_460] : memref<2x8x128xf32, #tpu.memory_space<vmem>> -> memref<1x1x128xf32, #tpu.memory_space<vmem>>
    %448 = tpu.memref_squeeze %447 : memref<1x1x128xf32, #tpu.memory_space<vmem>> -> memref<1x128xf32, #tpu.memory_space<vmem>>
    %449 = tpu.memref_slice %arg5[%c1_i32_456, %c3_i32_457] : memref<2x8x!tpu.dma_semaphore, #tpu.memory_space<semaphore_mem>> -> memref<1x1x!tpu.dma_semaphore, #tpu.memory_space<semaphore_mem>>
    %450 = tpu.memref_squeeze %449 : memref<1x1x!tpu.dma_semaphore, #tpu.memory_space<semaphore_mem>> -> memref<!tpu.dma_semaphore, #tpu.memory_space<semaphore_mem>>
    tpu.wait_dma2 semaphore(%450 : memref<!tpu.dma_semaphore, #tpu.memory_space<semaphore_mem>>) src(%446 : memref<1x128xf32, #tpu.memory_space<any>>) dst(%448 : memref<1x128xf32, #tpu.memory_space<vmem>>)
    %c1_i32_461 = arith.constant 1 : i32
    %c1_i32_462 = arith.constant 1 : i32
    %c4_i32_463 = arith.constant 4 : i32
    %c0_i32_464 = arith.constant 0 : i32
    %451 = tpu.memref_slice %arg2[%299, %c0_i32_464] : memref<1024x128xf32, #tpu.memory_space<any>> -> memref<1x128xf32, #tpu.memory_space<any>>
    %c4_i32_465 = arith.constant 4 : i32
    %c0_i32_466 = arith.constant 0 : i32
    %452 = tpu.memref_slice %arg4[%c1_i32_461, %c4_i32_465, %c0_i32_466] : memref<2x8x128xf32, #tpu.memory_space<vmem>> -> memref<1x1x128xf32, #tpu.memory_space<vmem>>
    %453 = tpu.memref_squeeze %452 : memref<1x1x128xf32, #tpu.memory_space<vmem>> -> memref<1x128xf32, #tpu.memory_space<vmem>>
    %454 = tpu.memref_slice %arg5[%c1_i32_462, %c4_i32_463] : memref<2x8x!tpu.dma_semaphore, #tpu.memory_space<semaphore_mem>> -> memref<1x1x!tpu.dma_semaphore, #tpu.memory_space<semaphore_mem>>
    %455 = tpu.memref_squeeze %454 : memref<1x1x!tpu.dma_semaphore, #tpu.memory_space<semaphore_mem>> -> memref<!tpu.dma_semaphore, #tpu.memory_space<semaphore_mem>>
    tpu.wait_dma2 semaphore(%455 : memref<!tpu.dma_semaphore, #tpu.memory_space<semaphore_mem>>) src(%451 : memref<1x128xf32, #tpu.memory_space<any>>) dst(%453 : memref<1x128xf32, #tpu.memory_space<vmem>>)
    %c1_i32_467 = arith.constant 1 : i32
    %c1_i32_468 = arith.constant 1 : i32
    %c5_i32_469 = arith.constant 5 : i32
    %c0_i32_470 = arith.constant 0 : i32
    %456 = tpu.memref_slice %arg2[%306, %c0_i32_470] : memref<1024x128xf32, #tpu.memory_space<any>> -> memref<1x128xf32, #tpu.memory_space<any>>
    %c5_i32_471 = arith.constant 5 : i32
    %c0_i32_472 = arith.constant 0 : i32
    %457 = tpu.memref_slice %arg4[%c1_i32_467, %c5_i32_471, %c0_i32_472] : memref<2x8x128xf32, #tpu.memory_space<vmem>> -> memref<1x1x128xf32, #tpu.memory_space<vmem>>
    %458 = tpu.memref_squeeze %457 : memref<1x1x128xf32, #tpu.memory_space<vmem>> -> memref<1x128xf32, #tpu.memory_space<vmem>>
    %459 = tpu.memref_slice %arg5[%c1_i32_468, %c5_i32_469] : memref<2x8x!tpu.dma_semaphore, #tpu.memory_space<semaphore_mem>> -> memref<1x1x!tpu.dma_semaphore, #tpu.memory_space<semaphore_mem>>
    %460 = tpu.memref_squeeze %459 : memref<1x1x!tpu.dma_semaphore, #tpu.memory_space<semaphore_mem>> -> memref<!tpu.dma_semaphore, #tpu.memory_space<semaphore_mem>>
    tpu.wait_dma2 semaphore(%460 : memref<!tpu.dma_semaphore, #tpu.memory_space<semaphore_mem>>) src(%456 : memref<1x128xf32, #tpu.memory_space<any>>) dst(%458 : memref<1x128xf32, #tpu.memory_space<vmem>>)
    %c1_i32_473 = arith.constant 1 : i32
    %c1_i32_474 = arith.constant 1 : i32
    %c6_i32_475 = arith.constant 6 : i32
    %c0_i32_476 = arith.constant 0 : i32
    %461 = tpu.memref_slice %arg2[%313, %c0_i32_476] : memref<1024x128xf32, #tpu.memory_space<any>> -> memref<1x128xf32, #tpu.memory_space<any>>
    %c6_i32_477 = arith.constant 6 : i32
    %c0_i32_478 = arith.constant 0 : i32
    %462 = tpu.memref_slice %arg4[%c1_i32_473, %c6_i32_477, %c0_i32_478] : memref<2x8x128xf32, #tpu.memory_space<vmem>> -> memref<1x1x128xf32, #tpu.memory_space<vmem>>
    %463 = tpu.memref_squeeze %462 : memref<1x1x128xf32, #tpu.memory_space<vmem>> -> memref<1x128xf32, #tpu.memory_space<vmem>>
    %464 = tpu.memref_slice %arg5[%c1_i32_474, %c6_i32_475] : memref<2x8x!tpu.dma_semaphore, #tpu.memory_space<semaphore_mem>> -> memref<1x1x!tpu.dma_semaphore, #tpu.memory_space<semaphore_mem>>
    %465 = tpu.memref_squeeze %464 : memref<1x1x!tpu.dma_semaphore, #tpu.memory_space<semaphore_mem>> -> memref<!tpu.dma_semaphore, #tpu.memory_space<semaphore_mem>>
    tpu.wait_dma2 semaphore(%465 : memref<!tpu.dma_semaphore, #tpu.memory_space<semaphore_mem>>) src(%461 : memref<1x128xf32, #tpu.memory_space<any>>) dst(%463 : memref<1x128xf32, #tpu.memory_space<vmem>>)
    %c1_i32_479 = arith.constant 1 : i32
    %c1_i32_480 = arith.constant 1 : i32
    %c7_i32_481 = arith.constant 7 : i32
    %c0_i32_482 = arith.constant 0 : i32
    %466 = tpu.memref_slice %arg2[%320, %c0_i32_482] : memref<1024x128xf32, #tpu.memory_space<any>> -> memref<1x128xf32, #tpu.memory_space<any>>
    %c7_i32_483 = arith.constant 7 : i32
    %c0_i32_484 = arith.constant 0 : i32
    %467 = tpu.memref_slice %arg4[%c1_i32_479, %c7_i32_483, %c0_i32_484] : memref<2x8x128xf32, #tpu.memory_space<vmem>> -> memref<1x1x128xf32, #tpu.memory_space<vmem>>
    %468 = tpu.memref_squeeze %467 : memref<1x1x128xf32, #tpu.memory_space<vmem>> -> memref<1x128xf32, #tpu.memory_space<vmem>>
    %469 = tpu.memref_slice %arg5[%c1_i32_480, %c7_i32_481] : memref<2x8x!tpu.dma_semaphore, #tpu.memory_space<semaphore_mem>> -> memref<1x1x!tpu.dma_semaphore, #tpu.memory_space<semaphore_mem>>
    %470 = tpu.memref_squeeze %469 : memref<1x1x!tpu.dma_semaphore, #tpu.memory_space<semaphore_mem>> -> memref<!tpu.dma_semaphore, #tpu.memory_space<semaphore_mem>>
    tpu.wait_dma2 semaphore(%470 : memref<!tpu.dma_semaphore, #tpu.memory_space<semaphore_mem>>) src(%466 : memref<1x128xf32, #tpu.memory_space<any>>) dst(%468 : memref<1x128xf32, #tpu.memory_space<vmem>>)
    %c1_485 = arith.constant 1 : index
    %c0_486 = arith.constant 0 : index
    %c0_487 = arith.constant 0 : index
    %471 = vector.load %arg4[%c1_485, %c0_486, %c0_487] : memref<2x8x128xf32, #tpu.memory_space<vmem>>, vector<1x8x128xf32>
    %472 = vector.shape_cast %471 : vector<1x8x128xf32> to vector<8x128xf32>
    %cst_488 = arith.constant dense<0.000000e+00> : vector<128xf32>
    %473 = vector.multi_reduction <add>, %472, %cst_488 [0] : vector<8x128xf32> to vector<128xf32>
    %474 = vector.shape_cast %473 : vector<128xf32> to vector<1x128xf32>
    %cst_489 = arith.constant 1.250000e-01 : f32
    %475 = vector.broadcast %cst_489 : f32 to vector<1x128xf32>
    %476 = arith.mulf %474, %475 : vector<1x128xf32>
    %c3_490 = arith.constant 3 : index
    %c0_491 = arith.constant 0 : index
    %477 = vector.load %arg3[%c3_490, %c0_491] : memref<8x128xf32, #tpu.memory_space<vmem>>, vector<1x128xf32>
    tpu.vector_store %arg3[%c3_490, %c0_491], %476 {strides = array<i32>} : memref<8x128xf32, #tpu.memory_space<vmem>>, vector<1x128xf32>,
    %c8_i32_492 = arith.constant 8 : i32
    %478 = arith.muli %arg0, %c8_i32_492 : i32
    %c5_i32_493 = arith.constant 5 : i32
    %479 = arith.addi %478, %c5_i32_493 : i32
    %480 = arith.index_cast %479 : i32 to index
    %c0_494 = arith.constant 0 : index
    %481 = memref.load %arg1[%480, %c0_494] : memref<8x8xi32, #tpu.memory_space<smem>>
    %c1_i32_495 = arith.constant 1 : i32
    %c1_i32_496 = arith.constant 1 : i32
    %c0_i32_497 = arith.constant 0 : i32
    %c0_i32_498 = arith.constant 0 : i32
    %482 = tpu.memref_slice %arg2[%481, %c0_i32_498] : memref<1024x128xf32, #tpu.memory_space<any>> -> memref<1x128xf32, #tpu.memory_space<any>>
    %c0_i32_499 = arith.constant 0 : i32
    %c0_i32_500 = arith.constant 0 : i32
    %483 = tpu.memref_slice %arg4[%c1_i32_495, %c0_i32_499, %c0_i32_500] : memref<2x8x128xf32, #tpu.memory_space<vmem>> -> memref<1x1x128xf32, #tpu.memory_space<vmem>>
    %484 = tpu.memref_squeeze %483 : memref<1x1x128xf32, #tpu.memory_space<vmem>> -> memref<1x128xf32, #tpu.memory_space<vmem>>
    %485 = tpu.memref_slice %arg5[%c1_i32_496, %c0_i32_497] : memref<2x8x!tpu.dma_semaphore, #tpu.memory_space<semaphore_mem>> -> memref<1x1x!tpu.dma_semaphore, #tpu.memory_space<semaphore_mem>>
    %486 = tpu.memref_squeeze %485 : memref<1x1x!tpu.dma_semaphore, #tpu.memory_space<semaphore_mem>> -> memref<!tpu.dma_semaphore, #tpu.memory_space<semaphore_mem>>
    tpu.enqueue_dma source(%482 : memref<1x128xf32, #tpu.memory_space<any>>) target(%484 : memref<1x128xf32, #tpu.memory_space<vmem>>) target_semaphore(%486 : memref<!tpu.dma_semaphore, #tpu.memory_space<semaphore_mem>>)
    %487 = arith.index_cast %479 : i32 to index
    %c1_501 = arith.constant 1 : index
    %488 = memref.load %arg1[%487, %c1_501] : memref<8x8xi32, #tpu.memory_space<smem>>
    %c1_i32_502 = arith.constant 1 : i32
    %c1_i32_503 = arith.constant 1 : i32
    %c1_i32_504 = arith.constant 1 : i32
    %c0_i32_505 = arith.constant 0 : i32
    %489 = tpu.memref_slice %arg2[%488, %c0_i32_505] : memref<1024x128xf32, #tpu.memory_space<any>> -> memref<1x128xf32, #tpu.memory_space<any>>
    %c1_i32_506 = arith.constant 1 : i32
    %c0_i32_507 = arith.constant 0 : i32
    %490 = tpu.memref_slice %arg4[%c1_i32_502, %c1_i32_506, %c0_i32_507] : memref<2x8x128xf32, #tpu.memory_space<vmem>> -> memref<1x1x128xf32, #tpu.memory_space<vmem>>
    %491 = tpu.memref_squeeze %490 : memref<1x1x128xf32, #tpu.memory_space<vmem>> -> memref<1x128xf32, #tpu.memory_space<vmem>>
    %492 = tpu.memref_slice %arg5[%c1_i32_503, %c1_i32_504] : memref<2x8x!tpu.dma_semaphore, #tpu.memory_space<semaphore_mem>> -> memref<1x1x!tpu.dma_semaphore, #tpu.memory_space<semaphore_mem>>
    %493 = tpu.memref_squeeze %492 : memref<1x1x!tpu.dma_semaphore, #tpu.memory_space<semaphore_mem>> -> memref<!tpu.dma_semaphore, #tpu.memory_space<semaphore_mem>>
    tpu.enqueue_dma source(%489 : memref<1x128xf32, #tpu.memory_space<any>>) target(%491 : memref<1x128xf32, #tpu.memory_space<vmem>>) target_semaphore(%493 : memref<!tpu.dma_semaphore, #tpu.memory_space<semaphore_mem>>)
    %494 = arith.index_cast %479 : i32 to index
    %c2_508 = arith.constant 2 : index
    %495 = memref.load %arg1[%494, %c2_508] : memref<8x8xi32, #tpu.memory_space<smem>>
    %c1_i32_509 = arith.constant 1 : i32
    %c1_i32_510 = arith.constant 1 : i32
    %c2_i32_511 = arith.constant 2 : i32
    %c0_i32_512 = arith.constant 0 : i32
    %496 = tpu.memref_slice %arg2[%495, %c0_i32_512] : memref<1024x128xf32, #tpu.memory_space<any>> -> memref<1x128xf32, #tpu.memory_space<any>>
    %c2_i32_513 = arith.constant 2 : i32
    %c0_i32_514 = arith.constant 0 : i32
    %497 = tpu.memref_slice %arg4[%c1_i32_509, %c2_i32_513, %c0_i32_514] : memref<2x8x128xf32, #tpu.memory_space<vmem>> -> memref<1x1x128xf32, #tpu.memory_space<vmem>>
    %498 = tpu.memref_squeeze %497 : memref<1x1x128xf32, #tpu.memory_space<vmem>> -> memref<1x128xf32, #tpu.memory_space<vmem>>
    %499 = tpu.memref_slice %arg5[%c1_i32_510, %c2_i32_511] : memref<2x8x!tpu.dma_semaphore, #tpu.memory_space<semaphore_mem>> -> memref<1x1x!tpu.dma_semaphore, #tpu.memory_space<semaphore_mem>>
    %500 = tpu.memref_squeeze %499 : memref<1x1x!tpu.dma_semaphore, #tpu.memory_space<semaphore_mem>> -> memref<!tpu.dma_semaphore, #tpu.memory_space<semaphore_mem>>
    tpu.enqueue_dma source(%496 : memref<1x128xf32, #tpu.memory_space<any>>) target(%498 : memref<1x128xf32, #tpu.memory_space<vmem>>) target_semaphore(%500 : memref<!tpu.dma_semaphore, #tpu.memory_space<semaphore_mem>>)
    %501 = arith.index_cast %479 : i32 to index
    %c3_515 = arith.constant 3 : index
    %502 = memref.load %arg1[%501, %c3_515] : memref<8x8xi32, #tpu.memory_space<smem>>
    %c1_i32_516 = arith.constant 1 : i32
    %c1_i32_517 = arith.constant 1 : i32
    %c3_i32_518 = arith.constant 3 : i32
    %c0_i32_519 = arith.constant 0 : i32
    %503 = tpu.memref_slice %arg2[%502, %c0_i32_519] : memref<1024x128xf32, #tpu.memory_space<any>> -> memref<1x128xf32, #tpu.memory_space<any>>
    %c3_i32_520 = arith.constant 3 : i32
    %c0_i32_521 = arith.constant 0 : i32
    %504 = tpu.memref_slice %arg4[%c1_i32_516, %c3_i32_520, %c0_i32_521] : memref<2x8x128xf32, #tpu.memory_space<vmem>> -> memref<1x1x128xf32, #tpu.memory_space<vmem>>
    %505 = tpu.memref_squeeze %504 : memref<1x1x128xf32, #tpu.memory_space<vmem>> -> memref<1x128xf32, #tpu.memory_space<vmem>>
    %506 = tpu.memref_slice %arg5[%c1_i32_517, %c3_i32_518] : memref<2x8x!tpu.dma_semaphore, #tpu.memory_space<semaphore_mem>> -> memref<1x1x!tpu.dma_semaphore, #tpu.memory_space<semaphore_mem>>
    %507 = tpu.memref_squeeze %506 : memref<1x1x!tpu.dma_semaphore, #tpu.memory_space<semaphore_mem>> -> memref<!tpu.dma_semaphore, #tpu.memory_space<semaphore_mem>>
    tpu.enqueue_dma source(%503 : memref<1x128xf32, #tpu.memory_space<any>>) target(%505 : memref<1x128xf32, #tpu.memory_space<vmem>>) target_semaphore(%507 : memref<!tpu.dma_semaphore, #tpu.memory_space<semaphore_mem>>)
    %508 = arith.index_cast %479 : i32 to index
    %c4_522 = arith.constant 4 : index
    %509 = memref.load %arg1[%508, %c4_522] : memref<8x8xi32, #tpu.memory_space<smem>>
    %c1_i32_523 = arith.constant 1 : i32
    %c1_i32_524 = arith.constant 1 : i32
    %c4_i32_525 = arith.constant 4 : i32
    %c0_i32_526 = arith.constant 0 : i32
    %510 = tpu.memref_slice %arg2[%509, %c0_i32_526] : memref<1024x128xf32, #tpu.memory_space<any>> -> memref<1x128xf32, #tpu.memory_space<any>>
    %c4_i32_527 = arith.constant 4 : i32
    %c0_i32_528 = arith.constant 0 : i32
    %511 = tpu.memref_slice %arg4[%c1_i32_523, %c4_i32_527, %c0_i32_528] : memref<2x8x128xf32, #tpu.memory_space<vmem>> -> memref<1x1x128xf32, #tpu.memory_space<vmem>>
    %512 = tpu.memref_squeeze %511 : memref<1x1x128xf32, #tpu.memory_space<vmem>> -> memref<1x128xf32, #tpu.memory_space<vmem>>
    %513 = tpu.memref_slice %arg5[%c1_i32_524, %c4_i32_525] : memref<2x8x!tpu.dma_semaphore, #tpu.memory_space<semaphore_mem>> -> memref<1x1x!tpu.dma_semaphore, #tpu.memory_space<semaphore_mem>>
    %514 = tpu.memref_squeeze %513 : memref<1x1x!tpu.dma_semaphore, #tpu.memory_space<semaphore_mem>> -> memref<!tpu.dma_semaphore, #tpu.memory_space<semaphore_mem>>
    tpu.enqueue_dma source(%510 : memref<1x128xf32, #tpu.memory_space<any>>) target(%512 : memref<1x128xf32, #tpu.memory_space<vmem>>) target_semaphore(%514 : memref<!tpu.dma_semaphore, #tpu.memory_space<semaphore_mem>>)
    %515 = arith.index_cast %479 : i32 to index
    %c5_529 = arith.constant 5 : index
    %516 = memref.load %arg1[%515, %c5_529] : memref<8x8xi32, #tpu.memory_space<smem>>
    %c1_i32_530 = arith.constant 1 : i32
    %c1_i32_531 = arith.constant 1 : i32
    %c5_i32_532 = arith.constant 5 : i32
    %c0_i32_533 = arith.constant 0 : i32
    %517 = tpu.memref_slice %arg2[%516, %c0_i32_533] : memref<1024x128xf32, #tpu.memory_space<any>> -> memref<1x128xf32, #tpu.memory_space<any>>
    %c5_i32_534 = arith.constant 5 : i32
    %c0_i32_535 = arith.constant 0 : i32
    %518 = tpu.memref_slice %arg4[%c1_i32_530, %c5_i32_534, %c0_i32_535] : memref<2x8x128xf32, #tpu.memory_space<vmem>> -> memref<1x1x128xf32, #tpu.memory_space<vmem>>
    %519 = tpu.memref_squeeze %518 : memref<1x1x128xf32, #tpu.memory_space<vmem>> -> memref<1x128xf32, #tpu.memory_space<vmem>>
    %520 = tpu.memref_slice %arg5[%c1_i32_531, %c5_i32_532] : memref<2x8x!tpu.dma_semaphore, #tpu.memory_space<semaphore_mem>> -> memref<1x1x!tpu.dma_semaphore, #tpu.memory_space<semaphore_mem>>
    %521 = tpu.memref_squeeze %520 : memref<1x1x!tpu.dma_semaphore, #tpu.memory_space<semaphore_mem>> -> memref<!tpu.dma_semaphore, #tpu.memory_space<semaphore_mem>>
    tpu.enqueue_dma source(%517 : memref<1x128xf32, #tpu.memory_space<any>>) target(%519 : memref<1x128xf32, #tpu.memory_space<vmem>>) target_semaphore(%521 : memref<!tpu.dma_semaphore, #tpu.memory_space<semaphore_mem>>)
    %522 = arith.index_cast %479 : i32 to index
    %c6_536 = arith.constant 6 : index
    %523 = memref.load %arg1[%522, %c6_536] : memref<8x8xi32, #tpu.memory_space<smem>>
    %c1_i32_537 = arith.constant 1 : i32
    %c1_i32_538 = arith.constant 1 : i32
    %c6_i32_539 = arith.constant 6 : i32
    %c0_i32_540 = arith.constant 0 : i32
    %524 = tpu.memref_slice %arg2[%523, %c0_i32_540] : memref<1024x128xf32, #tpu.memory_space<any>> -> memref<1x128xf32, #tpu.memory_space<any>>
    %c6_i32_541 = arith.constant 6 : i32
    %c0_i32_542 = arith.constant 0 : i32
    %525 = tpu.memref_slice %arg4[%c1_i32_537, %c6_i32_541, %c0_i32_542] : memref<2x8x128xf32, #tpu.memory_space<vmem>> -> memref<1x1x128xf32, #tpu.memory_space<vmem>>
    %526 = tpu.memref_squeeze %525 : memref<1x1x128xf32, #tpu.memory_space<vmem>> -> memref<1x128xf32, #tpu.memory_space<vmem>>
    %527 = tpu.memref_slice %arg5[%c1_i32_538, %c6_i32_539] : memref<2x8x!tpu.dma_semaphore, #tpu.memory_space<semaphore_mem>> -> memref<1x1x!tpu.dma_semaphore, #tpu.memory_space<semaphore_mem>>
    %528 = tpu.memref_squeeze %527 : memref<1x1x!tpu.dma_semaphore, #tpu.memory_space<semaphore_mem>> -> memref<!tpu.dma_semaphore, #tpu.memory_space<semaphore_mem>>
    tpu.enqueue_dma source(%524 : memref<1x128xf32, #tpu.memory_space<any>>) target(%526 : memref<1x128xf32, #tpu.memory_space<vmem>>) target_semaphore(%528 : memref<!tpu.dma_semaphore, #tpu.memory_space<semaphore_mem>>)
    %529 = arith.index_cast %479 : i32 to index
    %c7_543 = arith.constant 7 : index
    %530 = memref.load %arg1[%529, %c7_543] : memref<8x8xi32, #tpu.memory_space<smem>>
    %c1_i32_544 = arith.constant 1 : i32
    %c1_i32_545 = arith.constant 1 : i32
    %c7_i32_546 = arith.constant 7 : i32
    %c0_i32_547 = arith.constant 0 : i32
    %531 = tpu.memref_slice %arg2[%530, %c0_i32_547] : memref<1024x128xf32, #tpu.memory_space<any>> -> memref<1x128xf32, #tpu.memory_space<any>>
    %c7_i32_548 = arith.constant 7 : i32
    %c0_i32_549 = arith.constant 0 : i32
    %532 = tpu.memref_slice %arg4[%c1_i32_544, %c7_i32_548, %c0_i32_549] : memref<2x8x128xf32, #tpu.memory_space<vmem>> -> memref<1x1x128xf32, #tpu.memory_space<vmem>>
    %533 = tpu.memref_squeeze %532 : memref<1x1x128xf32, #tpu.memory_space<vmem>> -> memref<1x128xf32, #tpu.memory_space<vmem>>
    %534 = tpu.memref_slice %arg5[%c1_i32_545, %c7_i32_546] : memref<2x8x!tpu.dma_semaphore, #tpu.memory_space<semaphore_mem>> -> memref<1x1x!tpu.dma_semaphore, #tpu.memory_space<semaphore_mem>>
    %535 = tpu.memref_squeeze %534 : memref<1x1x!tpu.dma_semaphore, #tpu.memory_space<semaphore_mem>> -> memref<!tpu.dma_semaphore, #tpu.memory_space<semaphore_mem>>
    tpu.enqueue_dma source(%531 : memref<1x128xf32, #tpu.memory_space<any>>) target(%533 : memref<1x128xf32, #tpu.memory_space<vmem>>) target_semaphore(%535 : memref<!tpu.dma_semaphore, #tpu.memory_space<semaphore_mem>>)
    %c0_i32_550 = arith.constant 0 : i32
    %c0_i32_551 = arith.constant 0 : i32
    %c0_i32_552 = arith.constant 0 : i32
    %c0_i32_553 = arith.constant 0 : i32
    %536 = tpu.memref_slice %arg2[%376, %c0_i32_553] : memref<1024x128xf32, #tpu.memory_space<any>> -> memref<1x128xf32, #tpu.memory_space<any>>
    %c0_i32_554 = arith.constant 0 : i32
    %c0_i32_555 = arith.constant 0 : i32
    %537 = tpu.memref_slice %arg4[%c0_i32_550, %c0_i32_554, %c0_i32_555] : memref<2x8x128xf32, #tpu.memory_space<vmem>> -> memref<1x1x128xf32, #tpu.memory_space<vmem>>
    %538 = tpu.memref_squeeze %537 : memref<1x1x128xf32, #tpu.memory_space<vmem>> -> memref<1x128xf32, #tpu.memory_space<vmem>>
    %539 = tpu.memref_slice %arg5[%c0_i32_551, %c0_i32_552] : memref<2x8x!tpu.dma_semaphore, #tpu.memory_space<semaphore_mem>> -> memref<1x1x!tpu.dma_semaphore, #tpu.memory_space<semaphore_mem>>
    %540 = tpu.memref_squeeze %539 : memref<1x1x!tpu.dma_semaphore, #tpu.memory_space<semaphore_mem>> -> memref<!tpu.dma_semaphore, #tpu.memory_space<semaphore_mem>>
    tpu.wait_dma2 semaphore(%540 : memref<!tpu.dma_semaphore, #tpu.memory_space<semaphore_mem>>) src(%536 : memref<1x128xf32, #tpu.memory_space<any>>) dst(%538 : memref<1x128xf32, #tpu.memory_space<vmem>>)
    %c0_i32_556 = arith.constant 0 : i32
    %c0_i32_557 = arith.constant 0 : i32
    %c1_i32_558 = arith.constant 1 : i32
    %c0_i32_559 = arith.constant 0 : i32
    %541 = tpu.memref_slice %arg2[%383, %c0_i32_559] : memref<1024x128xf32, #tpu.memory_space<any>> -> memref<1x128xf32, #tpu.memory_space<any>>
    %c1_i32_560 = arith.constant 1 : i32
    %c0_i32_561 = arith.constant 0 : i32
    %542 = tpu.memref_slice %arg4[%c0_i32_556, %c1_i32_560, %c0_i32_561] : memref<2x8x128xf32, #tpu.memory_space<vmem>> -> memref<1x1x128xf32, #tpu.memory_space<vmem>>
    %543 = tpu.memref_squeeze %542 : memref<1x1x128xf32, #tpu.memory_space<vmem>> -> memref<1x128xf32, #tpu.memory_space<vmem>>
    %544 = tpu.memref_slice %arg5[%c0_i32_557, %c1_i32_558] : memref<2x8x!tpu.dma_semaphore, #tpu.memory_space<semaphore_mem>> -> memref<1x1x!tpu.dma_semaphore, #tpu.memory_space<semaphore_mem>>
    %545 = tpu.memref_squeeze %544 : memref<1x1x!tpu.dma_semaphore, #tpu.memory_space<semaphore_mem>> -> memref<!tpu.dma_semaphore, #tpu.memory_space<semaphore_mem>>
    tpu.wait_dma2 semaphore(%545 : memref<!tpu.dma_semaphore, #tpu.memory_space<semaphore_mem>>) src(%541 : memref<1x128xf32, #tpu.memory_space<any>>) dst(%543 : memref<1x128xf32, #tpu.memory_space<vmem>>)
    %c0_i32_562 = arith.constant 0 : i32
    %c0_i32_563 = arith.constant 0 : i32
    %c2_i32_564 = arith.constant 2 : i32
    %c0_i32_565 = arith.constant 0 : i32
    %546 = tpu.memref_slice %arg2[%390, %c0_i32_565] : memref<1024x128xf32, #tpu.memory_space<any>> -> memref<1x128xf32, #tpu.memory_space<any>>
    %c2_i32_566 = arith.constant 2 : i32
    %c0_i32_567 = arith.constant 0 : i32
    %547 = tpu.memref_slice %arg4[%c0_i32_562, %c2_i32_566, %c0_i32_567] : memref<2x8x128xf32, #tpu.memory_space<vmem>> -> memref<1x1x128xf32, #tpu.memory_space<vmem>>
    %548 = tpu.memref_squeeze %547 : memref<1x1x128xf32, #tpu.memory_space<vmem>> -> memref<1x128xf32, #tpu.memory_space<vmem>>
    %549 = tpu.memref_slice %arg5[%c0_i32_563, %c2_i32_564] : memref<2x8x!tpu.dma_semaphore, #tpu.memory_space<semaphore_mem>> -> memref<1x1x!tpu.dma_semaphore, #tpu.memory_space<semaphore_mem>>
    %550 = tpu.memref_squeeze %549 : memref<1x1x!tpu.dma_semaphore, #tpu.memory_space<semaphore_mem>> -> memref<!tpu.dma_semaphore, #tpu.memory_space<semaphore_mem>>
    tpu.wait_dma2 semaphore(%550 : memref<!tpu.dma_semaphore, #tpu.memory_space<semaphore_mem>>) src(%546 : memref<1x128xf32, #tpu.memory_space<any>>) dst(%548 : memref<1x128xf32, #tpu.memory_space<vmem>>)
    %c0_i32_568 = arith.constant 0 : i32
    %c0_i32_569 = arith.constant 0 : i32
    %c3_i32_570 = arith.constant 3 : i32
    %c0_i32_571 = arith.constant 0 : i32
    %551 = tpu.memref_slice %arg2[%397, %c0_i32_571] : memref<1024x128xf32, #tpu.memory_space<any>> -> memref<1x128xf32, #tpu.memory_space<any>>
    %c3_i32_572 = arith.constant 3 : i32
    %c0_i32_573 = arith.constant 0 : i32
    %552 = tpu.memref_slice %arg4[%c0_i32_568, %c3_i32_572, %c0_i32_573] : memref<2x8x128xf32, #tpu.memory_space<vmem>> -> memref<1x1x128xf32, #tpu.memory_space<vmem>>
    %553 = tpu.memref_squeeze %552 : memref<1x1x128xf32, #tpu.memory_space<vmem>> -> memref<1x128xf32, #tpu.memory_space<vmem>>
    %554 = tpu.memref_slice %arg5[%c0_i32_569, %c3_i32_570] : memref<2x8x!tpu.dma_semaphore, #tpu.memory_space<semaphore_mem>> -> memref<1x1x!tpu.dma_semaphore, #tpu.memory_space<semaphore_mem>>
    %555 = tpu.memref_squeeze %554 : memref<1x1x!tpu.dma_semaphore, #tpu.memory_space<semaphore_mem>> -> memref<!tpu.dma_semaphore, #tpu.memory_space<semaphore_mem>>
    tpu.wait_dma2 semaphore(%555 : memref<!tpu.dma_semaphore, #tpu.memory_space<semaphore_mem>>) src(%551 : memref<1x128xf32, #tpu.memory_space<any>>) dst(%553 : memref<1x128xf32, #tpu.memory_space<vmem>>)
    %c0_i32_574 = arith.constant 0 : i32
    %c0_i32_575 = arith.constant 0 : i32
    %c4_i32_576 = arith.constant 4 : i32
    %c0_i32_577 = arith.constant 0 : i32
    %556 = tpu.memref_slice %arg2[%404, %c0_i32_577] : memref<1024x128xf32, #tpu.memory_space<any>> -> memref<1x128xf32, #tpu.memory_space<any>>
    %c4_i32_578 = arith.constant 4 : i32
    %c0_i32_579 = arith.constant 0 : i32
    %557 = tpu.memref_slice %arg4[%c0_i32_574, %c4_i32_578, %c0_i32_579] : memref<2x8x128xf32, #tpu.memory_space<vmem>> -> memref<1x1x128xf32, #tpu.memory_space<vmem>>
    %558 = tpu.memref_squeeze %557 : memref<1x1x128xf32, #tpu.memory_space<vmem>> -> memref<1x128xf32, #tpu.memory_space<vmem>>
    %559 = tpu.memref_slice %arg5[%c0_i32_575, %c4_i32_576] : memref<2x8x!tpu.dma_semaphore, #tpu.memory_space<semaphore_mem>> -> memref<1x1x!tpu.dma_semaphore, #tpu.memory_space<semaphore_mem>>
    %560 = tpu.memref_squeeze %559 : memref<1x1x!tpu.dma_semaphore, #tpu.memory_space<semaphore_mem>> -> memref<!tpu.dma_semaphore, #tpu.memory_space<semaphore_mem>>
    tpu.wait_dma2 semaphore(%560 : memref<!tpu.dma_semaphore, #tpu.memory_space<semaphore_mem>>) src(%556 : memref<1x128xf32, #tpu.memory_space<any>>) dst(%558 : memref<1x128xf32, #tpu.memory_space<vmem>>)
    %c0_i32_580 = arith.constant 0 : i32
    %c0_i32_581 = arith.constant 0 : i32
    %c5_i32_582 = arith.constant 5 : i32
    %c0_i32_583 = arith.constant 0 : i32
    %561 = tpu.memref_slice %arg2[%411, %c0_i32_583] : memref<1024x128xf32, #tpu.memory_space<any>> -> memref<1x128xf32, #tpu.memory_space<any>>
    %c5_i32_584 = arith.constant 5 : i32
    %c0_i32_585 = arith.constant 0 : i32
    %562 = tpu.memref_slice %arg4[%c0_i32_580, %c5_i32_584, %c0_i32_585] : memref<2x8x128xf32, #tpu.memory_space<vmem>> -> memref<1x1x128xf32, #tpu.memory_space<vmem>>
    %563 = tpu.memref_squeeze %562 : memref<1x1x128xf32, #tpu.memory_space<vmem>> -> memref<1x128xf32, #tpu.memory_space<vmem>>
    %564 = tpu.memref_slice %arg5[%c0_i32_581, %c5_i32_582] : memref<2x8x!tpu.dma_semaphore, #tpu.memory_space<semaphore_mem>> -> memref<1x1x!tpu.dma_semaphore, #tpu.memory_space<semaphore_mem>>
    %565 = tpu.memref_squeeze %564 : memref<1x1x!tpu.dma_semaphore, #tpu.memory_space<semaphore_mem>> -> memref<!tpu.dma_semaphore, #tpu.memory_space<semaphore_mem>>
    tpu.wait_dma2 semaphore(%565 : memref<!tpu.dma_semaphore, #tpu.memory_space<semaphore_mem>>) src(%561 : memref<1x128xf32, #tpu.memory_space<any>>) dst(%563 : memref<1x128xf32, #tpu.memory_space<vmem>>)
    %c0_i32_586 = arith.constant 0 : i32
    %c0_i32_587 = arith.constant 0 : i32
    %c6_i32_588 = arith.constant 6 : i32
    %c0_i32_589 = arith.constant 0 : i32
    %566 = tpu.memref_slice %arg2[%418, %c0_i32_589] : memref<1024x128xf32, #tpu.memory_space<any>> -> memref<1x128xf32, #tpu.memory_space<any>>
    %c6_i32_590 = arith.constant 6 : i32
    %c0_i32_591 = arith.constant 0 : i32
    %567 = tpu.memref_slice %arg4[%c0_i32_586, %c6_i32_590, %c0_i32_591] : memref<2x8x128xf32, #tpu.memory_space<vmem>> -> memref<1x1x128xf32, #tpu.memory_space<vmem>>
    %568 = tpu.memref_squeeze %567 : memref<1x1x128xf32, #tpu.memory_space<vmem>> -> memref<1x128xf32, #tpu.memory_space<vmem>>
    %569 = tpu.memref_slice %arg5[%c0_i32_587, %c6_i32_588] : memref<2x8x!tpu.dma_semaphore, #tpu.memory_space<semaphore_mem>> -> memref<1x1x!tpu.dma_semaphore, #tpu.memory_space<semaphore_mem>>
    %570 = tpu.memref_squeeze %569 : memref<1x1x!tpu.dma_semaphore, #tpu.memory_space<semaphore_mem>> -> memref<!tpu.dma_semaphore, #tpu.memory_space<semaphore_mem>>
    tpu.wait_dma2 semaphore(%570 : memref<!tpu.dma_semaphore, #tpu.memory_space<semaphore_mem>>) src(%566 : memref<1x128xf32, #tpu.memory_space<any>>) dst(%568 : memref<1x128xf32, #tpu.memory_space<vmem>>)
    %c0_i32_592 = arith.constant 0 : i32
    %c0_i32_593 = arith.constant 0 : i32
    %c7_i32_594 = arith.constant 7 : i32
    %c0_i32_595 = arith.constant 0 : i32
    %571 = tpu.memref_slice %arg2[%425, %c0_i32_595] : memref<1024x128xf32, #tpu.memory_space<any>> -> memref<1x128xf32, #tpu.memory_space<any>>
    %c7_i32_596 = arith.constant 7 : i32
    %c0_i32_597 = arith.constant 0 : i32
    %572 = tpu.memref_slice %arg4[%c0_i32_592, %c7_i32_596, %c0_i32_597] : memref<2x8x128xf32, #tpu.memory_space<vmem>> -> memref<1x1x128xf32, #tpu.memory_space<vmem>>
    %573 = tpu.memref_squeeze %572 : memref<1x1x128xf32, #tpu.memory_space<vmem>> -> memref<1x128xf32, #tpu.memory_space<vmem>>
    %574 = tpu.memref_slice %arg5[%c0_i32_593, %c7_i32_594] : memref<2x8x!tpu.dma_semaphore, #tpu.memory_space<semaphore_mem>> -> memref<1x1x!tpu.dma_semaphore, #tpu.memory_space<semaphore_mem>>
    %575 = tpu.memref_squeeze %574 : memref<1x1x!tpu.dma_semaphore, #tpu.memory_space<semaphore_mem>> -> memref<!tpu.dma_semaphore, #tpu.memory_space<semaphore_mem>>
    tpu.wait_dma2 semaphore(%575 : memref<!tpu.dma_semaphore, #tpu.memory_space<semaphore_mem>>) src(%571 : memref<1x128xf32, #tpu.memory_space<any>>) dst(%573 : memref<1x128xf32, #tpu.memory_space<vmem>>)
    %c0_598 = arith.constant 0 : index
    %c0_599 = arith.constant 0 : index
    %c0_600 = arith.constant 0 : index
    %576 = vector.load %arg4[%c0_598, %c0_599, %c0_600] : memref<2x8x128xf32, #tpu.memory_space<vmem>>, vector<1x8x128xf32>
    %577 = vector.shape_cast %576 : vector<1x8x128xf32> to vector<8x128xf32>
    %cst_601 = arith.constant dense<0.000000e+00> : vector<128xf32>
    %578 = vector.multi_reduction <add>, %577, %cst_601 [0] : vector<8x128xf32> to vector<128xf32>
    %579 = vector.shape_cast %578 : vector<128xf32> to vector<1x128xf32>
    %cst_602 = arith.constant 1.250000e-01 : f32
    %580 = vector.broadcast %cst_602 : f32 to vector<1x128xf32>
    %581 = arith.mulf %579, %580 : vector<1x128xf32>
    %c4_603 = arith.constant 4 : index
    %c0_604 = arith.constant 0 : index
    %582 = vector.load %arg3[%c4_603, %c0_604] : memref<8x128xf32, #tpu.memory_space<vmem>>, vector<1x128xf32>
    tpu.vector_store %arg3[%c4_603, %c0_604], %581 {strides = array<i32>} : memref<8x128xf32, #tpu.memory_space<vmem>>, vector<1x128xf32>,
    %c8_i32_605 = arith.constant 8 : i32
    %583 = arith.muli %arg0, %c8_i32_605 : i32
    %c6_i32_606 = arith.constant 6 : i32
    %584 = arith.addi %583, %c6_i32_606 : i32
    %585 = arith.index_cast %584 : i32 to index
    %c0_607 = arith.constant 0 : index
    %586 = memref.load %arg1[%585, %c0_607] : memref<8x8xi32, #tpu.memory_space<smem>>
    %c0_i32_608 = arith.constant 0 : i32
    %c0_i32_609 = arith.constant 0 : i32
    %c0_i32_610 = arith.constant 0 : i32
    %c0_i32_611 = arith.constant 0 : i32
    %587 = tpu.memref_slice %arg2[%586, %c0_i32_611] : memref<1024x128xf32, #tpu.memory_space<any>> -> memref<1x128xf32, #tpu.memory_space<any>>
    %c0_i32_612 = arith.constant 0 : i32
    %c0_i32_613 = arith.constant 0 : i32
    %588 = tpu.memref_slice %arg4[%c0_i32_608, %c0_i32_612, %c0_i32_613] : memref<2x8x128xf32, #tpu.memory_space<vmem>> -> memref<1x1x128xf32, #tpu.memory_space<vmem>>
    %589 = tpu.memref_squeeze %588 : memref<1x1x128xf32, #tpu.memory_space<vmem>> -> memref<1x128xf32, #tpu.memory_space<vmem>>
    %590 = tpu.memref_slice %arg5[%c0_i32_609, %c0_i32_610] : memref<2x8x!tpu.dma_semaphore, #tpu.memory_space<semaphore_mem>> -> memref<1x1x!tpu.dma_semaphore, #tpu.memory_space<semaphore_mem>>
    %591 = tpu.memref_squeeze %590 : memref<1x1x!tpu.dma_semaphore, #tpu.memory_space<semaphore_mem>> -> memref<!tpu.dma_semaphore, #tpu.memory_space<semaphore_mem>>
    tpu.enqueue_dma source(%587 : memref<1x128xf32, #tpu.memory_space<any>>) target(%589 : memref<1x128xf32, #tpu.memory_space<vmem>>) target_semaphore(%591 : memref<!tpu.dma_semaphore, #tpu.memory_space<semaphore_mem>>)
    %592 = arith.index_cast %584 : i32 to index
    %c1_614 = arith.constant 1 : index
    %593 = memref.load %arg1[%592, %c1_614] : memref<8x8xi32, #tpu.memory_space<smem>>
    %c0_i32_615 = arith.constant 0 : i32
    %c0_i32_616 = arith.constant 0 : i32
    %c1_i32_617 = arith.constant 1 : i32
    %c0_i32_618 = arith.constant 0 : i32
    %594 = tpu.memref_slice %arg2[%593, %c0_i32_618] : memref<1024x128xf32, #tpu.memory_space<any>> -> memref<1x128xf32, #tpu.memory_space<any>>
    %c1_i32_619 = arith.constant 1 : i32
    %c0_i32_620 = arith.constant 0 : i32
    %595 = tpu.memref_slice %arg4[%c0_i32_615, %c1_i32_619, %c0_i32_620] : memref<2x8x128xf32, #tpu.memory_space<vmem>> -> memref<1x1x128xf32, #tpu.memory_space<vmem>>
    %596 = tpu.memref_squeeze %595 : memref<1x1x128xf32, #tpu.memory_space<vmem>> -> memref<1x128xf32, #tpu.memory_space<vmem>>
    %597 = tpu.memref_slice %arg5[%c0_i32_616, %c1_i32_617] : memref<2x8x!tpu.dma_semaphore, #tpu.memory_space<semaphore_mem>> -> memref<1x1x!tpu.dma_semaphore, #tpu.memory_space<semaphore_mem>>
    %598 = tpu.memref_squeeze %597 : memref<1x1x!tpu.dma_semaphore, #tpu.memory_space<semaphore_mem>> -> memref<!tpu.dma_semaphore, #tpu.memory_space<semaphore_mem>>
    tpu.enqueue_dma source(%594 : memref<1x128xf32, #tpu.memory_space<any>>) target(%596 : memref<1x128xf32, #tpu.memory_space<vmem>>) target_semaphore(%598 : memref<!tpu.dma_semaphore, #tpu.memory_space<semaphore_mem>>)
    %599 = arith.index_cast %584 : i32 to index
    %c2_621 = arith.constant 2 : index
    %600 = memref.load %arg1[%599, %c2_621] : memref<8x8xi32, #tpu.memory_space<smem>>
    %c0_i32_622 = arith.constant 0 : i32
    %c0_i32_623 = arith.constant 0 : i32
    %c2_i32_624 = arith.constant 2 : i32
    %c0_i32_625 = arith.constant 0 : i32
    %601 = tpu.memref_slice %arg2[%600, %c0_i32_625] : memref<1024x128xf32, #tpu.memory_space<any>> -> memref<1x128xf32, #tpu.memory_space<any>>
    %c2_i32_626 = arith.constant 2 : i32
    %c0_i32_627 = arith.constant 0 : i32
    %602 = tpu.memref_slice %arg4[%c0_i32_622, %c2_i32_626, %c0_i32_627] : memref<2x8x128xf32, #tpu.memory_space<vmem>> -> memref<1x1x128xf32, #tpu.memory_space<vmem>>
    %603 = tpu.memref_squeeze %602 : memref<1x1x128xf32, #tpu.memory_space<vmem>> -> memref<1x128xf32, #tpu.memory_space<vmem>>
    %604 = tpu.memref_slice %arg5[%c0_i32_623, %c2_i32_624] : memref<2x8x!tpu.dma_semaphore, #tpu.memory_space<semaphore_mem>> -> memref<1x1x!tpu.dma_semaphore, #tpu.memory_space<semaphore_mem>>
    %605 = tpu.memref_squeeze %604 : memref<1x1x!tpu.dma_semaphore, #tpu.memory_space<semaphore_mem>> -> memref<!tpu.dma_semaphore, #tpu.memory_space<semaphore_mem>>
    tpu.enqueue_dma source(%601 : memref<1x128xf32, #tpu.memory_space<any>>) target(%603 : memref<1x128xf32, #tpu.memory_space<vmem>>) target_semaphore(%605 : memref<!tpu.dma_semaphore, #tpu.memory_space<semaphore_mem>>)
    %606 = arith.index_cast %584 : i32 to index
    %c3_628 = arith.constant 3 : index
    %607 = memref.load %arg1[%606, %c3_628] : memref<8x8xi32, #tpu.memory_space<smem>>
    %c0_i32_629 = arith.constant 0 : i32
    %c0_i32_630 = arith.constant 0 : i32
    %c3_i32_631 = arith.constant 3 : i32
    %c0_i32_632 = arith.constant 0 : i32
    %608 = tpu.memref_slice %arg2[%607, %c0_i32_632] : memref<1024x128xf32, #tpu.memory_space<any>> -> memref<1x128xf32, #tpu.memory_space<any>>
    %c3_i32_633 = arith.constant 3 : i32
    %c0_i32_634 = arith.constant 0 : i32
    %609 = tpu.memref_slice %arg4[%c0_i32_629, %c3_i32_633, %c0_i32_634] : memref<2x8x128xf32, #tpu.memory_space<vmem>> -> memref<1x1x128xf32, #tpu.memory_space<vmem>>
    %610 = tpu.memref_squeeze %609 : memref<1x1x128xf32, #tpu.memory_space<vmem>> -> memref<1x128xf32, #tpu.memory_space<vmem>>
    %611 = tpu.memref_slice %arg5[%c0_i32_630, %c3_i32_631] : memref<2x8x!tpu.dma_semaphore, #tpu.memory_space<semaphore_mem>> -> memref<1x1x!tpu.dma_semaphore, #tpu.memory_space<semaphore_mem>>
    %612 = tpu.memref_squeeze %611 : memref<1x1x!tpu.dma_semaphore, #tpu.memory_space<semaphore_mem>> -> memref<!tpu.dma_semaphore, #tpu.memory_space<semaphore_mem>>
    tpu.enqueue_dma source(%608 : memref<1x128xf32, #tpu.memory_space<any>>) target(%610 : memref<1x128xf32, #tpu.memory_space<vmem>>) target_semaphore(%612 : memref<!tpu.dma_semaphore, #tpu.memory_space<semaphore_mem>>)
    %613 = arith.index_cast %584 : i32 to index
    %c4_635 = arith.constant 4 : index
    %614 = memref.load %arg1[%613, %c4_635] : memref<8x8xi32, #tpu.memory_space<smem>>
    %c0_i32_636 = arith.constant 0 : i32
    %c0_i32_637 = arith.constant 0 : i32
    %c4_i32_638 = arith.constant 4 : i32
    %c0_i32_639 = arith.constant 0 : i32
    %615 = tpu.memref_slice %arg2[%614, %c0_i32_639] : memref<1024x128xf32, #tpu.memory_space<any>> -> memref<1x128xf32, #tpu.memory_space<any>>
    %c4_i32_640 = arith.constant 4 : i32
    %c0_i32_641 = arith.constant 0 : i32
    %616 = tpu.memref_slice %arg4[%c0_i32_636, %c4_i32_640, %c0_i32_641] : memref<2x8x128xf32, #tpu.memory_space<vmem>> -> memref<1x1x128xf32, #tpu.memory_space<vmem>>
    %617 = tpu.memref_squeeze %616 : memref<1x1x128xf32, #tpu.memory_space<vmem>> -> memref<1x128xf32, #tpu.memory_space<vmem>>
    %618 = tpu.memref_slice %arg5[%c0_i32_637, %c4_i32_638] : memref<2x8x!tpu.dma_semaphore, #tpu.memory_space<semaphore_mem>> -> memref<1x1x!tpu.dma_semaphore, #tpu.memory_space<semaphore_mem>>
    %619 = tpu.memref_squeeze %618 : memref<1x1x!tpu.dma_semaphore, #tpu.memory_space<semaphore_mem>> -> memref<!tpu.dma_semaphore, #tpu.memory_space<semaphore_mem>>
    tpu.enqueue_dma source(%615 : memref<1x128xf32, #tpu.memory_space<any>>) target(%617 : memref<1x128xf32, #tpu.memory_space<vmem>>) target_semaphore(%619 : memref<!tpu.dma_semaphore, #tpu.memory_space<semaphore_mem>>)
    %620 = arith.index_cast %584 : i32 to index
    %c5_642 = arith.constant 5 : index
    %621 = memref.load %arg1[%620, %c5_642] : memref<8x8xi32, #tpu.memory_space<smem>>
    %c0_i32_643 = arith.constant 0 : i32
    %c0_i32_644 = arith.constant 0 : i32
    %c5_i32_645 = arith.constant 5 : i32
    %c0_i32_646 = arith.constant 0 : i32
    %622 = tpu.memref_slice %arg2[%621, %c0_i32_646] : memref<1024x128xf32, #tpu.memory_space<any>> -> memref<1x128xf32, #tpu.memory_space<any>>
    %c5_i32_647 = arith.constant 5 : i32
    %c0_i32_648 = arith.constant 0 : i32
    %623 = tpu.memref_slice %arg4[%c0_i32_643, %c5_i32_647, %c0_i32_648] : memref<2x8x128xf32, #tpu.memory_space<vmem>> -> memref<1x1x128xf32, #tpu.memory_space<vmem>>
    %624 = tpu.memref_squeeze %623 : memref<1x1x128xf32, #tpu.memory_space<vmem>> -> memref<1x128xf32, #tpu.memory_space<vmem>>
    %625 = tpu.memref_slice %arg5[%c0_i32_644, %c5_i32_645] : memref<2x8x!tpu.dma_semaphore, #tpu.memory_space<semaphore_mem>> -> memref<1x1x!tpu.dma_semaphore, #tpu.memory_space<semaphore_mem>>
    %626 = tpu.memref_squeeze %625 : memref<1x1x!tpu.dma_semaphore, #tpu.memory_space<semaphore_mem>> -> memref<!tpu.dma_semaphore, #tpu.memory_space<semaphore_mem>>
    tpu.enqueue_dma source(%622 : memref<1x128xf32, #tpu.memory_space<any>>) target(%624 : memref<1x128xf32, #tpu.memory_space<vmem>>) target_semaphore(%626 : memref<!tpu.dma_semaphore, #tpu.memory_space<semaphore_mem>>)
    %627 = arith.index_cast %584 : i32 to index
    %c6_649 = arith.constant 6 : index
    %628 = memref.load %arg1[%627, %c6_649] : memref<8x8xi32, #tpu.memory_space<smem>>
    %c0_i32_650 = arith.constant 0 : i32
    %c0_i32_651 = arith.constant 0 : i32
    %c6_i32_652 = arith.constant 6 : i32
    %c0_i32_653 = arith.constant 0 : i32
    %629 = tpu.memref_slice %arg2[%628, %c0_i32_653] : memref<1024x128xf32, #tpu.memory_space<any>> -> memref<1x128xf32, #tpu.memory_space<any>>
    %c6_i32_654 = arith.constant 6 : i32
    %c0_i32_655 = arith.constant 0 : i32
    %630 = tpu.memref_slice %arg4[%c0_i32_650, %c6_i32_654, %c0_i32_655] : memref<2x8x128xf32, #tpu.memory_space<vmem>> -> memref<1x1x128xf32, #tpu.memory_space<vmem>>
    %631 = tpu.memref_squeeze %630 : memref<1x1x128xf32, #tpu.memory_space<vmem>> -> memref<1x128xf32, #tpu.memory_space<vmem>>
    %632 = tpu.memref_slice %arg5[%c0_i32_651, %c6_i32_652] : memref<2x8x!tpu.dma_semaphore, #tpu.memory_space<semaphore_mem>> -> memref<1x1x!tpu.dma_semaphore, #tpu.memory_space<semaphore_mem>>
    %633 = tpu.memref_squeeze %632 : memref<1x1x!tpu.dma_semaphore, #tpu.memory_space<semaphore_mem>> -> memref<!tpu.dma_semaphore, #tpu.memory_space<semaphore_mem>>
    tpu.enqueue_dma source(%629 : memref<1x128xf32, #tpu.memory_space<any>>) target(%631 : memref<1x128xf32, #tpu.memory_space<vmem>>) target_semaphore(%633 : memref<!tpu.dma_semaphore, #tpu.memory_space<semaphore_mem>>)
    %634 = arith.index_cast %584 : i32 to index
    %c7_656 = arith.constant 7 : index
    %635 = memref.load %arg1[%634, %c7_656] : memref<8x8xi32, #tpu.memory_space<smem>>
    %c0_i32_657 = arith.constant 0 : i32
    %c0_i32_658 = arith.constant 0 : i32
    %c7_i32_659 = arith.constant 7 : i32
    %c0_i32_660 = arith.constant 0 : i32
    %636 = tpu.memref_slice %arg2[%635, %c0_i32_660] : memref<1024x128xf32, #tpu.memory_space<any>> -> memref<1x128xf32, #tpu.memory_space<any>>
    %c7_i32_661 = arith.constant 7 : i32
    %c0_i32_662 = arith.constant 0 : i32
    %637 = tpu.memref_slice %arg4[%c0_i32_657, %c7_i32_661, %c0_i32_662] : memref<2x8x128xf32, #tpu.memory_space<vmem>> -> memref<1x1x128xf32, #tpu.memory_space<vmem>>
    %638 = tpu.memref_squeeze %637 : memref<1x1x128xf32, #tpu.memory_space<vmem>> -> memref<1x128xf32, #tpu.memory_space<vmem>>
    %639 = tpu.memref_slice %arg5[%c0_i32_658, %c7_i32_659] : memref<2x8x!tpu.dma_semaphore, #tpu.memory_space<semaphore_mem>> -> memref<1x1x!tpu.dma_semaphore, #tpu.memory_space<semaphore_mem>>
    %640 = tpu.memref_squeeze %639 : memref<1x1x!tpu.dma_semaphore, #tpu.memory_space<semaphore_mem>> -> memref<!tpu.dma_semaphore, #tpu.memory_space<semaphore_mem>>
    tpu.enqueue_dma source(%636 : memref<1x128xf32, #tpu.memory_space<any>>) target(%638 : memref<1x128xf32, #tpu.memory_space<vmem>>) target_semaphore(%640 : memref<!tpu.dma_semaphore, #tpu.memory_space<semaphore_mem>>)
    %c1_i32_663 = arith.constant 1 : i32
    %c1_i32_664 = arith.constant 1 : i32
    %c0_i32_665 = arith.constant 0 : i32
    %c0_i32_666 = arith.constant 0 : i32
    %641 = tpu.memref_slice %arg2[%481, %c0_i32_666] : memref<1024x128xf32, #tpu.memory_space<any>> -> memref<1x128xf32, #tpu.memory_space<any>>
    %c0_i32_667 = arith.constant 0 : i32
    %c0_i32_668 = arith.constant 0 : i32
    %642 = tpu.memref_slice %arg4[%c1_i32_663, %c0_i32_667, %c0_i32_668] : memref<2x8x128xf32, #tpu.memory_space<vmem>> -> memref<1x1x128xf32, #tpu.memory_space<vmem>>
    %643 = tpu.memref_squeeze %642 : memref<1x1x128xf32, #tpu.memory_space<vmem>> -> memref<1x128xf32, #tpu.memory_space<vmem>>
    %644 = tpu.memref_slice %arg5[%c1_i32_664, %c0_i32_665] : memref<2x8x!tpu.dma_semaphore, #tpu.memory_space<semaphore_mem>> -> memref<1x1x!tpu.dma_semaphore, #tpu.memory_space<semaphore_mem>>
    %645 = tpu.memref_squeeze %644 : memref<1x1x!tpu.dma_semaphore, #tpu.memory_space<semaphore_mem>> -> memref<!tpu.dma_semaphore, #tpu.memory_space<semaphore_mem>>
    tpu.wait_dma2 semaphore(%645 : memref<!tpu.dma_semaphore, #tpu.memory_space<semaphore_mem>>) src(%641 : memref<1x128xf32, #tpu.memory_space<any>>) dst(%643 : memref<1x128xf32, #tpu.memory_space<vmem>>)
    %c1_i32_669 = arith.constant 1 : i32
    %c1_i32_670 = arith.constant 1 : i32
    %c1_i32_671 = arith.constant 1 : i32
    %c0_i32_672 = arith.constant 0 : i32
    %646 = tpu.memref_slice %arg2[%488, %c0_i32_672] : memref<1024x128xf32, #tpu.memory_space<any>> -> memref<1x128xf32, #tpu.memory_space<any>>
    %c1_i32_673 = arith.constant 1 : i32
    %c0_i32_674 = arith.constant 0 : i32
    %647 = tpu.memref_slice %arg4[%c1_i32_669, %c1_i32_673, %c0_i32_674] : memref<2x8x128xf32, #tpu.memory_space<vmem>> -> memref<1x1x128xf32, #tpu.memory_space<vmem>>
    %648 = tpu.memref_squeeze %647 : memref<1x1x128xf32, #tpu.memory_space<vmem>> -> memref<1x128xf32, #tpu.memory_space<vmem>>
    %649 = tpu.memref_slice %arg5[%c1_i32_670, %c1_i32_671] : memref<2x8x!tpu.dma_semaphore, #tpu.memory_space<semaphore_mem>> -> memref<1x1x!tpu.dma_semaphore, #tpu.memory_space<semaphore_mem>>
    %650 = tpu.memref_squeeze %649 : memref<1x1x!tpu.dma_semaphore, #tpu.memory_space<semaphore_mem>> -> memref<!tpu.dma_semaphore, #tpu.memory_space<semaphore_mem>>
    tpu.wait_dma2 semaphore(%650 : memref<!tpu.dma_semaphore, #tpu.memory_space<semaphore_mem>>) src(%646 : memref<1x128xf32, #tpu.memory_space<any>>) dst(%648 : memref<1x128xf32, #tpu.memory_space<vmem>>)
    %c1_i32_675 = arith.constant 1 : i32
    %c1_i32_676 = arith.constant 1 : i32
    %c2_i32_677 = arith.constant 2 : i32
    %c0_i32_678 = arith.constant 0 : i32
    %651 = tpu.memref_slice %arg2[%495, %c0_i32_678] : memref<1024x128xf32, #tpu.memory_space<any>> -> memref<1x128xf32, #tpu.memory_space<any>>
    %c2_i32_679 = arith.constant 2 : i32
    %c0_i32_680 = arith.constant 0 : i32
    %652 = tpu.memref_slice %arg4[%c1_i32_675, %c2_i32_679, %c0_i32_680] : memref<2x8x128xf32, #tpu.memory_space<vmem>> -> memref<1x1x128xf32, #tpu.memory_space<vmem>>
    %653 = tpu.memref_squeeze %652 : memref<1x1x128xf32, #tpu.memory_space<vmem>> -> memref<1x128xf32, #tpu.memory_space<vmem>>
    %654 = tpu.memref_slice %arg5[%c1_i32_676, %c2_i32_677] : memref<2x8x!tpu.dma_semaphore, #tpu.memory_space<semaphore_mem>> -> memref<1x1x!tpu.dma_semaphore, #tpu.memory_space<semaphore_mem>>
    %655 = tpu.memref_squeeze %654 : memref<1x1x!tpu.dma_semaphore, #tpu.memory_space<semaphore_mem>> -> memref<!tpu.dma_semaphore, #tpu.memory_space<semaphore_mem>>
    tpu.wait_dma2 semaphore(%655 : memref<!tpu.dma_semaphore, #tpu.memory_space<semaphore_mem>>) src(%651 : memref<1x128xf32, #tpu.memory_space<any>>) dst(%653 : memref<1x128xf32, #tpu.memory_space<vmem>>)
    %c1_i32_681 = arith.constant 1 : i32
    %c1_i32_682 = arith.constant 1 : i32
    %c3_i32_683 = arith.constant 3 : i32
    %c0_i32_684 = arith.constant 0 : i32
    %656 = tpu.memref_slice %arg2[%502, %c0_i32_684] : memref<1024x128xf32, #tpu.memory_space<any>> -> memref<1x128xf32, #tpu.memory_space<any>>
    %c3_i32_685 = arith.constant 3 : i32
    %c0_i32_686 = arith.constant 0 : i32
    %657 = tpu.memref_slice %arg4[%c1_i32_681, %c3_i32_685, %c0_i32_686] : memref<2x8x128xf32, #tpu.memory_space<vmem>> -> memref<1x1x128xf32, #tpu.memory_space<vmem>>
    %658 = tpu.memref_squeeze %657 : memref<1x1x128xf32, #tpu.memory_space<vmem>> -> memref<1x128xf32, #tpu.memory_space<vmem>>
    %659 = tpu.memref_slice %arg5[%c1_i32_682, %c3_i32_683] : memref<2x8x!tpu.dma_semaphore, #tpu.memory_space<semaphore_mem>> -> memref<1x1x!tpu.dma_semaphore, #tpu.memory_space<semaphore_mem>>
    %660 = tpu.memref_squeeze %659 : memref<1x1x!tpu.dma_semaphore, #tpu.memory_space<semaphore_mem>> -> memref<!tpu.dma_semaphore, #tpu.memory_space<semaphore_mem>>
    tpu.wait_dma2 semaphore(%660 : memref<!tpu.dma_semaphore, #tpu.memory_space<semaphore_mem>>) src(%656 : memref<1x128xf32, #tpu.memory_space<any>>) dst(%658 : memref<1x128xf32, #tpu.memory_space<vmem>>)
    %c1_i32_687 = arith.constant 1 : i32
    %c1_i32_688 = arith.constant 1 : i32
    %c4_i32_689 = arith.constant 4 : i32
    %c0_i32_690 = arith.constant 0 : i32
    %661 = tpu.memref_slice %arg2[%509, %c0_i32_690] : memref<1024x128xf32, #tpu.memory_space<any>> -> memref<1x128xf32, #tpu.memory_space<any>>
    %c4_i32_691 = arith.constant 4 : i32
    %c0_i32_692 = arith.constant 0 : i32
    %662 = tpu.memref_slice %arg4[%c1_i32_687, %c4_i32_691, %c0_i32_692] : memref<2x8x128xf32, #tpu.memory_space<vmem>> -> memref<1x1x128xf32, #tpu.memory_space<vmem>>
    %663 = tpu.memref_squeeze %662 : memref<1x1x128xf32, #tpu.memory_space<vmem>> -> memref<1x128xf32, #tpu.memory_space<vmem>>
    %664 = tpu.memref_slice %arg5[%c1_i32_688, %c4_i32_689] : memref<2x8x!tpu.dma_semaphore, #tpu.memory_space<semaphore_mem>> -> memref<1x1x!tpu.dma_semaphore, #tpu.memory_space<semaphore_mem>>
    %665 = tpu.memref_squeeze %664 : memref<1x1x!tpu.dma_semaphore, #tpu.memory_space<semaphore_mem>> -> memref<!tpu.dma_semaphore, #tpu.memory_space<semaphore_mem>>
    tpu.wait_dma2 semaphore(%665 : memref<!tpu.dma_semaphore, #tpu.memory_space<semaphore_mem>>) src(%661 : memref<1x128xf32, #tpu.memory_space<any>>) dst(%663 : memref<1x128xf32, #tpu.memory_space<vmem>>)
    %c1_i32_693 = arith.constant 1 : i32
    %c1_i32_694 = arith.constant 1 : i32
    %c5_i32_695 = arith.constant 5 : i32
    %c0_i32_696 = arith.constant 0 : i32
    %666 = tpu.memref_slice %arg2[%516, %c0_i32_696] : memref<1024x128xf32, #tpu.memory_space<any>> -> memref<1x128xf32, #tpu.memory_space<any>>
    %c5_i32_697 = arith.constant 5 : i32
    %c0_i32_698 = arith.constant 0 : i32
    %667 = tpu.memref_slice %arg4[%c1_i32_693, %c5_i32_697, %c0_i32_698] : memref<2x8x128xf32, #tpu.memory_space<vmem>> -> memref<1x1x128xf32, #tpu.memory_space<vmem>>
    %668 = tpu.memref_squeeze %667 : memref<1x1x128xf32, #tpu.memory_space<vmem>> -> memref<1x128xf32, #tpu.memory_space<vmem>>
    %669 = tpu.memref_slice %arg5[%c1_i32_694, %c5_i32_695] : memref<2x8x!tpu.dma_semaphore, #tpu.memory_space<semaphore_mem>> -> memref<1x1x!tpu.dma_semaphore, #tpu.memory_space<semaphore_mem>>
    %670 = tpu.memref_squeeze %669 : memref<1x1x!tpu.dma_semaphore, #tpu.memory_space<semaphore_mem>> -> memref<!tpu.dma_semaphore, #tpu.memory_space<semaphore_mem>>
    tpu.wait_dma2 semaphore(%670 : memref<!tpu.dma_semaphore, #tpu.memory_space<semaphore_mem>>) src(%666 : memref<1x128xf32, #tpu.memory_space<any>>) dst(%668 : memref<1x128xf32, #tpu.memory_space<vmem>>)
    %c1_i32_699 = arith.constant 1 : i32
    %c1_i32_700 = arith.constant 1 : i32
    %c6_i32_701 = arith.constant 6 : i32
    %c0_i32_702 = arith.constant 0 : i32
    %671 = tpu.memref_slice %arg2[%523, %c0_i32_702] : memref<1024x128xf32, #tpu.memory_space<any>> -> memref<1x128xf32, #tpu.memory_space<any>>
    %c6_i32_703 = arith.constant 6 : i32
    %c0_i32_704 = arith.constant 0 : i32
    %672 = tpu.memref_slice %arg4[%c1_i32_699, %c6_i32_703, %c0_i32_704] : memref<2x8x128xf32, #tpu.memory_space<vmem>> -> memref<1x1x128xf32, #tpu.memory_space<vmem>>
    %673 = tpu.memref_squeeze %672 : memref<1x1x128xf32, #tpu.memory_space<vmem>> -> memref<1x128xf32, #tpu.memory_space<vmem>>
    %674 = tpu.memref_slice %arg5[%c1_i32_700, %c6_i32_701] : memref<2x8x!tpu.dma_semaphore, #tpu.memory_space<semaphore_mem>> -> memref<1x1x!tpu.dma_semaphore, #tpu.memory_space<semaphore_mem>>
    %675 = tpu.memref_squeeze %674 : memref<1x1x!tpu.dma_semaphore, #tpu.memory_space<semaphore_mem>> -> memref<!tpu.dma_semaphore, #tpu.memory_space<semaphore_mem>>
    tpu.wait_dma2 semaphore(%675 : memref<!tpu.dma_semaphore, #tpu.memory_space<semaphore_mem>>) src(%671 : memref<1x128xf32, #tpu.memory_space<any>>) dst(%673 : memref<1x128xf32, #tpu.memory_space<vmem>>)
    %c1_i32_705 = arith.constant 1 : i32
    %c1_i32_706 = arith.constant 1 : i32
    %c7_i32_707 = arith.constant 7 : i32
    %c0_i32_708 = arith.constant 0 : i32
    %676 = tpu.memref_slice %arg2[%530, %c0_i32_708] : memref<1024x128xf32, #tpu.memory_space<any>> -> memref<1x128xf32, #tpu.memory_space<any>>
    %c7_i32_709 = arith.constant 7 : i32
    %c0_i32_710 = arith.constant 0 : i32
    %677 = tpu.memref_slice %arg4[%c1_i32_705, %c7_i32_709, %c0_i32_710] : memref<2x8x128xf32, #tpu.memory_space<vmem>> -> memref<1x1x128xf32, #tpu.memory_space<vmem>>
    %678 = tpu.memref_squeeze %677 : memref<1x1x128xf32, #tpu.memory_space<vmem>> -> memref<1x128xf32, #tpu.memory_space<vmem>>
    %679 = tpu.memref_slice %arg5[%c1_i32_706, %c7_i32_707] : memref<2x8x!tpu.dma_semaphore, #tpu.memory_space<semaphore_mem>> -> memref<1x1x!tpu.dma_semaphore, #tpu.memory_space<semaphore_mem>>
    %680 = tpu.memref_squeeze %679 : memref<1x1x!tpu.dma_semaphore, #tpu.memory_space<semaphore_mem>> -> memref<!tpu.dma_semaphore, #tpu.memory_space<semaphore_mem>>
    tpu.wait_dma2 semaphore(%680 : memref<!tpu.dma_semaphore, #tpu.memory_space<semaphore_mem>>) src(%676 : memref<1x128xf32, #tpu.memory_space<any>>) dst(%678 : memref<1x128xf32, #tpu.memory_space<vmem>>)
    %c1_711 = arith.constant 1 : index
    %c0_712 = arith.constant 0 : index
    %c0_713 = arith.constant 0 : index
    %681 = vector.load %arg4[%c1_711, %c0_712, %c0_713] : memref<2x8x128xf32, #tpu.memory_space<vmem>>, vector<1x8x128xf32>
    %682 = vector.shape_cast %681 : vector<1x8x128xf32> to vector<8x128xf32>
    %cst_714 = arith.constant dense<0.000000e+00> : vector<128xf32>
    %683 = vector.multi_reduction <add>, %682, %cst_714 [0] : vector<8x128xf32> to vector<128xf32>
    %684 = vector.shape_cast %683 : vector<128xf32> to vector<1x128xf32>
    %cst_715 = arith.constant 1.250000e-01 : f32
    %685 = vector.broadcast %cst_715 : f32 to vector<1x128xf32>
    %686 = arith.mulf %684, %685 : vector<1x128xf32>
    %c5_716 = arith.constant 5 : index
    %c0_717 = arith.constant 0 : index
    %687 = vector.load %arg3[%c5_716, %c0_717] : memref<8x128xf32, #tpu.memory_space<vmem>>, vector<1x128xf32>
    tpu.vector_store %arg3[%c5_716, %c0_717], %686 {strides = array<i32>} : memref<8x128xf32, #tpu.memory_space<vmem>>, vector<1x128xf32>,
    %c8_i32_718 = arith.constant 8 : i32
    %688 = arith.muli %arg0, %c8_i32_718 : i32
    %c7_i32_719 = arith.constant 7 : i32
    %689 = arith.addi %688, %c7_i32_719 : i32
    %690 = arith.index_cast %689 : i32 to index
    %c0_720 = arith.constant 0 : index
    %691 = memref.load %arg1[%690, %c0_720] : memref<8x8xi32, #tpu.memory_space<smem>>
    %c1_i32_721 = arith.constant 1 : i32
    %c1_i32_722 = arith.constant 1 : i32
    %c0_i32_723 = arith.constant 0 : i32
    %c0_i32_724 = arith.constant 0 : i32
    %692 = tpu.memref_slice %arg2[%691, %c0_i32_724] : memref<1024x128xf32, #tpu.memory_space<any>> -> memref<1x128xf32, #tpu.memory_space<any>>
    %c0_i32_725 = arith.constant 0 : i32
    %c0_i32_726 = arith.constant 0 : i32
    %693 = tpu.memref_slice %arg4[%c1_i32_721, %c0_i32_725, %c0_i32_726] : memref<2x8x128xf32, #tpu.memory_space<vmem>> -> memref<1x1x128xf32, #tpu.memory_space<vmem>>
    %694 = tpu.memref_squeeze %693 : memref<1x1x128xf32, #tpu.memory_space<vmem>> -> memref<1x128xf32, #tpu.memory_space<vmem>>
    %695 = tpu.memref_slice %arg5[%c1_i32_722, %c0_i32_723] : memref<2x8x!tpu.dma_semaphore, #tpu.memory_space<semaphore_mem>> -> memref<1x1x!tpu.dma_semaphore, #tpu.memory_space<semaphore_mem>>
    %696 = tpu.memref_squeeze %695 : memref<1x1x!tpu.dma_semaphore, #tpu.memory_space<semaphore_mem>> -> memref<!tpu.dma_semaphore, #tpu.memory_space<semaphore_mem>>
    tpu.enqueue_dma source(%692 : memref<1x128xf32, #tpu.memory_space<any>>) target(%694 : memref<1x128xf32, #tpu.memory_space<vmem>>) target_semaphore(%696 : memref<!tpu.dma_semaphore, #tpu.memory_space<semaphore_mem>>)
    %697 = arith.index_cast %689 : i32 to index
    %c1_727 = arith.constant 1 : index
    %698 = memref.load %arg1[%697, %c1_727] : memref<8x8xi32, #tpu.memory_space<smem>>
    %c1_i32_728 = arith.constant 1 : i32
    %c1_i32_729 = arith.constant 1 : i32
    %c1_i32_730 = arith.constant 1 : i32
    %c0_i32_731 = arith.constant 0 : i32
    %699 = tpu.memref_slice %arg2[%698, %c0_i32_731] : memref<1024x128xf32, #tpu.memory_space<any>> -> memref<1x128xf32, #tpu.memory_space<any>>
    %c1_i32_732 = arith.constant 1 : i32
    %c0_i32_733 = arith.constant 0 : i32
    %700 = tpu.memref_slice %arg4[%c1_i32_728, %c1_i32_732, %c0_i32_733] : memref<2x8x128xf32, #tpu.memory_space<vmem>> -> memref<1x1x128xf32, #tpu.memory_space<vmem>>
    %701 = tpu.memref_squeeze %700 : memref<1x1x128xf32, #tpu.memory_space<vmem>> -> memref<1x128xf32, #tpu.memory_space<vmem>>
    %702 = tpu.memref_slice %arg5[%c1_i32_729, %c1_i32_730] : memref<2x8x!tpu.dma_semaphore, #tpu.memory_space<semaphore_mem>> -> memref<1x1x!tpu.dma_semaphore, #tpu.memory_space<semaphore_mem>>
    %703 = tpu.memref_squeeze %702 : memref<1x1x!tpu.dma_semaphore, #tpu.memory_space<semaphore_mem>> -> memref<!tpu.dma_semaphore, #tpu.memory_space<semaphore_mem>>
    tpu.enqueue_dma source(%699 : memref<1x128xf32, #tpu.memory_space<any>>) target(%701 : memref<1x128xf32, #tpu.memory_space<vmem>>) target_semaphore(%703 : memref<!tpu.dma_semaphore, #tpu.memory_space<semaphore_mem>>)
    %704 = arith.index_cast %689 : i32 to index
    %c2_734 = arith.constant 2 : index
    %705 = memref.load %arg1[%704, %c2_734] : memref<8x8xi32, #tpu.memory_space<smem>>
    %c1_i32_735 = arith.constant 1 : i32
    %c1_i32_736 = arith.constant 1 : i32
    %c2_i32_737 = arith.constant 2 : i32
    %c0_i32_738 = arith.constant 0 : i32
    %706 = tpu.memref_slice %arg2[%705, %c0_i32_738] : memref<1024x128xf32, #tpu.memory_space<any>> -> memref<1x128xf32, #tpu.memory_space<any>>
    %c2_i32_739 = arith.constant 2 : i32
    %c0_i32_740 = arith.constant 0 : i32
    %707 = tpu.memref_slice %arg4[%c1_i32_735, %c2_i32_739, %c0_i32_740] : memref<2x8x128xf32, #tpu.memory_space<vmem>> -> memref<1x1x128xf32, #tpu.memory_space<vmem>>
    %708 = tpu.memref_squeeze %707 : memref<1x1x128xf32, #tpu.memory_space<vmem>> -> memref<1x128xf32, #tpu.memory_space<vmem>>
    %709 = tpu.memref_slice %arg5[%c1_i32_736, %c2_i32_737] : memref<2x8x!tpu.dma_semaphore, #tpu.memory_space<semaphore_mem>> -> memref<1x1x!tpu.dma_semaphore, #tpu.memory_space<semaphore_mem>>
    %710 = tpu.memref_squeeze %709 : memref<1x1x!tpu.dma_semaphore, #tpu.memory_space<semaphore_mem>> -> memref<!tpu.dma_semaphore, #tpu.memory_space<semaphore_mem>>
    tpu.enqueue_dma source(%706 : memref<1x128xf32, #tpu.memory_space<any>>) target(%708 : memref<1x128xf32, #tpu.memory_space<vmem>>) target_semaphore(%710 : memref<!tpu.dma_semaphore, #tpu.memory_space<semaphore_mem>>)
    %711 = arith.index_cast %689 : i32 to index
    %c3_741 = arith.constant 3 : index
    %712 = memref.load %arg1[%711, %c3_741] : memref<8x8xi32, #tpu.memory_space<smem>>
    %c1_i32_742 = arith.constant 1 : i32
    %c1_i32_743 = arith.constant 1 : i32
    %c3_i32_744 = arith.constant 3 : i32
    %c0_i32_745 = arith.constant 0 : i32
    %713 = tpu.memref_slice %arg2[%712, %c0_i32_745] : memref<1024x128xf32, #tpu.memory_space<any>> -> memref<1x128xf32, #tpu.memory_space<any>>
    %c3_i32_746 = arith.constant 3 : i32
    %c0_i32_747 = arith.constant 0 : i32
    %714 = tpu.memref_slice %arg4[%c1_i32_742, %c3_i32_746, %c0_i32_747] : memref<2x8x128xf32, #tpu.memory_space<vmem>> -> memref<1x1x128xf32, #tpu.memory_space<vmem>>
    %715 = tpu.memref_squeeze %714 : memref<1x1x128xf32, #tpu.memory_space<vmem>> -> memref<1x128xf32, #tpu.memory_space<vmem>>
    %716 = tpu.memref_slice %arg5[%c1_i32_743, %c3_i32_744] : memref<2x8x!tpu.dma_semaphore, #tpu.memory_space<semaphore_mem>> -> memref<1x1x!tpu.dma_semaphore, #tpu.memory_space<semaphore_mem>>
    %717 = tpu.memref_squeeze %716 : memref<1x1x!tpu.dma_semaphore, #tpu.memory_space<semaphore_mem>> -> memref<!tpu.dma_semaphore, #tpu.memory_space<semaphore_mem>>
    tpu.enqueue_dma source(%713 : memref<1x128xf32, #tpu.memory_space<any>>) target(%715 : memref<1x128xf32, #tpu.memory_space<vmem>>) target_semaphore(%717 : memref<!tpu.dma_semaphore, #tpu.memory_space<semaphore_mem>>)
    %718 = arith.index_cast %689 : i32 to index
    %c4_748 = arith.constant 4 : index
    %719 = memref.load %arg1[%718, %c4_748] : memref<8x8xi32, #tpu.memory_space<smem>>
    %c1_i32_749 = arith.constant 1 : i32
    %c1_i32_750 = arith.constant 1 : i32
    %c4_i32_751 = arith.constant 4 : i32
    %c0_i32_752 = arith.constant 0 : i32
    %720 = tpu.memref_slice %arg2[%719, %c0_i32_752] : memref<1024x128xf32, #tpu.memory_space<any>> -> memref<1x128xf32, #tpu.memory_space<any>>
    %c4_i32_753 = arith.constant 4 : i32
    %c0_i32_754 = arith.constant 0 : i32
    %721 = tpu.memref_slice %arg4[%c1_i32_749, %c4_i32_753, %c0_i32_754] : memref<2x8x128xf32, #tpu.memory_space<vmem>> -> memref<1x1x128xf32, #tpu.memory_space<vmem>>
    %722 = tpu.memref_squeeze %721 : memref<1x1x128xf32, #tpu.memory_space<vmem>> -> memref<1x128xf32, #tpu.memory_space<vmem>>
    %723 = tpu.memref_slice %arg5[%c1_i32_750, %c4_i32_751] : memref<2x8x!tpu.dma_semaphore, #tpu.memory_space<semaphore_mem>> -> memref<1x1x!tpu.dma_semaphore, #tpu.memory_space<semaphore_mem>>
    %724 = tpu.memref_squeeze %723 : memref<1x1x!tpu.dma_semaphore, #tpu.memory_space<semaphore_mem>> -> memref<!tpu.dma_semaphore, #tpu.memory_space<semaphore_mem>>
    tpu.enqueue_dma source(%720 : memref<1x128xf32, #tpu.memory_space<any>>) target(%722 : memref<1x128xf32, #tpu.memory_space<vmem>>) target_semaphore(%724 : memref<!tpu.dma_semaphore, #tpu.memory_space<semaphore_mem>>)
    %725 = arith.index_cast %689 : i32 to index
    %c5_755 = arith.constant 5 : index
    %726 = memref.load %arg1[%725, %c5_755] : memref<8x8xi32, #tpu.memory_space<smem>>
    %c1_i32_756 = arith.constant 1 : i32
    %c1_i32_757 = arith.constant 1 : i32
    %c5_i32_758 = arith.constant 5 : i32
    %c0_i32_759 = arith.constant 0 : i32
    %727 = tpu.memref_slice %arg2[%726, %c0_i32_759] : memref<1024x128xf32, #tpu.memory_space<any>> -> memref<1x128xf32, #tpu.memory_space<any>>
    %c5_i32_760 = arith.constant 5 : i32
    %c0_i32_761 = arith.constant 0 : i32
    %728 = tpu.memref_slice %arg4[%c1_i32_756, %c5_i32_760, %c0_i32_761] : memref<2x8x128xf32, #tpu.memory_space<vmem>> -> memref<1x1x128xf32, #tpu.memory_space<vmem>>
    %729 = tpu.memref_squeeze %728 : memref<1x1x128xf32, #tpu.memory_space<vmem>> -> memref<1x128xf32, #tpu.memory_space<vmem>>
    %730 = tpu.memref_slice %arg5[%c1_i32_757, %c5_i32_758] : memref<2x8x!tpu.dma_semaphore, #tpu.memory_space<semaphore_mem>> -> memref<1x1x!tpu.dma_semaphore, #tpu.memory_space<semaphore_mem>>
    %731 = tpu.memref_squeeze %730 : memref<1x1x!tpu.dma_semaphore, #tpu.memory_space<semaphore_mem>> -> memref<!tpu.dma_semaphore, #tpu.memory_space<semaphore_mem>>
    tpu.enqueue_dma source(%727 : memref<1x128xf32, #tpu.memory_space<any>>) target(%729 : memref<1x128xf32, #tpu.memory_space<vmem>>) target_semaphore(%731 : memref<!tpu.dma_semaphore, #tpu.memory_space<semaphore_mem>>)
    %732 = arith.index_cast %689 : i32 to index
    %c6_762 = arith.constant 6 : index
    %733 = memref.load %arg1[%732, %c6_762] : memref<8x8xi32, #tpu.memory_space<smem>>
    %c1_i32_763 = arith.constant 1 : i32
    %c1_i32_764 = arith.constant 1 : i32
    %c6_i32_765 = arith.constant 6 : i32
    %c0_i32_766 = arith.constant 0 : i32
    %734 = tpu.memref_slice %arg2[%733, %c0_i32_766] : memref<1024x128xf32, #tpu.memory_space<any>> -> memref<1x128xf32, #tpu.memory_space<any>>
    %c6_i32_767 = arith.constant 6 : i32
    %c0_i32_768 = arith.constant 0 : i32
    %735 = tpu.memref_slice %arg4[%c1_i32_763, %c6_i32_767, %c0_i32_768] : memref<2x8x128xf32, #tpu.memory_space<vmem>> -> memref<1x1x128xf32, #tpu.memory_space<vmem>>
    %736 = tpu.memref_squeeze %735 : memref<1x1x128xf32, #tpu.memory_space<vmem>> -> memref<1x128xf32, #tpu.memory_space<vmem>>
    %737 = tpu.memref_slice %arg5[%c1_i32_764, %c6_i32_765] : memref<2x8x!tpu.dma_semaphore, #tpu.memory_space<semaphore_mem>> -> memref<1x1x!tpu.dma_semaphore, #tpu.memory_space<semaphore_mem>>
    %738 = tpu.memref_squeeze %737 : memref<1x1x!tpu.dma_semaphore, #tpu.memory_space<semaphore_mem>> -> memref<!tpu.dma_semaphore, #tpu.memory_space<semaphore_mem>>
    tpu.enqueue_dma source(%734 : memref<1x128xf32, #tpu.memory_space<any>>) target(%736 : memref<1x128xf32, #tpu.memory_space<vmem>>) target_semaphore(%738 : memref<!tpu.dma_semaphore, #tpu.memory_space<semaphore_mem>>)
    %739 = arith.index_cast %689 : i32 to index
    %c7_769 = arith.constant 7 : index
    %740 = memref.load %arg1[%739, %c7_769] : memref<8x8xi32, #tpu.memory_space<smem>>
    %c1_i32_770 = arith.constant 1 : i32
    %c1_i32_771 = arith.constant 1 : i32
    %c7_i32_772 = arith.constant 7 : i32
    %c0_i32_773 = arith.constant 0 : i32
    %741 = tpu.memref_slice %arg2[%740, %c0_i32_773] : memref<1024x128xf32, #tpu.memory_space<any>> -> memref<1x128xf32, #tpu.memory_space<any>>
    %c7_i32_774 = arith.constant 7 : i32
    %c0_i32_775 = arith.constant 0 : i32
    %742 = tpu.memref_slice %arg4[%c1_i32_770, %c7_i32_774, %c0_i32_775] : memref<2x8x128xf32, #tpu.memory_space<vmem>> -> memref<1x1x128xf32, #tpu.memory_space<vmem>>
    %743 = tpu.memref_squeeze %742 : memref<1x1x128xf32, #tpu.memory_space<vmem>> -> memref<1x128xf32, #tpu.memory_space<vmem>>
    %744 = tpu.memref_slice %arg5[%c1_i32_771, %c7_i32_772] : memref<2x8x!tpu.dma_semaphore, #tpu.memory_space<semaphore_mem>> -> memref<1x1x!tpu.dma_semaphore, #tpu.memory_space<semaphore_mem>>
    %745 = tpu.memref_squeeze %744 : memref<1x1x!tpu.dma_semaphore, #tpu.memory_space<semaphore_mem>> -> memref<!tpu.dma_semaphore, #tpu.memory_space<semaphore_mem>>
    tpu.enqueue_dma source(%741 : memref<1x128xf32, #tpu.memory_space<any>>) target(%743 : memref<1x128xf32, #tpu.memory_space<vmem>>) target_semaphore(%745 : memref<!tpu.dma_semaphore, #tpu.memory_space<semaphore_mem>>)
    %c0_i32_776 = arith.constant 0 : i32
    %c0_i32_777 = arith.constant 0 : i32
    %c0_i32_778 = arith.constant 0 : i32
    %c0_i32_779 = arith.constant 0 : i32
    %746 = tpu.memref_slice %arg2[%586, %c0_i32_779] : memref<1024x128xf32, #tpu.memory_space<any>> -> memref<1x128xf32, #tpu.memory_space<any>>
    %c0_i32_780 = arith.constant 0 : i32
    %c0_i32_781 = arith.constant 0 : i32
    %747 = tpu.memref_slice %arg4[%c0_i32_776, %c0_i32_780, %c0_i32_781] : memref<2x8x128xf32, #tpu.memory_space<vmem>> -> memref<1x1x128xf32, #tpu.memory_space<vmem>>
    %748 = tpu.memref_squeeze %747 : memref<1x1x128xf32, #tpu.memory_space<vmem>> -> memref<1x128xf32, #tpu.memory_space<vmem>>
    %749 = tpu.memref_slice %arg5[%c0_i32_777, %c0_i32_778] : memref<2x8x!tpu.dma_semaphore, #tpu.memory_space<semaphore_mem>> -> memref<1x1x!tpu.dma_semaphore, #tpu.memory_space<semaphore_mem>>
    %750 = tpu.memref_squeeze %749 : memref<1x1x!tpu.dma_semaphore, #tpu.memory_space<semaphore_mem>> -> memref<!tpu.dma_semaphore, #tpu.memory_space<semaphore_mem>>
    tpu.wait_dma2 semaphore(%750 : memref<!tpu.dma_semaphore, #tpu.memory_space<semaphore_mem>>) src(%746 : memref<1x128xf32, #tpu.memory_space<any>>) dst(%748 : memref<1x128xf32, #tpu.memory_space<vmem>>)
    %c0_i32_782 = arith.constant 0 : i32
    %c0_i32_783 = arith.constant 0 : i32
    %c1_i32_784 = arith.constant 1 : i32
    %c0_i32_785 = arith.constant 0 : i32
    %751 = tpu.memref_slice %arg2[%593, %c0_i32_785] : memref<1024x128xf32, #tpu.memory_space<any>> -> memref<1x128xf32, #tpu.memory_space<any>>
    %c1_i32_786 = arith.constant 1 : i32
    %c0_i32_787 = arith.constant 0 : i32
    %752 = tpu.memref_slice %arg4[%c0_i32_782, %c1_i32_786, %c0_i32_787] : memref<2x8x128xf32, #tpu.memory_space<vmem>> -> memref<1x1x128xf32, #tpu.memory_space<vmem>>
    %753 = tpu.memref_squeeze %752 : memref<1x1x128xf32, #tpu.memory_space<vmem>> -> memref<1x128xf32, #tpu.memory_space<vmem>>
    %754 = tpu.memref_slice %arg5[%c0_i32_783, %c1_i32_784] : memref<2x8x!tpu.dma_semaphore, #tpu.memory_space<semaphore_mem>> -> memref<1x1x!tpu.dma_semaphore, #tpu.memory_space<semaphore_mem>>
    %755 = tpu.memref_squeeze %754 : memref<1x1x!tpu.dma_semaphore, #tpu.memory_space<semaphore_mem>> -> memref<!tpu.dma_semaphore, #tpu.memory_space<semaphore_mem>>
    tpu.wait_dma2 semaphore(%755 : memref<!tpu.dma_semaphore, #tpu.memory_space<semaphore_mem>>) src(%751 : memref<1x128xf32, #tpu.memory_space<any>>) dst(%753 : memref<1x128xf32, #tpu.memory_space<vmem>>)
    %c0_i32_788 = arith.constant 0 : i32
    %c0_i32_789 = arith.constant 0 : i32
    %c2_i32_790 = arith.constant 2 : i32
    %c0_i32_791 = arith.constant 0 : i32
    %756 = tpu.memref_slice %arg2[%600, %c0_i32_791] : memref<1024x128xf32, #tpu.memory_space<any>> -> memref<1x128xf32, #tpu.memory_space<any>>
    %c2_i32_792 = arith.constant 2 : i32
    %c0_i32_793 = arith.constant 0 : i32
    %757 = tpu.memref_slice %arg4[%c0_i32_788, %c2_i32_792, %c0_i32_793] : memref<2x8x128xf32, #tpu.memory_space<vmem>> -> memref<1x1x128xf32, #tpu.memory_space<vmem>>
    %758 = tpu.memref_squeeze %757 : memref<1x1x128xf32, #tpu.memory_space<vmem>> -> memref<1x128xf32, #tpu.memory_space<vmem>>
    %759 = tpu.memref_slice %arg5[%c0_i32_789, %c2_i32_790] : memref<2x8x!tpu.dma_semaphore, #tpu.memory_space<semaphore_mem>> -> memref<1x1x!tpu.dma_semaphore, #tpu.memory_space<semaphore_mem>>
    %760 = tpu.memref_squeeze %759 : memref<1x1x!tpu.dma_semaphore, #tpu.memory_space<semaphore_mem>> -> memref<!tpu.dma_semaphore, #tpu.memory_space<semaphore_mem>>
    tpu.wait_dma2 semaphore(%760 : memref<!tpu.dma_semaphore, #tpu.memory_space<semaphore_mem>>) src(%756 : memref<1x128xf32, #tpu.memory_space<any>>) dst(%758 : memref<1x128xf32, #tpu.memory_space<vmem>>)
    %c0_i32_794 = arith.constant 0 : i32
    %c0_i32_795 = arith.constant 0 : i32
    %c3_i32_796 = arith.constant 3 : i32
    %c0_i32_797 = arith.constant 0 : i32
    %761 = tpu.memref_slice %arg2[%607, %c0_i32_797] : memref<1024x128xf32, #tpu.memory_space<any>> -> memref<1x128xf32, #tpu.memory_space<any>>
    %c3_i32_798 = arith.constant 3 : i32
    %c0_i32_799 = arith.constant 0 : i32
    %762 = tpu.memref_slice %arg4[%c0_i32_794, %c3_i32_798, %c0_i32_799] : memref<2x8x128xf32, #tpu.memory_space<vmem>> -> memref<1x1x128xf32, #tpu.memory_space<vmem>>
    %763 = tpu.memref_squeeze %762 : memref<1x1x128xf32, #tpu.memory_space<vmem>> -> memref<1x128xf32, #tpu.memory_space<vmem>>
    %764 = tpu.memref_slice %arg5[%c0_i32_795, %c3_i32_796] : memref<2x8x!tpu.dma_semaphore, #tpu.memory_space<semaphore_mem>> -> memref<1x1x!tpu.dma_semaphore, #tpu.memory_space<semaphore_mem>>
    %765 = tpu.memref_squeeze %764 : memref<1x1x!tpu.dma_semaphore, #tpu.memory_space<semaphore_mem>> -> memref<!tpu.dma_semaphore, #tpu.memory_space<semaphore_mem>>
    tpu.wait_dma2 semaphore(%765 : memref<!tpu.dma_semaphore, #tpu.memory_space<semaphore_mem>>) src(%761 : memref<1x128xf32, #tpu.memory_space<any>>) dst(%763 : memref<1x128xf32, #tpu.memory_space<vmem>>)
    %c0_i32_800 = arith.constant 0 : i32
    %c0_i32_801 = arith.constant 0 : i32
    %c4_i32_802 = arith.constant 4 : i32
    %c0_i32_803 = arith.constant 0 : i32
    %766 = tpu.memref_slice %arg2[%614, %c0_i32_803] : memref<1024x128xf32, #tpu.memory_space<any>> -> memref<1x128xf32, #tpu.memory_space<any>>
    %c4_i32_804 = arith.constant 4 : i32
    %c0_i32_805 = arith.constant 0 : i32
    %767 = tpu.memref_slice %arg4[%c0_i32_800, %c4_i32_804, %c0_i32_805] : memref<2x8x128xf32, #tpu.memory_space<vmem>> -> memref<1x1x128xf32, #tpu.memory_space<vmem>>
    %768 = tpu.memref_squeeze %767 : memref<1x1x128xf32, #tpu.memory_space<vmem>> -> memref<1x128xf32, #tpu.memory_space<vmem>>
    %769 = tpu.memref_slice %arg5[%c0_i32_801, %c4_i32_802] : memref<2x8x!tpu.dma_semaphore, #tpu.memory_space<semaphore_mem>> -> memref<1x1x!tpu.dma_semaphore, #tpu.memory_space<semaphore_mem>>
    %770 = tpu.memref_squeeze %769 : memref<1x1x!tpu.dma_semaphore, #tpu.memory_space<semaphore_mem>> -> memref<!tpu.dma_semaphore, #tpu.memory_space<semaphore_mem>>
    tpu.wait_dma2 semaphore(%770 : memref<!tpu.dma_semaphore, #tpu.memory_space<semaphore_mem>>) src(%766 : memref<1x128xf32, #tpu.memory_space<any>>) dst(%768 : memref<1x128xf32, #tpu.memory_space<vmem>>)
    %c0_i32_806 = arith.constant 0 : i32
    %c0_i32_807 = arith.constant 0 : i32
    %c5_i32_808 = arith.constant 5 : i32
    %c0_i32_809 = arith.constant 0 : i32
    %771 = tpu.memref_slice %arg2[%621, %c0_i32_809] : memref<1024x128xf32, #tpu.memory_space<any>> -> memref<1x128xf32, #tpu.memory_space<any>>
    %c5_i32_810 = arith.constant 5 : i32
    %c0_i32_811 = arith.constant 0 : i32
    %772 = tpu.memref_slice %arg4[%c0_i32_806, %c5_i32_810, %c0_i32_811] : memref<2x8x128xf32, #tpu.memory_space<vmem>> -> memref<1x1x128xf32, #tpu.memory_space<vmem>>
    %773 = tpu.memref_squeeze %772 : memref<1x1x128xf32, #tpu.memory_space<vmem>> -> memref<1x128xf32, #tpu.memory_space<vmem>>
    %774 = tpu.memref_slice %arg5[%c0_i32_807, %c5_i32_808] : memref<2x8x!tpu.dma_semaphore, #tpu.memory_space<semaphore_mem>> -> memref<1x1x!tpu.dma_semaphore, #tpu.memory_space<semaphore_mem>>
    %775 = tpu.memref_squeeze %774 : memref<1x1x!tpu.dma_semaphore, #tpu.memory_space<semaphore_mem>> -> memref<!tpu.dma_semaphore, #tpu.memory_space<semaphore_mem>>
    tpu.wait_dma2 semaphore(%775 : memref<!tpu.dma_semaphore, #tpu.memory_space<semaphore_mem>>) src(%771 : memref<1x128xf32, #tpu.memory_space<any>>) dst(%773 : memref<1x128xf32, #tpu.memory_space<vmem>>)
    %c0_i32_812 = arith.constant 0 : i32
    %c0_i32_813 = arith.constant 0 : i32
    %c6_i32_814 = arith.constant 6 : i32
    %c0_i32_815 = arith.constant 0 : i32
    %776 = tpu.memref_slice %arg2[%628, %c0_i32_815] : memref<1024x128xf32, #tpu.memory_space<any>> -> memref<1x128xf32, #tpu.memory_space<any>>
    %c6_i32_816 = arith.constant 6 : i32
    %c0_i32_817 = arith.constant 0 : i32
    %777 = tpu.memref_slice %arg4[%c0_i32_812, %c6_i32_816, %c0_i32_817] : memref<2x8x128xf32, #tpu.memory_space<vmem>> -> memref<1x1x128xf32, #tpu.memory_space<vmem>>
    %778 = tpu.memref_squeeze %777 : memref<1x1x128xf32, #tpu.memory_space<vmem>> -> memref<1x128xf32, #tpu.memory_space<vmem>>
    %779 = tpu.memref_slice %arg5[%c0_i32_813, %c6_i32_814] : memref<2x8x!tpu.dma_semaphore, #tpu.memory_space<semaphore_mem>> -> memref<1x1x!tpu.dma_semaphore, #tpu.memory_space<semaphore_mem>>
    %780 = tpu.memref_squeeze %779 : memref<1x1x!tpu.dma_semaphore, #tpu.memory_space<semaphore_mem>> -> memref<!tpu.dma_semaphore, #tpu.memory_space<semaphore_mem>>
    tpu.wait_dma2 semaphore(%780 : memref<!tpu.dma_semaphore, #tpu.memory_space<semaphore_mem>>) src(%776 : memref<1x128xf32, #tpu.memory_space<any>>) dst(%778 : memref<1x128xf32, #tpu.memory_space<vmem>>)
    %c0_i32_818 = arith.constant 0 : i32
    %c0_i32_819 = arith.constant 0 : i32
    %c7_i32_820 = arith.constant 7 : i32
    %c0_i32_821 = arith.constant 0 : i32
    %781 = tpu.memref_slice %arg2[%635, %c0_i32_821] : memref<1024x128xf32, #tpu.memory_space<any>> -> memref<1x128xf32, #tpu.memory_space<any>>
    %c7_i32_822 = arith.constant 7 : i32
    %c0_i32_823 = arith.constant 0 : i32
    %782 = tpu.memref_slice %arg4[%c0_i32_818, %c7_i32_822, %c0_i32_823] : memref<2x8x128xf32, #tpu.memory_space<vmem>> -> memref<1x1x128xf32, #tpu.memory_space<vmem>>
    %783 = tpu.memref_squeeze %782 : memref<1x1x128xf32, #tpu.memory_space<vmem>> -> memref<1x128xf32, #tpu.memory_space<vmem>>
    %784 = tpu.memref_slice %arg5[%c0_i32_819, %c7_i32_820] : memref<2x8x!tpu.dma_semaphore, #tpu.memory_space<semaphore_mem>> -> memref<1x1x!tpu.dma_semaphore, #tpu.memory_space<semaphore_mem>>
    %785 = tpu.memref_squeeze %784 : memref<1x1x!tpu.dma_semaphore, #tpu.memory_space<semaphore_mem>> -> memref<!tpu.dma_semaphore, #tpu.memory_space<semaphore_mem>>
    tpu.wait_dma2 semaphore(%785 : memref<!tpu.dma_semaphore, #tpu.memory_space<semaphore_mem>>) src(%781 : memref<1x128xf32, #tpu.memory_space<any>>) dst(%783 : memref<1x128xf32, #tpu.memory_space<vmem>>)
    %c0_824 = arith.constant 0 : index
    %c0_825 = arith.constant 0 : index
    %c0_826 = arith.constant 0 : index
    %786 = vector.load %arg4[%c0_824, %c0_825, %c0_826] : memref<2x8x128xf32, #tpu.memory_space<vmem>>, vector<1x8x128xf32>
    %787 = vector.shape_cast %786 : vector<1x8x128xf32> to vector<8x128xf32>
    %cst_827 = arith.constant dense<0.000000e+00> : vector<128xf32>
    %788 = vector.multi_reduction <add>, %787, %cst_827 [0] : vector<8x128xf32> to vector<128xf32>
    %789 = vector.shape_cast %788 : vector<128xf32> to vector<1x128xf32>
    %cst_828 = arith.constant 1.250000e-01 : f32
    %790 = vector.broadcast %cst_828 : f32 to vector<1x128xf32>
    %791 = arith.mulf %789, %790 : vector<1x128xf32>
    %c6_829 = arith.constant 6 : index
    %c0_830 = arith.constant 0 : index
    %792 = vector.load %arg3[%c6_829, %c0_830] : memref<8x128xf32, #tpu.memory_space<vmem>>, vector<1x128xf32>
    tpu.vector_store %arg3[%c6_829, %c0_830], %791 {strides = array<i32>} : memref<8x128xf32, #tpu.memory_space<vmem>>, vector<1x128xf32>,
    %c1_i32_831 = arith.constant 1 : i32
    %c1_i32_832 = arith.constant 1 : i32
    %c0_i32_833 = arith.constant 0 : i32
    %c0_i32_834 = arith.constant 0 : i32
    %793 = tpu.memref_slice %arg2[%691, %c0_i32_834] : memref<1024x128xf32, #tpu.memory_space<any>> -> memref<1x128xf32, #tpu.memory_space<any>>
    %c0_i32_835 = arith.constant 0 : i32
    %c0_i32_836 = arith.constant 0 : i32
    %794 = tpu.memref_slice %arg4[%c1_i32_831, %c0_i32_835, %c0_i32_836] : memref<2x8x128xf32, #tpu.memory_space<vmem>> -> memref<1x1x128xf32, #tpu.memory_space<vmem>>
    %795 = tpu.memref_squeeze %794 : memref<1x1x128xf32, #tpu.memory_space<vmem>> -> memref<1x128xf32, #tpu.memory_space<vmem>>
    %796 = tpu.memref_slice %arg5[%c1_i32_832, %c0_i32_833] : memref<2x8x!tpu.dma_semaphore, #tpu.memory_space<semaphore_mem>> -> memref<1x1x!tpu.dma_semaphore, #tpu.memory_space<semaphore_mem>>
    %797 = tpu.memref_squeeze %796 : memref<1x1x!tpu.dma_semaphore, #tpu.memory_space<semaphore_mem>> -> memref<!tpu.dma_semaphore, #tpu.memory_space<semaphore_mem>>
    tpu.wait_dma2 semaphore(%797 : memref<!tpu.dma_semaphore, #tpu.memory_space<semaphore_mem>>) src(%793 : memref<1x128xf32, #tpu.memory_space<any>>) dst(%795 : memref<1x128xf32, #tpu.memory_space<vmem>>)
    %c1_i32_837 = arith.constant 1 : i32
    %c1_i32_838 = arith.constant 1 : i32
    %c1_i32_839 = arith.constant 1 : i32
    %c0_i32_840 = arith.constant 0 : i32
    %798 = tpu.memref_slice %arg2[%698, %c0_i32_840] : memref<1024x128xf32, #tpu.memory_space<any>> -> memref<1x128xf32, #tpu.memory_space<any>>
    %c1_i32_841 = arith.constant 1 : i32
    %c0_i32_842 = arith.constant 0 : i32
    %799 = tpu.memref_slice %arg4[%c1_i32_837, %c1_i32_841, %c0_i32_842] : memref<2x8x128xf32, #tpu.memory_space<vmem>> -> memref<1x1x128xf32, #tpu.memory_space<vmem>>
    %800 = tpu.memref_squeeze %799 : memref<1x1x128xf32, #tpu.memory_space<vmem>> -> memref<1x128xf32, #tpu.memory_space<vmem>>
    %801 = tpu.memref_slice %arg5[%c1_i32_838, %c1_i32_839] : memref<2x8x!tpu.dma_semaphore, #tpu.memory_space<semaphore_mem>> -> memref<1x1x!tpu.dma_semaphore, #tpu.memory_space<semaphore_mem>>
    %802 = tpu.memref_squeeze %801 : memref<1x1x!tpu.dma_semaphore, #tpu.memory_space<semaphore_mem>> -> memref<!tpu.dma_semaphore, #tpu.memory_space<semaphore_mem>>
    tpu.wait_dma2 semaphore(%802 : memref<!tpu.dma_semaphore, #tpu.memory_space<semaphore_mem>>) src(%798 : memref<1x128xf32, #tpu.memory_space<any>>) dst(%800 : memref<1x128xf32, #tpu.memory_space<vmem>>)
    %c1_i32_843 = arith.constant 1 : i32
    %c1_i32_844 = arith.constant 1 : i32
    %c2_i32_845 = arith.constant 2 : i32
    %c0_i32_846 = arith.constant 0 : i32
    %803 = tpu.memref_slice %arg2[%705, %c0_i32_846] : memref<1024x128xf32, #tpu.memory_space<any>> -> memref<1x128xf32, #tpu.memory_space<any>>
    %c2_i32_847 = arith.constant 2 : i32
    %c0_i32_848 = arith.constant 0 : i32
    %804 = tpu.memref_slice %arg4[%c1_i32_843, %c2_i32_847, %c0_i32_848] : memref<2x8x128xf32, #tpu.memory_space<vmem>> -> memref<1x1x128xf32, #tpu.memory_space<vmem>>
    %805 = tpu.memref_squeeze %804 : memref<1x1x128xf32, #tpu.memory_space<vmem>> -> memref<1x128xf32, #tpu.memory_space<vmem>>
    %806 = tpu.memref_slice %arg5[%c1_i32_844, %c2_i32_845] : memref<2x8x!tpu.dma_semaphore, #tpu.memory_space<semaphore_mem>> -> memref<1x1x!tpu.dma_semaphore, #tpu.memory_space<semaphore_mem>>
    %807 = tpu.memref_squeeze %806 : memref<1x1x!tpu.dma_semaphore, #tpu.memory_space<semaphore_mem>> -> memref<!tpu.dma_semaphore, #tpu.memory_space<semaphore_mem>>
    tpu.wait_dma2 semaphore(%807 : memref<!tpu.dma_semaphore, #tpu.memory_space<semaphore_mem>>) src(%803 : memref<1x128xf32, #tpu.memory_space<any>>) dst(%805 : memref<1x128xf32, #tpu.memory_space<vmem>>)
    %c1_i32_849 = arith.constant 1 : i32
    %c1_i32_850 = arith.constant 1 : i32
    %c3_i32_851 = arith.constant 3 : i32
    %c0_i32_852 = arith.constant 0 : i32
    %808 = tpu.memref_slice %arg2[%712, %c0_i32_852] : memref<1024x128xf32, #tpu.memory_space<any>> -> memref<1x128xf32, #tpu.memory_space<any>>
    %c3_i32_853 = arith.constant 3 : i32
    %c0_i32_854 = arith.constant 0 : i32
    %809 = tpu.memref_slice %arg4[%c1_i32_849, %c3_i32_853, %c0_i32_854] : memref<2x8x128xf32, #tpu.memory_space<vmem>> -> memref<1x1x128xf32, #tpu.memory_space<vmem>>
    %810 = tpu.memref_squeeze %809 : memref<1x1x128xf32, #tpu.memory_space<vmem>> -> memref<1x128xf32, #tpu.memory_space<vmem>>
    %811 = tpu.memref_slice %arg5[%c1_i32_850, %c3_i32_851] : memref<2x8x!tpu.dma_semaphore, #tpu.memory_space<semaphore_mem>> -> memref<1x1x!tpu.dma_semaphore, #tpu.memory_space<semaphore_mem>>
    %812 = tpu.memref_squeeze %811 : memref<1x1x!tpu.dma_semaphore, #tpu.memory_space<semaphore_mem>> -> memref<!tpu.dma_semaphore, #tpu.memory_space<semaphore_mem>>
    tpu.wait_dma2 semaphore(%812 : memref<!tpu.dma_semaphore, #tpu.memory_space<semaphore_mem>>) src(%808 : memref<1x128xf32, #tpu.memory_space<any>>) dst(%810 : memref<1x128xf32, #tpu.memory_space<vmem>>)
    %c1_i32_855 = arith.constant 1 : i32
    %c1_i32_856 = arith.constant 1 : i32
    %c4_i32_857 = arith.constant 4 : i32
    %c0_i32_858 = arith.constant 0 : i32
    %813 = tpu.memref_slice %arg2[%719, %c0_i32_858] : memref<1024x128xf32, #tpu.memory_space<any>> -> memref<1x128xf32, #tpu.memory_space<any>>
    %c4_i32_859 = arith.constant 4 : i32
    %c0_i32_860 = arith.constant 0 : i32
    %814 = tpu.memref_slice %arg4[%c1_i32_855, %c4_i32_859, %c0_i32_860] : memref<2x8x128xf32, #tpu.memory_space<vmem>> -> memref<1x1x128xf32, #tpu.memory_space<vmem>>
    %815 = tpu.memref_squeeze %814 : memref<1x1x128xf32, #tpu.memory_space<vmem>> -> memref<1x128xf32, #tpu.memory_space<vmem>>
    %816 = tpu.memref_slice %arg5[%c1_i32_856, %c4_i32_857] : memref<2x8x!tpu.dma_semaphore, #tpu.memory_space<semaphore_mem>> -> memref<1x1x!tpu.dma_semaphore, #tpu.memory_space<semaphore_mem>>
    %817 = tpu.memref_squeeze %816 : memref<1x1x!tpu.dma_semaphore, #tpu.memory_space<semaphore_mem>> -> memref<!tpu.dma_semaphore, #tpu.memory_space<semaphore_mem>>
    tpu.wait_dma2 semaphore(%817 : memref<!tpu.dma_semaphore, #tpu.memory_space<semaphore_mem>>) src(%813 : memref<1x128xf32, #tpu.memory_space<any>>) dst(%815 : memref<1x128xf32, #tpu.memory_space<vmem>>)
    %c1_i32_861 = arith.constant 1 : i32
    %c1_i32_862 = arith.constant 1 : i32
    %c5_i32_863 = arith.constant 5 : i32
    %c0_i32_864 = arith.constant 0 : i32
    %818 = tpu.memref_slice %arg2[%726, %c0_i32_864] : memref<1024x128xf32, #tpu.memory_space<any>> -> memref<1x128xf32, #tpu.memory_space<any>>
    %c5_i32_865 = arith.constant 5 : i32
    %c0_i32_866 = arith.constant 0 : i32
    %819 = tpu.memref_slice %arg4[%c1_i32_861, %c5_i32_865, %c0_i32_866] : memref<2x8x128xf32, #tpu.memory_space<vmem>> -> memref<1x1x128xf32, #tpu.memory_space<vmem>>
    %820 = tpu.memref_squeeze %819 : memref<1x1x128xf32, #tpu.memory_space<vmem>> -> memref<1x128xf32, #tpu.memory_space<vmem>>
    %821 = tpu.memref_slice %arg5[%c1_i32_862, %c5_i32_863] : memref<2x8x!tpu.dma_semaphore, #tpu.memory_space<semaphore_mem>> -> memref<1x1x!tpu.dma_semaphore, #tpu.memory_space<semaphore_mem>>
    %822 = tpu.memref_squeeze %821 : memref<1x1x!tpu.dma_semaphore, #tpu.memory_space<semaphore_mem>> -> memref<!tpu.dma_semaphore, #tpu.memory_space<semaphore_mem>>
    tpu.wait_dma2 semaphore(%822 : memref<!tpu.dma_semaphore, #tpu.memory_space<semaphore_mem>>) src(%818 : memref<1x128xf32, #tpu.memory_space<any>>) dst(%820 : memref<1x128xf32, #tpu.memory_space<vmem>>)
    %c1_i32_867 = arith.constant 1 : i32
    %c1_i32_868 = arith.constant 1 : i32
    %c6_i32_869 = arith.constant 6 : i32
    %c0_i32_870 = arith.constant 0 : i32
    %823 = tpu.memref_slice %arg2[%733, %c0_i32_870] : memref<1024x128xf32, #tpu.memory_space<any>> -> memref<1x128xf32, #tpu.memory_space<any>>
    %c6_i32_871 = arith.constant 6 : i32
    %c0_i32_872 = arith.constant 0 : i32
    %824 = tpu.memref_slice %arg4[%c1_i32_867, %c6_i32_871, %c0_i32_872] : memref<2x8x128xf32, #tpu.memory_space<vmem>> -> memref<1x1x128xf32, #tpu.memory_space<vmem>>
    %825 = tpu.memref_squeeze %824 : memref<1x1x128xf32, #tpu.memory_space<vmem>> -> memref<1x128xf32, #tpu.memory_space<vmem>>
    %826 = tpu.memref_slice %arg5[%c1_i32_868, %c6_i32_869] : memref<2x8x!tpu.dma_semaphore, #tpu.memory_space<semaphore_mem>> -> memref<1x1x!tpu.dma_semaphore, #tpu.memory_space<semaphore_mem>>
    %827 = tpu.memref_squeeze %826 : memref<1x1x!tpu.dma_semaphore, #tpu.memory_space<semaphore_mem>> -> memref<!tpu.dma_semaphore, #tpu.memory_space<semaphore_mem>>
    tpu.wait_dma2 semaphore(%827 : memref<!tpu.dma_semaphore, #tpu.memory_space<semaphore_mem>>) src(%823 : memref<1x128xf32, #tpu.memory_space<any>>) dst(%825 : memref<1x128xf32, #tpu.memory_space<vmem>>)
    %c1_i32_873 = arith.constant 1 : i32
    %c1_i32_874 = arith.constant 1 : i32
    %c7_i32_875 = arith.constant 7 : i32
    %c0_i32_876 = arith.constant 0 : i32
    %828 = tpu.memref_slice %arg2[%740, %c0_i32_876] : memref<1024x128xf32, #tpu.memory_space<any>> -> memref<1x128xf32, #tpu.memory_space<any>>
    %c7_i32_877 = arith.constant 7 : i32
    %c0_i32_878 = arith.constant 0 : i32
    %829 = tpu.memref_slice %arg4[%c1_i32_873, %c7_i32_877, %c0_i32_878] : memref<2x8x128xf32, #tpu.memory_space<vmem>> -> memref<1x1x128xf32, #tpu.memory_space<vmem>>
    %830 = tpu.memref_squeeze %829 : memref<1x1x128xf32, #tpu.memory_space<vmem>> -> memref<1x128xf32, #tpu.memory_space<vmem>>
    %831 = tpu.memref_slice %arg5[%c1_i32_874, %c7_i32_875] : memref<2x8x!tpu.dma_semaphore, #tpu.memory_space<semaphore_mem>> -> memref<1x1x!tpu.dma_semaphore, #tpu.memory_space<semaphore_mem>>
    %832 = tpu.memref_squeeze %831 : memref<1x1x!tpu.dma_semaphore, #tpu.memory_space<semaphore_mem>> -> memref<!tpu.dma_semaphore, #tpu.memory_space<semaphore_mem>>
    tpu.wait_dma2 semaphore(%832 : memref<!tpu.dma_semaphore, #tpu.memory_space<semaphore_mem>>) src(%828 : memref<1x128xf32, #tpu.memory_space<any>>) dst(%830 : memref<1x128xf32, #tpu.memory_space<vmem>>)
    %c1_879 = arith.constant 1 : index
    %c0_880 = arith.constant 0 : index
    %c0_881 = arith.constant 0 : index
    %833 = vector.load %arg4[%c1_879, %c0_880, %c0_881] : memref<2x8x128xf32, #tpu.memory_space<vmem>>, vector<1x8x128xf32>
    %834 = vector.shape_cast %833 : vector<1x8x128xf32> to vector<8x128xf32>
    %cst_882 = arith.constant dense<0.000000e+00> : vector<128xf32>
    %835 = vector.multi_reduction <add>, %834, %cst_882 [0] : vector<8x128xf32> to vector<128xf32>
    %836 = vector.shape_cast %835 : vector<128xf32> to vector<1x128xf32>
    %cst_883 = arith.constant 1.250000e-01 : f32
    %837 = vector.broadcast %cst_883 : f32 to vector<1x128xf32>
    %838 = arith.mulf %836, %837 : vector<1x128xf32>
    %c7_884 = arith.constant 7 : index
    %c0_885 = arith.constant 0 : index
    %839 = vector.load %arg3[%c7_884, %c0_885] : memref<8x128xf32, #tpu.memory_space<vmem>>, vector<1x128xf32>
    tpu.vector_store %arg3[%c7_884, %c0_885], %838 {strides = array<i32>} : memref<8x128xf32, #tpu.memory_space<vmem>>, vector<1x128xf32>,
    return
  }
  func.func @transform_1(%arg0: i32, %arg1: memref<8x8xi32, #tpu.memory_space<smem>>) -> (i32, i32) {
    %c0_i32 = arith.constant 0 : i32
    %c0_i32_0 = arith.constant 0 : i32
    return %arg0, %c0_i32 : i32, i32
  }
}

</mosaic_0001>

<llo_original>
// kernel: embedding_mean.1
$region0: #{embedding_mean.1}
  #allocation0 [shape = 'u32[]', space=smem, size = 0x4, offset = 0x4, fixed_abs, tag = 'smem constant byte address 0x4 - core index']
  #allocation1 [shape = 'u32[72,128]{1,0:T(1,128)}', space=vmem, size = 0x9000, scoped, tag = 'internal scratch']
  #allocation2 [shape = 'f32[2,8,128]{2,1,0:T(8,128)}', space=vmem, size = 0x2000, scoped, tag = 'scratch operand']
  #allocation3 [shape = 's32[16]{0}', space=sflag, size = 0x40, scoped, tag = 'scratch operand']
  #allocation4 [shape = 's32[1]{0}', space=sflag, size = 0x4, scoped, tag = 'scoped memory for embedding_mean.1']
  #allocation5 [shape = 'u8[4096]{0}', space=smem, size = 0x1000, scoped, tag = 'prefetched SMEM operand 0']
  #allocation6 [shape = 's32[]', space=sflag, size = 0x4, offset = 0, fixed_abs, tag = 'sflag constant byte address 0x0 - dummy sync flag']
  #allocation7 [shape = 's32[]', space=sflag, size = 0x4, offset = 0, fixed_abs, tag = 'sflag constant byte address 0x0 - dummy sync flag']
  #allocation8 [shape = 's32[]', space=sflag, size = 0x4, offset = 0, fixed_abs, tag = 'sflag constant byte address 0x0 - dummy sync flag']
  #allocation9 [shape = 's32[]', space=sflag, size = 0x4, offset = 0, fixed_abs, tag = 'sflag constant byte address 0x0 - dummy sync flag']
  #allocation10 [shape = 's32[]', space=sflag, size = 0x4, offset = 0, fixed_abs, tag = 'sflag constant byte address 0x0 - dummy sync flag']
  #allocation11 [shape = 's32[]', space=sflag, size = 0x4, offset = 0, fixed_abs, tag = 'sflag constant byte address 0x0 - dummy sync flag']
  #allocation12 [shape = 's32[]', space=sflag, size = 0x4, offset = 0, fixed_abs, tag = 'sflag constant byte address 0x0 - dummy sync flag']
  #allocation13 [shape = 's32[]', space=sflag, size = 0x4, offset = 0, fixed_abs, tag = 'sflag constant byte address 0x0 - dummy sync flag']
  #allocation14 [shape = 's32[]', space=sflag, size = 0x4, offset = 0, fixed_abs, tag = 'sflag constant byte address 0x0 - dummy sync flag']
  #allocation15 [shape = 's32[]', space=sflag, size = 0x4, offset = 0, fixed_abs, tag = 'sflag constant byte address 0x0 - dummy sync flag']
  #allocation16 [shape = 's32[]', space=sflag, size = 0x4, offset = 0, fixed_abs, tag = 'sflag constant byte address 0x0 - dummy sync flag']
  #allocation17 [shape = 's32[]', space=sflag, size = 0x4, offset = 0, fixed_abs, tag = 'sflag constant byte address 0x0 - dummy sync flag']
  #allocation18 [shape = 's32[]', space=sflag, size = 0x4, offset = 0, fixed_abs, tag = 'sflag constant byte address 0x0 - dummy sync flag']
  #allocation19 [shape = 's32[]', space=sflag, size = 0x4, offset = 0, fixed_abs, tag = 'sflag constant byte address 0x0 - dummy sync flag']
  #allocation20 [shape = 's32[]', space=sflag, size = 0x4, offset = 0, fixed_abs, tag = 'sflag constant byte address 0x0 - dummy sync flag']
  #allocation21 [shape = 's32[]', space=sflag, size = 0x4, offset = 0, fixed_abs, tag = 'sflag constant byte address 0x0 - dummy sync flag']
  #allocation22 [shape = 's32[]', space=sflag, size = 0x4, offset = 0, fixed_abs, tag = 'sflag constant byte address 0x0 - dummy sync flag']
  #allocation23 [shape = 's32[]', space=sflag, size = 0x4, offset = 0, fixed_abs, tag = 'sflag constant byte address 0x0 - dummy sync flag']
  #allocation24 [shape = 's32[]', space=sflag, size = 0x4, offset = 0, fixed_abs, tag = 'sflag constant byte address 0x0 - dummy sync flag']
  #allocation25 [shape = 's32[]', space=sflag, size = 0x4, offset = 0, fixed_abs, tag = 'sflag constant byte address 0x0 - dummy sync flag']
  #allocation26 [shape = 's32[]', space=sflag, size = 0x4, offset = 0, fixed_abs, tag = 'sflag constant byte address 0x0 - dummy sync flag']
  #allocation27 [shape = 's32[]', space=sflag, size = 0x4, offset = 0, fixed_abs, tag = 'sflag constant byte address 0x0 - dummy sync flag']
  #allocation28 [shape = 's32[]', space=sflag, size = 0x4, offset = 0, fixed_abs, tag = 'sflag constant byte address 0x0 - dummy sync flag']
  #allocation29 [shape = 's32[]', space=sflag, size = 0x4, offset = 0, fixed_abs, tag = 'sflag constant byte address 0x0 - dummy sync flag']
  #allocation30 [shape = 's32[]', space=sflag, size = 0x4, offset = 0, fixed_abs, tag = 'sflag constant byte address 0x0 - dummy sync flag']
  #allocation31 [shape = 's32[]', space=sflag, size = 0x4, offset = 0, fixed_abs, tag = 'sflag constant byte address 0x0 - dummy sync flag']
  #allocation32 [shape = 's32[]', space=sflag, size = 0x4, offset = 0, fixed_abs, tag = 'sflag constant byte address 0x0 - dummy sync flag']
  #allocation33 [shape = 's32[]', space=sflag, size = 0x4, offset = 0, fixed_abs, tag = 'sflag constant byte address 0x0 - dummy sync flag']
  #allocation34 [shape = 's32[]', space=sflag, size = 0x4, offset = 0, fixed_abs, tag = 'sflag constant byte address 0x0 - dummy sync flag']
  #allocation35 [shape = 's32[]', space=sflag, size = 0x4, offset = 0, fixed_abs, tag = 'sflag constant byte address 0x0 - dummy sync flag']
  #allocation36 [shape = 's32[]', space=sflag, size = 0x4, offset = 0, fixed_abs, tag = 'sflag constant byte address 0x0 - dummy sync flag']
  #allocation37 [shape = 's32[]', space=sflag, size = 0x4, offset = 0, fixed_abs, tag = 'sflag constant byte address 0x0 - dummy sync flag']
  #allocation38 [shape = 's32[]', space=sflag, size = 0x4, offset = 0, fixed_abs, tag = 'sflag constant byte address 0x0 - dummy sync flag']
  #allocation39 [shape = 's32[]', space=sflag, size = 0x4, offset = 0, fixed_abs, tag = 'sflag constant byte address 0x0 - dummy sync flag']
  #allocation40 [shape = 's32[]', space=sflag, size = 0x4, offset = 0, fixed_abs, tag = 'sflag constant byte address 0x0 - dummy sync flag']
  #allocation41 [shape = 's32[]', space=sflag, size = 0x4, offset = 0, fixed_abs, tag = 'sflag constant byte address 0x0 - dummy sync flag']
  #allocation42 [shape = 's32[]', space=sflag, size = 0x4, offset = 0, fixed_abs, tag = 'sflag constant byte address 0x0 - dummy sync flag']
  #allocation43 [shape = 's32[]', space=sflag, size = 0x4, offset = 0, fixed_abs, tag = 'sflag constant byte address 0x0 - dummy sync flag']
  #allocation44 [shape = 's32[]', space=sflag, size = 0x4, offset = 0, fixed_abs, tag = 'sflag constant byte address 0x0 - dummy sync flag']
  #allocation45 [shape = 's32[]', space=sflag, size = 0x4, offset = 0, fixed_abs, tag = 'sflag constant byte address 0x0 - dummy sync flag']
  #allocation46 [shape = 's32[]', space=sflag, size = 0x4, offset = 0, fixed_abs, tag = 'sflag constant byte address 0x0 - dummy sync flag']
  #allocation47 [shape = 's32[]', space=sflag, size = 0x4, offset = 0, fixed_abs, tag = 'sflag constant byte address 0x0 - dummy sync flag']
  #allocation48 [shape = 's32[]', space=sflag, size = 0x4, offset = 0, fixed_abs, tag = 'sflag constant byte address 0x0 - dummy sync flag']
  #allocation49 [shape = 's32[]', space=sflag, size = 0x4, offset = 0, fixed_abs, tag = 'sflag constant byte address 0x0 - dummy sync flag']
  #allocation50 [shape = 's32[]', space=sflag, size = 0x4, offset = 0, fixed_abs, tag = 'sflag constant byte address 0x0 - dummy sync flag']
  #allocation51 [shape = 's32[]', space=sflag, size = 0x4, offset = 0, fixed_abs, tag = 'sflag constant byte address 0x0 - dummy sync flag']
  #allocation52 [shape = 's32[]', space=sflag, size = 0x4, offset = 0, fixed_abs, tag = 'sflag constant byte address 0x0 - dummy sync flag']
  #allocation53 [shape = 's32[]', space=sflag, size = 0x4, offset = 0, fixed_abs, tag = 'sflag constant byte address 0x0 - dummy sync flag']
  #allocation54 [shape = 's32[]', space=sflag, size = 0x4, offset = 0, fixed_abs, tag = 'sflag constant byte address 0x0 - dummy sync flag']
  #allocation55 [shape = 's32[]', space=sflag, size = 0x4, offset = 0, fixed_abs, tag = 'sflag constant byte address 0x0 - dummy sync flag']
  #allocation56 [shape = 's32[]', space=sflag, size = 0x4, offset = 0, fixed_abs, tag = 'sflag constant byte address 0x0 - dummy sync flag']
  #allocation57 [shape = 's32[]', space=sflag, size = 0x4, offset = 0, fixed_abs, tag = 'sflag constant byte address 0x0 - dummy sync flag']
  #allocation58 [shape = 's32[]', space=sflag, size = 0x4, offset = 0, fixed_abs, tag = 'sflag constant byte address 0x0 - dummy sync flag']
  #allocation59 [shape = 's32[]', space=sflag, size = 0x4, offset = 0, fixed_abs, tag = 'sflag constant byte address 0x0 - dummy sync flag']
  #allocation60 [shape = 's32[]', space=sflag, size = 0x4, offset = 0, fixed_abs, tag = 'sflag constant byte address 0x0 - dummy sync flag']
  #allocation61 [shape = 's32[]', space=sflag, size = 0x4, offset = 0, fixed_abs, tag = 'sflag constant byte address 0x0 - dummy sync flag']
  #allocation62 [shape = 's32[]', space=sflag, size = 0x4, offset = 0, fixed_abs, tag = 'sflag constant byte address 0x0 - dummy sync flag']
  #allocation63 [shape = 's32[]', space=sflag, size = 0x4, offset = 0, fixed_abs, tag = 'sflag constant byte address 0x0 - dummy sync flag']
  #allocation64 [shape = 's32[]', space=sflag, size = 0x4, offset = 0, fixed_abs, tag = 'sflag constant byte address 0x0 - dummy sync flag']
  #allocation65 [shape = 's32[]', space=sflag, size = 0x4, offset = 0, fixed_abs, tag = 'sflag constant byte address 0x0 - dummy sync flag']
  #allocation66 [shape = 's32[]', space=sflag, size = 0x4, offset = 0, fixed_abs, tag = 'sflag constant byte address 0x0 - dummy sync flag']
  #allocation67 [shape = 's32[]', space=sflag, size = 0x4, offset = 0, fixed_abs, tag = 'sflag constant byte address 0x0 - dummy sync flag']
  #allocation68 [shape = 's32[]', space=sflag, size = 0x4, offset = 0, fixed_abs, tag = 'sflag constant byte address 0x0 - dummy sync flag']
  #allocation69 [shape = 's32[]', space=sflag, size = 0x4, offset = 0, fixed_abs, tag = 'sflag constant byte address 0x0 - dummy sync flag']
  %s0 = inlined_call_operand.vmem [shape: s32[8,8], index: 0, kind: input, shape index: {}]
  %s1 = inlined_call_operand.vmem [shape: f32[1024,128], index: 1, kind: input, shape index: {}]
  %s2 = inlined_call_operand.vmem [shape: f32[8,128], index: 2, kind: output, shape index: {}]
  %s3 = sld [smem:[#allocation0]]
  $region1930: #{embedding_mean.1} parent=0
    _
  %s5 = ssub.s32 1, %s3
  %s6 = scalar_select 0, %s5, %s3
  %s8 = sshll.u32 %s0, 4
  %s9 = int_to_ptr.vmem [resolvable:$true] %s8
  %11 = dma.vmem_to_smem %s9, 128, [#allocation5], [#allocation4]
  %13 = dma.done [#allocation4], 128
  %14 = sfence
  %s15 = smul.u32 0, 8
  %s16 = smul.u32 %s15, 128
  %s17 = sld [smem:[#allocation5 + %s16]]
  %s18 = scalar_lea.vmem %s1, %s17
  // Predicated region
  $region2: #{embedding_mean.1} parent=0 // pred_check
    _
  $region3: #{embedding_mean.1} parent=0 // pred_check_branch
    %20 = sbr.rel target = $region5
  $region4: #{embedding_mean.1} parent=0 // pred_region
    // Predicated region
    $region17: #{embedding_mean.1} parent=4 // pred_check
      _
    $region18: #{embedding_mean.1} parent=4 // pred_check_branch
      %36 = sbr.rel (0) target = $region20
    $region19: #{embedding_mean.1} parent=4 // pred_region
      %s38 = ssub.s32 2, 1
      loop: start=0, step=1, limit=1
      $region21: #{embedding_mean.1} parent=19 // loop_pre_header
        _
      $region22: #{embedding_mean.1} parent=19 // loop_header
        %s40 = sphi 0, %s44
        %p41 = scmp.ge.s32.totalorder %s40, 1
        %s45 = sphi %s18, %s18
        %s46 = sphi [#allocation2], [#allocation2]
      $region23: #{embedding_mean.1} parent=19 // loop_header_branch
        %43 = sbr.rel (%p41) target = $region27
      $region24: #{embedding_mean.1} parent=19 // loop_body
        %v47 = vld [vmem:[%s45] sm:%s38]
        %48 = vst [vmem:[%s46] sm:%s38] %v47
      $region25: #{embedding_mean.1} parent=19 // loop_footer
        %s44 = sadd.s32 1, %s40
      $region26: #{embedding_mean.1} parent=19 // loop_footer_branch
        %39 = sbr.rel target = $region22
      $region27: #{embedding_mean.1} parent=19 // loop_exit
        _
    $region20: #{embedding_mean.1} parent=4 // pred_fallthru
      _
  $region5: #{embedding_mean.1} parent=0 // pred_fallthru
    _
  // Predicated region
  $region6: #{embedding_mean.1} parent=0 // pred_check
    _
  $region7: #{embedding_mean.1} parent=0 // pred_check_branch
    %22 = sbr.rel (0) target = $region9
  $region8: #{embedding_mean.1} parent=0 // pred_region
    %s24 = ssub.s32 2, 1
    loop: start=0, step=1, limit=1
    $region10: #{embedding_mean.1} parent=8 // loop_pre_header
      _
    $region11: #{embedding_mean.1} parent=8 // loop_header
      %s26 = sphi 0, %s30
      %p27 = scmp.ge.s32.totalorder %s26, 1
      %s31 = sphi %s18, %s18
      %s32 = sphi [#allocation2], [#allocation2]
    $region12: #{embedding_mean.1} parent=8 // loop_header_branch
      %29 = sbr.rel (%p27) target = $region16
    $region13: #{embedding_mean.1} parent=8 // loop_body
      %v33 = vld [vmem:[%s31] sm:%s24]
      %34 = vst [vmem:[%s32] sm:%s24] %v33
    $region14: #{embedding_mean.1} parent=8 // loop_footer
      %s30 = sadd.s32 1, %s26
    $region15: #{embedding_mean.1} parent=8 // loop_footer_branch
      %25 = sbr.rel target = $region11
    $region16: #{embedding_mean.1} parent=8 // loop_exit
      _
  $region9: #{embedding_mean.1} parent=0 // pred_fallthru
    _
  // Predicated region
  $region28: #{embedding_mean.1} parent=0 // pred_check
    _
  $region29: #{embedding_mean.1} parent=0 // pred_check_branch
    %51 = sbr.rel (0) target = $region31
  $region30: #{embedding_mean.1} parent=0 // pred_region
    %52 = vsyncadd [#allocation3], 16
  $region31: #{embedding_mean.1} parent=0 // pred_fallthru
    _
  %s53 = sadd.s32 %s16, 1
  %s54 = sld [smem:[#allocation5 + %s53]]
  %s55 = scalar_lea.vmem %s1, %s54
  %s56 = scalar_lea.vmem [#allocation2], 1
  %s57 = scalar_lea.sflag [#allocation3], 1
  // Predicated region
  $region32: #{embedding_mean.1} parent=0 // pred_check
    _
  $region33: #{embedding_mean.1} parent=0 // pred_check_branch
    %59 = sbr.rel target = $region35
  $region34: #{embedding_mean.1} parent=0 // pred_region
    // Predicated region
    $region47: #{embedding_mean.1} parent=34 // pred_check
      _
    $region48: #{embedding_mean.1} parent=34 // pred_check_branch
      %75 = sbr.rel (0) target = $region50
    $region49: #{embedding_mean.1} parent=34 // pred_region
      %s77 = ssub.s32 2, 1
      loop: start=0, step=1, limit=1
      $region51: #{embedding_mean.1} parent=49 // loop_pre_header
        _
      $region52: #{embedding_mean.1} parent=49 // loop_header
        %s79 = sphi 0, %s83
        %p80 = scmp.ge.s32.totalorder %s79, 1
        %s84 = sphi %s55, %s55
        %s85 = sphi %s56, %s56
      $region53: #{embedding_mean.1} parent=49 // loop_header_branch
        %82 = sbr.rel (%p80) target = $region57
      $region54: #{embedding_mean.1} parent=49 // loop_body
        %v86 = vld [vmem:[%s84] sm:%s77]
        %87 = vst [vmem:[%s85] sm:%s77] %v86
      $region55: #{embedding_mean.1} parent=49 // loop_footer
        %s83 = sadd.s32 1, %s79
      $region56: #{embedding_mean.1} parent=49 // loop_footer_branch
        %78 = sbr.rel target = $region52
      $region57: #{embedding_mean.1} parent=49 // loop_exit
        _
    $region50: #{embedding_mean.1} parent=34 // pred_fallthru
      _
  $region35: #{embedding_mean.1} parent=0 // pred_fallthru
    _
  // Predicated region
  $region36: #{embedding_mean.1} parent=0 // pred_check
    _
  $region37: #{embedding_mean.1} parent=0 // pred_check_branch
    %61 = sbr.rel (0) target = $region39
  $region38: #{embedding_mean.1} parent=0 // pred_region
    %s63 = ssub.s32 2, 1
    loop: start=0, step=1, limit=1
    $region40: #{embedding_mean.1} parent=38 // loop_pre_header
      _
    $region41: #{embedding_mean.1} parent=38 // loop_header
      %s65 = sphi 0, %s69
      %p66 = scmp.ge.s32.totalorder %s65, 1
      %s70 = sphi %s55, %s55
      %s71 = sphi %s56, %s56
    $region42: #{embedding_mean.1} parent=38 // loop_header_branch
      %68 = sbr.rel (%p66) target = $region46
    $region43: #{embedding_mean.1} parent=38 // loop_body
      %v72 = vld [vmem:[%s70] sm:%s63]
      %73 = vst [vmem:[%s71] sm:%s63] %v72
    $region44: #{embedding_mean.1} parent=38 // loop_footer
      %s69 = sadd.s32 1, %s65
    $region45: #{embedding_mean.1} parent=38 // loop_footer_branch
      %64 = sbr.rel target = $region41
    $region46: #{embedding_mean.1} parent=38 // loop_exit
      _
  $region39: #{embedding_mean.1} parent=0 // pred_fallthru
    _
  // Predicated region
  $region58: #{embedding_mean.1} parent=0 // pred_check
    _
  $region59: #{embedding_mean.1} parent=0 // pred_check_branch
    %90 = sbr.rel (0) target = $region61
  $region60: #{embedding_mean.1} parent=0 // pred_region
    %91 = vsyncadd %s57, 16
  $region61: #{embedding_mean.1} parent=0 // pred_fallthru
    _
  %s92 = sadd.s32 %s16, 2
  %s93 = sld [smem:[#allocation5 + %s92]]
  %s94 = scalar_lea.vmem %s1, %s93
  %s95 = scalar_lea.vmem [#allocation2], 2
  %s96 = scalar_lea.sflag [#allocation3], 2
  // Predicated region
  $region62: #{embedding_mean.1} parent=0 // pred_check
    _
  $region63: #{embedding_mean.1} parent=0 // pred_check_branch
    %98 = sbr.rel target = $region65
  $region64: #{embedding_mean.1} parent=0 // pred_region
    // Predicated region
    $region77: #{embedding_mean.1} parent=64 // pred_check
      _
    $region78: #{embedding_mean.1} parent=64 // pred_check_branch
      %114 = sbr.rel (0) target = $region80
    $region79: #{embedding_mean.1} parent=64 // pred_region
      %s116 = ssub.s32 2, 1
      loop: start=0, step=1, limit=1
      $region81: #{embedding_mean.1} parent=79 // loop_pre_header
        _
      $region82: #{embedding_mean.1} parent=79 // loop_header
        %s118 = sphi 0, %s122
        %p119 = scmp.ge.s32.totalorder %s118, 1
        %s123 = sphi %s94, %s94
        %s124 = sphi %s95, %s95
      $region83: #{embedding_mean.1} parent=79 // loop_header_branch
        %121 = sbr.rel (%p119) target = $region87
      $region84: #{embedding_mean.1} parent=79 // loop_body
        %v125 = vld [vmem:[%s123] sm:%s116]
        %126 = vst [vmem:[%s124] sm:%s116] %v125
      $region85: #{embedding_mean.1} parent=79 // loop_footer
        %s122 = sadd.s32 1, %s118
      $region86: #{embedding_mean.1} parent=79 // loop_footer_branch
        %117 = sbr.rel target = $region82
      $region87: #{embedding_mean.1} parent=79 // loop_exit
        _
    $region80: #{embedding_mean.1} parent=64 // pred_fallthru
      _
  $region65: #{embedding_mean.1} parent=0 // pred_fallthru
    _
  // Predicated region
  $region66: #{embedding_mean.1} parent=0 // pred_check
    _
  $region67: #{embedding_mean.1} parent=0 // pred_check_branch
    %100 = sbr.rel (0) target = $region69
  $region68: #{embedding_mean.1} parent=0 // pred_region
    %s102 = ssub.s32 2, 1
    loop: start=0, step=1, limit=1
    $region70: #{embedding_mean.1} parent=68 // loop_pre_header
      _
    $region71: #{embedding_mean.1} parent=68 // loop_header
      %s104 = sphi 0, %s108
      %p105 = scmp.ge.s32.totalorder %s104, 1
      %s109 = sphi %s94, %s94
      %s110 = sphi %s95, %s95
    $region72: #{embedding_mean.1} parent=68 // loop_header_branch
      %107 = sbr.rel (%p105) target = $region76
    $region73: #{embedding_mean.1} parent=68 // loop_body
      %v111 = vld [vmem:[%s109] sm:%s102]
      %112 = vst [vmem:[%s110] sm:%s102] %v111
    $region74: #{embedding_mean.1} parent=68 // loop_footer
      %s108 = sadd.s32 1, %s104
    $region75: #{embedding_mean.1} parent=68 // loop_footer_branch
      %103 = sbr.rel target = $region71
    $region76: #{embedding_mean.1} parent=68 // loop_exit
      _
  $region69: #{embedding_mean.1} parent=0 // pred_fallthru
    _
  // Predicated region
  $region88: #{embedding_mean.1} parent=0 // pred_check
    _
  $region89: #{embedding_mean.1} parent=0 // pred_check_branch
    %129 = sbr.rel (0) target = $region91
  $region90: #{embedding_mean.1} parent=0 // pred_region
    %130 = vsyncadd %s96, 16
  $region91: #{embedding_mean.1} parent=0 // pred_fallthru
    _
  %s131 = sadd.s32 %s16, 3
  %s132 = sld [smem:[#allocation5 + %s131]]
  %s133 = scalar_lea.vmem %s1, %s132
  %s134 = scalar_lea.vmem [#allocation2], 3
  %s135 = scalar_lea.sflag [#allocation3], 3
  // Predicated region
  $region92: #{embedding_mean.1} parent=0 // pred_check
    _
  $region93: #{embedding_mean.1} parent=0 // pred_check_branch
    %137 = sbr.rel target = $region95
  $region94: #{embedding_mean.1} parent=0 // pred_region
    // Predicated region
    $region107: #{embedding_mean.1} parent=94 // pred_check
      _
    $region108: #{embedding_mean.1} parent=94 // pred_check_branch
      %153 = sbr.rel (0) target = $region110
    $region109: #{embedding_mean.1} parent=94 // pred_region
      %s155 = ssub.s32 2, 1
      loop: start=0, step=1, limit=1
      $region111: #{embedding_mean.1} parent=109 // loop_pre_header
        _
      $region112: #{embedding_mean.1} parent=109 // loop_header
        %s157 = sphi 0, %s161
        %p158 = scmp.ge.s32.totalorder %s157, 1
        %s162 = sphi %s133, %s133
        %s163 = sphi %s134, %s134
      $region113: #{embedding_mean.1} parent=109 // loop_header_branch
        %160 = sbr.rel (%p158) target = $region117
      $region114: #{embedding_mean.1} parent=109 // loop_body
        %v164 = vld [vmem:[%s162] sm:%s155]
        %165 = vst [vmem:[%s163] sm:%s155] %v164
      $region115: #{embedding_mean.1} parent=109 // loop_footer
        %s161 = sadd.s32 1, %s157
      $region116: #{embedding_mean.1} parent=109 // loop_footer_branch
        %156 = sbr.rel target = $region112
      $region117: #{embedding_mean.1} parent=109 // loop_exit
        _
    $region110: #{embedding_mean.1} parent=94 // pred_fallthru
      _
  $region95: #{embedding_mean.1} parent=0 // pred_fallthru
    _
  // Predicated region
  $region96: #{embedding_mean.1} parent=0 // pred_check
    _
  $region97: #{embedding_mean.1} parent=0 // pred_check_branch
    %139 = sbr.rel (0) target = $region99
  $region98: #{embedding_mean.1} parent=0 // pred_region
    %s141 = ssub.s32 2, 1
    loop: start=0, step=1, limit=1
    $region100: #{embedding_mean.1} parent=98 // loop_pre_header
      _
    $region101: #{embedding_mean.1} parent=98 // loop_header
      %s143 = sphi 0, %s147
      %p144 = scmp.ge.s32.totalorder %s143, 1
      %s148 = sphi %s133, %s133
      %s149 = sphi %s134, %s134
    $region102: #{embedding_mean.1} parent=98 // loop_header_branch
      %146 = sbr.rel (%p144) target = $region106
    $region103: #{embedding_mean.1} parent=98 // loop_body
      %v150 = vld [vmem:[%s148] sm:%s141]
      %151 = vst [vmem:[%s149] sm:%s141] %v150
    $region104: #{embedding_mean.1} parent=98 // loop_footer
      %s147 = sadd.s32 1, %s143
    $region105: #{embedding_mean.1} parent=98 // loop_footer_branch
      %142 = sbr.rel target = $region101
    $region106: #{embedding_mean.1} parent=98 // loop_exit
      _
  $region99: #{embedding_mean.1} parent=0 // pred_fallthru
    _
  // Predicated region
  $region118: #{embedding_mean.1} parent=0 // pred_check
    _
  $region119: #{embedding_mean.1} parent=0 // pred_check_branch
    %168 = sbr.rel (0) target = $region121
  $region120: #{embedding_mean.1} parent=0 // pred_region
    %169 = vsyncadd %s135, 16
  $region121: #{embedding_mean.1} parent=0 // pred_fallthru
    _
  %s170 = sadd.s32 %s16, 4
  %s171 = sld [smem:[#allocation5 + %s170]]
  %s172 = scalar_lea.vmem %s1, %s171
  %s173 = scalar_lea.vmem [#allocation2], 4
  %s174 = scalar_lea.sflag [#allocation3], 4
  // Predicated region
  $region122: #{embedding_mean.1} parent=0 // pred_check
    _
  $region123: #{embedding_mean.1} parent=0 // pred_check_branch
    %176 = sbr.rel target = $region125
  $region124: #{embedding_mean.1} parent=0 // pred_region
    // Predicated region
    $region137: #{embedding_mean.1} parent=124 // pred_check
      _
    $region138: #{embedding_mean.1} parent=124 // pred_check_branch
      %192 = sbr.rel (0) target = $region140
    $region139: #{embedding_mean.1} parent=124 // pred_region
      %s194 = ssub.s32 2, 1
      loop: start=0, step=1, limit=1
      $region141: #{embedding_mean.1} parent=139 // loop_pre_header
        _
      $region142: #{embedding_mean.1} parent=139 // loop_header
        %s196 = sphi 0, %s200
        %p197 = scmp.ge.s32.totalorder %s196, 1
        %s201 = sphi %s172, %s172
        %s202 = sphi %s173, %s173
      $region143: #{embedding_mean.1} parent=139 // loop_header_branch
        %199 = sbr.rel (%p197) target = $region147
      $region144: #{embedding_mean.1} parent=139 // loop_body
        %v203 = vld [vmem:[%s201] sm:%s194]
        %204 = vst [vmem:[%s202] sm:%s194] %v203
      $region145: #{embedding_mean.1} parent=139 // loop_footer
        %s200 = sadd.s32 1, %s196
      $region146: #{embedding_mean.1} parent=139 // loop_footer_branch
        %195 = sbr.rel target = $region142
      $region147: #{embedding_mean.1} parent=139 // loop_exit
        _
    $region140: #{embedding_mean.1} parent=124 // pred_fallthru
      _
  $region125: #{embedding_mean.1} parent=0 // pred_fallthru
    _
  // Predicated region
  $region126: #{embedding_mean.1} parent=0 // pred_check
    _
  $region127: #{embedding_mean.1} parent=0 // pred_check_branch
    %178 = sbr.rel (0) target = $region129
  $region128: #{embedding_mean.1} parent=0 // pred_region
    %s180 = ssub.s32 2, 1
    loop: start=0, step=1, limit=1
    $region130: #{embedding_mean.1} parent=128 // loop_pre_header
      _
    $region131: #{embedding_mean.1} parent=128 // loop_header
      %s182 = sphi 0, %s186
      %p183 = scmp.ge.s32.totalorder %s182, 1
      %s187 = sphi %s172, %s172
      %s188 = sphi %s173, %s173
    $region132: #{embedding_mean.1} parent=128 // loop_header_branch
      %185 = sbr.rel (%p183) target = $region136
    $region133: #{embedding_mean.1} parent=128 // loop_body
      %v189 = vld [vmem:[%s187] sm:%s180]
      %190 = vst [vmem:[%s188] sm:%s180] %v189
    $region134: #{embedding_mean.1} parent=128 // loop_footer
      %s186 = sadd.s32 1, %s182
    $region135: #{embedding_mean.1} parent=128 // loop_footer_branch
      %181 = sbr.rel target = $region131
    $region136: #{embedding_mean.1} parent=128 // loop_exit
      _
  $region129: #{embedding_mean.1} parent=0 // pred_fallthru
    _
  // Predicated region
  $region148: #{embedding_mean.1} parent=0 // pred_check
    _
  $region149: #{embedding_mean.1} parent=0 // pred_check_branch
    %207 = sbr.rel (0) target = $region151
  $region150: #{embedding_mean.1} parent=0 // pred_region
    %208 = vsyncadd %s174, 16
  $region151: #{embedding_mean.1} parent=0 // pred_fallthru
    _
  %s209 = sadd.s32 %s16, 5
  %s210 = sld [smem:[#allocation5 + %s209]]
  %s211 = scalar_lea.vmem %s1, %s210
  %s212 = scalar_lea.vmem [#allocation2], 5
  %s213 = scalar_lea.sflag [#allocation3], 5
  // Predicated region
  $region152: #{embedding_mean.1} parent=0 // pred_check
    _
  $region153: #{embedding_mean.1} parent=0 // pred_check_branch
    %215 = sbr.rel target = $region155
  $region154: #{embedding_mean.1} parent=0 // pred_region
    // Predicated region
    $region167: #{embedding_mean.1} parent=154 // pred_check
      _
    $region168: #{embedding_mean.1} parent=154 // pred_check_branch
      %231 = sbr.rel (0) target = $region170
    $region169: #{embedding_mean.1} parent=154 // pred_region
      %s233 = ssub.s32 2, 1
      loop: start=0, step=1, limit=1
      $region171: #{embedding_mean.1} parent=169 // loop_pre_header
        _
      $region172: #{embedding_mean.1} parent=169 // loop_header
        %s235 = sphi 0, %s239
        %p236 = scmp.ge.s32.totalorder %s235, 1
        %s240 = sphi %s211, %s211
        %s241 = sphi %s212, %s212
      $region173: #{embedding_mean.1} parent=169 // loop_header_branch
        %238 = sbr.rel (%p236) target = $region177
      $region174: #{embedding_mean.1} parent=169 // loop_body
        %v242 = vld [vmem:[%s240] sm:%s233]
        %243 = vst [vmem:[%s241] sm:%s233] %v242
      $region175: #{embedding_mean.1} parent=169 // loop_footer
        %s239 = sadd.s32 1, %s235
      $region176: #{embedding_mean.1} parent=169 // loop_footer_branch
        %234 = sbr.rel target = $region172
      $region177: #{embedding_mean.1} parent=169 // loop_exit
        _
    $region170: #{embedding_mean.1} parent=154 // pred_fallthru
      _
  $region155: #{embedding_mean.1} parent=0 // pred_fallthru
    _
  // Predicated region
  $region156: #{embedding_mean.1} parent=0 // pred_check
    _
  $region157: #{embedding_mean.1} parent=0 // pred_check_branch
    %217 = sbr.rel (0) target = $region159
  $region158: #{embedding_mean.1} parent=0 // pred_region
    %s219 = ssub.s32 2, 1
    loop: start=0, step=1, limit=1
    $region160: #{embedding_mean.1} parent=158 // loop_pre_header
      _
    $region161: #{embedding_mean.1} parent=158 // loop_header
      %s221 = sphi 0, %s225
      %p222 = scmp.ge.s32.totalorder %s221, 1
      %s226 = sphi %s211, %s211
      %s227 = sphi %s212, %s212
    $region162: #{embedding_mean.1} parent=158 // loop_header_branch
      %224 = sbr.rel (%p222) target = $region166
    $region163: #{embedding_mean.1} parent=158 // loop_body
      %v228 = vld [vmem:[%s226] sm:%s219]
      %229 = vst [vmem:[%s227] sm:%s219] %v228
    $region164: #{embedding_mean.1} parent=158 // loop_footer
      %s225 = sadd.s32 1, %s221
    $region165: #{embedding_mean.1} parent=158 // loop_footer_branch
      %220 = sbr.rel target = $region161
    $region166: #{embedding_mean.1} parent=158 // loop_exit
      _
  $region159: #{embedding_mean.1} parent=0 // pred_fallthru
    _
  // Predicated region
  $region178: #{embedding_mean.1} parent=0 // pred_check
    _
  $region179: #{embedding_mean.1} parent=0 // pred_check_branch
    %246 = sbr.rel (0) target = $region181
  $region180: #{embedding_mean.1} parent=0 // pred_region
    %247 = vsyncadd %s213, 16
  $region181: #{embedding_mean.1} parent=0 // pred_fallthru
    _
  %s248 = sadd.s32 %s16, 6
  %s249 = sld [smem:[#allocation5 + %s248]]
  %s250 = scalar_lea.vmem %s1, %s249
  %s251 = scalar_lea.vmem [#allocation2], 6
  %s252 = scalar_lea.sflag [#allocation3], 6
  // Predicated region
  $region182: #{embedding_mean.1} parent=0 // pred_check
    _
  $region183: #{embedding_mean.1} parent=0 // pred_check_branch
    %254 = sbr.rel target = $region185
  $region184: #{embedding_mean.1} parent=0 // pred_region
    // Predicated region
    $region197: #{embedding_mean.1} parent=184 // pred_check
      _
    $region198: #{embedding_mean.1} parent=184 // pred_check_branch
      %270 = sbr.rel (0) target = $region200
    $region199: #{embedding_mean.1} parent=184 // pred_region
      %s272 = ssub.s32 2, 1
      loop: start=0, step=1, limit=1
      $region201: #{embedding_mean.1} parent=199 // loop_pre_header
        _
      $region202: #{embedding_mean.1} parent=199 // loop_header
        %s274 = sphi 0, %s278
        %p275 = scmp.ge.s32.totalorder %s274, 1
        %s279 = sphi %s250, %s250
        %s280 = sphi %s251, %s251
      $region203: #{embedding_mean.1} parent=199 // loop_header_branch
        %277 = sbr.rel (%p275) target = $region207
      $region204: #{embedding_mean.1} parent=199 // loop_body
        %v281 = vld [vmem:[%s279] sm:%s272]
        %282 = vst [vmem:[%s280] sm:%s272] %v281
      $region205: #{embedding_mean.1} parent=199 // loop_footer
        %s278 = sadd.s32 1, %s274
      $region206: #{embedding_mean.1} parent=199 // loop_footer_branch
        %273 = sbr.rel target = $region202
      $region207: #{embedding_mean.1} parent=199 // loop_exit
        _
    $region200: #{embedding_mean.1} parent=184 // pred_fallthru
      _
  $region185: #{embedding_mean.1} parent=0 // pred_fallthru
    _
  // Predicated region
  $region186: #{embedding_mean.1} parent=0 // pred_check
    _
  $region187: #{embedding_mean.1} parent=0 // pred_check_branch
    %256 = sbr.rel (0) target = $region189
  $region188: #{embedding_mean.1} parent=0 // pred_region
    %s258 = ssub.s32 2, 1
    loop: start=0, step=1, limit=1
    $region190: #{embedding_mean.1} parent=188 // loop_pre_header
      _
    $region191: #{embedding_mean.1} parent=188 // loop_header
      %s260 = sphi 0, %s264
      %p261 = scmp.ge.s32.totalorder %s260, 1
      %s265 = sphi %s250, %s250
      %s266 = sphi %s251, %s251
    $region192: #{embedding_mean.1} parent=188 // loop_header_branch
      %263 = sbr.rel (%p261) target = $region196
    $region193: #{embedding_mean.1} parent=188 // loop_body
      %v267 = vld [vmem:[%s265] sm:%s258]
      %268 = vst [vmem:[%s266] sm:%s258] %v267
    $region194: #{embedding_mean.1} parent=188 // loop_footer
      %s264 = sadd.s32 1, %s260
    $region195: #{embedding_mean.1} parent=188 // loop_footer_branch
      %259 = sbr.rel target = $region191
    $region196: #{embedding_mean.1} parent=188 // loop_exit
      _
  $region189: #{embedding_mean.1} parent=0 // pred_fallthru
    _
  // Predicated region
  $region208: #{embedding_mean.1} parent=0 // pred_check
    _
  $region209: #{embedding_mean.1} parent=0 // pred_check_branch
    %285 = sbr.rel (0) target = $region211
  $region210: #{embedding_mean.1} parent=0 // pred_region
    %286 = vsyncadd %s252, 16
  $region211: #{embedding_mean.1} parent=0 // pred_fallthru
    _
  %s287 = sadd.s32 %s16, 7
  %s288 = sld [smem:[#allocation5 + %s287]]
  %s289 = scalar_lea.vmem %s1, %s288
  %s290 = scalar_lea.vmem [#allocation2], 7
  %s291 = scalar_lea.sflag [#allocation3], 7
  // Predicated region
  $region212: #{embedding_mean.1} parent=0 // pred_check
    _
  $region213: #{embedding_mean.1} parent=0 // pred_check_branch
    %293 = sbr.rel target = $region215
  $region214: #{embedding_mean.1} parent=0 // pred_region
    // Predicated region
    $region227: #{embedding_mean.1} parent=214 // pred_check
      _
    $region228: #{embedding_mean.1} parent=214 // pred_check_branch
      %309 = sbr.rel (0) target = $region230
    $region229: #{embedding_mean.1} parent=214 // pred_region
      %s311 = ssub.s32 2, 1
      loop: start=0, step=1, limit=1
      $region231: #{embedding_mean.1} parent=229 // loop_pre_header
        _
      $region232: #{embedding_mean.1} parent=229 // loop_header
        %s313 = sphi 0, %s317
        %p314 = scmp.ge.s32.totalorder %s313, 1
        %s318 = sphi %s289, %s289
        %s319 = sphi %s290, %s290
      $region233: #{embedding_mean.1} parent=229 // loop_header_branch
        %316 = sbr.rel (%p314) target = $region237
      $region234: #{embedding_mean.1} parent=229 // loop_body
        %v320 = vld [vmem:[%s318] sm:%s311]
        %321 = vst [vmem:[%s319] sm:%s311] %v320
      $region235: #{embedding_mean.1} parent=229 // loop_footer
        %s317 = sadd.s32 1, %s313
      $region236: #{embedding_mean.1} parent=229 // loop_footer_branch
        %312 = sbr.rel target = $region232
      $region237: #{embedding_mean.1} parent=229 // loop_exit
        _
    $region230: #{embedding_mean.1} parent=214 // pred_fallthru
      _
  $region215: #{embedding_mean.1} parent=0 // pred_fallthru
    _
  // Predicated region
  $region216: #{embedding_mean.1} parent=0 // pred_check
    _
  $region217: #{embedding_mean.1} parent=0 // pred_check_branch
    %295 = sbr.rel (0) target = $region219
  $region218: #{embedding_mean.1} parent=0 // pred_region
    %s297 = ssub.s32 2, 1
    loop: start=0, step=1, limit=1
    $region220: #{embedding_mean.1} parent=218 // loop_pre_header
      _
    $region221: #{embedding_mean.1} parent=218 // loop_header
      %s299 = sphi 0, %s303
      %p300 = scmp.ge.s32.totalorder %s299, 1
      %s304 = sphi %s289, %s289
      %s305 = sphi %s290, %s290
    $region222: #{embedding_mean.1} parent=218 // loop_header_branch
      %302 = sbr.rel (%p300) target = $region226
    $region223: #{embedding_mean.1} parent=218 // loop_body
      %v306 = vld [vmem:[%s304] sm:%s297]
      %307 = vst [vmem:[%s305] sm:%s297] %v306
    $region224: #{embedding_mean.1} parent=218 // loop_footer
      %s303 = sadd.s32 1, %s299
    $region225: #{embedding_mean.1} parent=218 // loop_footer_branch
      %298 = sbr.rel target = $region221
    $region226: #{embedding_mean.1} parent=218 // loop_exit
      _
  $region219: #{embedding_mean.1} parent=0 // pred_fallthru
    _
  // Predicated region
  $region238: #{embedding_mean.1} parent=0 // pred_check
    _
  $region239: #{embedding_mean.1} parent=0 // pred_check_branch
    %324 = sbr.rel (0) target = $region241
  $region240: #{embedding_mean.1} parent=0 // pred_region
    %325 = vsyncadd %s291, 16
  $region241: #{embedding_mean.1} parent=0 // pred_fallthru
    _
  %s326 = sadd.s32 %s15, 1
  %s327 = smul.u32 %s326, 128
  %s328 = sld [smem:[#allocation5 + %s327]]
  %s329 = scalar_lea.vmem %s1, %s328
  %s330 = scalar_lea.vmem [#allocation2], 8
  %s331 = scalar_lea.sflag [#allocation3], 8
  // Predicated region
  $region242: #{embedding_mean.1} parent=0 // pred_check
    _
  $region243: #{embedding_mean.1} parent=0 // pred_check_branch
    %333 = sbr.rel target = $region245
  $region244: #{embedding_mean.1} parent=0 // pred_region
    // Predicated region
    $region257: #{embedding_mean.1} parent=244 // pred_check
      _
    $region258: #{embedding_mean.1} parent=244 // pred_check_branch
      %349 = sbr.rel (0) target = $region260
    $region259: #{embedding_mean.1} parent=244 // pred_region
      %s351 = ssub.s32 2, 1
      loop: start=0, step=1, limit=1
      $region261: #{embedding_mean.1} parent=259 // loop_pre_header
        _
      $region262: #{embedding_mean.1} parent=259 // loop_header
        %s353 = sphi 0, %s357
        %p354 = scmp.ge.s32.totalorder %s353, 1
        %s358 = sphi %s329, %s329
        %s359 = sphi %s330, %s330
      $region263: #{embedding_mean.1} parent=259 // loop_header_branch
        %356 = sbr.rel (%p354) target = $region267
      $region264: #{embedding_mean.1} parent=259 // loop_body
        %v360 = vld [vmem:[%s358] sm:%s351]
        %361 = vst [vmem:[%s359] sm:%s351] %v360
      $region265: #{embedding_mean.1} parent=259 // loop_footer
        %s357 = sadd.s32 1, %s353
      $region266: #{embedding_mean.1} parent=259 // loop_footer_branch
        %352 = sbr.rel target = $region262
      $region267: #{embedding_mean.1} parent=259 // loop_exit
        _
    $region260: #{embedding_mean.1} parent=244 // pred_fallthru
      _
  $region245: #{embedding_mean.1} parent=0 // pred_fallthru
    _
  // Predicated region
  $region246: #{embedding_mean.1} parent=0 // pred_check
    _
  $region247: #{embedding_mean.1} parent=0 // pred_check_branch
    %335 = sbr.rel (0) target = $region249
  $region248: #{embedding_mean.1} parent=0 // pred_region
    %s337 = ssub.s32 2, 1
    loop: start=0, step=1, limit=1
    $region250: #{embedding_mean.1} parent=248 // loop_pre_header
      _
    $region251: #{embedding_mean.1} parent=248 // loop_header
      %s339 = sphi 0, %s343
      %p340 = scmp.ge.s32.totalorder %s339, 1
      %s344 = sphi %s329, %s329
      %s345 = sphi %s330, %s330
    $region252: #{embedding_mean.1} parent=248 // loop_header_branch
      %342 = sbr.rel (%p340) target = $region256
    $region253: #{embedding_mean.1} parent=248 // loop_body
      %v346 = vld [vmem:[%s344] sm:%s337]
      %347 = vst [vmem:[%s345] sm:%s337] %v346
    $region254: #{embedding_mean.1} parent=248 // loop_footer
      %s343 = sadd.s32 1, %s339
    $region255: #{embedding_mean.1} parent=248 // loop_footer_branch
      %338 = sbr.rel target = $region251
    $region256: #{embedding_mean.1} parent=248 // loop_exit
      _
  $region249: #{embedding_mean.1} parent=0 // pred_fallthru
    _
  // Predicated region
  $region268: #{embedding_mean.1} parent=0 // pred_check
    _
  $region269: #{embedding_mean.1} parent=0 // pred_check_branch
    %364 = sbr.rel (0) target = $region271
  $region270: #{embedding_mean.1} parent=0 // pred_region
    %365 = vsyncadd %s331, 16
  $region271: #{embedding_mean.1} parent=0 // pred_fallthru
    _
  %s366 = sadd.s32 %s327, 1
  %s367 = sld [smem:[#allocation5 + %s366]]
  %s368 = scalar_lea.vmem %s1, %s367
  %s369 = scalar_lea.vmem [#allocation2], 9
  %s370 = scalar_lea.sflag [#allocation3], 9
  // Predicated region
  $region272: #{embedding_mean.1} parent=0 // pred_check
    _
  $region273: #{embedding_mean.1} parent=0 // pred_check_branch
    %372 = sbr.rel target = $region275
  $region274: #{embedding_mean.1} parent=0 // pred_region
    // Predicated region
    $region287: #{embedding_mean.1} parent=274 // pred_check
      _
    $region288: #{embedding_mean.1} parent=274 // pred_check_branch
      %388 = sbr.rel (0) target = $region290
    $region289: #{embedding_mean.1} parent=274 // pred_region
      %s390 = ssub.s32 2, 1
      loop: start=0, step=1, limit=1
      $region291: #{embedding_mean.1} parent=289 // loop_pre_header
        _
      $region292: #{embedding_mean.1} parent=289 // loop_header
        %s392 = sphi 0, %s396
        %p393 = scmp.ge.s32.totalorder %s392, 1
        %s397 = sphi %s368, %s368
        %s398 = sphi %s369, %s369
      $region293: #{embedding_mean.1} parent=289 // loop_header_branch
        %395 = sbr.rel (%p393) target = $region297
      $region294: #{embedding_mean.1} parent=289 // loop_body
        %v399 = vld [vmem:[%s397] sm:%s390]
        %400 = vst [vmem:[%s398] sm:%s390] %v399
      $region295: #{embedding_mean.1} parent=289 // loop_footer
        %s396 = sadd.s32 1, %s392
      $region296: #{embedding_mean.1} parent=289 // loop_footer_branch
        %391 = sbr.rel target = $region292
      $region297: #{embedding_mean.1} parent=289 // loop_exit
        _
    $region290: #{embedding_mean.1} parent=274 // pred_fallthru
      _
  $region275: #{embedding_mean.1} parent=0 // pred_fallthru
    _
  // Predicated region
  $region276: #{embedding_mean.1} parent=0 // pred_check
    _
  $region277: #{embedding_mean.1} parent=0 // pred_check_branch
    %374 = sbr.rel (0) target = $region279
  $region278: #{embedding_mean.1} parent=0 // pred_region
    %s376 = ssub.s32 2, 1
    loop: start=0, step=1, limit=1
    $region280: #{embedding_mean.1} parent=278 // loop_pre_header
      _
    $region281: #{embedding_mean.1} parent=278 // loop_header
      %s378 = sphi 0, %s382
      %p379 = scmp.ge.s32.totalorder %s378, 1
      %s383 = sphi %s368, %s368
      %s384 = sphi %s369, %s369
    $region282: #{embedding_mean.1} parent=278 // loop_header_branch
      %381 = sbr.rel (%p379) target = $region286
    $region283: #{embedding_mean.1} parent=278 // loop_body
      %v385 = vld [vmem:[%s383] sm:%s376]
      %386 = vst [vmem:[%s384] sm:%s376] %v385
    $region284: #{embedding_mean.1} parent=278 // loop_footer
      %s382 = sadd.s32 1, %s378
    $region285: #{embedding_mean.1} parent=278 // loop_footer_branch
      %377 = sbr.rel target = $region281
    $region286: #{embedding_mean.1} parent=278 // loop_exit
      _
  $region279: #{embedding_mean.1} parent=0 // pred_fallthru
    _
  // Predicated region
  $region298: #{embedding_mean.1} parent=0 // pred_check
    _
  $region299: #{embedding_mean.1} parent=0 // pred_check_branch
    %403 = sbr.rel (0) target = $region301
  $region300: #{embedding_mean.1} parent=0 // pred_region
    %404 = vsyncadd %s370, 16
  $region301: #{embedding_mean.1} parent=0 // pred_fallthru
    _
  %s405 = sadd.s32 %s327, 2
  %s406 = sld [smem:[#allocation5 + %s405]]
  %s407 = scalar_lea.vmem %s1, %s406
  %s408 = scalar_lea.vmem [#allocation2], 10
  %s409 = scalar_lea.sflag [#allocation3], 10
  // Predicated region
  $region302: #{embedding_mean.1} parent=0 // pred_check
    _
  $region303: #{embedding_mean.1} parent=0 // pred_check_branch
    %411 = sbr.rel target = $region305
  $region304: #{embedding_mean.1} parent=0 // pred_region
    // Predicated region
    $region317: #{embedding_mean.1} parent=304 // pred_check
      _
    $region318: #{embedding_mean.1} parent=304 // pred_check_branch
      %427 = sbr.rel (0) target = $region320
    $region319: #{embedding_mean.1} parent=304 // pred_region
      %s429 = ssub.s32 2, 1
      loop: start=0, step=1, limit=1
      $region321: #{embedding_mean.1} parent=319 // loop_pre_header
        _
      $region322: #{embedding_mean.1} parent=319 // loop_header
        %s431 = sphi 0, %s435
        %p432 = scmp.ge.s32.totalorder %s431, 1
        %s436 = sphi %s407, %s407
        %s437 = sphi %s408, %s408
      $region323: #{embedding_mean.1} parent=319 // loop_header_branch
        %434 = sbr.rel (%p432) target = $region327
      $region324: #{embedding_mean.1} parent=319 // loop_body
        %v438 = vld [vmem:[%s436] sm:%s429]
        %439 = vst [vmem:[%s437] sm:%s429] %v438
      $region325: #{embedding_mean.1} parent=319 // loop_footer
        %s435 = sadd.s32 1, %s431
      $region326: #{embedding_mean.1} parent=319 // loop_footer_branch
        %430 = sbr.rel target = $region322
      $region327: #{embedding_mean.1} parent=319 // loop_exit
        _
    $region320: #{embedding_mean.1} parent=304 // pred_fallthru
      _
  $region305: #{embedding_mean.1} parent=0 // pred_fallthru
    _
  // Predicated region
  $region306: #{embedding_mean.1} parent=0 // pred_check
    _
  $region307: #{embedding_mean.1} parent=0 // pred_check_branch
    %413 = sbr.rel (0) target = $region309
  $region308: #{embedding_mean.1} parent=0 // pred_region
    %s415 = ssub.s32 2, 1
    loop: start=0, step=1, limit=1
    $region310: #{embedding_mean.1} parent=308 // loop_pre_header
      _
    $region311: #{embedding_mean.1} parent=308 // loop_header
      %s417 = sphi 0, %s421
      %p418 = scmp.ge.s32.totalorder %s417, 1
      %s422 = sphi %s407, %s407
      %s423 = sphi %s408, %s408
    $region312: #{embedding_mean.1} parent=308 // loop_header_branch
      %420 = sbr.rel (%p418) target = $region316
    $region313: #{embedding_mean.1} parent=308 // loop_body
      %v424 = vld [vmem:[%s422] sm:%s415]
      %425 = vst [vmem:[%s423] sm:%s415] %v424
    $region314: #{embedding_mean.1} parent=308 // loop_footer
      %s421 = sadd.s32 1, %s417
    $region315: #{embedding_mean.1} parent=308 // loop_footer_branch
      %416 = sbr.rel target = $region311
    $region316: #{embedding_mean.1} parent=308 // loop_exit
      _
  $region309: #{embedding_mean.1} parent=0 // pred_fallthru
    _
  // Predicated region
  $region328: #{embedding_mean.1} parent=0 // pred_check
    _
  $region329: #{embedding_mean.1} parent=0 // pred_check_branch
    %442 = sbr.rel (0) target = $region331
  $region330: #{embedding_mean.1} parent=0 // pred_region
    %443 = vsyncadd %s409, 16
  $region331: #{embedding_mean.1} parent=0 // pred_fallthru
    _
  %s444 = sadd.s32 %s327, 3
  %s445 = sld [smem:[#allocation5 + %s444]]
  %s446 = scalar_lea.vmem %s1, %s445
  %s447 = scalar_lea.vmem [#allocation2], 11
  %s448 = scalar_lea.sflag [#allocation3], 11
  // Predicated region
  $region332: #{embedding_mean.1} parent=0 // pred_check
    _
  $region333: #{embedding_mean.1} parent=0 // pred_check_branch
    %450 = sbr.rel target = $region335
  $region334: #{embedding_mean.1} parent=0 // pred_region
    // Predicated region
    $region347: #{embedding_mean.1} parent=334 // pred_check
      _
    $region348: #{embedding_mean.1} parent=334 // pred_check_branch
      %466 = sbr.rel (0) target = $region350
    $region349: #{embedding_mean.1} parent=334 // pred_region
      %s468 = ssub.s32 2, 1
      loop: start=0, step=1, limit=1
      $region351: #{embedding_mean.1} parent=349 // loop_pre_header
        _
      $region352: #{embedding_mean.1} parent=349 // loop_header
        %s470 = sphi 0, %s474
        %p471 = scmp.ge.s32.totalorder %s470, 1
        %s475 = sphi %s446, %s446
        %s476 = sphi %s447, %s447
      $region353: #{embedding_mean.1} parent=349 // loop_header_branch
        %473 = sbr.rel (%p471) target = $region357
      $region354: #{embedding_mean.1} parent=349 // loop_body
        %v477 = vld [vmem:[%s475] sm:%s468]
        %478 = vst [vmem:[%s476] sm:%s468] %v477
      $region355: #{embedding_mean.1} parent=349 // loop_footer
        %s474 = sadd.s32 1, %s470
      $region356: #{embedding_mean.1} parent=349 // loop_footer_branch
        %469 = sbr.rel target = $region352
      $region357: #{embedding_mean.1} parent=349 // loop_exit
        _
    $region350: #{embedding_mean.1} parent=334 // pred_fallthru
      _
  $region335: #{embedding_mean.1} parent=0 // pred_fallthru
    _
  // Predicated region
  $region336: #{embedding_mean.1} parent=0 // pred_check
    _
  $region337: #{embedding_mean.1} parent=0 // pred_check_branch
    %452 = sbr.rel (0) target = $region339
  $region338: #{embedding_mean.1} parent=0 // pred_region
    %s454 = ssub.s32 2, 1
    loop: start=0, step=1, limit=1
    $region340: #{embedding_mean.1} parent=338 // loop_pre_header
      _
    $region341: #{embedding_mean.1} parent=338 // loop_header
      %s456 = sphi 0, %s460
      %p457 = scmp.ge.s32.totalorder %s456, 1
      %s461 = sphi %s446, %s446
      %s462 = sphi %s447, %s447
    $region342: #{embedding_mean.1} parent=338 // loop_header_branch
      %459 = sbr.rel (%p457) target = $region346
    $region343: #{embedding_mean.1} parent=338 // loop_body
      %v463 = vld [vmem:[%s461] sm:%s454]
      %464 = vst [vmem:[%s462] sm:%s454] %v463
    $region344: #{embedding_mean.1} parent=338 // loop_footer
      %s460 = sadd.s32 1, %s456
    $region345: #{embedding_mean.1} parent=338 // loop_footer_branch
      %455 = sbr.rel target = $region341
    $region346: #{embedding_mean.1} parent=338 // loop_exit
      _
  $region339: #{embedding_mean.1} parent=0 // pred_fallthru
    _
  // Predicated region
  $region358: #{embedding_mean.1} parent=0 // pred_check
    _
  $region359: #{embedding_mean.1} parent=0 // pred_check_branch
    %481 = sbr.rel (0) target = $region361
  $region360: #{embedding_mean.1} parent=0 // pred_region
    %482 = vsyncadd %s448, 16
  $region361: #{embedding_mean.1} parent=0 // pred_fallthru
    _
  %s483 = sadd.s32 %s327, 4
  %s484 = sld [smem:[#allocation5 + %s483]]
  %s485 = scalar_lea.vmem %s1, %s484
  %s486 = scalar_lea.vmem [#allocation2], 12
  %s487 = scalar_lea.sflag [#allocation3], 12
  // Predicated region
  $region362: #{embedding_mean.1} parent=0 // pred_check
    _
  $region363: #{embedding_mean.1} parent=0 // pred_check_branch
    %489 = sbr.rel target = $region365
  $region364: #{embedding_mean.1} parent=0 // pred_region
    // Predicated region
    $region377: #{embedding_mean.1} parent=364 // pred_check
      _
    $region378: #{embedding_mean.1} parent=364 // pred_check_branch
      %505 = sbr.rel (0) target = $region380
    $region379: #{embedding_mean.1} parent=364 // pred_region
      %s507 = ssub.s32 2, 1
      loop: start=0, step=1, limit=1
      $region381: #{embedding_mean.1} parent=379 // loop_pre_header
        _
      $region382: #{embedding_mean.1} parent=379 // loop_header
        %s509 = sphi 0, %s513
        %p510 = scmp.ge.s32.totalorder %s509, 1
        %s514 = sphi %s485, %s485
        %s515 = sphi %s486, %s486
      $region383: #{embedding_mean.1} parent=379 // loop_header_branch
        %512 = sbr.rel (%p510) target = $region387
      $region384: #{embedding_mean.1} parent=379 // loop_body
        %v516 = vld [vmem:[%s514] sm:%s507]
        %517 = vst [vmem:[%s515] sm:%s507] %v516
      $region385: #{embedding_mean.1} parent=379 // loop_footer
        %s513 = sadd.s32 1, %s509
      $region386: #{embedding_mean.1} parent=379 // loop_footer_branch
        %508 = sbr.rel target = $region382
      $region387: #{embedding_mean.1} parent=379 // loop_exit
        _
    $region380: #{embedding_mean.1} parent=364 // pred_fallthru
      _
  $region365: #{embedding_mean.1} parent=0 // pred_fallthru
    _
  // Predicated region
  $region366: #{embedding_mean.1} parent=0 // pred_check
    _
  $region367: #{embedding_mean.1} parent=0 // pred_check_branch
    %491 = sbr.rel (0) target = $region369
  $region368: #{embedding_mean.1} parent=0 // pred_region
    %s493 = ssub.s32 2, 1
    loop: start=0, step=1, limit=1
    $region370: #{embedding_mean.1} parent=368 // loop_pre_header
      _
    $region371: #{embedding_mean.1} parent=368 // loop_header
      %s495 = sphi 0, %s499
      %p496 = scmp.ge.s32.totalorder %s495, 1
      %s500 = sphi %s485, %s485
      %s501 = sphi %s486, %s486
    $region372: #{embedding_mean.1} parent=368 // loop_header_branch
      %498 = sbr.rel (%p496) target = $region376
    $region373: #{embedding_mean.1} parent=368 // loop_body
      %v502 = vld [vmem:[%s500] sm:%s493]
      %503 = vst [vmem:[%s501] sm:%s493] %v502
    $region374: #{embedding_mean.1} parent=368 // loop_footer
      %s499 = sadd.s32 1, %s495
    $region375: #{embedding_mean.1} parent=368 // loop_footer_branch
      %494 = sbr.rel target = $region371
    $region376: #{embedding_mean.1} parent=368 // loop_exit
      _
  $region369: #{embedding_mean.1} parent=0 // pred_fallthru
    _
  // Predicated region
  $region388: #{embedding_mean.1} parent=0 // pred_check
    _
  $region389: #{embedding_mean.1} parent=0 // pred_check_branch
    %520 = sbr.rel (0) target = $region391
  $region390: #{embedding_mean.1} parent=0 // pred_region
    %521 = vsyncadd %s487, 16
  $region391: #{embedding_mean.1} parent=0 // pred_fallthru
    _
  %s522 = sadd.s32 %s327, 5
  %s523 = sld [smem:[#allocation5 + %s522]]
  %s524 = scalar_lea.vmem %s1, %s523
  %s525 = scalar_lea.vmem [#allocation2], 13
  %s526 = scalar_lea.sflag [#allocation3], 13
  // Predicated region
  $region392: #{embedding_mean.1} parent=0 // pred_check
    _
  $region393: #{embedding_mean.1} parent=0 // pred_check_branch
    %528 = sbr.rel target = $region395
  $region394: #{embedding_mean.1} parent=0 // pred_region
    // Predicated region
    $region407: #{embedding_mean.1} parent=394 // pred_check
      _
    $region408: #{embedding_mean.1} parent=394 // pred_check_branch
      %544 = sbr.rel (0) target = $region410
    $region409: #{embedding_mean.1} parent=394 // pred_region
      %s546 = ssub.s32 2, 1
      loop: start=0, step=1, limit=1
      $region411: #{embedding_mean.1} parent=409 // loop_pre_header
        _
      $region412: #{embedding_mean.1} parent=409 // loop_header
        %s548 = sphi 0, %s552
        %p549 = scmp.ge.s32.totalorder %s548, 1
        %s553 = sphi %s524, %s524
        %s554 = sphi %s525, %s525
      $region413: #{embedding_mean.1} parent=409 // loop_header_branch
        %551 = sbr.rel (%p549) target = $region417
      $region414: #{embedding_mean.1} parent=409 // loop_body
        %v555 = vld [vmem:[%s553] sm:%s546]
        %556 = vst [vmem:[%s554] sm:%s546] %v555
      $region415: #{embedding_mean.1} parent=409 // loop_footer
        %s552 = sadd.s32 1, %s548
      $region416: #{embedding_mean.1} parent=409 // loop_footer_branch
        %547 = sbr.rel target = $region412
      $region417: #{embedding_mean.1} parent=409 // loop_exit
        _
    $region410: #{embedding_mean.1} parent=394 // pred_fallthru
      _
  $region395: #{embedding_mean.1} parent=0 // pred_fallthru
    _
  // Predicated region
  $region396: #{embedding_mean.1} parent=0 // pred_check
    _
  $region397: #{embedding_mean.1} parent=0 // pred_check_branch
    %530 = sbr.rel (0) target = $region399
  $region398: #{embedding_mean.1} parent=0 // pred_region
    %s532 = ssub.s32 2, 1
    loop: start=0, step=1, limit=1
    $region400: #{embedding_mean.1} parent=398 // loop_pre_header
      _
    $region401: #{embedding_mean.1} parent=398 // loop_header
      %s534 = sphi 0, %s538
      %p535 = scmp.ge.s32.totalorder %s534, 1
      %s539 = sphi %s524, %s524
      %s540 = sphi %s525, %s525
    $region402: #{embedding_mean.1} parent=398 // loop_header_branch
      %537 = sbr.rel (%p535) target = $region406
    $region403: #{embedding_mean.1} parent=398 // loop_body
      %v541 = vld [vmem:[%s539] sm:%s532]
      %542 = vst [vmem:[%s540] sm:%s532] %v541
    $region404: #{embedding_mean.1} parent=398 // loop_footer
      %s538 = sadd.s32 1, %s534
    $region405: #{embedding_mean.1} parent=398 // loop_footer_branch
      %533 = sbr.rel target = $region401
    $region406: #{embedding_mean.1} parent=398 // loop_exit
      _
  $region399: #{embedding_mean.1} parent=0 // pred_fallthru
    _
  // Predicated region
  $region418: #{embedding_mean.1} parent=0 // pred_check
    _
  $region419: #{embedding_mean.1} parent=0 // pred_check_branch
    %559 = sbr.rel (0) target = $region421
  $region420: #{embedding_mean.1} parent=0 // pred_region
    %560 = vsyncadd %s526, 16
  $region421: #{embedding_mean.1} parent=0 // pred_fallthru
    _
  %s561 = sadd.s32 %s327, 6
  %s562 = sld [smem:[#allocation5 + %s561]]
  %s563 = scalar_lea.vmem %s1, %s562
  %s564 = scalar_lea.vmem [#allocation2], 14
  %s565 = scalar_lea.sflag [#allocation3], 14
  // Predicated region
  $region422: #{embedding_mean.1} parent=0 // pred_check
    _
  $region423: #{embedding_mean.1} parent=0 // pred_check_branch
    %567 = sbr.rel target = $region425
  $region424: #{embedding_mean.1} parent=0 // pred_region
    // Predicated region
    $region437: #{embedding_mean.1} parent=424 // pred_check
      _
    $region438: #{embedding_mean.1} parent=424 // pred_check_branch
      %583 = sbr.rel (0) target = $region440
    $region439: #{embedding_mean.1} parent=424 // pred_region
      %s585 = ssub.s32 2, 1
      loop: start=0, step=1, limit=1
      $region441: #{embedding_mean.1} parent=439 // loop_pre_header
        _
      $region442: #{embedding_mean.1} parent=439 // loop_header
        %s587 = sphi 0, %s591
        %p588 = scmp.ge.s32.totalorder %s587, 1
        %s592 = sphi %s563, %s563
        %s593 = sphi %s564, %s564
      $region443: #{embedding_mean.1} parent=439 // loop_header_branch
        %590 = sbr.rel (%p588) target = $region447
      $region444: #{embedding_mean.1} parent=439 // loop_body
        %v594 = vld [vmem:[%s592] sm:%s585]
        %595 = vst [vmem:[%s593] sm:%s585] %v594
      $region445: #{embedding_mean.1} parent=439 // loop_footer
        %s591 = sadd.s32 1, %s587
      $region446: #{embedding_mean.1} parent=439 // loop_footer_branch
        %586 = sbr.rel target = $region442
      $region447: #{embedding_mean.1} parent=439 // loop_exit
        _
    $region440: #{embedding_mean.1} parent=424 // pred_fallthru
      _
  $region425: #{embedding_mean.1} parent=0 // pred_fallthru
    _
  // Predicated region
  $region426: #{embedding_mean.1} parent=0 // pred_check
    _
  $region427: #{embedding_mean.1} parent=0 // pred_check_branch
    %569 = sbr.rel (0) target = $region429
  $region428: #{embedding_mean.1} parent=0 // pred_region
    %s571 = ssub.s32 2, 1
    loop: start=0, step=1, limit=1
    $region430: #{embedding_mean.1} parent=428 // loop_pre_header
      _
    $region431: #{embedding_mean.1} parent=428 // loop_header
      %s573 = sphi 0, %s577
      %p574 = scmp.ge.s32.totalorder %s573, 1
      %s578 = sphi %s563, %s563
      %s579 = sphi %s564, %s564
    $region432: #{embedding_mean.1} parent=428 // loop_header_branch
      %576 = sbr.rel (%p574) target = $region436
    $region433: #{embedding_mean.1} parent=428 // loop_body
      %v580 = vld [vmem:[%s578] sm:%s571]
      %581 = vst [vmem:[%s579] sm:%s571] %v580
    $region434: #{embedding_mean.1} parent=428 // loop_footer
      %s577 = sadd.s32 1, %s573
    $region435: #{embedding_mean.1} parent=428 // loop_footer_branch
      %572 = sbr.rel target = $region431
    $region436: #{embedding_mean.1} parent=428 // loop_exit
      _
  $region429: #{embedding_mean.1} parent=0 // pred_fallthru
    _
  // Predicated region
  $region448: #{embedding_mean.1} parent=0 // pred_check
    _
  $region449: #{embedding_mean.1} parent=0 // pred_check_branch
    %598 = sbr.rel (0) target = $region451
  $region450: #{embedding_mean.1} parent=0 // pred_region
    %599 = vsyncadd %s565, 16
  $region451: #{embedding_mean.1} parent=0 // pred_fallthru
    _
  %s600 = sadd.s32 %s327, 7
  %s601 = sld [smem:[#allocation5 + %s600]]
  %s602 = scalar_lea.vmem %s1, %s601
  %s603 = scalar_lea.vmem [#allocation2], 15
  %s604 = scalar_lea.sflag [#allocation3], 15
  // Predicated region
  $region452: #{embedding_mean.1} parent=0 // pred_check
    _
  $region453: #{embedding_mean.1} parent=0 // pred_check_branch
    %606 = sbr.rel target = $region455
  $region454: #{embedding_mean.1} parent=0 // pred_region
    // Predicated region
    $region467: #{embedding_mean.1} parent=454 // pred_check
      _
    $region468: #{embedding_mean.1} parent=454 // pred_check_branch
      %622 = sbr.rel (0) target = $region470
    $region469: #{embedding_mean.1} parent=454 // pred_region
      %s624 = ssub.s32 2, 1
      loop: start=0, step=1, limit=1
      $region471: #{embedding_mean.1} parent=469 // loop_pre_header
        _
      $region472: #{embedding_mean.1} parent=469 // loop_header
        %s626 = sphi 0, %s630
        %p627 = scmp.ge.s32.totalorder %s626, 1
        %s631 = sphi %s602, %s602
        %s632 = sphi %s603, %s603
      $region473: #{embedding_mean.1} parent=469 // loop_header_branch
        %629 = sbr.rel (%p627) target = $region477
      $region474: #{embedding_mean.1} parent=469 // loop_body
        %v633 = vld [vmem:[%s631] sm:%s624]
        %634 = vst [vmem:[%s632] sm:%s624] %v633
      $region475: #{embedding_mean.1} parent=469 // loop_footer
        %s630 = sadd.s32 1, %s626
      $region476: #{embedding_mean.1} parent=469 // loop_footer_branch
        %625 = sbr.rel target = $region472
      $region477: #{embedding_mean.1} parent=469 // loop_exit
        _
    $region470: #{embedding_mean.1} parent=454 // pred_fallthru
      _
  $region455: #{embedding_mean.1} parent=0 // pred_fallthru
    _
  // Predicated region
  $region456: #{embedding_mean.1} parent=0 // pred_check
    _
  $region457: #{embedding_mean.1} parent=0 // pred_check_branch
    %608 = sbr.rel (0) target = $region459
  $region458: #{embedding_mean.1} parent=0 // pred_region
    %s610 = ssub.s32 2, 1
    loop: start=0, step=1, limit=1
    $region460: #{embedding_mean.1} parent=458 // loop_pre_header
      _
    $region461: #{embedding_mean.1} parent=458 // loop_header
      %s612 = sphi 0, %s616
      %p613 = scmp.ge.s32.totalorder %s612, 1
      %s617 = sphi %s602, %s602
      %s618 = sphi %s603, %s603
    $region462: #{embedding_mean.1} parent=458 // loop_header_branch
      %615 = sbr.rel (%p613) target = $region466
    $region463: #{embedding_mean.1} parent=458 // loop_body
      %v619 = vld [vmem:[%s617] sm:%s610]
      %620 = vst [vmem:[%s618] sm:%s610] %v619
    $region464: #{embedding_mean.1} parent=458 // loop_footer
      %s616 = sadd.s32 1, %s612
    $region465: #{embedding_mean.1} parent=458 // loop_footer_branch
      %611 = sbr.rel target = $region461
    $region466: #{embedding_mean.1} parent=458 // loop_exit
      _
  $region459: #{embedding_mean.1} parent=0 // pred_fallthru
    _
  // Predicated region
  $region478: #{embedding_mean.1} parent=0 // pred_check
    _
  $region479: #{embedding_mean.1} parent=0 // pred_check_branch
    %637 = sbr.rel (0) target = $region481
  $region480: #{embedding_mean.1} parent=0 // pred_region
    %638 = vsyncadd %s604, 16
  $region481: #{embedding_mean.1} parent=0 // pred_fallthru
    _
  %s639 = smul.u32 1, 1
  %s640 = sshll.u32 %s639, 4
  %641 = dma.done [#allocation3], %s640
  %s642 = sshll.u32 %s639, 4
  %643 = dma.done %s57, %s642
  %s644 = sshll.u32 %s639, 4
  %645 = dma.done %s96, %s644
  %s646 = sshll.u32 %s639, 4
  %647 = dma.done %s135, %s646
  %s648 = sshll.u32 %s639, 4
  %649 = dma.done %s174, %s648
  %s650 = sshll.u32 %s639, 4
  %651 = dma.done %s213, %s650
  %s652 = sshll.u32 %s639, 4
  %653 = dma.done %s252, %s652
  %s654 = sshll.u32 %s639, 4
  %655 = dma.done %s291, %s654
  %v656 = vld [vmem:[#allocation2] sm:$0xff]
  %v657 = vrot.slane %v656, 4
  %v658 = vadd.f32 %v656, %v657
  %v659 = vrot.slane %v658, 2
  %v660 = vadd.f32 %v658, %v659
  %v661 = vrot.slane %v660, 1
  %v662 = vadd.f32 %v660, %v661
  %v663 = vmul.f32 %v662, 0.125
  %664 = vst [vmem:[%s2] sm:$0x1] %v663
  %s665 = sadd.s32 %s15, 2
  %s666 = smul.u32 %s665, 128
  %s667 = sld [smem:[#allocation5 + %s666]]
  %s668 = scalar_lea.vmem %s1, %s667
  // Predicated region
  $region482: #{embedding_mean.1} parent=0 // pred_check
    _
  $region483: #{embedding_mean.1} parent=0 // pred_check_branch
    %670 = sbr.rel target = $region485
  $region484: #{embedding_mean.1} parent=0 // pred_region
    // Predicated region
    $region497: #{embedding_mean.1} parent=484 // pred_check
      _
    $region498: #{embedding_mean.1} parent=484 // pred_check_branch
      %686 = sbr.rel (0) target = $region500
    $region499: #{embedding_mean.1} parent=484 // pred_region
      %s688 = ssub.s32 2, 1
      loop: start=0, step=1, limit=1
      $region501: #{embedding_mean.1} parent=499 // loop_pre_header
        _
      $region502: #{embedding_mean.1} parent=499 // loop_header
        %s690 = sphi 0, %s694
        %p691 = scmp.ge.s32.totalorder %s690, 1
        %s695 = sphi %s668, %s668
        %s696 = sphi [#allocation2], [#allocation2]
      $region503: #{embedding_mean.1} parent=499 // loop_header_branch
        %693 = sbr.rel (%p691) target = $region507
      $region504: #{embedding_mean.1} parent=499 // loop_body
        %v697 = vld [vmem:[%s695] sm:%s688]
        %698 = vst [vmem:[%s696] sm:%s688] %v697
      $region505: #{embedding_mean.1} parent=499 // loop_footer
        %s694 = sadd.s32 1, %s690
      $region506: #{embedding_mean.1} parent=499 // loop_footer_branch
        %689 = sbr.rel target = $region502
      $region507: #{embedding_mean.1} parent=499 // loop_exit
        _
    $region500: #{embedding_mean.1} parent=484 // pred_fallthru
      _
  $region485: #{embedding_mean.1} parent=0 // pred_fallthru
    _
  // Predicated region
  $region486: #{embedding_mean.1} parent=0 // pred_check
    _
  $region487: #{embedding_mean.1} parent=0 // pred_check_branch
    %672 = sbr.rel (0) target = $region489
  $region488: #{embedding_mean.1} parent=0 // pred_region
    %s674 = ssub.s32 2, 1
    loop: start=0, step=1, limit=1
    $region490: #{embedding_mean.1} parent=488 // loop_pre_header
      _
    $region491: #{embedding_mean.1} parent=488 // loop_header
      %s676 = sphi 0, %s680
      %p677 = scmp.ge.s32.totalorder %s676, 1
      %s681 = sphi %s668, %s668
      %s682 = sphi [#allocation2], [#allocation2]
    $region492: #{embedding_mean.1} parent=488 // loop_header_branch
      %679 = sbr.rel (%p677) target = $region496
    $region493: #{embedding_mean.1} parent=488 // loop_body
      %v683 = vld [vmem:[%s681] sm:%s674]
      %684 = vst [vmem:[%s682] sm:%s674] %v683
    $region494: #{embedding_mean.1} parent=488 // loop_footer
      %s680 = sadd.s32 1, %s676
    $region495: #{embedding_mean.1} parent=488 // loop_footer_branch
      %675 = sbr.rel target = $region491
    $region496: #{embedding_mean.1} parent=488 // loop_exit
      _
  $region489: #{embedding_mean.1} parent=0 // pred_fallthru
    _
  // Predicated region
  $region508: #{embedding_mean.1} parent=0 // pred_check
    _
  $region509: #{embedding_mean.1} parent=0 // pred_check_branch
    %701 = sbr.rel (0) target = $region511
  $region510: #{embedding_mean.1} parent=0 // pred_region
    %702 = vsyncadd [#allocation3], 16
  $region511: #{embedding_mean.1} parent=0 // pred_fallthru
    _
  %s703 = sadd.s32 %s666, 1
  %s704 = sld [smem:[#allocation5 + %s703]]
  %s705 = scalar_lea.vmem %s1, %s704
  // Predicated region
  $region512: #{embedding_mean.1} parent=0 // pred_check
    _
  $region513: #{embedding_mean.1} parent=0 // pred_check_branch
    %707 = sbr.rel target = $region515
  $region514: #{embedding_mean.1} parent=0 // pred_region
    // Predicated region
    $region527: #{embedding_mean.1} parent=514 // pred_check
      _
    $region528: #{embedding_mean.1} parent=514 // pred_check_branch
      %723 = sbr.rel (0) target = $region530
    $region529: #{embedding_mean.1} parent=514 // pred_region
      %s725 = ssub.s32 2, 1
      loop: start=0, step=1, limit=1
      $region531: #{embedding_mean.1} parent=529 // loop_pre_header
        _
      $region532: #{embedding_mean.1} parent=529 // loop_header
        %s727 = sphi 0, %s731
        %p728 = scmp.ge.s32.totalorder %s727, 1
        %s732 = sphi %s705, %s705
        %s733 = sphi %s56, %s56
      $region533: #{embedding_mean.1} parent=529 // loop_header_branch
        %730 = sbr.rel (%p728) target = $region537
      $region534: #{embedding_mean.1} parent=529 // loop_body
        %v734 = vld [vmem:[%s732] sm:%s725]
        %735 = vst [vmem:[%s733] sm:%s725] %v734
      $region535: #{embedding_mean.1} parent=529 // loop_footer
        %s731 = sadd.s32 1, %s727
      $region536: #{embedding_mean.1} parent=529 // loop_footer_branch
        %726 = sbr.rel target = $region532
      $region537: #{embedding_mean.1} parent=529 // loop_exit
        _
    $region530: #{embedding_mean.1} parent=514 // pred_fallthru
      _
  $region515: #{embedding_mean.1} parent=0 // pred_fallthru
    _
  // Predicated region
  $region516: #{embedding_mean.1} parent=0 // pred_check
    _
  $region517: #{embedding_mean.1} parent=0 // pred_check_branch
    %709 = sbr.rel (0) target = $region519
  $region518: #{embedding_mean.1} parent=0 // pred_region
    %s711 = ssub.s32 2, 1
    loop: start=0, step=1, limit=1
    $region520: #{embedding_mean.1} parent=518 // loop_pre_header
      _
    $region521: #{embedding_mean.1} parent=518 // loop_header
      %s713 = sphi 0, %s717
      %p714 = scmp.ge.s32.totalorder %s713, 1
      %s718 = sphi %s705, %s705
      %s719 = sphi %s56, %s56
    $region522: #{embedding_mean.1} parent=518 // loop_header_branch
      %716 = sbr.rel (%p714) target = $region526
    $region523: #{embedding_mean.1} parent=518 // loop_body
      %v720 = vld [vmem:[%s718] sm:%s711]
      %721 = vst [vmem:[%s719] sm:%s711] %v720
    $region524: #{embedding_mean.1} parent=518 // loop_footer
      %s717 = sadd.s32 1, %s713
    $region525: #{embedding_mean.1} parent=518 // loop_footer_branch
      %712 = sbr.rel target = $region521
    $region526: #{embedding_mean.1} parent=518 // loop_exit
      _
  $region519: #{embedding_mean.1} parent=0 // pred_fallthru
    _
  // Predicated region
  $region538: #{embedding_mean.1} parent=0 // pred_check
    _
  $region539: #{embedding_mean.1} parent=0 // pred_check_branch
    %738 = sbr.rel (0) target = $region541
  $region540: #{embedding_mean.1} parent=0 // pred_region
    %739 = vsyncadd %s57, 16
  $region541: #{embedding_mean.1} parent=0 // pred_fallthru
    _
  %s740 = sadd.s32 %s666, 2
  %s741 = sld [smem:[#allocation5 + %s740]]
  %s742 = scalar_lea.vmem %s1, %s741
  // Predicated region
  $region542: #{embedding_mean.1} parent=0 // pred_check
    _
  $region543: #{embedding_mean.1} parent=0 // pred_check_branch
    %744 = sbr.rel target = $region545
  $region544: #{embedding_mean.1} parent=0 // pred_region
    // Predicated region
    $region557: #{embedding_mean.1} parent=544 // pred_check
      _
    $region558: #{embedding_mean.1} parent=544 // pred_check_branch
      %760 = sbr.rel (0) target = $region560
    $region559: #{embedding_mean.1} parent=544 // pred_region
      %s762 = ssub.s32 2, 1
      loop: start=0, step=1, limit=1
      $region561: #{embedding_mean.1} parent=559 // loop_pre_header
        _
      $region562: #{embedding_mean.1} parent=559 // loop_header
        %s764 = sphi 0, %s768
        %p765 = scmp.ge.s32.totalorder %s764, 1
        %s769 = sphi %s742, %s742
        %s770 = sphi %s95, %s95
      $region563: #{embedding_mean.1} parent=559 // loop_header_branch
        %767 = sbr.rel (%p765) target = $region567
      $region564: #{embedding_mean.1} parent=559 // loop_body
        %v771 = vld [vmem:[%s769] sm:%s762]
        %772 = vst [vmem:[%s770] sm:%s762] %v771
      $region565: #{embedding_mean.1} parent=559 // loop_footer
        %s768 = sadd.s32 1, %s764
      $region566: #{embedding_mean.1} parent=559 // loop_footer_branch
        %763 = sbr.rel target = $region562
      $region567: #{embedding_mean.1} parent=559 // loop_exit
        _
    $region560: #{embedding_mean.1} parent=544 // pred_fallthru
      _
  $region545: #{embedding_mean.1} parent=0 // pred_fallthru
    _
  // Predicated region
  $region546: #{embedding_mean.1} parent=0 // pred_check
    _
  $region547: #{embedding_mean.1} parent=0 // pred_check_branch
    %746 = sbr.rel (0) target = $region549
  $region548: #{embedding_mean.1} parent=0 // pred_region
    %s748 = ssub.s32 2, 1
    loop: start=0, step=1, limit=1
    $region550: #{embedding_mean.1} parent=548 // loop_pre_header
      _
    $region551: #{embedding_mean.1} parent=548 // loop_header
      %s750 = sphi 0, %s754
      %p751 = scmp.ge.s32.totalorder %s750, 1
      %s755 = sphi %s742, %s742
      %s756 = sphi %s95, %s95
    $region552: #{embedding_mean.1} parent=548 // loop_header_branch
      %753 = sbr.rel (%p751) target = $region556
    $region553: #{embedding_mean.1} parent=548 // loop_body
      %v757 = vld [vmem:[%s755] sm:%s748]
      %758 = vst [vmem:[%s756] sm:%s748] %v757
    $region554: #{embedding_mean.1} parent=548 // loop_footer
      %s754 = sadd.s32 1, %s750
    $region555: #{embedding_mean.1} parent=548 // loop_footer_branch
      %749 = sbr.rel target = $region551
    $region556: #{embedding_mean.1} parent=548 // loop_exit
      _
  $region549: #{embedding_mean.1} parent=0 // pred_fallthru
    _
  // Predicated region
  $region568: #{embedding_mean.1} parent=0 // pred_check
    _
  $region569: #{embedding_mean.1} parent=0 // pred_check_branch
    %775 = sbr.rel (0) target = $region571
  $region570: #{embedding_mean.1} parent=0 // pred_region
    %776 = vsyncadd %s96, 16
  $region571: #{embedding_mean.1} parent=0 // pred_fallthru
    _
  %s777 = sadd.s32 %s666, 3
  %s778 = sld [smem:[#allocation5 + %s777]]
  %s779 = scalar_lea.vmem %s1, %s778
  // Predicated region
  $region572: #{embedding_mean.1} parent=0 // pred_check
    _
  $region573: #{embedding_mean.1} parent=0 // pred_check_branch
    %781 = sbr.rel target = $region575
  $region574: #{embedding_mean.1} parent=0 // pred_region
    // Predicated region
    $region587: #{embedding_mean.1} parent=574 // pred_check
      _
    $region588: #{embedding_mean.1} parent=574 // pred_check_branch
      %797 = sbr.rel (0) target = $region590
    $region589: #{embedding_mean.1} parent=574 // pred_region
      %s799 = ssub.s32 2, 1
      loop: start=0, step=1, limit=1
      $region591: #{embedding_mean.1} parent=589 // loop_pre_header
        _
      $region592: #{embedding_mean.1} parent=589 // loop_header
        %s801 = sphi 0, %s805
        %p802 = scmp.ge.s32.totalorder %s801, 1
        %s806 = sphi %s779, %s779
        %s807 = sphi %s134, %s134
      $region593: #{embedding_mean.1} parent=589 // loop_header_branch
        %804 = sbr.rel (%p802) target = $region597
      $region594: #{embedding_mean.1} parent=589 // loop_body
        %v808 = vld [vmem:[%s806] sm:%s799]
        %809 = vst [vmem:[%s807] sm:%s799] %v808
      $region595: #{embedding_mean.1} parent=589 // loop_footer
        %s805 = sadd.s32 1, %s801
      $region596: #{embedding_mean.1} parent=589 // loop_footer_branch
        %800 = sbr.rel target = $region592
      $region597: #{embedding_mean.1} parent=589 // loop_exit
        _
    $region590: #{embedding_mean.1} parent=574 // pred_fallthru
      _
  $region575: #{embedding_mean.1} parent=0 // pred_fallthru
    _
  // Predicated region
  $region576: #{embedding_mean.1} parent=0 // pred_check
    _
  $region577: #{embedding_mean.1} parent=0 // pred_check_branch
    %783 = sbr.rel (0) target = $region579
  $region578: #{embedding_mean.1} parent=0 // pred_region
    %s785 = ssub.s32 2, 1
    loop: start=0, step=1, limit=1
    $region580: #{embedding_mean.1} parent=578 // loop_pre_header
      _
    $region581: #{embedding_mean.1} parent=578 // loop_header
      %s787 = sphi 0, %s791
      %p788 = scmp.ge.s32.totalorder %s787, 1
      %s792 = sphi %s779, %s779
      %s793 = sphi %s134, %s134
    $region582: #{embedding_mean.1} parent=578 // loop_header_branch
      %790 = sbr.rel (%p788) target = $region586
    $region583: #{embedding_mean.1} parent=578 // loop_body
      %v794 = vld [vmem:[%s792] sm:%s785]
      %795 = vst [vmem:[%s793] sm:%s785] %v794
    $region584: #{embedding_mean.1} parent=578 // loop_footer
      %s791 = sadd.s32 1, %s787
    $region585: #{embedding_mean.1} parent=578 // loop_footer_branch
      %786 = sbr.rel target = $region581
    $region586: #{embedding_mean.1} parent=578 // loop_exit
      _
  $region579: #{embedding_mean.1} parent=0 // pred_fallthru
    _
  // Predicated region
  $region598: #{embedding_mean.1} parent=0 // pred_check
    _
  $region599: #{embedding_mean.1} parent=0 // pred_check_branch
    %812 = sbr.rel (0) target = $region601
  $region600: #{embedding_mean.1} parent=0 // pred_region
    %813 = vsyncadd %s135, 16
  $region601: #{embedding_mean.1} parent=0 // pred_fallthru
    _
  %s814 = sadd.s32 %s666, 4
  %s815 = sld [smem:[#allocation5 + %s814]]
  %s816 = scalar_lea.vmem %s1, %s815
  // Predicated region
  $region602: #{embedding_mean.1} parent=0 // pred_check
    _
  $region603: #{embedding_mean.1} parent=0 // pred_check_branch
    %818 = sbr.rel target = $region605
  $region604: #{embedding_mean.1} parent=0 // pred_region
    // Predicated region
    $region617: #{embedding_mean.1} parent=604 // pred_check
      _
    $region618: #{embedding_mean.1} parent=604 // pred_check_branch
      %834 = sbr.rel (0) target = $region620
    $region619: #{embedding_mean.1} parent=604 // pred_region
      %s836 = ssub.s32 2, 1
      loop: start=0, step=1, limit=1
      $region621: #{embedding_mean.1} parent=619 // loop_pre_header
        _
      $region622: #{embedding_mean.1} parent=619 // loop_header
        %s838 = sphi 0, %s842
        %p839 = scmp.ge.s32.totalorder %s838, 1
        %s843 = sphi %s816, %s816
        %s844 = sphi %s173, %s173
      $region623: #{embedding_mean.1} parent=619 // loop_header_branch
        %841 = sbr.rel (%p839) target = $region627
      $region624: #{embedding_mean.1} parent=619 // loop_body
        %v845 = vld [vmem:[%s843] sm:%s836]
        %846 = vst [vmem:[%s844] sm:%s836] %v845
      $region625: #{embedding_mean.1} parent=619 // loop_footer
        %s842 = sadd.s32 1, %s838
      $region626: #{embedding_mean.1} parent=619 // loop_footer_branch
        %837 = sbr.rel target = $region622
      $region627: #{embedding_mean.1} parent=619 // loop_exit
        _
    $region620: #{embedding_mean.1} parent=604 // pred_fallthru
      _
  $region605: #{embedding_mean.1} parent=0 // pred_fallthru
    _
  // Predicated region
  $region606: #{embedding_mean.1} parent=0 // pred_check
    _
  $region607: #{embedding_mean.1} parent=0 // pred_check_branch
    %820 = sbr.rel (0) target = $region609
  $region608: #{embedding_mean.1} parent=0 // pred_region
    %s822 = ssub.s32 2, 1
    loop: start=0, step=1, limit=1
    $region610: #{embedding_mean.1} parent=608 // loop_pre_header
      _
    $region611: #{embedding_mean.1} parent=608 // loop_header
      %s824 = sphi 0, %s828
      %p825 = scmp.ge.s32.totalorder %s824, 1
      %s829 = sphi %s816, %s816
      %s830 = sphi %s173, %s173
    $region612: #{embedding_mean.1} parent=608 // loop_header_branch
      %827 = sbr.rel (%p825) target = $region616
    $region613: #{embedding_mean.1} parent=608 // loop_body
      %v831 = vld [vmem:[%s829] sm:%s822]
      %832 = vst [vmem:[%s830] sm:%s822] %v831
    $region614: #{embedding_mean.1} parent=608 // loop_footer
      %s828 = sadd.s32 1, %s824
    $region615: #{embedding_mean.1} parent=608 // loop_footer_branch
      %823 = sbr.rel target = $region611
    $region616: #{embedding_mean.1} parent=608 // loop_exit
      _
  $region609: #{embedding_mean.1} parent=0 // pred_fallthru
    _
  // Predicated region
  $region628: #{embedding_mean.1} parent=0 // pred_check
    _
  $region629: #{embedding_mean.1} parent=0 // pred_check_branch
    %849 = sbr.rel (0) target = $region631
  $region630: #{embedding_mean.1} parent=0 // pred_region
    %850 = vsyncadd %s174, 16
  $region631: #{embedding_mean.1} parent=0 // pred_fallthru
    _
  %s851 = sadd.s32 %s666, 5
  %s852 = sld [smem:[#allocation5 + %s851]]
  %s853 = scalar_lea.vmem %s1, %s852
  // Predicated region
  $region632: #{embedding_mean.1} parent=0 // pred_check
    _
  $region633: #{embedding_mean.1} parent=0 // pred_check_branch
    %855 = sbr.rel target = $region635
  $region634: #{embedding_mean.1} parent=0 // pred_region
    // Predicated region
    $region647: #{embedding_mean.1} parent=634 // pred_check
      _
    $region648: #{embedding_mean.1} parent=634 // pred_check_branch
      %871 = sbr.rel (0) target = $region650
    $region649: #{embedding_mean.1} parent=634 // pred_region
      %s873 = ssub.s32 2, 1
      loop: start=0, step=1, limit=1
      $region651: #{embedding_mean.1} parent=649 // loop_pre_header
        _
      $region652: #{embedding_mean.1} parent=649 // loop_header
        %s875 = sphi 0, %s879
        %p876 = scmp.ge.s32.totalorder %s875, 1
        %s880 = sphi %s853, %s853
        %s881 = sphi %s212, %s212
      $region653: #{embedding_mean.1} parent=649 // loop_header_branch
        %878 = sbr.rel (%p876) target = $region657
      $region654: #{embedding_mean.1} parent=649 // loop_body
        %v882 = vld [vmem:[%s880] sm:%s873]
        %883 = vst [vmem:[%s881] sm:%s873] %v882
      $region655: #{embedding_mean.1} parent=649 // loop_footer
        %s879 = sadd.s32 1, %s875
      $region656: #{embedding_mean.1} parent=649 // loop_footer_branch
        %874 = sbr.rel target = $region652
      $region657: #{embedding_mean.1} parent=649 // loop_exit
        _
    $region650: #{embedding_mean.1} parent=634 // pred_fallthru
      _
  $region635: #{embedding_mean.1} parent=0 // pred_fallthru
    _
  // Predicated region
  $region636: #{embedding_mean.1} parent=0 // pred_check
    _
  $region637: #{embedding_mean.1} parent=0 // pred_check_branch
    %857 = sbr.rel (0) target = $region639
  $region638: #{embedding_mean.1} parent=0 // pred_region
    %s859 = ssub.s32 2, 1
    loop: start=0, step=1, limit=1
    $region640: #{embedding_mean.1} parent=638 // loop_pre_header
      _
    $region641: #{embedding_mean.1} parent=638 // loop_header
      %s861 = sphi 0, %s865
      %p862 = scmp.ge.s32.totalorder %s861, 1
      %s866 = sphi %s853, %s853
      %s867 = sphi %s212, %s212
    $region642: #{embedding_mean.1} parent=638 // loop_header_branch
      %864 = sbr.rel (%p862) target = $region646
    $region643: #{embedding_mean.1} parent=638 // loop_body
      %v868 = vld [vmem:[%s866] sm:%s859]
      %869 = vst [vmem:[%s867] sm:%s859] %v868
    $region644: #{embedding_mean.1} parent=638 // loop_footer
      %s865 = sadd.s32 1, %s861
    $region645: #{embedding_mean.1} parent=638 // loop_footer_branch
      %860 = sbr.rel target = $region641
    $region646: #{embedding_mean.1} parent=638 // loop_exit
      _
  $region639: #{embedding_mean.1} parent=0 // pred_fallthru
    _
  // Predicated region
  $region658: #{embedding_mean.1} parent=0 // pred_check
    _
  $region659: #{embedding_mean.1} parent=0 // pred_check_branch
    %886 = sbr.rel (0) target = $region661
  $region660: #{embedding_mean.1} parent=0 // pred_region
    %887 = vsyncadd %s213, 16
  $region661: #{embedding_mean.1} parent=0 // pred_fallthru
    _
  %s888 = sadd.s32 %s666, 6
  %s889 = sld [smem:[#allocation5 + %s888]]
  %s890 = scalar_lea.vmem %s1, %s889
  // Predicated region
  $region662: #{embedding_mean.1} parent=0 // pred_check
    _
  $region663: #{embedding_mean.1} parent=0 // pred_check_branch
    %892 = sbr.rel target = $region665
  $region664: #{embedding_mean.1} parent=0 // pred_region
    // Predicated region
    $region677: #{embedding_mean.1} parent=664 // pred_check
      _
    $region678: #{embedding_mean.1} parent=664 // pred_check_branch
      %908 = sbr.rel (0) target = $region680
    $region679: #{embedding_mean.1} parent=664 // pred_region
      %s910 = ssub.s32 2, 1
      loop: start=0, step=1, limit=1
      $region681: #{embedding_mean.1} parent=679 // loop_pre_header
        _
      $region682: #{embedding_mean.1} parent=679 // loop_header
        %s912 = sphi 0, %s916
        %p913 = scmp.ge.s32.totalorder %s912, 1
        %s917 = sphi %s890, %s890
        %s918 = sphi %s251, %s251
      $region683: #{embedding_mean.1} parent=679 // loop_header_branch
        %915 = sbr.rel (%p913) target = $region687
      $region684: #{embedding_mean.1} parent=679 // loop_body
        %v919 = vld [vmem:[%s917] sm:%s910]
        %920 = vst [vmem:[%s918] sm:%s910] %v919
      $region685: #{embedding_mean.1} parent=679 // loop_footer
        %s916 = sadd.s32 1, %s912
      $region686: #{embedding_mean.1} parent=679 // loop_footer_branch
        %911 = sbr.rel target = $region682
      $region687: #{embedding_mean.1} parent=679 // loop_exit
        _
    $region680: #{embedding_mean.1} parent=664 // pred_fallthru
      _
  $region665: #{embedding_mean.1} parent=0 // pred_fallthru
    _
  // Predicated region
  $region666: #{embedding_mean.1} parent=0 // pred_check
    _
  $region667: #{embedding_mean.1} parent=0 // pred_check_branch
    %894 = sbr.rel (0) target = $region669
  $region668: #{embedding_mean.1} parent=0 // pred_region
    %s896 = ssub.s32 2, 1
    loop: start=0, step=1, limit=1
    $region670: #{embedding_mean.1} parent=668 // loop_pre_header
      _
    $region671: #{embedding_mean.1} parent=668 // loop_header
      %s898 = sphi 0, %s902
      %p899 = scmp.ge.s32.totalorder %s898, 1
      %s903 = sphi %s890, %s890
      %s904 = sphi %s251, %s251
    $region672: #{embedding_mean.1} parent=668 // loop_header_branch
      %901 = sbr.rel (%p899) target = $region676
    $region673: #{embedding_mean.1} parent=668 // loop_body
      %v905 = vld [vmem:[%s903] sm:%s896]
      %906 = vst [vmem:[%s904] sm:%s896] %v905
    $region674: #{embedding_mean.1} parent=668 // loop_footer
      %s902 = sadd.s32 1, %s898
    $region675: #{embedding_mean.1} parent=668 // loop_footer_branch
      %897 = sbr.rel target = $region671
    $region676: #{embedding_mean.1} parent=668 // loop_exit
      _
  $region669: #{embedding_mean.1} parent=0 // pred_fallthru
    _
  // Predicated region
  $region688: #{embedding_mean.1} parent=0 // pred_check
    _
  $region689: #{embedding_mean.1} parent=0 // pred_check_branch
    %923 = sbr.rel (0) target = $region691
  $region690: #{embedding_mean.1} parent=0 // pred_region
    %924 = vsyncadd %s252, 16
  $region691: #{embedding_mean.1} parent=0 // pred_fallthru
    _
  %s925 = sadd.s32 %s666, 7
  %s926 = sld [smem:[#allocation5 + %s925]]
  %s927 = scalar_lea.vmem %s1, %s926
  // Predicated region
  $region692: #{embedding_mean.1} parent=0 // pred_check
    _
  $region693: #{embedding_mean.1} parent=0 // pred_check_branch
    %929 = sbr.rel target = $region695
  $region694: #{embedding_mean.1} parent=0 // pred_region
    // Predicated region
    $region707: #{embedding_mean.1} parent=694 // pred_check
      _
    $region708: #{embedding_mean.1} parent=694 // pred_check_branch
      %945 = sbr.rel (0) target = $region710
    $region709: #{embedding_mean.1} parent=694 // pred_region
      %s947 = ssub.s32 2, 1
      loop: start=0, step=1, limit=1
      $region711: #{embedding_mean.1} parent=709 // loop_pre_header
        _
      $region712: #{embedding_mean.1} parent=709 // loop_header
        %s949 = sphi 0, %s953
        %p950 = scmp.ge.s32.totalorder %s949, 1
        %s954 = sphi %s927, %s927
        %s955 = sphi %s290, %s290
      $region713: #{embedding_mean.1} parent=709 // loop_header_branch
        %952 = sbr.rel (%p950) target = $region717
      $region714: #{embedding_mean.1} parent=709 // loop_body
        %v956 = vld [vmem:[%s954] sm:%s947]
        %957 = vst [vmem:[%s955] sm:%s947] %v956
      $region715: #{embedding_mean.1} parent=709 // loop_footer
        %s953 = sadd.s32 1, %s949
      $region716: #{embedding_mean.1} parent=709 // loop_footer_branch
        %948 = sbr.rel target = $region712
      $region717: #{embedding_mean.1} parent=709 // loop_exit
        _
    $region710: #{embedding_mean.1} parent=694 // pred_fallthru
      _
  $region695: #{embedding_mean.1} parent=0 // pred_fallthru
    _
  // Predicated region
  $region696: #{embedding_mean.1} parent=0 // pred_check
    _
  $region697: #{embedding_mean.1} parent=0 // pred_check_branch
    %931 = sbr.rel (0) target = $region699
  $region698: #{embedding_mean.1} parent=0 // pred_region
    %s933 = ssub.s32 2, 1
    loop: start=0, step=1, limit=1
    $region700: #{embedding_mean.1} parent=698 // loop_pre_header
      _
    $region701: #{embedding_mean.1} parent=698 // loop_header
      %s935 = sphi 0, %s939
      %p936 = scmp.ge.s32.totalorder %s935, 1
      %s940 = sphi %s927, %s927
      %s941 = sphi %s290, %s290
    $region702: #{embedding_mean.1} parent=698 // loop_header_branch
      %938 = sbr.rel (%p936) target = $region706
    $region703: #{embedding_mean.1} parent=698 // loop_body
      %v942 = vld [vmem:[%s940] sm:%s933]
      %943 = vst [vmem:[%s941] sm:%s933] %v942
    $region704: #{embedding_mean.1} parent=698 // loop_footer
      %s939 = sadd.s32 1, %s935
    $region705: #{embedding_mean.1} parent=698 // loop_footer_branch
      %934 = sbr.rel target = $region701
    $region706: #{embedding_mean.1} parent=698 // loop_exit
      _
  $region699: #{embedding_mean.1} parent=0 // pred_fallthru
    _
  // Predicated region
  $region718: #{embedding_mean.1} parent=0 // pred_check
    _
  $region719: #{embedding_mean.1} parent=0 // pred_check_branch
    %960 = sbr.rel (0) target = $region721
  $region720: #{embedding_mean.1} parent=0 // pred_region
    %961 = vsyncadd %s291, 16
  $region721: #{embedding_mean.1} parent=0 // pred_fallthru
    _
  %s962 = sshll.u32 %s639, 4
  %963 = dma.done %s331, %s962
  %s964 = sshll.u32 %s639, 4
  %965 = dma.done %s370, %s964
  %s966 = sshll.u32 %s639, 4
  %967 = dma.done %s409, %s966
  %s968 = sshll.u32 %s639, 4
  %969 = dma.done %s448, %s968
  %s970 = sshll.u32 %s639, 4
  %971 = dma.done %s487, %s970
  %s972 = sshll.u32 %s639, 4
  %973 = dma.done %s526, %s972
  %s974 = sshll.u32 %s639, 4
  %975 = dma.done %s565, %s974
  %s976 = sshll.u32 %s639, 4
  %977 = dma.done %s604, %s976
  %v978 = vld [vmem:[%s330] sm:$0xff]
  %v979 = vrot.slane %v978, 4
  %v980 = vadd.f32 %v978, %v979
  %v981 = vrot.slane %v980, 2
  %v982 = vadd.f32 %v980, %v981
  %v983 = vrot.slane %v982, 1
  %v984 = vadd.f32 %v982, %v983
  %v985 = vmul.f32 %v984, 0.125
  %986 = vst [vmem:[%s2 + $0x1] sm:$0x1] %v985
  %s987 = sadd.s32 %s15, 3
  %s988 = smul.u32 %s987, 128
  %s989 = sld [smem:[#allocation5 + %s988]]
  %s990 = scalar_lea.vmem %s1, %s989
  // Predicated region
  $region722: #{embedding_mean.1} parent=0 // pred_check
    _
  $region723: #{embedding_mean.1} parent=0 // pred_check_branch
    %992 = sbr.rel target = $region725
  $region724: #{embedding_mean.1} parent=0 // pred_region
    // Predicated region
    $region737: #{embedding_mean.1} parent=724 // pred_check
      _
    $region738: #{embedding_mean.1} parent=724 // pred_check_branch
      %1008 = sbr.rel (0) target = $region740
    $region739: #{embedding_mean.1} parent=724 // pred_region
      %s1010 = ssub.s32 2, 1
      loop: start=0, step=1, limit=1
      $region741: #{embedding_mean.1} parent=739 // loop_pre_header
        _
      $region742: #{embedding_mean.1} parent=739 // loop_header
        %s1012 = sphi 0, %s1016
        %p1013 = scmp.ge.s32.totalorder %s1012, 1
        %s1017 = sphi %s990, %s990
        %s1018 = sphi %s330, %s330
      $region743: #{embedding_mean.1} parent=739 // loop_header_branch
        %1015 = sbr.rel (%p1013) target = $region747
      $region744: #{embedding_mean.1} parent=739 // loop_body
        %v1019 = vld [vmem:[%s1017] sm:%s1010]
        %1020 = vst [vmem:[%s1018] sm:%s1010] %v1019
      $region745: #{embedding_mean.1} parent=739 // loop_footer
        %s1016 = sadd.s32 1, %s1012
      $region746: #{embedding_mean.1} parent=739 // loop_footer_branch
        %1011 = sbr.rel target = $region742
      $region747: #{embedding_mean.1} parent=739 // loop_exit
        _
    $region740: #{embedding_mean.1} parent=724 // pred_fallthru
      _
  $region725: #{embedding_mean.1} parent=0 // pred_fallthru
    _
  // Predicated region
  $region726: #{embedding_mean.1} parent=0 // pred_check
    _
  $region727: #{embedding_mean.1} parent=0 // pred_check_branch
    %994 = sbr.rel (0) target = $region729
  $region728: #{embedding_mean.1} parent=0 // pred_region
    %s996 = ssub.s32 2, 1
    loop: start=0, step=1, limit=1
    $region730: #{embedding_mean.1} parent=728 // loop_pre_header
      _
    $region731: #{embedding_mean.1} parent=728 // loop_header
      %s998 = sphi 0, %s1002
      %p999 = scmp.ge.s32.totalorder %s998, 1
      %s1003 = sphi %s990, %s990
      %s1004 = sphi %s330, %s330
    $region732: #{embedding_mean.1} parent=728 // loop_header_branch
      %1001 = sbr.rel (%p999) target = $region736
    $region733: #{embedding_mean.1} parent=728 // loop_body
      %v1005 = vld [vmem:[%s1003] sm:%s996]
      %1006 = vst [vmem:[%s1004] sm:%s996] %v1005
    $region734: #{embedding_mean.1} parent=728 // loop_footer
      %s1002 = sadd.s32 1, %s998
    $region735: #{embedding_mean.1} parent=728 // loop_footer_branch
      %997 = sbr.rel target = $region731
    $region736: #{embedding_mean.1} parent=728 // loop_exit
      _
  $region729: #{embedding_mean.1} parent=0 // pred_fallthru
    _
  // Predicated region
  $region748: #{embedding_mean.1} parent=0 // pred_check
    _
  $region749: #{embedding_mean.1} parent=0 // pred_check_branch
    %1023 = sbr.rel (0) target = $region751
  $region750: #{embedding_mean.1} parent=0 // pred_region
    %1024 = vsyncadd %s331, 16
  $region751: #{embedding_mean.1} parent=0 // pred_fallthru
    _
  %s1025 = sadd.s32 %s988, 1
  %s1026 = sld [smem:[#allocation5 + %s1025]]
  %s1027 = scalar_lea.vmem %s1, %s1026
  // Predicated region
  $region752: #{embedding_mean.1} parent=0 // pred_check
    _
  $region753: #{embedding_mean.1} parent=0 // pred_check_branch
    %1029 = sbr.rel target = $region755
  $region754: #{embedding_mean.1} parent=0 // pred_region
    // Predicated region
    $region767: #{embedding_mean.1} parent=754 // pred_check
      _
    $region768: #{embedding_mean.1} parent=754 // pred_check_branch
      %1045 = sbr.rel (0) target = $region770
    $region769: #{embedding_mean.1} parent=754 // pred_region
      %s1047 = ssub.s32 2, 1
      loop: start=0, step=1, limit=1
      $region771: #{embedding_mean.1} parent=769 // loop_pre_header
        _
      $region772: #{embedding_mean.1} parent=769 // loop_header
        %s1049 = sphi 0, %s1053
        %p1050 = scmp.ge.s32.totalorder %s1049, 1
        %s1054 = sphi %s1027, %s1027
        %s1055 = sphi %s369, %s369
      $region773: #{embedding_mean.1} parent=769 // loop_header_branch
        %1052 = sbr.rel (%p1050) target = $region777
      $region774: #{embedding_mean.1} parent=769 // loop_body
        %v1056 = vld [vmem:[%s1054] sm:%s1047]
        %1057 = vst [vmem:[%s1055] sm:%s1047] %v1056
      $region775: #{embedding_mean.1} parent=769 // loop_footer
        %s1053 = sadd.s32 1, %s1049
      $region776: #{embedding_mean.1} parent=769 // loop_footer_branch
        %1048 = sbr.rel target = $region772
      $region777: #{embedding_mean.1} parent=769 // loop_exit
        _
    $region770: #{embedding_mean.1} parent=754 // pred_fallthru
      _
  $region755: #{embedding_mean.1} parent=0 // pred_fallthru
    _
  // Predicated region
  $region756: #{embedding_mean.1} parent=0 // pred_check
    _
  $region757: #{embedding_mean.1} parent=0 // pred_check_branch
    %1031 = sbr.rel (0) target = $region759
  $region758: #{embedding_mean.1} parent=0 // pred_region
    %s1033 = ssub.s32 2, 1
    loop: start=0, step=1, limit=1
    $region760: #{embedding_mean.1} parent=758 // loop_pre_header
      _
    $region761: #{embedding_mean.1} parent=758 // loop_header
      %s1035 = sphi 0, %s1039
      %p1036 = scmp.ge.s32.totalorder %s1035, 1
      %s1040 = sphi %s1027, %s1027
      %s1041 = sphi %s369, %s369
    $region762: #{embedding_mean.1} parent=758 // loop_header_branch
      %1038 = sbr.rel (%p1036) target = $region766
    $region763: #{embedding_mean.1} parent=758 // loop_body
      %v1042 = vld [vmem:[%s1040] sm:%s1033]
      %1043 = vst [vmem:[%s1041] sm:%s1033] %v1042
    $region764: #{embedding_mean.1} parent=758 // loop_footer
      %s1039 = sadd.s32 1, %s1035
    $region765: #{embedding_mean.1} parent=758 // loop_footer_branch
      %1034 = sbr.rel target = $region761
    $region766: #{embedding_mean.1} parent=758 // loop_exit
      _
  $region759: #{embedding_mean.1} parent=0 // pred_fallthru
    _
  // Predicated region
  $region778: #{embedding_mean.1} parent=0 // pred_check
    _
  $region779: #{embedding_mean.1} parent=0 // pred_check_branch
    %1060 = sbr.rel (0) target = $region781
  $region780: #{embedding_mean.1} parent=0 // pred_region
    %1061 = vsyncadd %s370, 16
  $region781: #{embedding_mean.1} parent=0 // pred_fallthru
    _
  %s1062 = sadd.s32 %s988, 2
  %s1063 = sld [smem:[#allocation5 + %s1062]]
  %s1064 = scalar_lea.vmem %s1, %s1063
  // Predicated region
  $region782: #{embedding_mean.1} parent=0 // pred_check
    _
  $region783: #{embedding_mean.1} parent=0 // pred_check_branch
    %1066 = sbr.rel target = $region785
  $region784: #{embedding_mean.1} parent=0 // pred_region
    // Predicated region
    $region797: #{embedding_mean.1} parent=784 // pred_check
      _
    $region798: #{embedding_mean.1} parent=784 // pred_check_branch
      %1082 = sbr.rel (0) target = $region800
    $region799: #{embedding_mean.1} parent=784 // pred_region
      %s1084 = ssub.s32 2, 1
      loop: start=0, step=1, limit=1
      $region801: #{embedding_mean.1} parent=799 // loop_pre_header
        _
      $region802: #{embedding_mean.1} parent=799 // loop_header
        %s1086 = sphi 0, %s1090
        %p1087 = scmp.ge.s32.totalorder %s1086, 1
        %s1091 = sphi %s1064, %s1064
        %s1092 = sphi %s408, %s408
      $region803: #{embedding_mean.1} parent=799 // loop_header_branch
        %1089 = sbr.rel (%p1087) target = $region807
      $region804: #{embedding_mean.1} parent=799 // loop_body
        %v1093 = vld [vmem:[%s1091] sm:%s1084]
        %1094 = vst [vmem:[%s1092] sm:%s1084] %v1093
      $region805: #{embedding_mean.1} parent=799 // loop_footer
        %s1090 = sadd.s32 1, %s1086
      $region806: #{embedding_mean.1} parent=799 // loop_footer_branch
        %1085 = sbr.rel target = $region802
      $region807: #{embedding_mean.1} parent=799 // loop_exit
        _
    $region800: #{embedding_mean.1} parent=784 // pred_fallthru
      _
  $region785: #{embedding_mean.1} parent=0 // pred_fallthru
    _
  // Predicated region
  $region786: #{embedding_mean.1} parent=0 // pred_check
    _
  $region787: #{embedding_mean.1} parent=0 // pred_check_branch
    %1068 = sbr.rel (0) target = $region789
  $region788: #{embedding_mean.1} parent=0 // pred_region
    %s1070 = ssub.s32 2, 1
    loop: start=0, step=1, limit=1
    $region790: #{embedding_mean.1} parent=788 // loop_pre_header
      _
    $region791: #{embedding_mean.1} parent=788 // loop_header
      %s1072 = sphi 0, %s1076
      %p1073 = scmp.ge.s32.totalorder %s1072, 1
      %s1077 = sphi %s1064, %s1064
      %s1078 = sphi %s408, %s408
    $region792: #{embedding_mean.1} parent=788 // loop_header_branch
      %1075 = sbr.rel (%p1073) target = $region796
    $region793: #{embedding_mean.1} parent=788 // loop_body
      %v1079 = vld [vmem:[%s1077] sm:%s1070]
      %1080 = vst [vmem:[%s1078] sm:%s1070] %v1079
    $region794: #{embedding_mean.1} parent=788 // loop_footer
      %s1076 = sadd.s32 1, %s1072
    $region795: #{embedding_mean.1} parent=788 // loop_footer_branch
      %1071 = sbr.rel target = $region791
    $region796: #{embedding_mean.1} parent=788 // loop_exit
      _
  $region789: #{embedding_mean.1} parent=0 // pred_fallthru
    _
  // Predicated region
  $region808: #{embedding_mean.1} parent=0 // pred_check
    _
  $region809: #{embedding_mean.1} parent=0 // pred_check_branch
    %1097 = sbr.rel (0) target = $region811
  $region810: #{embedding_mean.1} parent=0 // pred_region
    %1098 = vsyncadd %s409, 16
  $region811: #{embedding_mean.1} parent=0 // pred_fallthru
    _
  %s1099 = sadd.s32 %s988, 3
  %s1100 = sld [smem:[#allocation5 + %s1099]]
  %s1101 = scalar_lea.vmem %s1, %s1100
  // Predicated region
  $region812: #{embedding_mean.1} parent=0 // pred_check
    _
  $region813: #{embedding_mean.1} parent=0 // pred_check_branch
    %1103 = sbr.rel target = $region815
  $region814: #{embedding_mean.1} parent=0 // pred_region
    // Predicated region
    $region827: #{embedding_mean.1} parent=814 // pred_check
      _
    $region828: #{embedding_mean.1} parent=814 // pred_check_branch
      %1119 = sbr.rel (0) target = $region830
    $region829: #{embedding_mean.1} parent=814 // pred_region
      %s1121 = ssub.s32 2, 1
      loop: start=0, step=1, limit=1
      $region831: #{embedding_mean.1} parent=829 // loop_pre_header
        _
      $region832: #{embedding_mean.1} parent=829 // loop_header
        %s1123 = sphi 0, %s1127
        %p1124 = scmp.ge.s32.totalorder %s1123, 1
        %s1128 = sphi %s1101, %s1101
        %s1129 = sphi %s447, %s447
      $region833: #{embedding_mean.1} parent=829 // loop_header_branch
        %1126 = sbr.rel (%p1124) target = $region837
      $region834: #{embedding_mean.1} parent=829 // loop_body
        %v1130 = vld [vmem:[%s1128] sm:%s1121]
        %1131 = vst [vmem:[%s1129] sm:%s1121] %v1130
      $region835: #{embedding_mean.1} parent=829 // loop_footer
        %s1127 = sadd.s32 1, %s1123
      $region836: #{embedding_mean.1} parent=829 // loop_footer_branch
        %1122 = sbr.rel target = $region832
      $region837: #{embedding_mean.1} parent=829 // loop_exit
        _
    $region830: #{embedding_mean.1} parent=814 // pred_fallthru
      _
  $region815: #{embedding_mean.1} parent=0 // pred_fallthru
    _
  // Predicated region
  $region816: #{embedding_mean.1} parent=0 // pred_check
    _
  $region817: #{embedding_mean.1} parent=0 // pred_check_branch
    %1105 = sbr.rel (0) target = $region819
  $region818: #{embedding_mean.1} parent=0 // pred_region
    %s1107 = ssub.s32 2, 1
    loop: start=0, step=1, limit=1
    $region820: #{embedding_mean.1} parent=818 // loop_pre_header
      _
    $region821: #{embedding_mean.1} parent=818 // loop_header
      %s1109 = sphi 0, %s1113
      %p1110 = scmp.ge.s32.totalorder %s1109, 1
      %s1114 = sphi %s1101, %s1101
      %s1115 = sphi %s447, %s447
    $region822: #{embedding_mean.1} parent=818 // loop_header_branch
      %1112 = sbr.rel (%p1110) target = $region826
    $region823: #{embedding_mean.1} parent=818 // loop_body
      %v1116 = vld [vmem:[%s1114] sm:%s1107]
      %1117 = vst [vmem:[%s1115] sm:%s1107] %v1116
    $region824: #{embedding_mean.1} parent=818 // loop_footer
      %s1113 = sadd.s32 1, %s1109
    $region825: #{embedding_mean.1} parent=818 // loop_footer_branch
      %1108 = sbr.rel target = $region821
    $region826: #{embedding_mean.1} parent=818 // loop_exit
      _
  $region819: #{embedding_mean.1} parent=0 // pred_fallthru
    _
  // Predicated region
  $region838: #{embedding_mean.1} parent=0 // pred_check
    _
  $region839: #{embedding_mean.1} parent=0 // pred_check_branch
    %1134 = sbr.rel (0) target = $region841
  $region840: #{embedding_mean.1} parent=0 // pred_region
    %1135 = vsyncadd %s448, 16
  $region841: #{embedding_mean.1} parent=0 // pred_fallthru
    _
  %s1136 = sadd.s32 %s988, 4
  %s1137 = sld [smem:[#allocation5 + %s1136]]
  %s1138 = scalar_lea.vmem %s1, %s1137
  // Predicated region
  $region842: #{embedding_mean.1} parent=0 // pred_check
    _
  $region843: #{embedding_mean.1} parent=0 // pred_check_branch
    %1140 = sbr.rel target = $region845
  $region844: #{embedding_mean.1} parent=0 // pred_region
    // Predicated region
    $region857: #{embedding_mean.1} parent=844 // pred_check
      _
    $region858: #{embedding_mean.1} parent=844 // pred_check_branch
      %1156 = sbr.rel (0) target = $region860
    $region859: #{embedding_mean.1} parent=844 // pred_region
      %s1158 = ssub.s32 2, 1
      loop: start=0, step=1, limit=1
      $region861: #{embedding_mean.1} parent=859 // loop_pre_header
        _
      $region862: #{embedding_mean.1} parent=859 // loop_header
        %s1160 = sphi 0, %s1164
        %p1161 = scmp.ge.s32.totalorder %s1160, 1
        %s1165 = sphi %s1138, %s1138
        %s1166 = sphi %s486, %s486
      $region863: #{embedding_mean.1} parent=859 // loop_header_branch
        %1163 = sbr.rel (%p1161) target = $region867
      $region864: #{embedding_mean.1} parent=859 // loop_body
        %v1167 = vld [vmem:[%s1165] sm:%s1158]
        %1168 = vst [vmem:[%s1166] sm:%s1158] %v1167
      $region865: #{embedding_mean.1} parent=859 // loop_footer
        %s1164 = sadd.s32 1, %s1160
      $region866: #{embedding_mean.1} parent=859 // loop_footer_branch
        %1159 = sbr.rel target = $region862
      $region867: #{embedding_mean.1} parent=859 // loop_exit
        _
    $region860: #{embedding_mean.1} parent=844 // pred_fallthru
      _
  $region845: #{embedding_mean.1} parent=0 // pred_fallthru
    _
  // Predicated region
  $region846: #{embedding_mean.1} parent=0 // pred_check
    _
  $region847: #{embedding_mean.1} parent=0 // pred_check_branch
    %1142 = sbr.rel (0) target = $region849
  $region848: #{embedding_mean.1} parent=0 // pred_region
    %s1144 = ssub.s32 2, 1
    loop: start=0, step=1, limit=1
    $region850: #{embedding_mean.1} parent=848 // loop_pre_header
      _
    $region851: #{embedding_mean.1} parent=848 // loop_header
      %s1146 = sphi 0, %s1150
      %p1147 = scmp.ge.s32.totalorder %s1146, 1
      %s1151 = sphi %s1138, %s1138
      %s1152 = sphi %s486, %s486
    $region852: #{embedding_mean.1} parent=848 // loop_header_branch
      %1149 = sbr.rel (%p1147) target = $region856
    $region853: #{embedding_mean.1} parent=848 // loop_body
      %v1153 = vld [vmem:[%s1151] sm:%s1144]
      %1154 = vst [vmem:[%s1152] sm:%s1144] %v1153
    $region854: #{embedding_mean.1} parent=848 // loop_footer
      %s1150 = sadd.s32 1, %s1146
    $region855: #{embedding_mean.1} parent=848 // loop_footer_branch
      %1145 = sbr.rel target = $region851
    $region856: #{embedding_mean.1} parent=848 // loop_exit
      _
  $region849: #{embedding_mean.1} parent=0 // pred_fallthru
    _
  // Predicated region
  $region868: #{embedding_mean.1} parent=0 // pred_check
    _
  $region869: #{embedding_mean.1} parent=0 // pred_check_branch
    %1171 = sbr.rel (0) target = $region871
  $region870: #{embedding_mean.1} parent=0 // pred_region
    %1172 = vsyncadd %s487, 16
  $region871: #{embedding_mean.1} parent=0 // pred_fallthru
    _
  %s1173 = sadd.s32 %s988, 5
  %s1174 = sld [smem:[#allocation5 + %s1173]]
  %s1175 = scalar_lea.vmem %s1, %s1174
  // Predicated region
  $region872: #{embedding_mean.1} parent=0 // pred_check
    _
  $region873: #{embedding_mean.1} parent=0 // pred_check_branch
    %1177 = sbr.rel target = $region875
  $region874: #{embedding_mean.1} parent=0 // pred_region
    // Predicated region
    $region887: #{embedding_mean.1} parent=874 // pred_check
      _
    $region888: #{embedding_mean.1} parent=874 // pred_check_branch
      %1193 = sbr.rel (0) target = $region890
    $region889: #{embedding_mean.1} parent=874 // pred_region
      %s1195 = ssub.s32 2, 1
      loop: start=0, step=1, limit=1
      $region891: #{embedding_mean.1} parent=889 // loop_pre_header
        _
      $region892: #{embedding_mean.1} parent=889 // loop_header
        %s1197 = sphi 0, %s1201
        %p1198 = scmp.ge.s32.totalorder %s1197, 1
        %s1202 = sphi %s1175, %s1175
        %s1203 = sphi %s525, %s525
      $region893: #{embedding_mean.1} parent=889 // loop_header_branch
        %1200 = sbr.rel (%p1198) target = $region897
      $region894: #{embedding_mean.1} parent=889 // loop_body
        %v1204 = vld [vmem:[%s1202] sm:%s1195]
        %1205 = vst [vmem:[%s1203] sm:%s1195] %v1204
      $region895: #{embedding_mean.1} parent=889 // loop_footer
        %s1201 = sadd.s32 1, %s1197
      $region896: #{embedding_mean.1} parent=889 // loop_footer_branch
        %1196 = sbr.rel target = $region892
      $region897: #{embedding_mean.1} parent=889 // loop_exit
        _
    $region890: #{embedding_mean.1} parent=874 // pred_fallthru
      _
  $region875: #{embedding_mean.1} parent=0 // pred_fallthru
    _
  // Predicated region
  $region876: #{embedding_mean.1} parent=0 // pred_check
    _
  $region877: #{embedding_mean.1} parent=0 // pred_check_branch
    %1179 = sbr.rel (0) target = $region879
  $region878: #{embedding_mean.1} parent=0 // pred_region
    %s1181 = ssub.s32 2, 1
    loop: start=0, step=1, limit=1
    $region880: #{embedding_mean.1} parent=878 // loop_pre_header
      _
    $region881: #{embedding_mean.1} parent=878 // loop_header
      %s1183 = sphi 0, %s1187
      %p1184 = scmp.ge.s32.totalorder %s1183, 1
      %s1188 = sphi %s1175, %s1175
      %s1189 = sphi %s525, %s525
    $region882: #{embedding_mean.1} parent=878 // loop_header_branch
      %1186 = sbr.rel (%p1184) target = $region886
    $region883: #{embedding_mean.1} parent=878 // loop_body
      %v1190 = vld [vmem:[%s1188] sm:%s1181]
      %1191 = vst [vmem:[%s1189] sm:%s1181] %v1190
    $region884: #{embedding_mean.1} parent=878 // loop_footer
      %s1187 = sadd.s32 1, %s1183
    $region885: #{embedding_mean.1} parent=878 // loop_footer_branch
      %1182 = sbr.rel target = $region881
    $region886: #{embedding_mean.1} parent=878 // loop_exit
      _
  $region879: #{embedding_mean.1} parent=0 // pred_fallthru
    _
  // Predicated region
  $region898: #{embedding_mean.1} parent=0 // pred_check
    _
  $region899: #{embedding_mean.1} parent=0 // pred_check_branch
    %1208 = sbr.rel (0) target = $region901
  $region900: #{embedding_mean.1} parent=0 // pred_region
    %1209 = vsyncadd %s526, 16
  $region901: #{embedding_mean.1} parent=0 // pred_fallthru
    _
  %s1210 = sadd.s32 %s988, 6
  %s1211 = sld [smem:[#allocation5 + %s1210]]
  %s1212 = scalar_lea.vmem %s1, %s1211
  // Predicated region
  $region902: #{embedding_mean.1} parent=0 // pred_check
    _
  $region903: #{embedding_mean.1} parent=0 // pred_check_branch
    %1214 = sbr.rel target = $region905
  $region904: #{embedding_mean.1} parent=0 // pred_region
    // Predicated region
    $region917: #{embedding_mean.1} parent=904 // pred_check
      _
    $region918: #{embedding_mean.1} parent=904 // pred_check_branch
      %1230 = sbr.rel (0) target = $region920
    $region919: #{embedding_mean.1} parent=904 // pred_region
      %s1232 = ssub.s32 2, 1
      loop: start=0, step=1, limit=1
      $region921: #{embedding_mean.1} parent=919 // loop_pre_header
        _
      $region922: #{embedding_mean.1} parent=919 // loop_header
        %s1234 = sphi 0, %s1238
        %p1235 = scmp.ge.s32.totalorder %s1234, 1
        %s1239 = sphi %s1212, %s1212
        %s1240 = sphi %s564, %s564
      $region923: #{embedding_mean.1} parent=919 // loop_header_branch
        %1237 = sbr.rel (%p1235) target = $region927
      $region924: #{embedding_mean.1} parent=919 // loop_body
        %v1241 = vld [vmem:[%s1239] sm:%s1232]
        %1242 = vst [vmem:[%s1240] sm:%s1232] %v1241
      $region925: #{embedding_mean.1} parent=919 // loop_footer
        %s1238 = sadd.s32 1, %s1234
      $region926: #{embedding_mean.1} parent=919 // loop_footer_branch
        %1233 = sbr.rel target = $region922
      $region927: #{embedding_mean.1} parent=919 // loop_exit
        _
    $region920: #{embedding_mean.1} parent=904 // pred_fallthru
      _
  $region905: #{embedding_mean.1} parent=0 // pred_fallthru
    _
  // Predicated region
  $region906: #{embedding_mean.1} parent=0 // pred_check
    _
  $region907: #{embedding_mean.1} parent=0 // pred_check_branch
    %1216 = sbr.rel (0) target = $region909
  $region908: #{embedding_mean.1} parent=0 // pred_region
    %s1218 = ssub.s32 2, 1
    loop: start=0, step=1, limit=1
    $region910: #{embedding_mean.1} parent=908 // loop_pre_header
      _
    $region911: #{embedding_mean.1} parent=908 // loop_header
      %s1220 = sphi 0, %s1224
      %p1221 = scmp.ge.s32.totalorder %s1220, 1
      %s1225 = sphi %s1212, %s1212
      %s1226 = sphi %s564, %s564
    $region912: #{embedding_mean.1} parent=908 // loop_header_branch
      %1223 = sbr.rel (%p1221) target = $region916
    $region913: #{embedding_mean.1} parent=908 // loop_body
      %v1227 = vld [vmem:[%s1225] sm:%s1218]
      %1228 = vst [vmem:[%s1226] sm:%s1218] %v1227
    $region914: #{embedding_mean.1} parent=908 // loop_footer
      %s1224 = sadd.s32 1, %s1220
    $region915: #{embedding_mean.1} parent=908 // loop_footer_branch
      %1219 = sbr.rel target = $region911
    $region916: #{embedding_mean.1} parent=908 // loop_exit
      _
  $region909: #{embedding_mean.1} parent=0 // pred_fallthru
    _
  // Predicated region
  $region928: #{embedding_mean.1} parent=0 // pred_check
    _
  $region929: #{embedding_mean.1} parent=0 // pred_check_branch
    %1245 = sbr.rel (0) target = $region931
  $region930: #{embedding_mean.1} parent=0 // pred_region
    %1246 = vsyncadd %s565, 16
  $region931: #{embedding_mean.1} parent=0 // pred_fallthru
    _
  %s1247 = sadd.s32 %s988, 7
  %s1248 = sld [smem:[#allocation5 + %s1247]]
  %s1249 = scalar_lea.vmem %s1, %s1248
  // Predicated region
  $region932: #{embedding_mean.1} parent=0 // pred_check
    _
  $region933: #{embedding_mean.1} parent=0 // pred_check_branch
    %1251 = sbr.rel target = $region935
  $region934: #{embedding_mean.1} parent=0 // pred_region
    // Predicated region
    $region947: #{embedding_mean.1} parent=934 // pred_check
      _
    $region948: #{embedding_mean.1} parent=934 // pred_check_branch
      %1267 = sbr.rel (0) target = $region950
    $region949: #{embedding_mean.1} parent=934 // pred_region
      %s1269 = ssub.s32 2, 1
      loop: start=0, step=1, limit=1
      $region951: #{embedding_mean.1} parent=949 // loop_pre_header
        _
      $region952: #{embedding_mean.1} parent=949 // loop_header
        %s1271 = sphi 0, %s1275
        %p1272 = scmp.ge.s32.totalorder %s1271, 1
        %s1276 = sphi %s1249, %s1249
        %s1277 = sphi %s603, %s603
      $region953: #{embedding_mean.1} parent=949 // loop_header_branch
        %1274 = sbr.rel (%p1272) target = $region957
      $region954: #{embedding_mean.1} parent=949 // loop_body
        %v1278 = vld [vmem:[%s1276] sm:%s1269]
        %1279 = vst [vmem:[%s1277] sm:%s1269] %v1278
      $region955: #{embedding_mean.1} parent=949 // loop_footer
        %s1275 = sadd.s32 1, %s1271
      $region956: #{embedding_mean.1} parent=949 // loop_footer_branch
        %1270 = sbr.rel target = $region952
      $region957: #{embedding_mean.1} parent=949 // loop_exit
        _
    $region950: #{embedding_mean.1} parent=934 // pred_fallthru
      _
  $region935: #{embedding_mean.1} parent=0 // pred_fallthru
    _
  // Predicated region
  $region936: #{embedding_mean.1} parent=0 // pred_check
    _
  $region937: #{embedding_mean.1} parent=0 // pred_check_branch
    %1253 = sbr.rel (0) target = $region939
  $region938: #{embedding_mean.1} parent=0 // pred_region
    %s1255 = ssub.s32 2, 1
    loop: start=0, step=1, limit=1
    $region940: #{embedding_mean.1} parent=938 // loop_pre_header
      _
    $region941: #{embedding_mean.1} parent=938 // loop_header
      %s1257 = sphi 0, %s1261
      %p1258 = scmp.ge.s32.totalorder %s1257, 1
      %s1262 = sphi %s1249, %s1249
      %s1263 = sphi %s603, %s603
    $region942: #{embedding_mean.1} parent=938 // loop_header_branch
      %1260 = sbr.rel (%p1258) target = $region946
    $region943: #{embedding_mean.1} parent=938 // loop_body
      %v1264 = vld [vmem:[%s1262] sm:%s1255]
      %1265 = vst [vmem:[%s1263] sm:%s1255] %v1264
    $region944: #{embedding_mean.1} parent=938 // loop_footer
      %s1261 = sadd.s32 1, %s1257
    $region945: #{embedding_mean.1} parent=938 // loop_footer_branch
      %1256 = sbr.rel target = $region941
    $region946: #{embedding_mean.1} parent=938 // loop_exit
      _
  $region939: #{embedding_mean.1} parent=0 // pred_fallthru
    _
  // Predicated region
  $region958: #{embedding_mean.1} parent=0 // pred_check
    _
  $region959: #{embedding_mean.1} parent=0 // pred_check_branch
    %1282 = sbr.rel (0) target = $region961
  $region960: #{embedding_mean.1} parent=0 // pred_region
    %1283 = vsyncadd %s604, 16
  $region961: #{embedding_mean.1} parent=0 // pred_fallthru
    _
  %s1284 = sshll.u32 %s639, 4
  %1285 = dma.done [#allocation3], %s1284
  %s1286 = sshll.u32 %s639, 4
  %1287 = dma.done %s57, %s1286
  %s1288 = sshll.u32 %s639, 4
  %1289 = dma.done %s96, %s1288
  %s1290 = sshll.u32 %s639, 4
  %1291 = dma.done %s135, %s1290
  %s1292 = sshll.u32 %s639, 4
  %1293 = dma.done %s174, %s1292
  %s1294 = sshll.u32 %s639, 4
  %1295 = dma.done %s213, %s1294
  %s1296 = sshll.u32 %s639, 4
  %1297 = dma.done %s252, %s1296
  %s1298 = sshll.u32 %s639, 4
  %1299 = dma.done %s291, %s1298
  %v1300 = vld [vmem:[#allocation2] sm:$0xff]
  %v1301 = vrot.slane %v1300, 4
  %v1302 = vadd.f32 %v1300, %v1301
  %v1303 = vrot.slane %v1302, 2
  %v1304 = vadd.f32 %v1302, %v1303
  %v1305 = vrot.slane %v1304, 1
  %v1306 = vadd.f32 %v1304, %v1305
  %v1307 = vmul.f32 %v1306, 0.125
  %1308 = vst [vmem:[%s2 + $0x2] sm:$0x1] %v1307
  %s1309 = sadd.s32 %s15, 4
  %s1310 = smul.u32 %s1309, 128
  %s1311 = sld [smem:[#allocation5 + %s1310]]
  %s1312 = scalar_lea.vmem %s1, %s1311
  // Predicated region
  $region962: #{embedding_mean.1} parent=0 // pred_check
    _
  $region963: #{embedding_mean.1} parent=0 // pred_check_branch
    %1314 = sbr.rel target = $region965
  $region964: #{embedding_mean.1} parent=0 // pred_region
    // Predicated region
    $region977: #{embedding_mean.1} parent=964 // pred_check
      _
    $region978: #{embedding_mean.1} parent=964 // pred_check_branch
      %1330 = sbr.rel (0) target = $region980
    $region979: #{embedding_mean.1} parent=964 // pred_region
      %s1332 = ssub.s32 2, 1
      loop: start=0, step=1, limit=1
      $region981: #{embedding_mean.1} parent=979 // loop_pre_header
        _
      $region982: #{embedding_mean.1} parent=979 // loop_header
        %s1334 = sphi 0, %s1338
        %p1335 = scmp.ge.s32.totalorder %s1334, 1
        %s1339 = sphi %s1312, %s1312
        %s1340 = sphi [#allocation2], [#allocation2]
      $region983: #{embedding_mean.1} parent=979 // loop_header_branch
        %1337 = sbr.rel (%p1335) target = $region987
      $region984: #{embedding_mean.1} parent=979 // loop_body
        %v1341 = vld [vmem:[%s1339] sm:%s1332]
        %1342 = vst [vmem:[%s1340] sm:%s1332] %v1341
      $region985: #{embedding_mean.1} parent=979 // loop_footer
        %s1338 = sadd.s32 1, %s1334
      $region986: #{embedding_mean.1} parent=979 // loop_footer_branch
        %1333 = sbr.rel target = $region982
      $region987: #{embedding_mean.1} parent=979 // loop_exit
        _
    $region980: #{embedding_mean.1} parent=964 // pred_fallthru
      _
  $region965: #{embedding_mean.1} parent=0 // pred_fallthru
    _
  // Predicated region
  $region966: #{embedding_mean.1} parent=0 // pred_check
    _
  $region967: #{embedding_mean.1} parent=0 // pred_check_branch
    %1316 = sbr.rel (0) target = $region969
  $region968: #{embedding_mean.1} parent=0 // pred_region
    %s1318 = ssub.s32 2, 1
    loop: start=0, step=1, limit=1
    $region970: #{embedding_mean.1} parent=968 // loop_pre_header
      _
    $region971: #{embedding_mean.1} parent=968 // loop_header
      %s1320 = sphi 0, %s1324
      %p1321 = scmp.ge.s32.totalorder %s1320, 1
      %s1325 = sphi %s1312, %s1312
      %s1326 = sphi [#allocation2], [#allocation2]
    $region972: #{embedding_mean.1} parent=968 // loop_header_branch
      %1323 = sbr.rel (%p1321) target = $region976
    $region973: #{embedding_mean.1} parent=968 // loop_body
      %v1327 = vld [vmem:[%s1325] sm:%s1318]
      %1328 = vst [vmem:[%s1326] sm:%s1318] %v1327
    $region974: #{embedding_mean.1} parent=968 // loop_footer
      %s1324 = sadd.s32 1, %s1320
    $region975: #{embedding_mean.1} parent=968 // loop_footer_branch
      %1319 = sbr.rel target = $region971
    $region976: #{embedding_mean.1} parent=968 // loop_exit
      _
  $region969: #{embedding_mean.1} parent=0 // pred_fallthru
    _
  // Predicated region
  $region988: #{embedding_mean.1} parent=0 // pred_check
    _
  $region989: #{embedding_mean.1} parent=0 // pred_check_branch
    %1345 = sbr.rel (0) target = $region991
  $region990: #{embedding_mean.1} parent=0 // pred_region
    %1346 = vsyncadd [#allocation3], 16
  $region991: #{embedding_mean.1} parent=0 // pred_fallthru
    _
  %s1347 = sadd.s32 %s1310, 1
  %s1348 = sld [smem:[#allocation5 + %s1347]]
  %s1349 = scalar_lea.vmem %s1, %s1348
  // Predicated region
  $region992: #{embedding_mean.1} parent=0 // pred_check
    _
  $region993: #{embedding_mean.1} parent=0 // pred_check_branch
    %1351 = sbr.rel target = $region995
  $region994: #{embedding_mean.1} parent=0 // pred_region
    // Predicated region
    $region1007: #{embedding_mean.1} parent=994 // pred_check
      _
    $region1008: #{embedding_mean.1} parent=994 // pred_check_branch
      %1367 = sbr.rel (0) target = $region1010
    $region1009: #{embedding_mean.1} parent=994 // pred_region
      %s1369 = ssub.s32 2, 1
      loop: start=0, step=1, limit=1
      $region1011: #{embedding_mean.1} parent=1009 // loop_pre_header
        _
      $region1012: #{embedding_mean.1} parent=1009 // loop_header
        %s1371 = sphi 0, %s1375
        %p1372 = scmp.ge.s32.totalorder %s1371, 1
        %s1376 = sphi %s1349, %s1349
        %s1377 = sphi %s56, %s56
      $region1013: #{embedding_mean.1} parent=1009 // loop_header_branch
        %1374 = sbr.rel (%p1372) target = $region1017
      $region1014: #{embedding_mean.1} parent=1009 // loop_body
        %v1378 = vld [vmem:[%s1376] sm:%s1369]
        %1379 = vst [vmem:[%s1377] sm:%s1369] %v1378
      $region1015: #{embedding_mean.1} parent=1009 // loop_footer
        %s1375 = sadd.s32 1, %s1371
      $region1016: #{embedding_mean.1} parent=1009 // loop_footer_branch
        %1370 = sbr.rel target = $region1012
      $region1017: #{embedding_mean.1} parent=1009 // loop_exit
        _
    $region1010: #{embedding_mean.1} parent=994 // pred_fallthru
      _
  $region995: #{embedding_mean.1} parent=0 // pred_fallthru
    _
  // Predicated region
  $region996: #{embedding_mean.1} parent=0 // pred_check
    _
  $region997: #{embedding_mean.1} parent=0 // pred_check_branch
    %1353 = sbr.rel (0) target = $region999
  $region998: #{embedding_mean.1} parent=0 // pred_region
    %s1355 = ssub.s32 2, 1
    loop: start=0, step=1, limit=1
    $region1000: #{embedding_mean.1} parent=998 // loop_pre_header
      _
    $region1001: #{embedding_mean.1} parent=998 // loop_header
      %s1357 = sphi 0, %s1361
      %p1358 = scmp.ge.s32.totalorder %s1357, 1
      %s1362 = sphi %s1349, %s1349
      %s1363 = sphi %s56, %s56
    $region1002: #{embedding_mean.1} parent=998 // loop_header_branch
      %1360 = sbr.rel (%p1358) target = $region1006
    $region1003: #{embedding_mean.1} parent=998 // loop_body
      %v1364 = vld [vmem:[%s1362] sm:%s1355]
      %1365 = vst [vmem:[%s1363] sm:%s1355] %v1364
    $region1004: #{embedding_mean.1} parent=998 // loop_footer
      %s1361 = sadd.s32 1, %s1357
    $region1005: #{embedding_mean.1} parent=998 // loop_footer_branch
      %1356 = sbr.rel target = $region1001
    $region1006: #{embedding_mean.1} parent=998 // loop_exit
      _
  $region999: #{embedding_mean.1} parent=0 // pred_fallthru
    _
  // Predicated region
  $region1018: #{embedding_mean.1} parent=0 // pred_check
    _
  $region1019: #{embedding_mean.1} parent=0 // pred_check_branch
    %1382 = sbr.rel (0) target = $region1021
  $region1020: #{embedding_mean.1} parent=0 // pred_region
    %1383 = vsyncadd %s57, 16
  $region1021: #{embedding_mean.1} parent=0 // pred_fallthru
    _
  %s1384 = sadd.s32 %s1310, 2
  %s1385 = sld [smem:[#allocation5 + %s1384]]
  %s1386 = scalar_lea.vmem %s1, %s1385
  // Predicated region
  $region1022: #{embedding_mean.1} parent=0 // pred_check
    _
  $region1023: #{embedding_mean.1} parent=0 // pred_check_branch
    %1388 = sbr.rel target = $region1025
  $region1024: #{embedding_mean.1} parent=0 // pred_region
    // Predicated region
    $region1037: #{embedding_mean.1} parent=1024 // pred_check
      _
    $region1038: #{embedding_mean.1} parent=1024 // pred_check_branch
      %1404 = sbr.rel (0) target = $region1040
    $region1039: #{embedding_mean.1} parent=1024 // pred_region
      %s1406 = ssub.s32 2, 1
      loop: start=0, step=1, limit=1
      $region1041: #{embedding_mean.1} parent=1039 // loop_pre_header
        _
      $region1042: #{embedding_mean.1} parent=1039 // loop_header
        %s1408 = sphi 0, %s1412
        %p1409 = scmp.ge.s32.totalorder %s1408, 1
        %s1413 = sphi %s1386, %s1386
        %s1414 = sphi %s95, %s95
      $region1043: #{embedding_mean.1} parent=1039 // loop_header_branch
        %1411 = sbr.rel (%p1409) target = $region1047
      $region1044: #{embedding_mean.1} parent=1039 // loop_body
        %v1415 = vld [vmem:[%s1413] sm:%s1406]
        %1416 = vst [vmem:[%s1414] sm:%s1406] %v1415
      $region1045: #{embedding_mean.1} parent=1039 // loop_footer
        %s1412 = sadd.s32 1, %s1408
      $region1046: #{embedding_mean.1} parent=1039 // loop_footer_branch
        %1407 = sbr.rel target = $region1042
      $region1047: #{embedding_mean.1} parent=1039 // loop_exit
        _
    $region1040: #{embedding_mean.1} parent=1024 // pred_fallthru
      _
  $region1025: #{embedding_mean.1} parent=0 // pred_fallthru
    _
  // Predicated region
  $region1026: #{embedding_mean.1} parent=0 // pred_check
    _
  $region1027: #{embedding_mean.1} parent=0 // pred_check_branch
    %1390 = sbr.rel (0) target = $region1029
  $region1028: #{embedding_mean.1} parent=0 // pred_region
    %s1392 = ssub.s32 2, 1
    loop: start=0, step=1, limit=1
    $region1030: #{embedding_mean.1} parent=1028 // loop_pre_header
      _
    $region1031: #{embedding_mean.1} parent=1028 // loop_header
      %s1394 = sphi 0, %s1398
      %p1395 = scmp.ge.s32.totalorder %s1394, 1
      %s1399 = sphi %s1386, %s1386
      %s1400 = sphi %s95, %s95
    $region1032: #{embedding_mean.1} parent=1028 // loop_header_branch
      %1397 = sbr.rel (%p1395) target = $region1036
    $region1033: #{embedding_mean.1} parent=1028 // loop_body
      %v1401 = vld [vmem:[%s1399] sm:%s1392]
      %1402 = vst [vmem:[%s1400] sm:%s1392] %v1401
    $region1034: #{embedding_mean.1} parent=1028 // loop_footer
      %s1398 = sadd.s32 1, %s1394
    $region1035: #{embedding_mean.1} parent=1028 // loop_footer_branch
      %1393 = sbr.rel target = $region1031
    $region1036: #{embedding_mean.1} parent=1028 // loop_exit
      _
  $region1029: #{embedding_mean.1} parent=0 // pred_fallthru
    _
  // Predicated region
  $region1048: #{embedding_mean.1} parent=0 // pred_check
    _
  $region1049: #{embedding_mean.1} parent=0 // pred_check_branch
    %1419 = sbr.rel (0) target = $region1051
  $region1050: #{embedding_mean.1} parent=0 // pred_region
    %1420 = vsyncadd %s96, 16
  $region1051: #{embedding_mean.1} parent=0 // pred_fallthru
    _
  %s1421 = sadd.s32 %s1310, 3
  %s1422 = sld [smem:[#allocation5 + %s1421]]
  %s1423 = scalar_lea.vmem %s1, %s1422
  // Predicated region
  $region1052: #{embedding_mean.1} parent=0 // pred_check
    _
  $region1053: #{embedding_mean.1} parent=0 // pred_check_branch
    %1425 = sbr.rel target = $region1055
  $region1054: #{embedding_mean.1} parent=0 // pred_region
    // Predicated region
    $region1067: #{embedding_mean.1} parent=1054 // pred_check
      _
    $region1068: #{embedding_mean.1} parent=1054 // pred_check_branch
      %1441 = sbr.rel (0) target = $region1070
    $region1069: #{embedding_mean.1} parent=1054 // pred_region
      %s1443 = ssub.s32 2, 1
      loop: start=0, step=1, limit=1
      $region1071: #{embedding_mean.1} parent=1069 // loop_pre_header
        _
      $region1072: #{embedding_mean.1} parent=1069 // loop_header
        %s1445 = sphi 0, %s1449
        %p1446 = scmp.ge.s32.totalorder %s1445, 1
        %s1450 = sphi %s1423, %s1423
        %s1451 = sphi %s134, %s134
      $region1073: #{embedding_mean.1} parent=1069 // loop_header_branch
        %1448 = sbr.rel (%p1446) target = $region1077
      $region1074: #{embedding_mean.1} parent=1069 // loop_body
        %v1452 = vld [vmem:[%s1450] sm:%s1443]
        %1453 = vst [vmem:[%s1451] sm:%s1443] %v1452
      $region1075: #{embedding_mean.1} parent=1069 // loop_footer
        %s1449 = sadd.s32 1, %s1445
      $region1076: #{embedding_mean.1} parent=1069 // loop_footer_branch
        %1444 = sbr.rel target = $region1072
      $region1077: #{embedding_mean.1} parent=1069 // loop_exit
        _
    $region1070: #{embedding_mean.1} parent=1054 // pred_fallthru
      _
  $region1055: #{embedding_mean.1} parent=0 // pred_fallthru
    _
  // Predicated region
  $region1056: #{embedding_mean.1} parent=0 // pred_check
    _
  $region1057: #{embedding_mean.1} parent=0 // pred_check_branch
    %1427 = sbr.rel (0) target = $region1059
  $region1058: #{embedding_mean.1} parent=0 // pred_region
    %s1429 = ssub.s32 2, 1
    loop: start=0, step=1, limit=1
    $region1060: #{embedding_mean.1} parent=1058 // loop_pre_header
      _
    $region1061: #{embedding_mean.1} parent=1058 // loop_header
      %s1431 = sphi 0, %s1435
      %p1432 = scmp.ge.s32.totalorder %s1431, 1
      %s1436 = sphi %s1423, %s1423
      %s1437 = sphi %s134, %s134
    $region1062: #{embedding_mean.1} parent=1058 // loop_header_branch
      %1434 = sbr.rel (%p1432) target = $region1066
    $region1063: #{embedding_mean.1} parent=1058 // loop_body
      %v1438 = vld [vmem:[%s1436] sm:%s1429]
      %1439 = vst [vmem:[%s1437] sm:%s1429] %v1438
    $region1064: #{embedding_mean.1} parent=1058 // loop_footer
      %s1435 = sadd.s32 1, %s1431
    $region1065: #{embedding_mean.1} parent=1058 // loop_footer_branch
      %1430 = sbr.rel target = $region1061
    $region1066: #{embedding_mean.1} parent=1058 // loop_exit
      _
  $region1059: #{embedding_mean.1} parent=0 // pred_fallthru
    _
  // Predicated region
  $region1078: #{embedding_mean.1} parent=0 // pred_check
    _
  $region1079: #{embedding_mean.1} parent=0 // pred_check_branch
    %1456 = sbr.rel (0) target = $region1081
  $region1080: #{embedding_mean.1} parent=0 // pred_region
    %1457 = vsyncadd %s135, 16
  $region1081: #{embedding_mean.1} parent=0 // pred_fallthru
    _
  %s1458 = sadd.s32 %s1310, 4
  %s1459 = sld [smem:[#allocation5 + %s1458]]
  %s1460 = scalar_lea.vmem %s1, %s1459
  // Predicated region
  $region1082: #{embedding_mean.1} parent=0 // pred_check
    _
  $region1083: #{embedding_mean.1} parent=0 // pred_check_branch
    %1462 = sbr.rel target = $region1085
  $region1084: #{embedding_mean.1} parent=0 // pred_region
    // Predicated region
    $region1097: #{embedding_mean.1} parent=1084 // pred_check
      _
    $region1098: #{embedding_mean.1} parent=1084 // pred_check_branch
      %1478 = sbr.rel (0) target = $region1100
    $region1099: #{embedding_mean.1} parent=1084 // pred_region
      %s1480 = ssub.s32 2, 1
      loop: start=0, step=1, limit=1
      $region1101: #{embedding_mean.1} parent=1099 // loop_pre_header
        _
      $region1102: #{embedding_mean.1} parent=1099 // loop_header
        %s1482 = sphi 0, %s1486
        %p1483 = scmp.ge.s32.totalorder %s1482, 1
        %s1487 = sphi %s1460, %s1460
        %s1488 = sphi %s173, %s173
      $region1103: #{embedding_mean.1} parent=1099 // loop_header_branch
        %1485 = sbr.rel (%p1483) target = $region1107
      $region1104: #{embedding_mean.1} parent=1099 // loop_body
        %v1489 = vld [vmem:[%s1487] sm:%s1480]
        %1490 = vst [vmem:[%s1488] sm:%s1480] %v1489
      $region1105: #{embedding_mean.1} parent=1099 // loop_footer
        %s1486 = sadd.s32 1, %s1482
      $region1106: #{embedding_mean.1} parent=1099 // loop_footer_branch
        %1481 = sbr.rel target = $region1102
      $region1107: #{embedding_mean.1} parent=1099 // loop_exit
        _
    $region1100: #{embedding_mean.1} parent=1084 // pred_fallthru
      _
  $region1085: #{embedding_mean.1} parent=0 // pred_fallthru
    _
  // Predicated region
  $region1086: #{embedding_mean.1} parent=0 // pred_check
    _
  $region1087: #{embedding_mean.1} parent=0 // pred_check_branch
    %1464 = sbr.rel (0) target = $region1089
  $region1088: #{embedding_mean.1} parent=0 // pred_region
    %s1466 = ssub.s32 2, 1
    loop: start=0, step=1, limit=1
    $region1090: #{embedding_mean.1} parent=1088 // loop_pre_header
      _
    $region1091: #{embedding_mean.1} parent=1088 // loop_header
      %s1468 = sphi 0, %s1472
      %p1469 = scmp.ge.s32.totalorder %s1468, 1
      %s1473 = sphi %s1460, %s1460
      %s1474 = sphi %s173, %s173
    $region1092: #{embedding_mean.1} parent=1088 // loop_header_branch
      %1471 = sbr.rel (%p1469) target = $region1096
    $region1093: #{embedding_mean.1} parent=1088 // loop_body
      %v1475 = vld [vmem:[%s1473] sm:%s1466]
      %1476 = vst [vmem:[%s1474] sm:%s1466] %v1475
    $region1094: #{embedding_mean.1} parent=1088 // loop_footer
      %s1472 = sadd.s32 1, %s1468
    $region1095: #{embedding_mean.1} parent=1088 // loop_footer_branch
      %1467 = sbr.rel target = $region1091
    $region1096: #{embedding_mean.1} parent=1088 // loop_exit
      _
  $region1089: #{embedding_mean.1} parent=0 // pred_fallthru
    _
  // Predicated region
  $region1108: #{embedding_mean.1} parent=0 // pred_check
    _
  $region1109: #{embedding_mean.1} parent=0 // pred_check_branch
    %1493 = sbr.rel (0) target = $region1111
  $region1110: #{embedding_mean.1} parent=0 // pred_region
    %1494 = vsyncadd %s174, 16
  $region1111: #{embedding_mean.1} parent=0 // pred_fallthru
    _
  %s1495 = sadd.s32 %s1310, 5
  %s1496 = sld [smem:[#allocation5 + %s1495]]
  %s1497 = scalar_lea.vmem %s1, %s1496
  // Predicated region
  $region1112: #{embedding_mean.1} parent=0 // pred_check
    _
  $region1113: #{embedding_mean.1} parent=0 // pred_check_branch
    %1499 = sbr.rel target = $region1115
  $region1114: #{embedding_mean.1} parent=0 // pred_region
    // Predicated region
    $region1127: #{embedding_mean.1} parent=1114 // pred_check
      _
    $region1128: #{embedding_mean.1} parent=1114 // pred_check_branch
      %1515 = sbr.rel (0) target = $region1130
    $region1129: #{embedding_mean.1} parent=1114 // pred_region
      %s1517 = ssub.s32 2, 1
      loop: start=0, step=1, limit=1
      $region1131: #{embedding_mean.1} parent=1129 // loop_pre_header
        _
      $region1132: #{embedding_mean.1} parent=1129 // loop_header
        %s1519 = sphi 0, %s1523
        %p1520 = scmp.ge.s32.totalorder %s1519, 1
        %s1524 = sphi %s1497, %s1497
        %s1525 = sphi %s212, %s212
      $region1133: #{embedding_mean.1} parent=1129 // loop_header_branch
        %1522 = sbr.rel (%p1520) target = $region1137
      $region1134: #{embedding_mean.1} parent=1129 // loop_body
        %v1526 = vld [vmem:[%s1524] sm:%s1517]
        %1527 = vst [vmem:[%s1525] sm:%s1517] %v1526
      $region1135: #{embedding_mean.1} parent=1129 // loop_footer
        %s1523 = sadd.s32 1, %s1519
      $region1136: #{embedding_mean.1} parent=1129 // loop_footer_branch
        %1518 = sbr.rel target = $region1132
      $region1137: #{embedding_mean.1} parent=1129 // loop_exit
        _
    $region1130: #{embedding_mean.1} parent=1114 // pred_fallthru
      _
  $region1115: #{embedding_mean.1} parent=0 // pred_fallthru
    _
  // Predicated region
  $region1116: #{embedding_mean.1} parent=0 // pred_check
    _
  $region1117: #{embedding_mean.1} parent=0 // pred_check_branch
    %1501 = sbr.rel (0) target = $region1119
  $region1118: #{embedding_mean.1} parent=0 // pred_region
    %s1503 = ssub.s32 2, 1
    loop: start=0, step=1, limit=1
    $region1120: #{embedding_mean.1} parent=1118 // loop_pre_header
      _
    $region1121: #{embedding_mean.1} parent=1118 // loop_header
      %s1505 = sphi 0, %s1509
      %p1506 = scmp.ge.s32.totalorder %s1505, 1
      %s1510 = sphi %s1497, %s1497
      %s1511 = sphi %s212, %s212
    $region1122: #{embedding_mean.1} parent=1118 // loop_header_branch
      %1508 = sbr.rel (%p1506) target = $region1126
    $region1123: #{embedding_mean.1} parent=1118 // loop_body
      %v1512 = vld [vmem:[%s1510] sm:%s1503]
      %1513 = vst [vmem:[%s1511] sm:%s1503] %v1512
    $region1124: #{embedding_mean.1} parent=1118 // loop_footer
      %s1509 = sadd.s32 1, %s1505
    $region1125: #{embedding_mean.1} parent=1118 // loop_footer_branch
      %1504 = sbr.rel target = $region1121
    $region1126: #{embedding_mean.1} parent=1118 // loop_exit
      _
  $region1119: #{embedding_mean.1} parent=0 // pred_fallthru
    _
  // Predicated region
  $region1138: #{embedding_mean.1} parent=0 // pred_check
    _
  $region1139: #{embedding_mean.1} parent=0 // pred_check_branch
    %1530 = sbr.rel (0) target = $region1141
  $region1140: #{embedding_mean.1} parent=0 // pred_region
    %1531 = vsyncadd %s213, 16
  $region1141: #{embedding_mean.1} parent=0 // pred_fallthru
    _
  %s1532 = sadd.s32 %s1310, 6
  %s1533 = sld [smem:[#allocation5 + %s1532]]
  %s1534 = scalar_lea.vmem %s1, %s1533
  // Predicated region
  $region1142: #{embedding_mean.1} parent=0 // pred_check
    _
  $region1143: #{embedding_mean.1} parent=0 // pred_check_branch
    %1536 = sbr.rel target = $region1145
  $region1144: #{embedding_mean.1} parent=0 // pred_region
    // Predicated region
    $region1157: #{embedding_mean.1} parent=1144 // pred_check
      _
    $region1158: #{embedding_mean.1} parent=1144 // pred_check_branch
      %1552 = sbr.rel (0) target = $region1160
    $region1159: #{embedding_mean.1} parent=1144 // pred_region
      %s1554 = ssub.s32 2, 1
      loop: start=0, step=1, limit=1
      $region1161: #{embedding_mean.1} parent=1159 // loop_pre_header
        _
      $region1162: #{embedding_mean.1} parent=1159 // loop_header
        %s1556 = sphi 0, %s1560
        %p1557 = scmp.ge.s32.totalorder %s1556, 1
        %s1561 = sphi %s1534, %s1534
        %s1562 = sphi %s251, %s251
      $region1163: #{embedding_mean.1} parent=1159 // loop_header_branch
        %1559 = sbr.rel (%p1557) target = $region1167
      $region1164: #{embedding_mean.1} parent=1159 // loop_body
        %v1563 = vld [vmem:[%s1561] sm:%s1554]
        %1564 = vst [vmem:[%s1562] sm:%s1554] %v1563
      $region1165: #{embedding_mean.1} parent=1159 // loop_footer
        %s1560 = sadd.s32 1, %s1556
      $region1166: #{embedding_mean.1} parent=1159 // loop_footer_branch
        %1555 = sbr.rel target = $region1162
      $region1167: #{embedding_mean.1} parent=1159 // loop_exit
        _
    $region1160: #{embedding_mean.1} parent=1144 // pred_fallthru
      _
  $region1145: #{embedding_mean.1} parent=0 // pred_fallthru
    _
  // Predicated region
  $region1146: #{embedding_mean.1} parent=0 // pred_check
    _
  $region1147: #{embedding_mean.1} parent=0 // pred_check_branch
    %1538 = sbr.rel (0) target = $region1149
  $region1148: #{embedding_mean.1} parent=0 // pred_region
    %s1540 = ssub.s32 2, 1
    loop: start=0, step=1, limit=1
    $region1150: #{embedding_mean.1} parent=1148 // loop_pre_header
      _
    $region1151: #{embedding_mean.1} parent=1148 // loop_header
      %s1542 = sphi 0, %s1546
      %p1543 = scmp.ge.s32.totalorder %s1542, 1
      %s1547 = sphi %s1534, %s1534
      %s1548 = sphi %s251, %s251
    $region1152: #{embedding_mean.1} parent=1148 // loop_header_branch
      %1545 = sbr.rel (%p1543) target = $region1156
    $region1153: #{embedding_mean.1} parent=1148 // loop_body
      %v1549 = vld [vmem:[%s1547] sm:%s1540]
      %1550 = vst [vmem:[%s1548] sm:%s1540] %v1549
    $region1154: #{embedding_mean.1} parent=1148 // loop_footer
      %s1546 = sadd.s32 1, %s1542
    $region1155: #{embedding_mean.1} parent=1148 // loop_footer_branch
      %1541 = sbr.rel target = $region1151
    $region1156: #{embedding_mean.1} parent=1148 // loop_exit
      _
  $region1149: #{embedding_mean.1} parent=0 // pred_fallthru
    _
  // Predicated region
  $region1168: #{embedding_mean.1} parent=0 // pred_check
    _
  $region1169: #{embedding_mean.1} parent=0 // pred_check_branch
    %1567 = sbr.rel (0) target = $region1171
  $region1170: #{embedding_mean.1} parent=0 // pred_region
    %1568 = vsyncadd %s252, 16
  $region1171: #{embedding_mean.1} parent=0 // pred_fallthru
    _
  %s1569 = sadd.s32 %s1310, 7
  %s1570 = sld [smem:[#allocation5 + %s1569]]
  %s1571 = scalar_lea.vmem %s1, %s1570
  // Predicated region
  $region1172: #{embedding_mean.1} parent=0 // pred_check
    _
  $region1173: #{embedding_mean.1} parent=0 // pred_check_branch
    %1573 = sbr.rel target = $region1175
  $region1174: #{embedding_mean.1} parent=0 // pred_region
    // Predicated region
    $region1187: #{embedding_mean.1} parent=1174 // pred_check
      _
    $region1188: #{embedding_mean.1} parent=1174 // pred_check_branch
      %1589 = sbr.rel (0) target = $region1190
    $region1189: #{embedding_mean.1} parent=1174 // pred_region
      %s1591 = ssub.s32 2, 1
      loop: start=0, step=1, limit=1
      $region1191: #{embedding_mean.1} parent=1189 // loop_pre_header
        _
      $region1192: #{embedding_mean.1} parent=1189 // loop_header
        %s1593 = sphi 0, %s1597
        %p1594 = scmp.ge.s32.totalorder %s1593, 1
        %s1598 = sphi %s1571, %s1571
        %s1599 = sphi %s290, %s290
      $region1193: #{embedding_mean.1} parent=1189 // loop_header_branch
        %1596 = sbr.rel (%p1594) target = $region1197
      $region1194: #{embedding_mean.1} parent=1189 // loop_body
        %v1600 = vld [vmem:[%s1598] sm:%s1591]
        %1601 = vst [vmem:[%s1599] sm:%s1591] %v1600
      $region1195: #{embedding_mean.1} parent=1189 // loop_footer
        %s1597 = sadd.s32 1, %s1593
      $region1196: #{embedding_mean.1} parent=1189 // loop_footer_branch
        %1592 = sbr.rel target = $region1192
      $region1197: #{embedding_mean.1} parent=1189 // loop_exit
        _
    $region1190: #{embedding_mean.1} parent=1174 // pred_fallthru
      _
  $region1175: #{embedding_mean.1} parent=0 // pred_fallthru
    _
  // Predicated region
  $region1176: #{embedding_mean.1} parent=0 // pred_check
    _
  $region1177: #{embedding_mean.1} parent=0 // pred_check_branch
    %1575 = sbr.rel (0) target = $region1179
  $region1178: #{embedding_mean.1} parent=0 // pred_region
    %s1577 = ssub.s32 2, 1
    loop: start=0, step=1, limit=1
    $region1180: #{embedding_mean.1} parent=1178 // loop_pre_header
      _
    $region1181: #{embedding_mean.1} parent=1178 // loop_header
      %s1579 = sphi 0, %s1583
      %p1580 = scmp.ge.s32.totalorder %s1579, 1
      %s1584 = sphi %s1571, %s1571
      %s1585 = sphi %s290, %s290
    $region1182: #{embedding_mean.1} parent=1178 // loop_header_branch
      %1582 = sbr.rel (%p1580) target = $region1186
    $region1183: #{embedding_mean.1} parent=1178 // loop_body
      %v1586 = vld [vmem:[%s1584] sm:%s1577]
      %1587 = vst [vmem:[%s1585] sm:%s1577] %v1586
    $region1184: #{embedding_mean.1} parent=1178 // loop_footer
      %s1583 = sadd.s32 1, %s1579
    $region1185: #{embedding_mean.1} parent=1178 // loop_footer_branch
      %1578 = sbr.rel target = $region1181
    $region1186: #{embedding_mean.1} parent=1178 // loop_exit
      _
  $region1179: #{embedding_mean.1} parent=0 // pred_fallthru
    _
  // Predicated region
  $region1198: #{embedding_mean.1} parent=0 // pred_check
    _
  $region1199: #{embedding_mean.1} parent=0 // pred_check_branch
    %1604 = sbr.rel (0) target = $region1201
  $region1200: #{embedding_mean.1} parent=0 // pred_region
    %1605 = vsyncadd %s291, 16
  $region1201: #{embedding_mean.1} parent=0 // pred_fallthru
    _
  %s1606 = sshll.u32 %s639, 4
  %1607 = dma.done %s331, %s1606
  %s1608 = sshll.u32 %s639, 4
  %1609 = dma.done %s370, %s1608
  %s1610 = sshll.u32 %s639, 4
  %1611 = dma.done %s409, %s1610
  %s1612 = sshll.u32 %s639, 4
  %1613 = dma.done %s448, %s1612
  %s1614 = sshll.u32 %s639, 4
  %1615 = dma.done %s487, %s1614
  %s1616 = sshll.u32 %s639, 4
  %1617 = dma.done %s526, %s1616
  %s1618 = sshll.u32 %s639, 4
  %1619 = dma.done %s565, %s1618
  %s1620 = sshll.u32 %s639, 4
  %1621 = dma.done %s604, %s1620
  %v1622 = vld [vmem:[%s330] sm:$0xff]
  %v1623 = vrot.slane %v1622, 4
  %v1624 = vadd.f32 %v1622, %v1623
  %v1625 = vrot.slane %v1624, 2
  %v1626 = vadd.f32 %v1624, %v1625
  %v1627 = vrot.slane %v1626, 1
  %v1628 = vadd.f32 %v1626, %v1627
  %v1629 = vmul.f32 %v1628, 0.125
  %1630 = vst [vmem:[%s2 + $0x3] sm:$0x1] %v1629
  %s1631 = sadd.s32 %s15, 5
  %s1632 = smul.u32 %s1631, 128
  %s1633 = sld [smem:[#allocation5 + %s1632]]
  %s1634 = scalar_lea.vmem %s1, %s1633
  // Predicated region
  $region1202: #{embedding_mean.1} parent=0 // pred_check
    _
  $region1203: #{embedding_mean.1} parent=0 // pred_check_branch
    %1636 = sbr.rel target = $region1205
  $region1204: #{embedding_mean.1} parent=0 // pred_region
    // Predicated region
    $region1217: #{embedding_mean.1} parent=1204 // pred_check
      _
    $region1218: #{embedding_mean.1} parent=1204 // pred_check_branch
      %1652 = sbr.rel (0) target = $region1220
    $region1219: #{embedding_mean.1} parent=1204 // pred_region
      %s1654 = ssub.s32 2, 1
      loop: start=0, step=1, limit=1
      $region1221: #{embedding_mean.1} parent=1219 // loop_pre_header
        _
      $region1222: #{embedding_mean.1} parent=1219 // loop_header
        %s1656 = sphi 0, %s1660
        %p1657 = scmp.ge.s32.totalorder %s1656, 1
        %s1661 = sphi %s1634, %s1634
        %s1662 = sphi %s330, %s330
      $region1223: #{embedding_mean.1} parent=1219 // loop_header_branch
        %1659 = sbr.rel (%p1657) target = $region1227
      $region1224: #{embedding_mean.1} parent=1219 // loop_body
        %v1663 = vld [vmem:[%s1661] sm:%s1654]
        %1664 = vst [vmem:[%s1662] sm:%s1654] %v1663
      $region1225: #{embedding_mean.1} parent=1219 // loop_footer
        %s1660 = sadd.s32 1, %s1656
      $region1226: #{embedding_mean.1} parent=1219 // loop_footer_branch
        %1655 = sbr.rel target = $region1222
      $region1227: #{embedding_mean.1} parent=1219 // loop_exit
        _
    $region1220: #{embedding_mean.1} parent=1204 // pred_fallthru
      _
  $region1205: #{embedding_mean.1} parent=0 // pred_fallthru
    _
  // Predicated region
  $region1206: #{embedding_mean.1} parent=0 // pred_check
    _
  $region1207: #{embedding_mean.1} parent=0 // pred_check_branch
    %1638 = sbr.rel (0) target = $region1209
  $region1208: #{embedding_mean.1} parent=0 // pred_region
    %s1640 = ssub.s32 2, 1
    loop: start=0, step=1, limit=1
    $region1210: #{embedding_mean.1} parent=1208 // loop_pre_header
      _
    $region1211: #{embedding_mean.1} parent=1208 // loop_header
      %s1642 = sphi 0, %s1646
      %p1643 = scmp.ge.s32.totalorder %s1642, 1
      %s1647 = sphi %s1634, %s1634
      %s1648 = sphi %s330, %s330
    $region1212: #{embedding_mean.1} parent=1208 // loop_header_branch
      %1645 = sbr.rel (%p1643) target = $region1216
    $region1213: #{embedding_mean.1} parent=1208 // loop_body
      %v1649 = vld [vmem:[%s1647] sm:%s1640]
      %1650 = vst [vmem:[%s1648] sm:%s1640] %v1649
    $region1214: #{embedding_mean.1} parent=1208 // loop_footer
      %s1646 = sadd.s32 1, %s1642
    $region1215: #{embedding_mean.1} parent=1208 // loop_footer_branch
      %1641 = sbr.rel target = $region1211
    $region1216: #{embedding_mean.1} parent=1208 // loop_exit
      _
  $region1209: #{embedding_mean.1} parent=0 // pred_fallthru
    _
  // Predicated region
  $region1228: #{embedding_mean.1} parent=0 // pred_check
    _
  $region1229: #{embedding_mean.1} parent=0 // pred_check_branch
    %1667 = sbr.rel (0) target = $region1231
  $region1230: #{embedding_mean.1} parent=0 // pred_region
    %1668 = vsyncadd %s331, 16
  $region1231: #{embedding_mean.1} parent=0 // pred_fallthru
    _
  %s1669 = sadd.s32 %s1632, 1
  %s1670 = sld [smem:[#allocation5 + %s1669]]
  %s1671 = scalar_lea.vmem %s1, %s1670
  // Predicated region
  $region1232: #{embedding_mean.1} parent=0 // pred_check
    _
  $region1233: #{embedding_mean.1} parent=0 // pred_check_branch
    %1673 = sbr.rel target = $region1235
  $region1234: #{embedding_mean.1} parent=0 // pred_region
    // Predicated region
    $region1247: #{embedding_mean.1} parent=1234 // pred_check
      _
    $region1248: #{embedding_mean.1} parent=1234 // pred_check_branch
      %1689 = sbr.rel (0) target = $region1250
    $region1249: #{embedding_mean.1} parent=1234 // pred_region
      %s1691 = ssub.s32 2, 1
      loop: start=0, step=1, limit=1
      $region1251: #{embedding_mean.1} parent=1249 // loop_pre_header
        _
      $region1252: #{embedding_mean.1} parent=1249 // loop_header
        %s1693 = sphi 0, %s1697
        %p1694 = scmp.ge.s32.totalorder %s1693, 1
        %s1698 = sphi %s1671, %s1671
        %s1699 = sphi %s369, %s369
      $region1253: #{embedding_mean.1} parent=1249 // loop_header_branch
        %1696 = sbr.rel (%p1694) target = $region1257
      $region1254: #{embedding_mean.1} parent=1249 // loop_body
        %v1700 = vld [vmem:[%s1698] sm:%s1691]
        %1701 = vst [vmem:[%s1699] sm:%s1691] %v1700
      $region1255: #{embedding_mean.1} parent=1249 // loop_footer
        %s1697 = sadd.s32 1, %s1693
      $region1256: #{embedding_mean.1} parent=1249 // loop_footer_branch
        %1692 = sbr.rel target = $region1252
      $region1257: #{embedding_mean.1} parent=1249 // loop_exit
        _
    $region1250: #{embedding_mean.1} parent=1234 // pred_fallthru
      _
  $region1235: #{embedding_mean.1} parent=0 // pred_fallthru
    _
  // Predicated region
  $region1236: #{embedding_mean.1} parent=0 // pred_check
    _
  $region1237: #{embedding_mean.1} parent=0 // pred_check_branch
    %1675 = sbr.rel (0) target = $region1239
  $region1238: #{embedding_mean.1} parent=0 // pred_region
    %s1677 = ssub.s32 2, 1
    loop: start=0, step=1, limit=1
    $region1240: #{embedding_mean.1} parent=1238 // loop_pre_header
      _
    $region1241: #{embedding_mean.1} parent=1238 // loop_header
      %s1679 = sphi 0, %s1683
      %p1680 = scmp.ge.s32.totalorder %s1679, 1
      %s1684 = sphi %s1671, %s1671
      %s1685 = sphi %s369, %s369
    $region1242: #{embedding_mean.1} parent=1238 // loop_header_branch
      %1682 = sbr.rel (%p1680) target = $region1246
    $region1243: #{embedding_mean.1} parent=1238 // loop_body
      %v1686 = vld [vmem:[%s1684] sm:%s1677]
      %1687 = vst [vmem:[%s1685] sm:%s1677] %v1686
    $region1244: #{embedding_mean.1} parent=1238 // loop_footer
      %s1683 = sadd.s32 1, %s1679
    $region1245: #{embedding_mean.1} parent=1238 // loop_footer_branch
      %1678 = sbr.rel target = $region1241
    $region1246: #{embedding_mean.1} parent=1238 // loop_exit
      _
  $region1239: #{embedding_mean.1} parent=0 // pred_fallthru
    _
  // Predicated region
  $region1258: #{embedding_mean.1} parent=0 // pred_check
    _
  $region1259: #{embedding_mean.1} parent=0 // pred_check_branch
    %1704 = sbr.rel (0) target = $region1261
  $region1260: #{embedding_mean.1} parent=0 // pred_region
    %1705 = vsyncadd %s370, 16
  $region1261: #{embedding_mean.1} parent=0 // pred_fallthru
    _
  %s1706 = sadd.s32 %s1632, 2
  %s1707 = sld [smem:[#allocation5 + %s1706]]
  %s1708 = scalar_lea.vmem %s1, %s1707
  // Predicated region
  $region1262: #{embedding_mean.1} parent=0 // pred_check
    _
  $region1263: #{embedding_mean.1} parent=0 // pred_check_branch
    %1710 = sbr.rel target = $region1265
  $region1264: #{embedding_mean.1} parent=0 // pred_region
    // Predicated region
    $region1277: #{embedding_mean.1} parent=1264 // pred_check
      _
    $region1278: #{embedding_mean.1} parent=1264 // pred_check_branch
      %1726 = sbr.rel (0) target = $region1280
    $region1279: #{embedding_mean.1} parent=1264 // pred_region
      %s1728 = ssub.s32 2, 1
      loop: start=0, step=1, limit=1
      $region1281: #{embedding_mean.1} parent=1279 // loop_pre_header
        _
      $region1282: #{embedding_mean.1} parent=1279 // loop_header
        %s1730 = sphi 0, %s1734
        %p1731 = scmp.ge.s32.totalorder %s1730, 1
        %s1735 = sphi %s1708, %s1708
        %s1736 = sphi %s408, %s408
      $region1283: #{embedding_mean.1} parent=1279 // loop_header_branch
        %1733 = sbr.rel (%p1731) target = $region1287
      $region1284: #{embedding_mean.1} parent=1279 // loop_body
        %v1737 = vld [vmem:[%s1735] sm:%s1728]
        %1738 = vst [vmem:[%s1736] sm:%s1728] %v1737
      $region1285: #{embedding_mean.1} parent=1279 // loop_footer
        %s1734 = sadd.s32 1, %s1730
      $region1286: #{embedding_mean.1} parent=1279 // loop_footer_branch
        %1729 = sbr.rel target = $region1282
      $region1287: #{embedding_mean.1} parent=1279 // loop_exit
        _
    $region1280: #{embedding_mean.1} parent=1264 // pred_fallthru
      _
  $region1265: #{embedding_mean.1} parent=0 // pred_fallthru
    _
  // Predicated region
  $region1266: #{embedding_mean.1} parent=0 // pred_check
    _
  $region1267: #{embedding_mean.1} parent=0 // pred_check_branch
    %1712 = sbr.rel (0) target = $region1269
  $region1268: #{embedding_mean.1} parent=0 // pred_region
    %s1714 = ssub.s32 2, 1
    loop: start=0, step=1, limit=1
    $region1270: #{embedding_mean.1} parent=1268 // loop_pre_header
      _
    $region1271: #{embedding_mean.1} parent=1268 // loop_header
      %s1716 = sphi 0, %s1720
      %p1717 = scmp.ge.s32.totalorder %s1716, 1
      %s1721 = sphi %s1708, %s1708
      %s1722 = sphi %s408, %s408
    $region1272: #{embedding_mean.1} parent=1268 // loop_header_branch
      %1719 = sbr.rel (%p1717) target = $region1276
    $region1273: #{embedding_mean.1} parent=1268 // loop_body
      %v1723 = vld [vmem:[%s1721] sm:%s1714]
      %1724 = vst [vmem:[%s1722] sm:%s1714] %v1723
    $region1274: #{embedding_mean.1} parent=1268 // loop_footer
      %s1720 = sadd.s32 1, %s1716
    $region1275: #{embedding_mean.1} parent=1268 // loop_footer_branch
      %1715 = sbr.rel target = $region1271
    $region1276: #{embedding_mean.1} parent=1268 // loop_exit
      _
  $region1269: #{embedding_mean.1} parent=0 // pred_fallthru
    _
  // Predicated region
  $region1288: #{embedding_mean.1} parent=0 // pred_check
    _
  $region1289: #{embedding_mean.1} parent=0 // pred_check_branch
    %1741 = sbr.rel (0) target = $region1291
  $region1290: #{embedding_mean.1} parent=0 // pred_region
    %1742 = vsyncadd %s409, 16
  $region1291: #{embedding_mean.1} parent=0 // pred_fallthru
    _
  %s1743 = sadd.s32 %s1632, 3
  %s1744 = sld [smem:[#allocation5 + %s1743]]
  %s1745 = scalar_lea.vmem %s1, %s1744
  // Predicated region
  $region1292: #{embedding_mean.1} parent=0 // pred_check
    _
  $region1293: #{embedding_mean.1} parent=0 // pred_check_branch
    %1747 = sbr.rel target = $region1295
  $region1294: #{embedding_mean.1} parent=0 // pred_region
    // Predicated region
    $region1307: #{embedding_mean.1} parent=1294 // pred_check
      _
    $region1308: #{embedding_mean.1} parent=1294 // pred_check_branch
      %1763 = sbr.rel (0) target = $region1310
    $region1309: #{embedding_mean.1} parent=1294 // pred_region
      %s1765 = ssub.s32 2, 1
      loop: start=0, step=1, limit=1
      $region1311: #{embedding_mean.1} parent=1309 // loop_pre_header
        _
      $region1312: #{embedding_mean.1} parent=1309 // loop_header
        %s1767 = sphi 0, %s1771
        %p1768 = scmp.ge.s32.totalorder %s1767, 1
        %s1772 = sphi %s1745, %s1745
        %s1773 = sphi %s447, %s447
      $region1313: #{embedding_mean.1} parent=1309 // loop_header_branch
        %1770 = sbr.rel (%p1768) target = $region1317
      $region1314: #{embedding_mean.1} parent=1309 // loop_body
        %v1774 = vld [vmem:[%s1772] sm:%s1765]
        %1775 = vst [vmem:[%s1773] sm:%s1765] %v1774
      $region1315: #{embedding_mean.1} parent=1309 // loop_footer
        %s1771 = sadd.s32 1, %s1767
      $region1316: #{embedding_mean.1} parent=1309 // loop_footer_branch
        %1766 = sbr.rel target = $region1312
      $region1317: #{embedding_mean.1} parent=1309 // loop_exit
        _
    $region1310: #{embedding_mean.1} parent=1294 // pred_fallthru
      _
  $region1295: #{embedding_mean.1} parent=0 // pred_fallthru
    _
  // Predicated region
  $region1296: #{embedding_mean.1} parent=0 // pred_check
    _
  $region1297: #{embedding_mean.1} parent=0 // pred_check_branch
    %1749 = sbr.rel (0) target = $region1299
  $region1298: #{embedding_mean.1} parent=0 // pred_region
    %s1751 = ssub.s32 2, 1
    loop: start=0, step=1, limit=1
    $region1300: #{embedding_mean.1} parent=1298 // loop_pre_header
      _
    $region1301: #{embedding_mean.1} parent=1298 // loop_header
      %s1753 = sphi 0, %s1757
      %p1754 = scmp.ge.s32.totalorder %s1753, 1
      %s1758 = sphi %s1745, %s1745
      %s1759 = sphi %s447, %s447
    $region1302: #{embedding_mean.1} parent=1298 // loop_header_branch
      %1756 = sbr.rel (%p1754) target = $region1306
    $region1303: #{embedding_mean.1} parent=1298 // loop_body
      %v1760 = vld [vmem:[%s1758] sm:%s1751]
      %1761 = vst [vmem:[%s1759] sm:%s1751] %v1760
    $region1304: #{embedding_mean.1} parent=1298 // loop_footer
      %s1757 = sadd.s32 1, %s1753
    $region1305: #{embedding_mean.1} parent=1298 // loop_footer_branch
      %1752 = sbr.rel target = $region1301
    $region1306: #{embedding_mean.1} parent=1298 // loop_exit
      _
  $region1299: #{embedding_mean.1} parent=0 // pred_fallthru
    _
  // Predicated region
  $region1318: #{embedding_mean.1} parent=0 // pred_check
    _
  $region1319: #{embedding_mean.1} parent=0 // pred_check_branch
    %1778 = sbr.rel (0) target = $region1321
  $region1320: #{embedding_mean.1} parent=0 // pred_region
    %1779 = vsyncadd %s448, 16
  $region1321: #{embedding_mean.1} parent=0 // pred_fallthru
    _
  %s1780 = sadd.s32 %s1632, 4
  %s1781 = sld [smem:[#allocation5 + %s1780]]
  %s1782 = scalar_lea.vmem %s1, %s1781
  // Predicated region
  $region1322: #{embedding_mean.1} parent=0 // pred_check
    _
  $region1323: #{embedding_mean.1} parent=0 // pred_check_branch
    %1784 = sbr.rel target = $region1325
  $region1324: #{embedding_mean.1} parent=0 // pred_region
    // Predicated region
    $region1337: #{embedding_mean.1} parent=1324 // pred_check
      _
    $region1338: #{embedding_mean.1} parent=1324 // pred_check_branch
      %1800 = sbr.rel (0) target = $region1340
    $region1339: #{embedding_mean.1} parent=1324 // pred_region
      %s1802 = ssub.s32 2, 1
      loop: start=0, step=1, limit=1
      $region1341: #{embedding_mean.1} parent=1339 // loop_pre_header
        _
      $region1342: #{embedding_mean.1} parent=1339 // loop_header
        %s1804 = sphi 0, %s1808
        %p1805 = scmp.ge.s32.totalorder %s1804, 1
        %s1809 = sphi %s1782, %s1782
        %s1810 = sphi %s486, %s486
      $region1343: #{embedding_mean.1} parent=1339 // loop_header_branch
        %1807 = sbr.rel (%p1805) target = $region1347
      $region1344: #{embedding_mean.1} parent=1339 // loop_body
        %v1811 = vld [vmem:[%s1809] sm:%s1802]
        %1812 = vst [vmem:[%s1810] sm:%s1802] %v1811
      $region1345: #{embedding_mean.1} parent=1339 // loop_footer
        %s1808 = sadd.s32 1, %s1804
      $region1346: #{embedding_mean.1} parent=1339 // loop_footer_branch
        %1803 = sbr.rel target = $region1342
      $region1347: #{embedding_mean.1} parent=1339 // loop_exit
        _
    $region1340: #{embedding_mean.1} parent=1324 // pred_fallthru
      _
  $region1325: #{embedding_mean.1} parent=0 // pred_fallthru
    _
  // Predicated region
  $region1326: #{embedding_mean.1} parent=0 // pred_check
    _
  $region1327: #{embedding_mean.1} parent=0 // pred_check_branch
    %1786 = sbr.rel (0) target = $region1329
  $region1328: #{embedding_mean.1} parent=0 // pred_region
    %s1788 = ssub.s32 2, 1
    loop: start=0, step=1, limit=1
    $region1330: #{embedding_mean.1} parent=1328 // loop_pre_header
      _
    $region1331: #{embedding_mean.1} parent=1328 // loop_header
      %s1790 = sphi 0, %s1794
      %p1791 = scmp.ge.s32.totalorder %s1790, 1
      %s1795 = sphi %s1782, %s1782
      %s1796 = sphi %s486, %s486
    $region1332: #{embedding_mean.1} parent=1328 // loop_header_branch
      %1793 = sbr.rel (%p1791) target = $region1336
    $region1333: #{embedding_mean.1} parent=1328 // loop_body
      %v1797 = vld [vmem:[%s1795] sm:%s1788]
      %1798 = vst [vmem:[%s1796] sm:%s1788] %v1797
    $region1334: #{embedding_mean.1} parent=1328 // loop_footer
      %s1794 = sadd.s32 1, %s1790
    $region1335: #{embedding_mean.1} parent=1328 // loop_footer_branch
      %1789 = sbr.rel target = $region1331
    $region1336: #{embedding_mean.1} parent=1328 // loop_exit
      _
  $region1329: #{embedding_mean.1} parent=0 // pred_fallthru
    _
  // Predicated region
  $region1348: #{embedding_mean.1} parent=0 // pred_check
    _
  $region1349: #{embedding_mean.1} parent=0 // pred_check_branch
    %1815 = sbr.rel (0) target = $region1351
  $region1350: #{embedding_mean.1} parent=0 // pred_region
    %1816 = vsyncadd %s487, 16
  $region1351: #{embedding_mean.1} parent=0 // pred_fallthru
    _
  %s1817 = sadd.s32 %s1632, 5
  %s1818 = sld [smem:[#allocation5 + %s1817]]
  %s1819 = scalar_lea.vmem %s1, %s1818
  // Predicated region
  $region1352: #{embedding_mean.1} parent=0 // pred_check
    _
  $region1353: #{embedding_mean.1} parent=0 // pred_check_branch
    %1821 = sbr.rel target = $region1355
  $region1354: #{embedding_mean.1} parent=0 // pred_region
    // Predicated region
    $region1367: #{embedding_mean.1} parent=1354 // pred_check
      _
    $region1368: #{embedding_mean.1} parent=1354 // pred_check_branch
      %1837 = sbr.rel (0) target = $region1370
    $region1369: #{embedding_mean.1} parent=1354 // pred_region
      %s1839 = ssub.s32 2, 1
      loop: start=0, step=1, limit=1
      $region1371: #{embedding_mean.1} parent=1369 // loop_pre_header
        _
      $region1372: #{embedding_mean.1} parent=1369 // loop_header
        %s1841 = sphi 0, %s1845
        %p1842 = scmp.ge.s32.totalorder %s1841, 1
        %s1846 = sphi %s1819, %s1819
        %s1847 = sphi %s525, %s525
      $region1373: #{embedding_mean.1} parent=1369 // loop_header_branch
        %1844 = sbr.rel (%p1842) target = $region1377
      $region1374: #{embedding_mean.1} parent=1369 // loop_body
        %v1848 = vld [vmem:[%s1846] sm:%s1839]
        %1849 = vst [vmem:[%s1847] sm:%s1839] %v1848
      $region1375: #{embedding_mean.1} parent=1369 // loop_footer
        %s1845 = sadd.s32 1, %s1841
      $region1376: #{embedding_mean.1} parent=1369 // loop_footer_branch
        %1840 = sbr.rel target = $region1372
      $region1377: #{embedding_mean.1} parent=1369 // loop_exit
        _
    $region1370: #{embedding_mean.1} parent=1354 // pred_fallthru
      _
  $region1355: #{embedding_mean.1} parent=0 // pred_fallthru
    _
  // Predicated region
  $region1356: #{embedding_mean.1} parent=0 // pred_check
    _
  $region1357: #{embedding_mean.1} parent=0 // pred_check_branch
    %1823 = sbr.rel (0) target = $region1359
  $region1358: #{embedding_mean.1} parent=0 // pred_region
    %s1825 = ssub.s32 2, 1
    loop: start=0, step=1, limit=1
    $region1360: #{embedding_mean.1} parent=1358 // loop_pre_header
      _
    $region1361: #{embedding_mean.1} parent=1358 // loop_header
      %s1827 = sphi 0, %s1831
      %p1828 = scmp.ge.s32.totalorder %s1827, 1
      %s1832 = sphi %s1819, %s1819
      %s1833 = sphi %s525, %s525
    $region1362: #{embedding_mean.1} parent=1358 // loop_header_branch
      %1830 = sbr.rel (%p1828) target = $region1366
    $region1363: #{embedding_mean.1} parent=1358 // loop_body
      %v1834 = vld [vmem:[%s1832] sm:%s1825]
      %1835 = vst [vmem:[%s1833] sm:%s1825] %v1834
    $region1364: #{embedding_mean.1} parent=1358 // loop_footer
      %s1831 = sadd.s32 1, %s1827
    $region1365: #{embedding_mean.1} parent=1358 // loop_footer_branch
      %1826 = sbr.rel target = $region1361
    $region1366: #{embedding_mean.1} parent=1358 // loop_exit
      _
  $region1359: #{embedding_mean.1} parent=0 // pred_fallthru
    _
  // Predicated region
  $region1378: #{embedding_mean.1} parent=0 // pred_check
    _
  $region1379: #{embedding_mean.1} parent=0 // pred_check_branch
    %1852 = sbr.rel (0) target = $region1381
  $region1380: #{embedding_mean.1} parent=0 // pred_region
    %1853 = vsyncadd %s526, 16
  $region1381: #{embedding_mean.1} parent=0 // pred_fallthru
    _
  %s1854 = sadd.s32 %s1632, 6
  %s1855 = sld [smem:[#allocation5 + %s1854]]
  %s1856 = scalar_lea.vmem %s1, %s1855
  // Predicated region
  $region1382: #{embedding_mean.1} parent=0 // pred_check
    _
  $region1383: #{embedding_mean.1} parent=0 // pred_check_branch
    %1858 = sbr.rel target = $region1385
  $region1384: #{embedding_mean.1} parent=0 // pred_region
    // Predicated region
    $region1397: #{embedding_mean.1} parent=1384 // pred_check
      _
    $region1398: #{embedding_mean.1} parent=1384 // pred_check_branch
      %1874 = sbr.rel (0) target = $region1400
    $region1399: #{embedding_mean.1} parent=1384 // pred_region
      %s1876 = ssub.s32 2, 1
      loop: start=0, step=1, limit=1
      $region1401: #{embedding_mean.1} parent=1399 // loop_pre_header
        _
      $region1402: #{embedding_mean.1} parent=1399 // loop_header
        %s1878 = sphi 0, %s1882
        %p1879 = scmp.ge.s32.totalorder %s1878, 1
        %s1883 = sphi %s1856, %s1856
        %s1884 = sphi %s564, %s564
      $region1403: #{embedding_mean.1} parent=1399 // loop_header_branch
        %1881 = sbr.rel (%p1879) target = $region1407
      $region1404: #{embedding_mean.1} parent=1399 // loop_body
        %v1885 = vld [vmem:[%s1883] sm:%s1876]
        %1886 = vst [vmem:[%s1884] sm:%s1876] %v1885
      $region1405: #{embedding_mean.1} parent=1399 // loop_footer
        %s1882 = sadd.s32 1, %s1878
      $region1406: #{embedding_mean.1} parent=1399 // loop_footer_branch
        %1877 = sbr.rel target = $region1402
      $region1407: #{embedding_mean.1} parent=1399 // loop_exit
        _
    $region1400: #{embedding_mean.1} parent=1384 // pred_fallthru
      _
  $region1385: #{embedding_mean.1} parent=0 // pred_fallthru
    _
  // Predicated region
  $region1386: #{embedding_mean.1} parent=0 // pred_check
    _
  $region1387: #{embedding_mean.1} parent=0 // pred_check_branch
    %1860 = sbr.rel (0) target = $region1389
  $region1388: #{embedding_mean.1} parent=0 // pred_region
    %s1862 = ssub.s32 2, 1
    loop: start=0, step=1, limit=1
    $region1390: #{embedding_mean.1} parent=1388 // loop_pre_header
      _
    $region1391: #{embedding_mean.1} parent=1388 // loop_header
      %s1864 = sphi 0, %s1868
      %p1865 = scmp.ge.s32.totalorder %s1864, 1
      %s1869 = sphi %s1856, %s1856
      %s1870 = sphi %s564, %s564
    $region1392: #{embedding_mean.1} parent=1388 // loop_header_branch
      %1867 = sbr.rel (%p1865) target = $region1396
    $region1393: #{embedding_mean.1} parent=1388 // loop_body
      %v1871 = vld [vmem:[%s1869] sm:%s1862]
      %1872 = vst [vmem:[%s1870] sm:%s1862] %v1871
    $region1394: #{embedding_mean.1} parent=1388 // loop_footer
      %s1868 = sadd.s32 1, %s1864
    $region1395: #{embedding_mean.1} parent=1388 // loop_footer_branch
      %1863 = sbr.rel target = $region1391
    $region1396: #{embedding_mean.1} parent=1388 // loop_exit
      _
  $region1389: #{embedding_mean.1} parent=0 // pred_fallthru
    _
  // Predicated region
  $region1408: #{embedding_mean.1} parent=0 // pred_check
    _
  $region1409: #{embedding_mean.1} parent=0 // pred_check_branch
    %1889 = sbr.rel (0) target = $region1411
  $region1410: #{embedding_mean.1} parent=0 // pred_region
    %1890 = vsyncadd %s565, 16
  $region1411: #{embedding_mean.1} parent=0 // pred_fallthru
    _
  %s1891 = sadd.s32 %s1632, 7
  %s1892 = sld [smem:[#allocation5 + %s1891]]
  %s1893 = scalar_lea.vmem %s1, %s1892
  // Predicated region
  $region1412: #{embedding_mean.1} parent=0 // pred_check
    _
  $region1413: #{embedding_mean.1} parent=0 // pred_check_branch
    %1895 = sbr.rel target = $region1415
  $region1414: #{embedding_mean.1} parent=0 // pred_region
    // Predicated region
    $region1427: #{embedding_mean.1} parent=1414 // pred_check
      _
    $region1428: #{embedding_mean.1} parent=1414 // pred_check_branch
      %1911 = sbr.rel (0) target = $region1430
    $region1429: #{embedding_mean.1} parent=1414 // pred_region
      %s1913 = ssub.s32 2, 1
      loop: start=0, step=1, limit=1
      $region1431: #{embedding_mean.1} parent=1429 // loop_pre_header
        _
      $region1432: #{embedding_mean.1} parent=1429 // loop_header
        %s1915 = sphi 0, %s1919
        %p1916 = scmp.ge.s32.totalorder %s1915, 1
        %s1920 = sphi %s1893, %s1893
        %s1921 = sphi %s603, %s603
      $region1433: #{embedding_mean.1} parent=1429 // loop_header_branch
        %1918 = sbr.rel (%p1916) target = $region1437
      $region1434: #{embedding_mean.1} parent=1429 // loop_body
        %v1922 = vld [vmem:[%s1920] sm:%s1913]
        %1923 = vst [vmem:[%s1921] sm:%s1913] %v1922
      $region1435: #{embedding_mean.1} parent=1429 // loop_footer
        %s1919 = sadd.s32 1, %s1915
      $region1436: #{embedding_mean.1} parent=1429 // loop_footer_branch
        %1914 = sbr.rel target = $region1432
      $region1437: #{embedding_mean.1} parent=1429 // loop_exit
        _
    $region1430: #{embedding_mean.1} parent=1414 // pred_fallthru
      _
  $region1415: #{embedding_mean.1} parent=0 // pred_fallthru
    _
  // Predicated region
  $region1416: #{embedding_mean.1} parent=0 // pred_check
    _
  $region1417: #{embedding_mean.1} parent=0 // pred_check_branch
    %1897 = sbr.rel (0) target = $region1419
  $region1418: #{embedding_mean.1} parent=0 // pred_region
    %s1899 = ssub.s32 2, 1
    loop: start=0, step=1, limit=1
    $region1420: #{embedding_mean.1} parent=1418 // loop_pre_header
      _
    $region1421: #{embedding_mean.1} parent=1418 // loop_header
      %s1901 = sphi 0, %s1905
      %p1902 = scmp.ge.s32.totalorder %s1901, 1
      %s1906 = sphi %s1893, %s1893
      %s1907 = sphi %s603, %s603
    $region1422: #{embedding_mean.1} parent=1418 // loop_header_branch
      %1904 = sbr.rel (%p1902) target = $region1426
    $region1423: #{embedding_mean.1} parent=1418 // loop_body
      %v1908 = vld [vmem:[%s1906] sm:%s1899]
      %1909 = vst [vmem:[%s1907] sm:%s1899] %v1908
    $region1424: #{embedding_mean.1} parent=1418 // loop_footer
      %s1905 = sadd.s32 1, %s1901
    $region1425: #{embedding_mean.1} parent=1418 // loop_footer_branch
      %1900 = sbr.rel target = $region1421
    $region1426: #{embedding_mean.1} parent=1418 // loop_exit
      _
  $region1419: #{embedding_mean.1} parent=0 // pred_fallthru
    _
  // Predicated region
  $region1438: #{embedding_mean.1} parent=0 // pred_check
    _
  $region1439: #{embedding_mean.1} parent=0 // pred_check_branch
    %1926 = sbr.rel (0) target = $region1441
  $region1440: #{embedding_mean.1} parent=0 // pred_region
    %1927 = vsyncadd %s604, 16
  $region1441: #{embedding_mean.1} parent=0 // pred_fallthru
    _
  %s1928 = sshll.u32 %s639, 4
  %1929 = dma.done [#allocation3], %s1928
  %s1930 = sshll.u32 %s639, 4
  %1931 = dma.done %s57, %s1930
  %s1932 = sshll.u32 %s639, 4
  %1933 = dma.done %s96, %s1932
  %s1934 = sshll.u32 %s639, 4
  %1935 = dma.done %s135, %s1934
  %s1936 = sshll.u32 %s639, 4
  %1937 = dma.done %s174, %s1936
  %s1938 = sshll.u32 %s639, 4
  %1939 = dma.done %s213, %s1938
  %s1940 = sshll.u32 %s639, 4
  %1941 = dma.done %s252, %s1940
  %s1942 = sshll.u32 %s639, 4
  %1943 = dma.done %s291, %s1942
  %v1944 = vld [vmem:[#allocation2] sm:$0xff]
  %v1945 = vrot.slane %v1944, 4
  %v1946 = vadd.f32 %v1944, %v1945
  %v1947 = vrot.slane %v1946, 2
  %v1948 = vadd.f32 %v1946, %v1947
  %v1949 = vrot.slane %v1948, 1
  %v1950 = vadd.f32 %v1948, %v1949
  %v1951 = vmul.f32 %v1950, 0.125
  %1952 = vst [vmem:[%s2 + $0x4] sm:$0x1] %v1951
  %s1953 = sadd.s32 %s15, 6
  %s1954 = smul.u32 %s1953, 128
  %s1955 = sld [smem:[#allocation5 + %s1954]]
  %s1956 = scalar_lea.vmem %s1, %s1955
  // Predicated region
  $region1442: #{embedding_mean.1} parent=0 // pred_check
    _
  $region1443: #{embedding_mean.1} parent=0 // pred_check_branch
    %1958 = sbr.rel target = $region1445
  $region1444: #{embedding_mean.1} parent=0 // pred_region
    // Predicated region
    $region1457: #{embedding_mean.1} parent=1444 // pred_check
      _
    $region1458: #{embedding_mean.1} parent=1444 // pred_check_branch
      %1974 = sbr.rel (0) target = $region1460
    $region1459: #{embedding_mean.1} parent=1444 // pred_region
      %s1976 = ssub.s32 2, 1
      loop: start=0, step=1, limit=1
      $region1461: #{embedding_mean.1} parent=1459 // loop_pre_header
        _
      $region1462: #{embedding_mean.1} parent=1459 // loop_header
        %s1978 = sphi 0, %s1982
        %p1979 = scmp.ge.s32.totalorder %s1978, 1
        %s1983 = sphi %s1956, %s1956
        %s1984 = sphi [#allocation2], [#allocation2]
      $region1463: #{embedding_mean.1} parent=1459 // loop_header_branch
        %1981 = sbr.rel (%p1979) target = $region1467
      $region1464: #{embedding_mean.1} parent=1459 // loop_body
        %v1985 = vld [vmem:[%s1983] sm:%s1976]
        %1986 = vst [vmem:[%s1984] sm:%s1976] %v1985
      $region1465: #{embedding_mean.1} parent=1459 // loop_footer
        %s1982 = sadd.s32 1, %s1978
      $region1466: #{embedding_mean.1} parent=1459 // loop_footer_branch
        %1977 = sbr.rel target = $region1462
      $region1467: #{embedding_mean.1} parent=1459 // loop_exit
        _
    $region1460: #{embedding_mean.1} parent=1444 // pred_fallthru
      _
  $region1445: #{embedding_mean.1} parent=0 // pred_fallthru
    _
  // Predicated region
  $region1446: #{embedding_mean.1} parent=0 // pred_check
    _
  $region1447: #{embedding_mean.1} parent=0 // pred_check_branch
    %1960 = sbr.rel (0) target = $region1449
  $region1448: #{embedding_mean.1} parent=0 // pred_region
    %s1962 = ssub.s32 2, 1
    loop: start=0, step=1, limit=1
    $region1450: #{embedding_mean.1} parent=1448 // loop_pre_header
      _
    $region1451: #{embedding_mean.1} parent=1448 // loop_header
      %s1964 = sphi 0, %s1968
      %p1965 = scmp.ge.s32.totalorder %s1964, 1
      %s1969 = sphi %s1956, %s1956
      %s1970 = sphi [#allocation2], [#allocation2]
    $region1452: #{embedding_mean.1} parent=1448 // loop_header_branch
      %1967 = sbr.rel (%p1965) target = $region1456
    $region1453: #{embedding_mean.1} parent=1448 // loop_body
      %v1971 = vld [vmem:[%s1969] sm:%s1962]
      %1972 = vst [vmem:[%s1970] sm:%s1962] %v1971
    $region1454: #{embedding_mean.1} parent=1448 // loop_footer
      %s1968 = sadd.s32 1, %s1964
    $region1455: #{embedding_mean.1} parent=1448 // loop_footer_branch
      %1963 = sbr.rel target = $region1451
    $region1456: #{embedding_mean.1} parent=1448 // loop_exit
      _
  $region1449: #{embedding_mean.1} parent=0 // pred_fallthru
    _
  // Predicated region
  $region1468: #{embedding_mean.1} parent=0 // pred_check
    _
  $region1469: #{embedding_mean.1} parent=0 // pred_check_branch
    %1989 = sbr.rel (0) target = $region1471
  $region1470: #{embedding_mean.1} parent=0 // pred_region
    %1990 = vsyncadd [#allocation3], 16
  $region1471: #{embedding_mean.1} parent=0 // pred_fallthru
    _
  %s1991 = sadd.s32 %s1954, 1
  %s1992 = sld [smem:[#allocation5 + %s1991]]
  %s1993 = scalar_lea.vmem %s1, %s1992
  // Predicated region
  $region1472: #{embedding_mean.1} parent=0 // pred_check
    _
  $region1473: #{embedding_mean.1} parent=0 // pred_check_branch
    %1995 = sbr.rel target = $region1475
  $region1474: #{embedding_mean.1} parent=0 // pred_region
    // Predicated region
    $region1487: #{embedding_mean.1} parent=1474 // pred_check
      _
    $region1488: #{embedding_mean.1} parent=1474 // pred_check_branch
      %2011 = sbr.rel (0) target = $region1490
    $region1489: #{embedding_mean.1} parent=1474 // pred_region
      %s2013 = ssub.s32 2, 1
      loop: start=0, step=1, limit=1
      $region1491: #{embedding_mean.1} parent=1489 // loop_pre_header
        _
      $region1492: #{embedding_mean.1} parent=1489 // loop_header
        %s2015 = sphi 0, %s2019
        %p2016 = scmp.ge.s32.totalorder %s2015, 1
        %s2020 = sphi %s1993, %s1993
        %s2021 = sphi %s56, %s56
      $region1493: #{embedding_mean.1} parent=1489 // loop_header_branch
        %2018 = sbr.rel (%p2016) target = $region1497
      $region1494: #{embedding_mean.1} parent=1489 // loop_body
        %v2022 = vld [vmem:[%s2020] sm:%s2013]
        %2023 = vst [vmem:[%s2021] sm:%s2013] %v2022
      $region1495: #{embedding_mean.1} parent=1489 // loop_footer
        %s2019 = sadd.s32 1, %s2015
      $region1496: #{embedding_mean.1} parent=1489 // loop_footer_branch
        %2014 = sbr.rel target = $region1492
      $region1497: #{embedding_mean.1} parent=1489 // loop_exit
        _
    $region1490: #{embedding_mean.1} parent=1474 // pred_fallthru
      _
  $region1475: #{embedding_mean.1} parent=0 // pred_fallthru
    _
  // Predicated region
  $region1476: #{embedding_mean.1} parent=0 // pred_check
    _
  $region1477: #{embedding_mean.1} parent=0 // pred_check_branch
    %1997 = sbr.rel (0) target = $region1479
  $region1478: #{embedding_mean.1} parent=0 // pred_region
    %s1999 = ssub.s32 2, 1
    loop: start=0, step=1, limit=1
    $region1480: #{embedding_mean.1} parent=1478 // loop_pre_header
      _
    $region1481: #{embedding_mean.1} parent=1478 // loop_header
      %s2001 = sphi 0, %s2005
      %p2002 = scmp.ge.s32.totalorder %s2001, 1
      %s2006 = sphi %s1993, %s1993
      %s2007 = sphi %s56, %s56
    $region1482: #{embedding_mean.1} parent=1478 // loop_header_branch
      %2004 = sbr.rel (%p2002) target = $region1486
    $region1483: #{embedding_mean.1} parent=1478 // loop_body
      %v2008 = vld [vmem:[%s2006] sm:%s1999]
      %2009 = vst [vmem:[%s2007] sm:%s1999] %v2008
    $region1484: #{embedding_mean.1} parent=1478 // loop_footer
      %s2005 = sadd.s32 1, %s2001
    $region1485: #{embedding_mean.1} parent=1478 // loop_footer_branch
      %2000 = sbr.rel target = $region1481
    $region1486: #{embedding_mean.1} parent=1478 // loop_exit
      _
  $region1479: #{embedding_mean.1} parent=0 // pred_fallthru
    _
  // Predicated region
  $region1498: #{embedding_mean.1} parent=0 // pred_check
    _
  $region1499: #{embedding_mean.1} parent=0 // pred_check_branch
    %2026 = sbr.rel (0) target = $region1501
  $region1500: #{embedding_mean.1} parent=0 // pred_region
    %2027 = vsyncadd %s57, 16
  $region1501: #{embedding_mean.1} parent=0 // pred_fallthru
    _
  %s2028 = sadd.s32 %s1954, 2
  %s2029 = sld [smem:[#allocation5 + %s2028]]
  %s2030 = scalar_lea.vmem %s1, %s2029
  // Predicated region
  $region1502: #{embedding_mean.1} parent=0 // pred_check
    _
  $region1503: #{embedding_mean.1} parent=0 // pred_check_branch
    %2032 = sbr.rel target = $region1505
  $region1504: #{embedding_mean.1} parent=0 // pred_region
    // Predicated region
    $region1517: #{embedding_mean.1} parent=1504 // pred_check
      _
    $region1518: #{embedding_mean.1} parent=1504 // pred_check_branch
      %2048 = sbr.rel (0) target = $region1520
    $region1519: #{embedding_mean.1} parent=1504 // pred_region
      %s2050 = ssub.s32 2, 1
      loop: start=0, step=1, limit=1
      $region1521: #{embedding_mean.1} parent=1519 // loop_pre_header
        _
      $region1522: #{embedding_mean.1} parent=1519 // loop_header
        %s2052 = sphi 0, %s2056
        %p2053 = scmp.ge.s32.totalorder %s2052, 1
        %s2057 = sphi %s2030, %s2030
        %s2058 = sphi %s95, %s95
      $region1523: #{embedding_mean.1} parent=1519 // loop_header_branch
        %2055 = sbr.rel (%p2053) target = $region1527
      $region1524: #{embedding_mean.1} parent=1519 // loop_body
        %v2059 = vld [vmem:[%s2057] sm:%s2050]
        %2060 = vst [vmem:[%s2058] sm:%s2050] %v2059
      $region1525: #{embedding_mean.1} parent=1519 // loop_footer
        %s2056 = sadd.s32 1, %s2052
      $region1526: #{embedding_mean.1} parent=1519 // loop_footer_branch
        %2051 = sbr.rel target = $region1522
      $region1527: #{embedding_mean.1} parent=1519 // loop_exit
        _
    $region1520: #{embedding_mean.1} parent=1504 // pred_fallthru
      _
  $region1505: #{embedding_mean.1} parent=0 // pred_fallthru
    _
  // Predicated region
  $region1506: #{embedding_mean.1} parent=0 // pred_check
    _
  $region1507: #{embedding_mean.1} parent=0 // pred_check_branch
    %2034 = sbr.rel (0) target = $region1509
  $region1508: #{embedding_mean.1} parent=0 // pred_region
    %s2036 = ssub.s32 2, 1
    loop: start=0, step=1, limit=1
    $region1510: #{embedding_mean.1} parent=1508 // loop_pre_header
      _
    $region1511: #{embedding_mean.1} parent=1508 // loop_header
      %s2038 = sphi 0, %s2042
      %p2039 = scmp.ge.s32.totalorder %s2038, 1
      %s2043 = sphi %s2030, %s2030
      %s2044 = sphi %s95, %s95
    $region1512: #{embedding_mean.1} parent=1508 // loop_header_branch
      %2041 = sbr.rel (%p2039) target = $region1516
    $region1513: #{embedding_mean.1} parent=1508 // loop_body
      %v2045 = vld [vmem:[%s2043] sm:%s2036]
      %2046 = vst [vmem:[%s2044] sm:%s2036] %v2045
    $region1514: #{embedding_mean.1} parent=1508 // loop_footer
      %s2042 = sadd.s32 1, %s2038
    $region1515: #{embedding_mean.1} parent=1508 // loop_footer_branch
      %2037 = sbr.rel target = $region1511
    $region1516: #{embedding_mean.1} parent=1508 // loop_exit
      _
  $region1509: #{embedding_mean.1} parent=0 // pred_fallthru
    _
  // Predicated region
  $region1528: #{embedding_mean.1} parent=0 // pred_check
    _
  $region1529: #{embedding_mean.1} parent=0 // pred_check_branch
    %2063 = sbr.rel (0) target = $region1531
  $region1530: #{embedding_mean.1} parent=0 // pred_region
    %2064 = vsyncadd %s96, 16
  $region1531: #{embedding_mean.1} parent=0 // pred_fallthru
    _
  %s2065 = sadd.s32 %s1954, 3
  %s2066 = sld [smem:[#allocation5 + %s2065]]
  %s2067 = scalar_lea.vmem %s1, %s2066
  // Predicated region
  $region1532: #{embedding_mean.1} parent=0 // pred_check
    _
  $region1533: #{embedding_mean.1} parent=0 // pred_check_branch
    %2069 = sbr.rel target = $region1535
  $region1534: #{embedding_mean.1} parent=0 // pred_region
    // Predicated region
    $region1547: #{embedding_mean.1} parent=1534 // pred_check
      _
    $region1548: #{embedding_mean.1} parent=1534 // pred_check_branch
      %2085 = sbr.rel (0) target = $region1550
    $region1549: #{embedding_mean.1} parent=1534 // pred_region
      %s2087 = ssub.s32 2, 1
      loop: start=0, step=1, limit=1
      $region1551: #{embedding_mean.1} parent=1549 // loop_pre_header
        _
      $region1552: #{embedding_mean.1} parent=1549 // loop_header
        %s2089 = sphi 0, %s2093
        %p2090 = scmp.ge.s32.totalorder %s2089, 1
        %s2094 = sphi %s2067, %s2067
        %s2095 = sphi %s134, %s134
      $region1553: #{embedding_mean.1} parent=1549 // loop_header_branch
        %2092 = sbr.rel (%p2090) target = $region1557
      $region1554: #{embedding_mean.1} parent=1549 // loop_body
        %v2096 = vld [vmem:[%s2094] sm:%s2087]
        %2097 = vst [vmem:[%s2095] sm:%s2087] %v2096
      $region1555: #{embedding_mean.1} parent=1549 // loop_footer
        %s2093 = sadd.s32 1, %s2089
      $region1556: #{embedding_mean.1} parent=1549 // loop_footer_branch
        %2088 = sbr.rel target = $region1552
      $region1557: #{embedding_mean.1} parent=1549 // loop_exit
        _
    $region1550: #{embedding_mean.1} parent=1534 // pred_fallthru
      _
  $region1535: #{embedding_mean.1} parent=0 // pred_fallthru
    _
  // Predicated region
  $region1536: #{embedding_mean.1} parent=0 // pred_check
    _
  $region1537: #{embedding_mean.1} parent=0 // pred_check_branch
    %2071 = sbr.rel (0) target = $region1539
  $region1538: #{embedding_mean.1} parent=0 // pred_region
    %s2073 = ssub.s32 2, 1
    loop: start=0, step=1, limit=1
    $region1540: #{embedding_mean.1} parent=1538 // loop_pre_header
      _
    $region1541: #{embedding_mean.1} parent=1538 // loop_header
      %s2075 = sphi 0, %s2079
      %p2076 = scmp.ge.s32.totalorder %s2075, 1
      %s2080 = sphi %s2067, %s2067
      %s2081 = sphi %s134, %s134
    $region1542: #{embedding_mean.1} parent=1538 // loop_header_branch
      %2078 = sbr.rel (%p2076) target = $region1546
    $region1543: #{embedding_mean.1} parent=1538 // loop_body
      %v2082 = vld [vmem:[%s2080] sm:%s2073]
      %2083 = vst [vmem:[%s2081] sm:%s2073] %v2082
    $region1544: #{embedding_mean.1} parent=1538 // loop_footer
      %s2079 = sadd.s32 1, %s2075
    $region1545: #{embedding_mean.1} parent=1538 // loop_footer_branch
      %2074 = sbr.rel target = $region1541
    $region1546: #{embedding_mean.1} parent=1538 // loop_exit
      _
  $region1539: #{embedding_mean.1} parent=0 // pred_fallthru
    _
  // Predicated region
  $region1558: #{embedding_mean.1} parent=0 // pred_check
    _
  $region1559: #{embedding_mean.1} parent=0 // pred_check_branch
    %2100 = sbr.rel (0) target = $region1561
  $region1560: #{embedding_mean.1} parent=0 // pred_region
    %2101 = vsyncadd %s135, 16
  $region1561: #{embedding_mean.1} parent=0 // pred_fallthru
    _
  %s2102 = sadd.s32 %s1954, 4
  %s2103 = sld [smem:[#allocation5 + %s2102]]
  %s2104 = scalar_lea.vmem %s1, %s2103
  // Predicated region
  $region1562: #{embedding_mean.1} parent=0 // pred_check
    _
  $region1563: #{embedding_mean.1} parent=0 // pred_check_branch
    %2106 = sbr.rel target = $region1565
  $region1564: #{embedding_mean.1} parent=0 // pred_region
    // Predicated region
    $region1577: #{embedding_mean.1} parent=1564 // pred_check
      _
    $region1578: #{embedding_mean.1} parent=1564 // pred_check_branch
      %2122 = sbr.rel (0) target = $region1580
    $region1579: #{embedding_mean.1} parent=1564 // pred_region
      %s2124 = ssub.s32 2, 1
      loop: start=0, step=1, limit=1
      $region1581: #{embedding_mean.1} parent=1579 // loop_pre_header
        _
      $region1582: #{embedding_mean.1} parent=1579 // loop_header
        %s2126 = sphi 0, %s2130
        %p2127 = scmp.ge.s32.totalorder %s2126, 1
        %s2131 = sphi %s2104, %s2104
        %s2132 = sphi %s173, %s173
      $region1583: #{embedding_mean.1} parent=1579 // loop_header_branch
        %2129 = sbr.rel (%p2127) target = $region1587
      $region1584: #{embedding_mean.1} parent=1579 // loop_body
        %v2133 = vld [vmem:[%s2131] sm:%s2124]
        %2134 = vst [vmem:[%s2132] sm:%s2124] %v2133
      $region1585: #{embedding_mean.1} parent=1579 // loop_footer
        %s2130 = sadd.s32 1, %s2126
      $region1586: #{embedding_mean.1} parent=1579 // loop_footer_branch
        %2125 = sbr.rel target = $region1582
      $region1587: #{embedding_mean.1} parent=1579 // loop_exit
        _
    $region1580: #{embedding_mean.1} parent=1564 // pred_fallthru
      _
  $region1565: #{embedding_mean.1} parent=0 // pred_fallthru
    _
  // Predicated region
  $region1566: #{embedding_mean.1} parent=0 // pred_check
    _
  $region1567: #{embedding_mean.1} parent=0 // pred_check_branch
    %2108 = sbr.rel (0) target = $region1569
  $region1568: #{embedding_mean.1} parent=0 // pred_region
    %s2110 = ssub.s32 2, 1
    loop: start=0, step=1, limit=1
    $region1570: #{embedding_mean.1} parent=1568 // loop_pre_header
      _
    $region1571: #{embedding_mean.1} parent=1568 // loop_header
      %s2112 = sphi 0, %s2116
      %p2113 = scmp.ge.s32.totalorder %s2112, 1
      %s2117 = sphi %s2104, %s2104
      %s2118 = sphi %s173, %s173
    $region1572: #{embedding_mean.1} parent=1568 // loop_header_branch
      %2115 = sbr.rel (%p2113) target = $region1576
    $region1573: #{embedding_mean.1} parent=1568 // loop_body
      %v2119 = vld [vmem:[%s2117] sm:%s2110]
      %2120 = vst [vmem:[%s2118] sm:%s2110] %v2119
    $region1574: #{embedding_mean.1} parent=1568 // loop_footer
      %s2116 = sadd.s32 1, %s2112
    $region1575: #{embedding_mean.1} parent=1568 // loop_footer_branch
      %2111 = sbr.rel target = $region1571
    $region1576: #{embedding_mean.1} parent=1568 // loop_exit
      _
  $region1569: #{embedding_mean.1} parent=0 // pred_fallthru
    _
  // Predicated region
  $region1588: #{embedding_mean.1} parent=0 // pred_check
    _
  $region1589: #{embedding_mean.1} parent=0 // pred_check_branch
    %2137 = sbr.rel (0) target = $region1591
  $region1590: #{embedding_mean.1} parent=0 // pred_region
    %2138 = vsyncadd %s174, 16
  $region1591: #{embedding_mean.1} parent=0 // pred_fallthru
    _
  %s2139 = sadd.s32 %s1954, 5
  %s2140 = sld [smem:[#allocation5 + %s2139]]
  %s2141 = scalar_lea.vmem %s1, %s2140
  // Predicated region
  $region1592: #{embedding_mean.1} parent=0 // pred_check
    _
  $region1593: #{embedding_mean.1} parent=0 // pred_check_branch
    %2143 = sbr.rel target = $region1595
  $region1594: #{embedding_mean.1} parent=0 // pred_region
    // Predicated region
    $region1607: #{embedding_mean.1} parent=1594 // pred_check
      _
    $region1608: #{embedding_mean.1} parent=1594 // pred_check_branch
      %2159 = sbr.rel (0) target = $region1610
    $region1609: #{embedding_mean.1} parent=1594 // pred_region
      %s2161 = ssub.s32 2, 1
      loop: start=0, step=1, limit=1
      $region1611: #{embedding_mean.1} parent=1609 // loop_pre_header
        _
      $region1612: #{embedding_mean.1} parent=1609 // loop_header
        %s2163 = sphi 0, %s2167
        %p2164 = scmp.ge.s32.totalorder %s2163, 1
        %s2168 = sphi %s2141, %s2141
        %s2169 = sphi %s212, %s212
      $region1613: #{embedding_mean.1} parent=1609 // loop_header_branch
        %2166 = sbr.rel (%p2164) target = $region1617
      $region1614: #{embedding_mean.1} parent=1609 // loop_body
        %v2170 = vld [vmem:[%s2168] sm:%s2161]
        %2171 = vst [vmem:[%s2169] sm:%s2161] %v2170
      $region1615: #{embedding_mean.1} parent=1609 // loop_footer
        %s2167 = sadd.s32 1, %s2163
      $region1616: #{embedding_mean.1} parent=1609 // loop_footer_branch
        %2162 = sbr.rel target = $region1612
      $region1617: #{embedding_mean.1} parent=1609 // loop_exit
        _
    $region1610: #{embedding_mean.1} parent=1594 // pred_fallthru
      _
  $region1595: #{embedding_mean.1} parent=0 // pred_fallthru
    _
  // Predicated region
  $region1596: #{embedding_mean.1} parent=0 // pred_check
    _
  $region1597: #{embedding_mean.1} parent=0 // pred_check_branch
    %2145 = sbr.rel (0) target = $region1599
  $region1598: #{embedding_mean.1} parent=0 // pred_region
    %s2147 = ssub.s32 2, 1
    loop: start=0, step=1, limit=1
    $region1600: #{embedding_mean.1} parent=1598 // loop_pre_header
      _
    $region1601: #{embedding_mean.1} parent=1598 // loop_header
      %s2149 = sphi 0, %s2153
      %p2150 = scmp.ge.s32.totalorder %s2149, 1
      %s2154 = sphi %s2141, %s2141
      %s2155 = sphi %s212, %s212
    $region1602: #{embedding_mean.1} parent=1598 // loop_header_branch
      %2152 = sbr.rel (%p2150) target = $region1606
    $region1603: #{embedding_mean.1} parent=1598 // loop_body
      %v2156 = vld [vmem:[%s2154] sm:%s2147]
      %2157 = vst [vmem:[%s2155] sm:%s2147] %v2156
    $region1604: #{embedding_mean.1} parent=1598 // loop_footer
      %s2153 = sadd.s32 1, %s2149
    $region1605: #{embedding_mean.1} parent=1598 // loop_footer_branch
      %2148 = sbr.rel target = $region1601
    $region1606: #{embedding_mean.1} parent=1598 // loop_exit
      _
  $region1599: #{embedding_mean.1} parent=0 // pred_fallthru
    _
  // Predicated region
  $region1618: #{embedding_mean.1} parent=0 // pred_check
    _
  $region1619: #{embedding_mean.1} parent=0 // pred_check_branch
    %2174 = sbr.rel (0) target = $region1621
  $region1620: #{embedding_mean.1} parent=0 // pred_region
    %2175 = vsyncadd %s213, 16
  $region1621: #{embedding_mean.1} parent=0 // pred_fallthru
    _
  %s2176 = sadd.s32 %s1954, 6
  %s2177 = sld [smem:[#allocation5 + %s2176]]
  %s2178 = scalar_lea.vmem %s1, %s2177
  // Predicated region
  $region1622: #{embedding_mean.1} parent=0 // pred_check
    _
  $region1623: #{embedding_mean.1} parent=0 // pred_check_branch
    %2180 = sbr.rel target = $region1625
  $region1624: #{embedding_mean.1} parent=0 // pred_region
    // Predicated region
    $region1637: #{embedding_mean.1} parent=1624 // pred_check
      _
    $region1638: #{embedding_mean.1} parent=1624 // pred_check_branch
      %2196 = sbr.rel (0) target = $region1640
    $region1639: #{embedding_mean.1} parent=1624 // pred_region
      %s2198 = ssub.s32 2, 1
      loop: start=0, step=1, limit=1
      $region1641: #{embedding_mean.1} parent=1639 // loop_pre_header
        _
      $region1642: #{embedding_mean.1} parent=1639 // loop_header
        %s2200 = sphi 0, %s2204
        %p2201 = scmp.ge.s32.totalorder %s2200, 1
        %s2205 = sphi %s2178, %s2178
        %s2206 = sphi %s251, %s251
      $region1643: #{embedding_mean.1} parent=1639 // loop_header_branch
        %2203 = sbr.rel (%p2201) target = $region1647
      $region1644: #{embedding_mean.1} parent=1639 // loop_body
        %v2207 = vld [vmem:[%s2205] sm:%s2198]
        %2208 = vst [vmem:[%s2206] sm:%s2198] %v2207
      $region1645: #{embedding_mean.1} parent=1639 // loop_footer
        %s2204 = sadd.s32 1, %s2200
      $region1646: #{embedding_mean.1} parent=1639 // loop_footer_branch
        %2199 = sbr.rel target = $region1642
      $region1647: #{embedding_mean.1} parent=1639 // loop_exit
        _
    $region1640: #{embedding_mean.1} parent=1624 // pred_fallthru
      _
  $region1625: #{embedding_mean.1} parent=0 // pred_fallthru
    _
  // Predicated region
  $region1626: #{embedding_mean.1} parent=0 // pred_check
    _
  $region1627: #{embedding_mean.1} parent=0 // pred_check_branch
    %2182 = sbr.rel (0) target = $region1629
  $region1628: #{embedding_mean.1} parent=0 // pred_region
    %s2184 = ssub.s32 2, 1
    loop: start=0, step=1, limit=1
    $region1630: #{embedding_mean.1} parent=1628 // loop_pre_header
      _
    $region1631: #{embedding_mean.1} parent=1628 // loop_header
      %s2186 = sphi 0, %s2190
      %p2187 = scmp.ge.s32.totalorder %s2186, 1
      %s2191 = sphi %s2178, %s2178
      %s2192 = sphi %s251, %s251
    $region1632: #{embedding_mean.1} parent=1628 // loop_header_branch
      %2189 = sbr.rel (%p2187) target = $region1636
    $region1633: #{embedding_mean.1} parent=1628 // loop_body
      %v2193 = vld [vmem:[%s2191] sm:%s2184]
      %2194 = vst [vmem:[%s2192] sm:%s2184] %v2193
    $region1634: #{embedding_mean.1} parent=1628 // loop_footer
      %s2190 = sadd.s32 1, %s2186
    $region1635: #{embedding_mean.1} parent=1628 // loop_footer_branch
      %2185 = sbr.rel target = $region1631
    $region1636: #{embedding_mean.1} parent=1628 // loop_exit
      _
  $region1629: #{embedding_mean.1} parent=0 // pred_fallthru
    _
  // Predicated region
  $region1648: #{embedding_mean.1} parent=0 // pred_check
    _
  $region1649: #{embedding_mean.1} parent=0 // pred_check_branch
    %2211 = sbr.rel (0) target = $region1651
  $region1650: #{embedding_mean.1} parent=0 // pred_region
    %2212 = vsyncadd %s252, 16
  $region1651: #{embedding_mean.1} parent=0 // pred_fallthru
    _
  %s2213 = sadd.s32 %s1954, 7
  %s2214 = sld [smem:[#allocation5 + %s2213]]
  %s2215 = scalar_lea.vmem %s1, %s2214
  // Predicated region
  $region1652: #{embedding_mean.1} parent=0 // pred_check
    _
  $region1653: #{embedding_mean.1} parent=0 // pred_check_branch
    %2217 = sbr.rel target = $region1655
  $region1654: #{embedding_mean.1} parent=0 // pred_region
    // Predicated region
    $region1667: #{embedding_mean.1} parent=1654 // pred_check
      _
    $region1668: #{embedding_mean.1} parent=1654 // pred_check_branch
      %2233 = sbr.rel (0) target = $region1670
    $region1669: #{embedding_mean.1} parent=1654 // pred_region
      %s2235 = ssub.s32 2, 1
      loop: start=0, step=1, limit=1
      $region1671: #{embedding_mean.1} parent=1669 // loop_pre_header
        _
      $region1672: #{embedding_mean.1} parent=1669 // loop_header
        %s2237 = sphi 0, %s2241
        %p2238 = scmp.ge.s32.totalorder %s2237, 1
        %s2242 = sphi %s2215, %s2215
        %s2243 = sphi %s290, %s290
      $region1673: #{embedding_mean.1} parent=1669 // loop_header_branch
        %2240 = sbr.rel (%p2238) target = $region1677
      $region1674: #{embedding_mean.1} parent=1669 // loop_body
        %v2244 = vld [vmem:[%s2242] sm:%s2235]
        %2245 = vst [vmem:[%s2243] sm:%s2235] %v2244
      $region1675: #{embedding_mean.1} parent=1669 // loop_footer
        %s2241 = sadd.s32 1, %s2237
      $region1676: #{embedding_mean.1} parent=1669 // loop_footer_branch
        %2236 = sbr.rel target = $region1672
      $region1677: #{embedding_mean.1} parent=1669 // loop_exit
        _
    $region1670: #{embedding_mean.1} parent=1654 // pred_fallthru
      _
  $region1655: #{embedding_mean.1} parent=0 // pred_fallthru
    _
  // Predicated region
  $region1656: #{embedding_mean.1} parent=0 // pred_check
    _
  $region1657: #{embedding_mean.1} parent=0 // pred_check_branch
    %2219 = sbr.rel (0) target = $region1659
  $region1658: #{embedding_mean.1} parent=0 // pred_region
    %s2221 = ssub.s32 2, 1
    loop: start=0, step=1, limit=1
    $region1660: #{embedding_mean.1} parent=1658 // loop_pre_header
      _
    $region1661: #{embedding_mean.1} parent=1658 // loop_header
      %s2223 = sphi 0, %s2227
      %p2224 = scmp.ge.s32.totalorder %s2223, 1
      %s2228 = sphi %s2215, %s2215
      %s2229 = sphi %s290, %s290
    $region1662: #{embedding_mean.1} parent=1658 // loop_header_branch
      %2226 = sbr.rel (%p2224) target = $region1666
    $region1663: #{embedding_mean.1} parent=1658 // loop_body
      %v2230 = vld [vmem:[%s2228] sm:%s2221]
      %2231 = vst [vmem:[%s2229] sm:%s2221] %v2230
    $region1664: #{embedding_mean.1} parent=1658 // loop_footer
      %s2227 = sadd.s32 1, %s2223
    $region1665: #{embedding_mean.1} parent=1658 // loop_footer_branch
      %2222 = sbr.rel target = $region1661
    $region1666: #{embedding_mean.1} parent=1658 // loop_exit
      _
  $region1659: #{embedding_mean.1} parent=0 // pred_fallthru
    _
  // Predicated region
  $region1678: #{embedding_mean.1} parent=0 // pred_check
    _
  $region1679: #{embedding_mean.1} parent=0 // pred_check_branch
    %2248 = sbr.rel (0) target = $region1681
  $region1680: #{embedding_mean.1} parent=0 // pred_region
    %2249 = vsyncadd %s291, 16
  $region1681: #{embedding_mean.1} parent=0 // pred_fallthru
    _
  %s2250 = sshll.u32 %s639, 4
  %2251 = dma.done %s331, %s2250
  %s2252 = sshll.u32 %s639, 4
  %2253 = dma.done %s370, %s2252
  %s2254 = sshll.u32 %s639, 4
  %2255 = dma.done %s409, %s2254
  %s2256 = sshll.u32 %s639, 4
  %2257 = dma.done %s448, %s2256
  %s2258 = sshll.u32 %s639, 4
  %2259 = dma.done %s487, %s2258
  %s2260 = sshll.u32 %s639, 4
  %2261 = dma.done %s526, %s2260
  %s2262 = sshll.u32 %s639, 4
  %2263 = dma.done %s565, %s2262
  %s2264 = sshll.u32 %s639, 4
  %2265 = dma.done %s604, %s2264
  %v2266 = vld [vmem:[%s330] sm:$0xff]
  %v2267 = vrot.slane %v2266, 4
  %v2268 = vadd.f32 %v2266, %v2267
  %v2269 = vrot.slane %v2268, 2
  %v2270 = vadd.f32 %v2268, %v2269
  %v2271 = vrot.slane %v2270, 1
  %v2272 = vadd.f32 %v2270, %v2271
  %v2273 = vmul.f32 %v2272, 0.125
  %2274 = vst [vmem:[%s2 + $0x5] sm:$0x1] %v2273
  %s2275 = sadd.s32 %s15, 7
  %s2276 = smul.u32 %s2275, 128
  %s2277 = sld [smem:[#allocation5 + %s2276]]
  %s2278 = scalar_lea.vmem %s1, %s2277
  // Predicated region
  $region1682: #{embedding_mean.1} parent=0 // pred_check
    _
  $region1683: #{embedding_mean.1} parent=0 // pred_check_branch
    %2280 = sbr.rel target = $region1685
  $region1684: #{embedding_mean.1} parent=0 // pred_region
    // Predicated region
    $region1697: #{embedding_mean.1} parent=1684 // pred_check
      _
    $region1698: #{embedding_mean.1} parent=1684 // pred_check_branch
      %2296 = sbr.rel (0) target = $region1700
    $region1699: #{embedding_mean.1} parent=1684 // pred_region
      %s2298 = ssub.s32 2, 1
      loop: start=0, step=1, limit=1
      $region1701: #{embedding_mean.1} parent=1699 // loop_pre_header
        _
      $region1702: #{embedding_mean.1} parent=1699 // loop_header
        %s2300 = sphi 0, %s2304
        %p2301 = scmp.ge.s32.totalorder %s2300, 1
        %s2305 = sphi %s2278, %s2278
        %s2306 = sphi %s330, %s330
      $region1703: #{embedding_mean.1} parent=1699 // loop_header_branch
        %2303 = sbr.rel (%p2301) target = $region1707
      $region1704: #{embedding_mean.1} parent=1699 // loop_body
        %v2307 = vld [vmem:[%s2305] sm:%s2298]
        %2308 = vst [vmem:[%s2306] sm:%s2298] %v2307
      $region1705: #{embedding_mean.1} parent=1699 // loop_footer
        %s2304 = sadd.s32 1, %s2300
      $region1706: #{embedding_mean.1} parent=1699 // loop_footer_branch
        %2299 = sbr.rel target = $region1702
      $region1707: #{embedding_mean.1} parent=1699 // loop_exit
        _
    $region1700: #{embedding_mean.1} parent=1684 // pred_fallthru
      _
  $region1685: #{embedding_mean.1} parent=0 // pred_fallthru
    _
  // Predicated region
  $region1686: #{embedding_mean.1} parent=0 // pred_check
    _
  $region1687: #{embedding_mean.1} parent=0 // pred_check_branch
    %2282 = sbr.rel (0) target = $region1689
  $region1688: #{embedding_mean.1} parent=0 // pred_region
    %s2284 = ssub.s32 2, 1
    loop: start=0, step=1, limit=1
    $region1690: #{embedding_mean.1} parent=1688 // loop_pre_header
      _
    $region1691: #{embedding_mean.1} parent=1688 // loop_header
      %s2286 = sphi 0, %s2290
      %p2287 = scmp.ge.s32.totalorder %s2286, 1
      %s2291 = sphi %s2278, %s2278
      %s2292 = sphi %s330, %s330
    $region1692: #{embedding_mean.1} parent=1688 // loop_header_branch
      %2289 = sbr.rel (%p2287) target = $region1696
    $region1693: #{embedding_mean.1} parent=1688 // loop_body
      %v2293 = vld [vmem:[%s2291] sm:%s2284]
      %2294 = vst [vmem:[%s2292] sm:%s2284] %v2293
    $region1694: #{embedding_mean.1} parent=1688 // loop_footer
      %s2290 = sadd.s32 1, %s2286
    $region1695: #{embedding_mean.1} parent=1688 // loop_footer_branch
      %2285 = sbr.rel target = $region1691
    $region1696: #{embedding_mean.1} parent=1688 // loop_exit
      _
  $region1689: #{embedding_mean.1} parent=0 // pred_fallthru
    _
  // Predicated region
  $region1708: #{embedding_mean.1} parent=0 // pred_check
    _
  $region1709: #{embedding_mean.1} parent=0 // pred_check_branch
    %2311 = sbr.rel (0) target = $region1711
  $region1710: #{embedding_mean.1} parent=0 // pred_region
    %2312 = vsyncadd %s331, 16
  $region1711: #{embedding_mean.1} parent=0 // pred_fallthru
    _
  %s2313 = sadd.s32 %s2276, 1
  %s2314 = sld [smem:[#allocation5 + %s2313]]
  %s2315 = scalar_lea.vmem %s1, %s2314
  // Predicated region
  $region1712: #{embedding_mean.1} parent=0 // pred_check
    _
  $region1713: #{embedding_mean.1} parent=0 // pred_check_branch
    %2317 = sbr.rel target = $region1715
  $region1714: #{embedding_mean.1} parent=0 // pred_region
    // Predicated region
    $region1727: #{embedding_mean.1} parent=1714 // pred_check
      _
    $region1728: #{embedding_mean.1} parent=1714 // pred_check_branch
      %2333 = sbr.rel (0) target = $region1730
    $region1729: #{embedding_mean.1} parent=1714 // pred_region
      %s2335 = ssub.s32 2, 1
      loop: start=0, step=1, limit=1
      $region1731: #{embedding_mean.1} parent=1729 // loop_pre_header
        _
      $region1732: #{embedding_mean.1} parent=1729 // loop_header
        %s2337 = sphi 0, %s2341
        %p2338 = scmp.ge.s32.totalorder %s2337, 1
        %s2342 = sphi %s2315, %s2315
        %s2343 = sphi %s369, %s369
      $region1733: #{embedding_mean.1} parent=1729 // loop_header_branch
        %2340 = sbr.rel (%p2338) target = $region1737
      $region1734: #{embedding_mean.1} parent=1729 // loop_body
        %v2344 = vld [vmem:[%s2342] sm:%s2335]
        %2345 = vst [vmem:[%s2343] sm:%s2335] %v2344
      $region1735: #{embedding_mean.1} parent=1729 // loop_footer
        %s2341 = sadd.s32 1, %s2337
      $region1736: #{embedding_mean.1} parent=1729 // loop_footer_branch
        %2336 = sbr.rel target = $region1732
      $region1737: #{embedding_mean.1} parent=1729 // loop_exit
        _
    $region1730: #{embedding_mean.1} parent=1714 // pred_fallthru
      _
  $region1715: #{embedding_mean.1} parent=0 // pred_fallthru
    _
  // Predicated region
  $region1716: #{embedding_mean.1} parent=0 // pred_check
    _
  $region1717: #{embedding_mean.1} parent=0 // pred_check_branch
    %2319 = sbr.rel (0) target = $region1719
  $region1718: #{embedding_mean.1} parent=0 // pred_region
    %s2321 = ssub.s32 2, 1
    loop: start=0, step=1, limit=1
    $region1720: #{embedding_mean.1} parent=1718 // loop_pre_header
      _
    $region1721: #{embedding_mean.1} parent=1718 // loop_header
      %s2323 = sphi 0, %s2327
      %p2324 = scmp.ge.s32.totalorder %s2323, 1
      %s2328 = sphi %s2315, %s2315
      %s2329 = sphi %s369, %s369
    $region1722: #{embedding_mean.1} parent=1718 // loop_header_branch
      %2326 = sbr.rel (%p2324) target = $region1726
    $region1723: #{embedding_mean.1} parent=1718 // loop_body
      %v2330 = vld [vmem:[%s2328] sm:%s2321]
      %2331 = vst [vmem:[%s2329] sm:%s2321] %v2330
    $region1724: #{embedding_mean.1} parent=1718 // loop_footer
      %s2327 = sadd.s32 1, %s2323
    $region1725: #{embedding_mean.1} parent=1718 // loop_footer_branch
      %2322 = sbr.rel target = $region1721
    $region1726: #{embedding_mean.1} parent=1718 // loop_exit
      _
  $region1719: #{embedding_mean.1} parent=0 // pred_fallthru
    _
  // Predicated region
  $region1738: #{embedding_mean.1} parent=0 // pred_check
    _
  $region1739: #{embedding_mean.1} parent=0 // pred_check_branch
    %2348 = sbr.rel (0) target = $region1741
  $region1740: #{embedding_mean.1} parent=0 // pred_region
    %2349 = vsyncadd %s370, 16
  $region1741: #{embedding_mean.1} parent=0 // pred_fallthru
    _
  %s2350 = sadd.s32 %s2276, 2
  %s2351 = sld [smem:[#allocation5 + %s2350]]
  %s2352 = scalar_lea.vmem %s1, %s2351
  // Predicated region
  $region1742: #{embedding_mean.1} parent=0 // pred_check
    _
  $region1743: #{embedding_mean.1} parent=0 // pred_check_branch
    %2354 = sbr.rel target = $region1745
  $region1744: #{embedding_mean.1} parent=0 // pred_region
    // Predicated region
    $region1757: #{embedding_mean.1} parent=1744 // pred_check
      _
    $region1758: #{embedding_mean.1} parent=1744 // pred_check_branch
      %2370 = sbr.rel (0) target = $region1760
    $region1759: #{embedding_mean.1} parent=1744 // pred_region
      %s2372 = ssub.s32 2, 1
      loop: start=0, step=1, limit=1
      $region1761: #{embedding_mean.1} parent=1759 // loop_pre_header
        _
      $region1762: #{embedding_mean.1} parent=1759 // loop_header
        %s2374 = sphi 0, %s2378
        %p2375 = scmp.ge.s32.totalorder %s2374, 1
        %s2379 = sphi %s2352, %s2352
        %s2380 = sphi %s408, %s408
      $region1763: #{embedding_mean.1} parent=1759 // loop_header_branch
        %2377 = sbr.rel (%p2375) target = $region1767
      $region1764: #{embedding_mean.1} parent=1759 // loop_body
        %v2381 = vld [vmem:[%s2379] sm:%s2372]
        %2382 = vst [vmem:[%s2380] sm:%s2372] %v2381
      $region1765: #{embedding_mean.1} parent=1759 // loop_footer
        %s2378 = sadd.s32 1, %s2374
      $region1766: #{embedding_mean.1} parent=1759 // loop_footer_branch
        %2373 = sbr.rel target = $region1762
      $region1767: #{embedding_mean.1} parent=1759 // loop_exit
        _
    $region1760: #{embedding_mean.1} parent=1744 // pred_fallthru
      _
  $region1745: #{embedding_mean.1} parent=0 // pred_fallthru
    _
  // Predicated region
  $region1746: #{embedding_mean.1} parent=0 // pred_check
    _
  $region1747: #{embedding_mean.1} parent=0 // pred_check_branch
    %2356 = sbr.rel (0) target = $region1749
  $region1748: #{embedding_mean.1} parent=0 // pred_region
    %s2358 = ssub.s32 2, 1
    loop: start=0, step=1, limit=1
    $region1750: #{embedding_mean.1} parent=1748 // loop_pre_header
      _
    $region1751: #{embedding_mean.1} parent=1748 // loop_header
      %s2360 = sphi 0, %s2364
      %p2361 = scmp.ge.s32.totalorder %s2360, 1
      %s2365 = sphi %s2352, %s2352
      %s2366 = sphi %s408, %s408
    $region1752: #{embedding_mean.1} parent=1748 // loop_header_branch
      %2363 = sbr.rel (%p2361) target = $region1756
    $region1753: #{embedding_mean.1} parent=1748 // loop_body
      %v2367 = vld [vmem:[%s2365] sm:%s2358]
      %2368 = vst [vmem:[%s2366] sm:%s2358] %v2367
    $region1754: #{embedding_mean.1} parent=1748 // loop_footer
      %s2364 = sadd.s32 1, %s2360
    $region1755: #{embedding_mean.1} parent=1748 // loop_footer_branch
      %2359 = sbr.rel target = $region1751
    $region1756: #{embedding_mean.1} parent=1748 // loop_exit
      _
  $region1749: #{embedding_mean.1} parent=0 // pred_fallthru
    _
  // Predicated region
  $region1768: #{embedding_mean.1} parent=0 // pred_check
    _
  $region1769: #{embedding_mean.1} parent=0 // pred_check_branch
    %2385 = sbr.rel (0) target = $region1771
  $region1770: #{embedding_mean.1} parent=0 // pred_region
    %2386 = vsyncadd %s409, 16
  $region1771: #{embedding_mean.1} parent=0 // pred_fallthru
    _
  %s2387 = sadd.s32 %s2276, 3
  %s2388 = sld [smem:[#allocation5 + %s2387]]
  %s2389 = scalar_lea.vmem %s1, %s2388
  // Predicated region
  $region1772: #{embedding_mean.1} parent=0 // pred_check
    _
  $region1773: #{embedding_mean.1} parent=0 // pred_check_branch
    %2391 = sbr.rel target = $region1775
  $region1774: #{embedding_mean.1} parent=0 // pred_region
    // Predicated region
    $region1787: #{embedding_mean.1} parent=1774 // pred_check
      _
    $region1788: #{embedding_mean.1} parent=1774 // pred_check_branch
      %2407 = sbr.rel (0) target = $region1790
    $region1789: #{embedding_mean.1} parent=1774 // pred_region
      %s2409 = ssub.s32 2, 1
      loop: start=0, step=1, limit=1
      $region1791: #{embedding_mean.1} parent=1789 // loop_pre_header
        _
      $region1792: #{embedding_mean.1} parent=1789 // loop_header
        %s2411 = sphi 0, %s2415
        %p2412 = scmp.ge.s32.totalorder %s2411, 1
        %s2416 = sphi %s2389, %s2389
        %s2417 = sphi %s447, %s447
      $region1793: #{embedding_mean.1} parent=1789 // loop_header_branch
        %2414 = sbr.rel (%p2412) target = $region1797
      $region1794: #{embedding_mean.1} parent=1789 // loop_body
        %v2418 = vld [vmem:[%s2416] sm:%s2409]
        %2419 = vst [vmem:[%s2417] sm:%s2409] %v2418
      $region1795: #{embedding_mean.1} parent=1789 // loop_footer
        %s2415 = sadd.s32 1, %s2411
      $region1796: #{embedding_mean.1} parent=1789 // loop_footer_branch
        %2410 = sbr.rel target = $region1792
      $region1797: #{embedding_mean.1} parent=1789 // loop_exit
        _
    $region1790: #{embedding_mean.1} parent=1774 // pred_fallthru
      _
  $region1775: #{embedding_mean.1} parent=0 // pred_fallthru
    _
  // Predicated region
  $region1776: #{embedding_mean.1} parent=0 // pred_check
    _
  $region1777: #{embedding_mean.1} parent=0 // pred_check_branch
    %2393 = sbr.rel (0) target = $region1779
  $region1778: #{embedding_mean.1} parent=0 // pred_region
    %s2395 = ssub.s32 2, 1
    loop: start=0, step=1, limit=1
    $region1780: #{embedding_mean.1} parent=1778 // loop_pre_header
      _
    $region1781: #{embedding_mean.1} parent=1778 // loop_header
      %s2397 = sphi 0, %s2401
      %p2398 = scmp.ge.s32.totalorder %s2397, 1
      %s2402 = sphi %s2389, %s2389
      %s2403 = sphi %s447, %s447
    $region1782: #{embedding_mean.1} parent=1778 // loop_header_branch
      %2400 = sbr.rel (%p2398) target = $region1786
    $region1783: #{embedding_mean.1} parent=1778 // loop_body
      %v2404 = vld [vmem:[%s2402] sm:%s2395]
      %2405 = vst [vmem:[%s2403] sm:%s2395] %v2404
    $region1784: #{embedding_mean.1} parent=1778 // loop_footer
      %s2401 = sadd.s32 1, %s2397
    $region1785: #{embedding_mean.1} parent=1778 // loop_footer_branch
      %2396 = sbr.rel target = $region1781
    $region1786: #{embedding_mean.1} parent=1778 // loop_exit
      _
  $region1779: #{embedding_mean.1} parent=0 // pred_fallthru
    _
  // Predicated region
  $region1798: #{embedding_mean.1} parent=0 // pred_check
    _
  $region1799: #{embedding_mean.1} parent=0 // pred_check_branch
    %2422 = sbr.rel (0) target = $region1801
  $region1800: #{embedding_mean.1} parent=0 // pred_region
    %2423 = vsyncadd %s448, 16
  $region1801: #{embedding_mean.1} parent=0 // pred_fallthru
    _
  %s2424 = sadd.s32 %s2276, 4
  %s2425 = sld [smem:[#allocation5 + %s2424]]
  %s2426 = scalar_lea.vmem %s1, %s2425
  // Predicated region
  $region1802: #{embedding_mean.1} parent=0 // pred_check
    _
  $region1803: #{embedding_mean.1} parent=0 // pred_check_branch
    %2428 = sbr.rel target = $region1805
  $region1804: #{embedding_mean.1} parent=0 // pred_region
    // Predicated region
    $region1817: #{embedding_mean.1} parent=1804 // pred_check
      _
    $region1818: #{embedding_mean.1} parent=1804 // pred_check_branch
      %2444 = sbr.rel (0) target = $region1820
    $region1819: #{embedding_mean.1} parent=1804 // pred_region
      %s2446 = ssub.s32 2, 1
      loop: start=0, step=1, limit=1
      $region1821: #{embedding_mean.1} parent=1819 // loop_pre_header
        _
      $region1822: #{embedding_mean.1} parent=1819 // loop_header
        %s2448 = sphi 0, %s2452
        %p2449 = scmp.ge.s32.totalorder %s2448, 1
        %s2453 = sphi %s2426, %s2426
        %s2454 = sphi %s486, %s486
      $region1823: #{embedding_mean.1} parent=1819 // loop_header_branch
        %2451 = sbr.rel (%p2449) target = $region1827
      $region1824: #{embedding_mean.1} parent=1819 // loop_body
        %v2455 = vld [vmem:[%s2453] sm:%s2446]
        %2456 = vst [vmem:[%s2454] sm:%s2446] %v2455
      $region1825: #{embedding_mean.1} parent=1819 // loop_footer
        %s2452 = sadd.s32 1, %s2448
      $region1826: #{embedding_mean.1} parent=1819 // loop_footer_branch
        %2447 = sbr.rel target = $region1822
      $region1827: #{embedding_mean.1} parent=1819 // loop_exit
        _
    $region1820: #{embedding_mean.1} parent=1804 // pred_fallthru
      _
  $region1805: #{embedding_mean.1} parent=0 // pred_fallthru
    _
  // Predicated region
  $region1806: #{embedding_mean.1} parent=0 // pred_check
    _
  $region1807: #{embedding_mean.1} parent=0 // pred_check_branch
    %2430 = sbr.rel (0) target = $region1809
  $region1808: #{embedding_mean.1} parent=0 // pred_region
    %s2432 = ssub.s32 2, 1
    loop: start=0, step=1, limit=1
    $region1810: #{embedding_mean.1} parent=1808 // loop_pre_header
      _
    $region1811: #{embedding_mean.1} parent=1808 // loop_header
      %s2434 = sphi 0, %s2438
      %p2435 = scmp.ge.s32.totalorder %s2434, 1
      %s2439 = sphi %s2426, %s2426
      %s2440 = sphi %s486, %s486
    $region1812: #{embedding_mean.1} parent=1808 // loop_header_branch
      %2437 = sbr.rel (%p2435) target = $region1816
    $region1813: #{embedding_mean.1} parent=1808 // loop_body
      %v2441 = vld [vmem:[%s2439] sm:%s2432]
      %2442 = vst [vmem:[%s2440] sm:%s2432] %v2441
    $region1814: #{embedding_mean.1} parent=1808 // loop_footer
      %s2438 = sadd.s32 1, %s2434
    $region1815: #{embedding_mean.1} parent=1808 // loop_footer_branch
      %2433 = sbr.rel target = $region1811
    $region1816: #{embedding_mean.1} parent=1808 // loop_exit
      _
  $region1809: #{embedding_mean.1} parent=0 // pred_fallthru
    _
  // Predicated region
  $region1828: #{embedding_mean.1} parent=0 // pred_check
    _
  $region1829: #{embedding_mean.1} parent=0 // pred_check_branch
    %2459 = sbr.rel (0) target = $region1831
  $region1830: #{embedding_mean.1} parent=0 // pred_region
    %2460 = vsyncadd %s487, 16
  $region1831: #{embedding_mean.1} parent=0 // pred_fallthru
    _
  %s2461 = sadd.s32 %s2276, 5
  %s2462 = sld [smem:[#allocation5 + %s2461]]
  %s2463 = scalar_lea.vmem %s1, %s2462
  // Predicated region
  $region1832: #{embedding_mean.1} parent=0 // pred_check
    _
  $region1833: #{embedding_mean.1} parent=0 // pred_check_branch
    %2465 = sbr.rel target = $region1835
  $region1834: #{embedding_mean.1} parent=0 // pred_region
    // Predicated region
    $region1847: #{embedding_mean.1} parent=1834 // pred_check
      _
    $region1848: #{embedding_mean.1} parent=1834 // pred_check_branch
      %2481 = sbr.rel (0) target = $region1850
    $region1849: #{embedding_mean.1} parent=1834 // pred_region
      %s2483 = ssub.s32 2, 1
      loop: start=0, step=1, limit=1
      $region1851: #{embedding_mean.1} parent=1849 // loop_pre_header
        _
      $region1852: #{embedding_mean.1} parent=1849 // loop_header
        %s2485 = sphi 0, %s2489
        %p2486 = scmp.ge.s32.totalorder %s2485, 1
        %s2490 = sphi %s2463, %s2463
        %s2491 = sphi %s525, %s525
      $region1853: #{embedding_mean.1} parent=1849 // loop_header_branch
        %2488 = sbr.rel (%p2486) target = $region1857
      $region1854: #{embedding_mean.1} parent=1849 // loop_body
        %v2492 = vld [vmem:[%s2490] sm:%s2483]
        %2493 = vst [vmem:[%s2491] sm:%s2483] %v2492
      $region1855: #{embedding_mean.1} parent=1849 // loop_footer
        %s2489 = sadd.s32 1, %s2485
      $region1856: #{embedding_mean.1} parent=1849 // loop_footer_branch
        %2484 = sbr.rel target = $region1852
      $region1857: #{embedding_mean.1} parent=1849 // loop_exit
        _
    $region1850: #{embedding_mean.1} parent=1834 // pred_fallthru
      _
  $region1835: #{embedding_mean.1} parent=0 // pred_fallthru
    _
  // Predicated region
  $region1836: #{embedding_mean.1} parent=0 // pred_check
    _
  $region1837: #{embedding_mean.1} parent=0 // pred_check_branch
    %2467 = sbr.rel (0) target = $region1839
  $region1838: #{embedding_mean.1} parent=0 // pred_region
    %s2469 = ssub.s32 2, 1
    loop: start=0, step=1, limit=1
    $region1840: #{embedding_mean.1} parent=1838 // loop_pre_header
      _
    $region1841: #{embedding_mean.1} parent=1838 // loop_header
      %s2471 = sphi 0, %s2475
      %p2472 = scmp.ge.s32.totalorder %s2471, 1
      %s2476 = sphi %s2463, %s2463
      %s2477 = sphi %s525, %s525
    $region1842: #{embedding_mean.1} parent=1838 // loop_header_branch
      %2474 = sbr.rel (%p2472) target = $region1846
    $region1843: #{embedding_mean.1} parent=1838 // loop_body
      %v2478 = vld [vmem:[%s2476] sm:%s2469]
      %2479 = vst [vmem:[%s2477] sm:%s2469] %v2478
    $region1844: #{embedding_mean.1} parent=1838 // loop_footer
      %s2475 = sadd.s32 1, %s2471
    $region1845: #{embedding_mean.1} parent=1838 // loop_footer_branch
      %2470 = sbr.rel target = $region1841
    $region1846: #{embedding_mean.1} parent=1838 // loop_exit
      _
  $region1839: #{embedding_mean.1} parent=0 // pred_fallthru
    _
  // Predicated region
  $region1858: #{embedding_mean.1} parent=0 // pred_check
    _
  $region1859: #{embedding_mean.1} parent=0 // pred_check_branch
    %2496 = sbr.rel (0) target = $region1861
  $region1860: #{embedding_mean.1} parent=0 // pred_region
    %2497 = vsyncadd %s526, 16
  $region1861: #{embedding_mean.1} parent=0 // pred_fallthru
    _
  %s2498 = sadd.s32 %s2276, 6
  %s2499 = sld [smem:[#allocation5 + %s2498]]
  %s2500 = scalar_lea.vmem %s1, %s2499
  // Predicated region
  $region1862: #{embedding_mean.1} parent=0 // pred_check
    _
  $region1863: #{embedding_mean.1} parent=0 // pred_check_branch
    %2502 = sbr.rel target = $region1865
  $region1864: #{embedding_mean.1} parent=0 // pred_region
    // Predicated region
    $region1877: #{embedding_mean.1} parent=1864 // pred_check
      _
    $region1878: #{embedding_mean.1} parent=1864 // pred_check_branch
      %2518 = sbr.rel (0) target = $region1880
    $region1879: #{embedding_mean.1} parent=1864 // pred_region
      %s2520 = ssub.s32 2, 1
      loop: start=0, step=1, limit=1
      $region1881: #{embedding_mean.1} parent=1879 // loop_pre_header
        _
      $region1882: #{embedding_mean.1} parent=1879 // loop_header
        %s2522 = sphi 0, %s2526
        %p2523 = scmp.ge.s32.totalorder %s2522, 1
        %s2527 = sphi %s2500, %s2500
        %s2528 = sphi %s564, %s564
      $region1883: #{embedding_mean.1} parent=1879 // loop_header_branch
        %2525 = sbr.rel (%p2523) target = $region1887
      $region1884: #{embedding_mean.1} parent=1879 // loop_body
        %v2529 = vld [vmem:[%s2527] sm:%s2520]
        %2530 = vst [vmem:[%s2528] sm:%s2520] %v2529
      $region1885: #{embedding_mean.1} parent=1879 // loop_footer
        %s2526 = sadd.s32 1, %s2522
      $region1886: #{embedding_mean.1} parent=1879 // loop_footer_branch
        %2521 = sbr.rel target = $region1882
      $region1887: #{embedding_mean.1} parent=1879 // loop_exit
        _
    $region1880: #{embedding_mean.1} parent=1864 // pred_fallthru
      _
  $region1865: #{embedding_mean.1} parent=0 // pred_fallthru
    _
  // Predicated region
  $region1866: #{embedding_mean.1} parent=0 // pred_check
    _
  $region1867: #{embedding_mean.1} parent=0 // pred_check_branch
    %2504 = sbr.rel (0) target = $region1869
  $region1868: #{embedding_mean.1} parent=0 // pred_region
    %s2506 = ssub.s32 2, 1
    loop: start=0, step=1, limit=1
    $region1870: #{embedding_mean.1} parent=1868 // loop_pre_header
      _
    $region1871: #{embedding_mean.1} parent=1868 // loop_header
      %s2508 = sphi 0, %s2512
      %p2509 = scmp.ge.s32.totalorder %s2508, 1
      %s2513 = sphi %s2500, %s2500
      %s2514 = sphi %s564, %s564
    $region1872: #{embedding_mean.1} parent=1868 // loop_header_branch
      %2511 = sbr.rel (%p2509) target = $region1876
    $region1873: #{embedding_mean.1} parent=1868 // loop_body
      %v2515 = vld [vmem:[%s2513] sm:%s2506]
      %2516 = vst [vmem:[%s2514] sm:%s2506] %v2515
    $region1874: #{embedding_mean.1} parent=1868 // loop_footer
      %s2512 = sadd.s32 1, %s2508
    $region1875: #{embedding_mean.1} parent=1868 // loop_footer_branch
      %2507 = sbr.rel target = $region1871
    $region1876: #{embedding_mean.1} parent=1868 // loop_exit
      _
  $region1869: #{embedding_mean.1} parent=0 // pred_fallthru
    _
  // Predicated region
  $region1888: #{embedding_mean.1} parent=0 // pred_check
    _
  $region1889: #{embedding_mean.1} parent=0 // pred_check_branch
    %2533 = sbr.rel (0) target = $region1891
  $region1890: #{embedding_mean.1} parent=0 // pred_region
    %2534 = vsyncadd %s565, 16
  $region1891: #{embedding_mean.1} parent=0 // pred_fallthru
    _
  %s2535 = sadd.s32 %s2276, 7
  %s2536 = sld [smem:[#allocation5 + %s2535]]
  %s2537 = scalar_lea.vmem %s1, %s2536
  // Predicated region
  $region1892: #{embedding_mean.1} parent=0 // pred_check
    _
  $region1893: #{embedding_mean.1} parent=0 // pred_check_branch
    %2539 = sbr.rel target = $region1895
  $region1894: #{embedding_mean.1} parent=0 // pred_region
    // Predicated region
    $region1907: #{embedding_mean.1} parent=1894 // pred_check
      _
    $region1908: #{embedding_mean.1} parent=1894 // pred_check_branch
      %2555 = sbr.rel (0) target = $region1910
    $region1909: #{embedding_mean.1} parent=1894 // pred_region
      %s2557 = ssub.s32 2, 1
      loop: start=0, step=1, limit=1
      $region1911: #{embedding_mean.1} parent=1909 // loop_pre_header
        _
      $region1912: #{embedding_mean.1} parent=1909 // loop_header
        %s2559 = sphi 0, %s2563
        %p2560 = scmp.ge.s32.totalorder %s2559, 1
        %s2564 = sphi %s2537, %s2537
        %s2565 = sphi %s603, %s603
      $region1913: #{embedding_mean.1} parent=1909 // loop_header_branch
        %2562 = sbr.rel (%p2560) target = $region1917
      $region1914: #{embedding_mean.1} parent=1909 // loop_body
        %v2566 = vld [vmem:[%s2564] sm:%s2557]
        %2567 = vst [vmem:[%s2565] sm:%s2557] %v2566
      $region1915: #{embedding_mean.1} parent=1909 // loop_footer
        %s2563 = sadd.s32 1, %s2559
      $region1916: #{embedding_mean.1} parent=1909 // loop_footer_branch
        %2558 = sbr.rel target = $region1912
      $region1917: #{embedding_mean.1} parent=1909 // loop_exit
        _
    $region1910: #{embedding_mean.1} parent=1894 // pred_fallthru
      _
  $region1895: #{embedding_mean.1} parent=0 // pred_fallthru
    _
  // Predicated region
  $region1896: #{embedding_mean.1} parent=0 // pred_check
    _
  $region1897: #{embedding_mean.1} parent=0 // pred_check_branch
    %2541 = sbr.rel (0) target = $region1899
  $region1898: #{embedding_mean.1} parent=0 // pred_region
    %s2543 = ssub.s32 2, 1
    loop: start=0, step=1, limit=1
    $region1900: #{embedding_mean.1} parent=1898 // loop_pre_header
      _
    $region1901: #{embedding_mean.1} parent=1898 // loop_header
      %s2545 = sphi 0, %s2549
      %p2546 = scmp.ge.s32.totalorder %s2545, 1
      %s2550 = sphi %s2537, %s2537
      %s2551 = sphi %s603, %s603
    $region1902: #{embedding_mean.1} parent=1898 // loop_header_branch
      %2548 = sbr.rel (%p2546) target = $region1906
    $region1903: #{embedding_mean.1} parent=1898 // loop_body
      %v2552 = vld [vmem:[%s2550] sm:%s2543]
      %2553 = vst [vmem:[%s2551] sm:%s2543] %v2552
    $region1904: #{embedding_mean.1} parent=1898 // loop_footer
      %s2549 = sadd.s32 1, %s2545
    $region1905: #{embedding_mean.1} parent=1898 // loop_footer_branch
      %2544 = sbr.rel target = $region1901
    $region1906: #{embedding_mean.1} parent=1898 // loop_exit
      _
  $region1899: #{embedding_mean.1} parent=0 // pred_fallthru
    _
  // Predicated region
  $region1918: #{embedding_mean.1} parent=0 // pred_check
    _
  $region1919: #{embedding_mean.1} parent=0 // pred_check_branch
    %2570 = sbr.rel (0) target = $region1921
  $region1920: #{embedding_mean.1} parent=0 // pred_region
    %2571 = vsyncadd %s604, 16
  $region1921: #{embedding_mean.1} parent=0 // pred_fallthru
    _
  %s2572 = sshll.u32 %s639, 4
  %2573 = dma.done [#allocation3], %s2572
  %s2574 = sshll.u32 %s639, 4
  %2575 = dma.done %s57, %s2574
  %s2576 = sshll.u32 %s639, 4
  %2577 = dma.done %s96, %s2576
  %s2578 = sshll.u32 %s639, 4
  %2579 = dma.done %s135, %s2578
  %s2580 = sshll.u32 %s639, 4
  %2581 = dma.done %s174, %s2580
  %s2582 = sshll.u32 %s639, 4
  %2583 = dma.done %s213, %s2582
  %s2584 = sshll.u32 %s639, 4
  %2585 = dma.done %s252, %s2584
  %s2586 = sshll.u32 %s639, 4
  %2587 = dma.done %s291, %s2586
  %v2588 = vld [vmem:[#allocation2] sm:$0xff]
  %v2589 = vrot.slane %v2588, 4
  %v2590 = vadd.f32 %v2588, %v2589
  %v2591 = vrot.slane %v2590, 2
  %v2592 = vadd.f32 %v2590, %v2591
  %v2593 = vrot.slane %v2592, 1
  %v2594 = vadd.f32 %v2592, %v2593
  %v2595 = vmul.f32 %v2594, 0.125
  %2596 = vst [vmem:[%s2 + $0x6] sm:$0x1] %v2595
  %s2597 = sshll.u32 %s639, 4
  %2598 = dma.done %s331, %s2597
  %s2599 = sshll.u32 %s639, 4
  %2600 = dma.done %s370, %s2599
  %s2601 = sshll.u32 %s639, 4
  %2602 = dma.done %s409, %s2601
  %s2603 = sshll.u32 %s639, 4
  %2604 = dma.done %s448, %s2603
  %s2605 = sshll.u32 %s639, 4
  %2606 = dma.done %s487, %s2605
  %s2607 = sshll.u32 %s639, 4
  %2608 = dma.done %s526, %s2607
  %s2609 = sshll.u32 %s639, 4
  %2610 = dma.done %s565, %s2609
  %s2611 = sshll.u32 %s639, 4
  %2612 = dma.done %s604, %s2611
  %v2613 = vld [vmem:[%s330] sm:$0xff]
  %v2614 = vrot.slane %v2613, 4
  %v2615 = vadd.f32 %v2613, %v2614
  %v2616 = vrot.slane %v2615, 2
  %v2617 = vadd.f32 %v2615, %v2616
  %v2618 = vrot.slane %v2617, 1
  %v2619 = vadd.f32 %v2617, %v2618
  %v2620 = vmul.f32 %v2619, 0.125
  %2621 = vst [vmem:[%s2 + $0x7] sm:$0x1] %v2620
  // Predicated region
  $region1922: #{embedding_mean.1} parent=0 // pred_check
    _
  $region1923: #{embedding_mean.1} parent=0 // pred_check_branch
    %2623 = sbr.rel (0) target = $region1925
  $region1924: #{embedding_mean.1} parent=0 // pred_region
    _
  $region1925: #{embedding_mean.1} parent=0 // pred_fallthru
    _
  // Predicated region
  $region1926: #{embedding_mean.1} parent=0 // pred_check
    _
  $region1927: #{embedding_mean.1} parent=0 // pred_check_branch
    %2625 = sbr.rel (0) target = $region1929
  $region1928: #{embedding_mean.1} parent=0 // pred_region
    _
  $region1929: #{embedding_mean.1} parent=0 // pred_fallthru
    _
  %2626 = vsyncmov [#allocation3]
  %s2627 = vpop.sfrf %2626
  %p2628 = scmp.eq.s32.totalorder %s2627, 0
  %p2629 = pneg %p2628
  %2631 = shalt.err (%p2629)
  %s2632 = scalar_lea.sflag [#allocation3], 1
  %2633 = vsyncmov %s2632
  %s2634 = vpop.sfrf %2633
  %p2635 = scmp.eq.s32.totalorder %s2634, 0
  %p2636 = pneg %p2635
  %2638 = shalt.err (%p2636)
  %s2639 = scalar_lea.sflag [#allocation3], 2
  %2640 = vsyncmov %s2639
  %s2641 = vpop.sfrf %2640
  %p2642 = scmp.eq.s32.totalorder %s2641, 0
  %p2643 = pneg %p2642
  %2645 = shalt.err (%p2643)
  %s2646 = scalar_lea.sflag [#allocation3], 3
  %2647 = vsyncmov %s2646
  %s2648 = vpop.sfrf %2647
  %p2649 = scmp.eq.s32.totalorder %s2648, 0
  %p2650 = pneg %p2649
  %2652 = shalt.err (%p2650)
  %s2653 = scalar_lea.sflag [#allocation3], 4
  %2654 = vsyncmov %s2653
  %s2655 = vpop.sfrf %2654
  %p2656 = scmp.eq.s32.totalorder %s2655, 0
  %p2657 = pneg %p2656
  %2659 = shalt.err (%p2657)
  %s2660 = scalar_lea.sflag [#allocation3], 5
  %2661 = vsyncmov %s2660
  %s2662 = vpop.sfrf %2661
  %p2663 = scmp.eq.s32.totalorder %s2662, 0
  %p2664 = pneg %p2663
  %2666 = shalt.err (%p2664)
  %s2667 = scalar_lea.sflag [#allocation3], 6
  %2668 = vsyncmov %s2667
  %s2669 = vpop.sfrf %2668
  %p2670 = scmp.eq.s32.totalorder %s2669, 0
  %p2671 = pneg %p2670
  %2673 = shalt.err (%p2671)
  %s2674 = scalar_lea.sflag [#allocation3], 7
  %2675 = vsyncmov %s2674
  %s2676 = vpop.sfrf %2675
  %p2677 = scmp.eq.s32.totalorder %s2676, 0
  %p2678 = pneg %p2677
  %2680 = shalt.err (%p2678)
  %s2681 = scalar_lea.sflag [#allocation3], 8
  %2682 = vsyncmov %s2681
  %s2683 = vpop.sfrf %2682
  %p2684 = scmp.eq.s32.totalorder %s2683, 0
  %p2685 = pneg %p2684
  %2687 = shalt.err (%p2685)
  %s2688 = scalar_lea.sflag [#allocation3], 9
  %2689 = vsyncmov %s2688
  %s2690 = vpop.sfrf %2689
  %p2691 = scmp.eq.s32.totalorder %s2690, 0
  %p2692 = pneg %p2691
  %2694 = shalt.err (%p2692)
  %s2695 = scalar_lea.sflag [#allocation3], 10
  %2696 = vsyncmov %s2695
  %s2697 = vpop.sfrf %2696
  %p2698 = scmp.eq.s32.totalorder %s2697, 0
  %p2699 = pneg %p2698
  %2701 = shalt.err (%p2699)
  %s2702 = scalar_lea.sflag [#allocation3], 11
  %2703 = vsyncmov %s2702
  %s2704 = vpop.sfrf %2703
  %p2705 = scmp.eq.s32.totalorder %s2704, 0
  %p2706 = pneg %p2705
  %2708 = shalt.err (%p2706)
  %s2709 = scalar_lea.sflag [#allocation3], 12
  %2710 = vsyncmov %s2709
  %s2711 = vpop.sfrf %2710
  %p2712 = scmp.eq.s32.totalorder %s2711, 0
  %p2713 = pneg %p2712
  %2715 = shalt.err (%p2713)
  %s2716 = scalar_lea.sflag [#allocation3], 13
  %2717 = vsyncmov %s2716
  %s2718 = vpop.sfrf %2717
  %p2719 = scmp.eq.s32.totalorder %s2718, 0
  %p2720 = pneg %p2719
  %2722 = shalt.err (%p2720)
  %s2723 = scalar_lea.sflag [#allocation3], 14
  %2724 = vsyncmov %s2723
  %s2725 = vpop.sfrf %2724
  %p2726 = scmp.eq.s32.totalorder %s2725, 0
  %p2727 = pneg %p2726
  %2729 = shalt.err (%p2727)
  %s2730 = scalar_lea.sflag [#allocation3], 15
  %2731 = vsyncmov %s2730
  %s2732 = vpop.sfrf %2731
  %p2733 = scmp.eq.s32.totalorder %s2732, 0
  %p2734 = pneg %p2733
  %2736 = shalt.err (%p2734)

</llo_original>
